<compile_context>
chip_gen: v7x
topology: tpu7x:2x2x1
jax: 0.10.0
libtpu: 0.0.40
codegen_flags: <defaults>
</compile_context>

<pallas_src>
import math

import jax
import jax.numpy as jnp
from jax import lax
from jax.experimental import pallas as pl
from jax.experimental.pallas import tpu as pltpu

# ----------------------------- configuration -----------------------------
ENC_IN = 4
DEC_IN = 4
C_OUT = 4
SEQ_LEN = 16
LABEL_LEN = 8
PRED_LEN = 8
DEC_LEN = LABEL_LEN + PRED_LEN
D_MODEL = 32
N_HEADS = 4
HEAD_DIM = D_MODEL // N_HEADS
D_FF = 64
E_LAYERS = 1
D_LAYERS = 1
P_HIDDEN_DIMS = (16, 16)      # p_hidden_layers = 2
TRAIN_RES = False
LN_EPS = 1e-5
STD_EPS = 1e-10               # matches the reference: sqrt(var + 1e-10)
ATTN_SCALE = 1.0 / math.sqrt(HEAD_DIM)
NEG_INF = -1e30               # finite "-inf" so masked softmax rows never NaN
LANES = 128                   # param-slab lane width


# ----------------------- in-kernel helper functions -----------------------
def _mm(a, b):
    """MXU matmul: bf16 operands, f32 accumulation (main weight matmuls)."""
    return jnp.dot(a.astype(jnp.bfloat16), b.astype(jnp.bfloat16),
                   preferred_element_type=jnp.float32)


def _mm32(a, b):
    """f32 matmul (tiny projector MLP + permutation/selection matrices)."""
    return jnp.dot(a, b, preferred_element_type=jnp.float32)


def _dot_nt(a, b):
    """a @ b.T without materializing the transpose (contract last dims)."""
    return lax.dot_general(a.astype(jnp.bfloat16), b.astype(jnp.bfloat16),
                           dimension_numbers=(((1,), (1,)), ((), ())),
                           preferred_element_type=jnp.float32)


def _shift_matrix(n, s):
    """Permutation matrix P with (P @ x)[i] == x[(i - s) mod n], |s| <= 1."""
    i = lax.broadcasted_iota(jnp.int32, (n, n), 0)
    j = lax.broadcasted_iota(jnp.int32, (n, n), 1)
    d = j - i + s
    return ((d == 0) | (d == n) | (d == -n)).astype(jnp.float32)


def _layernorm(x, w, b):
    m = jnp.mean(x, axis=-1, keepdims=True)
    xc = x - m
    v = jnp.mean(xc * xc, axis=-1, keepdims=True)
    return xc * lax.rsqrt(v + LN_EPS) * w + b


def _token_embed(x, w0, w1, w2, pe, sp1, sm1):
    """Circular Conv1d(k=3, pad=1, circular, no bias) over length + pos. emb.
    x: (W, C) channels-last; w0/w1/w2: (C, D); sp1/sm1: (W, W) shifts."""
    y = _mm(_mm32(sp1, x), w0) + _mm(x, w1) + _mm(_mm32(sm1, x), w2)
    return y + pe


def _projector(getp, pfx, x_raw, stats_row, sp1_c, sm1_c):
    """Projector: series_conv (circular k=3 over enc_in, channels=seq_len),
    concat with stats, 2-hidden-layer MLP (last layer bias-free).
    x_raw: (seq_len, enc_in); stats_row: (1, enc_in). Returns (1, output_dim).
    Kept in f32 (tiny matmuls; feeds exp() so precision is cheap insurance)."""
    cw = getp(pfx + "conv_w")                                   # (3, seq_len)
    c0 = _mm32(_mm32(cw[0:1, :], x_raw), sm1_c)
    c1 = _mm32(cw[1:2, :], x_raw)
    c2 = _mm32(_mm32(cw[2:3, :], x_raw), sp1_c)
    conv_row = c0 + c1 + c2                                     # (1, enc_in)
    h = (_mm32(conv_row, getp(pfx + "fc1_w_conv"))
         + _mm32(stats_row, getp(pfx + "fc1_w_stat"))
         + getp(pfx + "fc1_b"))
    h = jnp.maximum(h, 0.0)
    h = jnp.maximum(_mm32(h, getp(pfx + "fc2_w")) + getp(pfx + "fc2_b"), 0.0)
    return _mm32(h, getp(pfx + "fc3_w"))                        # no bias


def _mha(getp, pfx, x_q, x_kv, tau_s, delta_s, mask_add, fused_qkv):
    """De-stationary multi-head attention + output projection.
    x_q: (L, D), x_kv: (S, D); tau_s: (1,1) = tau*scale; delta_s: (1,S)*scale
    or None; mask_add: additive (L,S) 0/NEG_INF matrix or None."""
    D, H, E = D_MODEL, N_HEADS, HEAD_DIM
    wqkv = getp(pfx + "wqkv")
    bqkv = getp(pfx + "bqkv")
    if fused_qkv:
        qkv = _mm(x_q, wqkv) + bqkv                             # (L, 3D)
        q, k, v = qkv[:, :D], qkv[:, D:2 * D], qkv[:, 2 * D:]
    else:
        q = _mm(x_q, wqkv[:, :D]) + bqkv[:, :D]
        kv = _mm(x_kv, wqkv[:, D:]) + bqkv[:, D:]
        k, v = kv[:, :D], kv[:, D:]
    q = q * tau_s                                               # tau & 1/sqrt(E) folded once
    wo = getp(pfx + "wo")
    out = None
    for h in range(H):                                          # heads unrolled
        qh = q[:, h * E:(h + 1) * E]
        kh = k[:, h * E:(h + 1) * E]
        vh = v[:, h * E:(h + 1) * E]
        s = _dot_nt(qh, kh)                                     # (L, S) scores
        if delta_s is not None:
            s = s + delta_s                                     # + delta (per key)
        if mask_add is not None:
            s = s + mask_add                                    # causal mask
        s = s - jnp.max(s, axis=-1, keepdims=True)
        p = jnp.exp(s)
        p = p * pl.reciprocal(jnp.sum(p, axis=-1, keepdims=True), approx=True)
        oh = _mm(p, vh)                                         # (L, E)
        part = _mm(oh, wo[h * E:(h + 1) * E, :])                # accumulate out-proj
        out = part if out is None else out + part
    return out + getp(pfx + "bo")


def _encoder_layer(getp, pfx, x, tau_s, delta_s):
    a = _mha(getp, pfx + "attn_", x, x, tau_s, delta_s, None, fused_qkv=True)
    x = _layernorm(x + a, getp(pfx + "norm1_w"), getp(pfx + "norm1_b"))
    y = jnp.maximum(_mm(x, getp(pfx + "conv1_w")) + getp(pfx + "conv1_b"), 0.0)
    y = _mm(y, getp(pfx + "conv2_w")) + getp(pfx + "conv2_b")
    return _layernorm(x + y, getp(pfx + "norm2_w"), getp(pfx + "norm2_b"))


def _decoder_layer(getp, pfx, x, cross, tau_s, delta_s, causal_add):
    # self-attn: tau only (reference passes delta=None); causal mask
    x = x + _mha(getp, pfx + "self_", x, x, tau_s, None, causal_add, fused_qkv=True)
    x = _layernorm(x, getp(pfx + "norm1_w"), getp(pfx + "norm1_b"))
    x = x + _mha(getp, pfx + "cross_", x, cross, tau_s, delta_s, None, fused_qkv=False)
    x = _layernorm(x, getp(pfx + "norm2_w"), getp(pfx + "norm2_b"))
    y = jnp.maximum(_mm(x, getp(pfx + "conv1_w")) + getp(pfx + "conv1_b"), 0.0)
    y = _mm(y, getp(pfx + "conv2_w")) + getp(pfx + "conv2_b")
    return _layernorm(x + y, getp(pfx + "norm3_w"), getp(pfx + "norm3_b"))


# ----------------------------- fused kernel -----------------------------
def _make_kernel(layout):
    def kernel(x_ref, slab_ref, out_ref):
        def getp(name):
            off, r, c = layout[name]          # static python ints
            return slab_ref[off:off + r, 0:c]

        # Hoisted constant matrices (built once per program from iota).
        sp1_seq = _shift_matrix(SEQ_LEN, 1)
        sm1_seq = _shift_matrix(SEQ_LEN, -1)
        if DEC_LEN == SEQ_LEN:
            sp1_dec, sm1_dec = sp1_seq, sm1_seq
        else:
            sp1_dec = _shift_matrix(DEC_LEN, 1)
            sm1_dec = _shift_matrix(DEC_LEN, -1)
        sp1_c = _shift_matrix(ENC_IN, 1)
        sm1_c = _shift_matrix(ENC_IN, -1)
        # Selection: x_dec_new = [x_norm[-LABEL_LEN:]; zeros(PRED_LEN)]
        di = lax.broadcasted_iota(jnp.int32, (DEC_LEN, SEQ_LEN), 0)
        dj = lax.broadcasted_iota(jnp.int32, (DEC_LEN, SEQ_LEN), 1)
        sel = ((di < LABEL_LEN)
               & (dj == di + (SEQ_LEN - LABEL_LEN))).astype(jnp.float32)
        # Additive causal mask (hoisted out of the per-head loop).
        row = lax.broadcasted_iota(jnp.int32, (DEC_LEN, DEC_LEN), 0)
        col = lax.broadcasted_iota(jnp.int32, (DEC_LEN, DEC_LEN), 1)
        causal_add = jnp.where(col > row, jnp.float32(NEG_INF), jnp.float32(0.0))

        pe = getp("pe")                                      # (max_len, D)

        x_raw = x_ref[...]                                   # (SEQ_LEN, ENC_IN)
        mean_b = jnp.mean(x_raw, axis=0, keepdims=True)      # (1, ENC_IN)
        xc = x_raw - mean_b
        std_b = jnp.sqrt(jnp.mean(xc * xc, axis=0, keepdims=True) + STD_EPS)
        x_norm = xc / std_b
        x_dec_in = _mm32(sel, x_norm)                        # (DEC_LEN, ENC_IN)

        # De-stationary factors (scale folded in once per batch).
        tau_s = jnp.exp(_projector(getp, "tau_", x_raw, std_b,
                                   sp1_c, sm1_c)) * ATTN_SCALE        # (1,1)
        delta_s = _projector(getp, "delta_", x_raw, mean_b,
                             sp1_c, sm1_c) * ATTN_SCALE               # (1,SEQ_LEN)

        # Encoder.
        enc = _token_embed(x_norm, getp("enc_tok_w0"), getp("enc_tok_w1"),
                           getp("enc_tok_w2"), pe[:SEQ_LEN, :],
                           sp1_seq, sm1_seq)
        for li in range(E_LAYERS):
            enc = _encoder_layer(getp, f"enc{li}_", enc, tau_s, delta_s)
        enc = _layernorm(enc, getp("enc_norm_w"), getp("enc_norm_b"))

        # Decoder.
        dec = _token_embed(x_dec_in, getp("dec_tok_w0"), getp("dec_tok_w1"),
                           getp("dec_tok_w2"), pe[:DEC_LEN, :],
                           sp1_dec, sm1_dec)
        for li in range(D_LAYERS):
            dec = _decoder_layer(getp, f"dec{li}_", dec, enc,
                                 tau_s, delta_s, causal_add)
        dec = _layernorm(dec, getp("dec_norm_w"), getp("dec_norm_b"))
        dec = _mm(dec, getp("dec_proj_w")) + getp("dec_proj_b")

        # De-normalize.
        if not TRAIN_RES:
            dec = dec * std_b + mean_b
        else:
            dec = dec * std_b
        out_ref[...] = dec[DEC_LEN - PRED_LEN:, :]           # last pred_len steps
    return kernel


# ----------------------- host-side parameter packing -----------------------
def _pad8(r):
    return ((r + 7) // 8) * 8


def _pack_params(named):
    """named: ordered list of (name, 2D f32 array with width <= 128).
    Returns (slab (ROWS,128) f32, layout {name: (row_off, rows, cols)})."""
    layout = {}
    blocks = []
    off = 0
    for name, a in named:
        a = jnp.asarray(a, jnp.float32)
        assert a.ndim == 2 and a.shape[1] <= LANES, (name, a.shape)
        r, c = a.shape
        rp = _pad8(r)
        blk = jnp.zeros((rp, LANES), jnp.float32).at[:r, :c].set(a)
        blocks.append(blk)
        layout[name] = (off, r, c)
        off += rp
    return jnp.concatenate(blocks, axis=0), layout


def _flatten_params(p):
    """Flatten the nested param dict into an ordered list of (name, 2D array)."""
    out = [("pe", p["pe"])]
    for k in range(3):
        out.append((f"enc_tok_w{k}", p["enc_emb"]["token_w"][k]))
    for k in range(3):
        out.append((f"dec_tok_w{k}", p["dec_emb"]["token_w"][k]))

    def attn(pfx, a):
        return [(pfx + "wqkv", a["wqkv"]), (pfx + "bqkv", a["bqkv"]),
                (pfx + "wo", a["wo"]), (pfx + "bo", a["bo"])]

    for li, lp in enumerate(p["encoder"]["layers"]):
        pfx = f"enc{li}_"
        out += attn(pfx + "attn_", lp["attn"])
        out += [(pfx + "conv1_w", lp["conv1_w"]), (pfx + "conv1_b", lp["conv1_b"]),
                (pfx + "conv2_w", lp["conv2_w"]), (pfx + "conv2_b", lp["conv2_b"]),
                (pfx + "norm1_w", lp["norm1_w"]), (pfx + "norm1_b", lp["norm1_b"]),
                (pfx + "norm2_w", lp["norm2_w"]), (pfx + "norm2_b", lp["norm2_b"])]
    out += [("enc_norm_w", p["encoder"]["norm_w"]),
            ("enc_norm_b", p["encoder"]["norm_b"])]

    for li, lp in enumerate(p["decoder"]["layers"]):
        pfx = f"dec{li}_"
        out += attn(pfx + "self_", lp["self_attn"])
        out += attn(pfx + "cross_", lp["cross_attn"])
        out += [(pfx + "conv1_w", lp["conv1_w"]), (pfx + "conv1_b", lp["conv1_b"]),
                (pfx + "conv2_w", lp["conv2_w"]), (pfx + "conv2_b", lp["conv2_b"]),
                (pfx + "norm1_w", lp["norm1_w"]), (pfx + "norm1_b", lp["norm1_b"]),
                (pfx + "norm2_w", lp["norm2_w"]), (pfx + "norm2_b", lp["norm2_b"]),
                (pfx + "norm3_w", lp["norm3_w"]), (pfx + "norm3_b", lp["norm3_b"])]
    out += [("dec_norm_w", p["decoder"]["norm_w"]),
            ("dec_norm_b", p["decoder"]["norm_b"]),
            ("dec_proj_w", p["decoder"]["proj_w"]),
            ("dec_proj_b", p["decoder"]["proj_b"])]

    for nm, pp in (("tau_", p["tau"]), ("delta_", p["delta"])):
        out += [(nm + "conv_w", pp["conv_w"].reshape(3, -1)),
                (nm + "fc1_w_conv", pp["fc1_w_conv"]),
                (nm + "fc1_w_stat", pp["fc1_w_stat"]),
                (nm + "fc1_b", pp["fc1_b"]),
                (nm + "fc2_w", pp["fc2_w"]),
                (nm + "fc2_b", pp["fc2_b"]),
                (nm + "fc3_w", pp["fc3_w"])]
    return out


# ------------------------------- wrapper -------------------------------
def make_forward(params):
    slab, layout = _pack_params(_flatten_params(params))
    kernel = _make_kernel(layout)
    n_rows = slab.shape[0]

    @jax.jit
    def forward(slab_arr, x_enc):
        B = x_enc.shape[0]
        return pl.pallas_call(
            kernel,
            grid=(B,),
            in_specs=[
                pl.BlockSpec((None, SEQ_LEN, ENC_IN), lambda b: (b, 0, 0)),
                pl.BlockSpec((n_rows, LANES), lambda b: (0, 0)),
            ],
            out_specs=pl.BlockSpec((None, PRED_LEN, C_OUT), lambda b: (b, 0, 0)),
            out_shape=jax.ShapeDtypeStruct((B, PRED_LEN, C_OUT), jnp.float32),
            compiler_params=pltpu.CompilerParams(
                dimension_semantics=("parallel",)),   # 2-TC split on v7x
        )(x_enc.astype(jnp.float32), slab_arr)

    return forward, slab


# ----------------------------- parameter init -----------------------------
class KeyGen:
    def __init__(self, key):
        self._key = key

    def __call__(self):
        self._key, sub = jax.random.split(self._key)
        return sub


def _nrm(kg, shape, scale=0.1):
    return jax.random.normal(kg(), shape, jnp.float32) * scale


def _ones(shape):
    return jnp.ones(shape, jnp.float32)


def _zeros(shape):
    return jnp.zeros(shape, jnp.float32)


def make_positional_embedding(max_len, d_model):
    position = jnp.arange(max_len, dtype=jnp.float32)[:, None]
    div_term = jnp.exp(jnp.arange(0, d_model, 2, dtype=jnp.float32)
                       * -(math.log(10000.0) / d_model))
    pe = jnp.zeros((max_len, d_model), jnp.float32)
    pe = pe.at[:, 0::2].set(jnp.sin(position * div_term))
    pe = pe.at[:, 1::2].set(jnp.cos(position * div_term))
    return pe


def init_attn_params(kg):
    return dict(
        wqkv=_nrm(kg, (D_MODEL, 3 * D_MODEL)), bqkv=_nrm(kg, (1, 3 * D_MODEL)),
        wo=_nrm(kg, (D_MODEL, D_MODEL)), bo=_nrm(kg, (1, D_MODEL)),
    )


def init_encoder_layer(kg):
    return dict(
        attn=init_attn_params(kg),
        conv1_w=_nrm(kg, (D_MODEL, D_FF)), conv1_b=_nrm(kg, (1, D_FF)),
        conv2_w=_nrm(kg, (D_FF, D_MODEL)), conv2_b=_nrm(kg, (1, D_MODEL)),
        norm1_w=_ones((1, D_MODEL)), norm1_b=_zeros((1, D_MODEL)),
        norm2_w=_ones((1, D_MODEL)), norm2_b=_zeros((1, D_MODEL)),
    )


def init_decoder_layer(kg):
    return dict(
        self_attn=init_attn_params(kg),
        cross_attn=init_attn_params(kg),
        conv1_w=_nrm(kg, (D_MODEL, D_FF)), conv1_b=_nrm(kg, (1, D_FF)),
        conv2_w=_nrm(kg, (D_FF, D_MODEL)), conv2_b=_nrm(kg, (1, D_MODEL)),
        norm1_w=_ones((1, D_MODEL)), norm1_b=_zeros((1, D_MODEL)),
        norm2_w=_ones((1, D_MODEL)), norm2_b=_zeros((1, D_MODEL)),
        norm3_w=_ones((1, D_MODEL)), norm3_b=_zeros((1, D_MODEL)),
    )


def init_projector(kg, enc_in, seq_len, hidden_dims, output_dim):
    return dict(
        conv_w=_nrm(kg, (3, 1, seq_len)),                  # (k, 1, channels=seq_len)
        fc1_w_conv=_nrm(kg, (enc_in, hidden_dims[0])),     # fc1 split to avoid concat
        fc1_w_stat=_nrm(kg, (enc_in, hidden_dims[0])),
        fc1_b=_nrm(kg, (1, hidden_dims[0])),
        fc2_w=_nrm(kg, (hidden_dims[0], hidden_dims[1])),
        fc2_b=_nrm(kg, (1, hidden_dims[1])),
        fc3_w=_nrm(kg, (hidden_dims[1], output_dim)),      # final layer: no bias
    )


def init_params(key):
    kg = KeyGen(key)
    pe = make_positional_embedding(max(SEQ_LEN, DEC_LEN), D_MODEL)
    return dict(
        pe=pe,
        enc_emb=dict(token_w=_nrm(kg, (3, ENC_IN, D_MODEL))),
        dec_emb=dict(token_w=_nrm(kg, (3, DEC_IN, D_MODEL))),
        encoder=dict(
            layers=[init_encoder_layer(kg) for _ in range(E_LAYERS)],
            norm_w=_ones((1, D_MODEL)), norm_b=_zeros((1, D_MODEL)),
        ),
        decoder=dict(
            layers=[init_decoder_layer(kg) for _ in range(D_LAYERS)],
            norm_w=_ones((1, D_MODEL)), norm_b=_zeros((1, D_MODEL)),
            proj_w=_nrm(kg, (D_MODEL, C_OUT)), proj_b=_nrm(kg, (1, C_OUT)),
        ),
        tau=init_projector(kg, ENC_IN, SEQ_LEN, P_HIDDEN_DIMS, 1),
        delta=init_projector(kg, ENC_IN, SEQ_LEN, P_HIDDEN_DIMS, SEQ_LEN),
    )


# ----------------------------- main -----------------------------
if __name__ == "__main__":
    root = jax.random.PRNGKey(0)
    pkey, xkey = jax.random.split(root)
    params = init_params(pkey)
    x_enc = jax.random.normal(xkey, (2, SEQ_LEN, ENC_IN), jnp.float32)

    forward, slab = make_forward(params)
    out = jax.block_until_ready(forward(slab, x_enc))

    assert out.shape == (2, PRED_LEN, C_OUT), out.shape
    assert bool(jnp.all(jnp.isfinite(out)))
    print("KERNEL_OK")
</pallas_src>

<mosaic_0001>
module attributes {stable_mosaic.version = 11 : i64} {
  func.func @kernel(%arg0: i32, %arg1: memref<1x16x4xf32, #tpu.memory_space<vmem>>, %arg2: memref<824x128xf32, #tpu.memory_space<vmem>>, %arg3: memref<1x8x4xf32, #tpu.memory_space<vmem>>) attributes {dimension_semantics = [#tpu.dimension_semantics<parallel>], iteration_bounds = array<i64: 2>, scalar_prefetch = 0 : i64, scratch_operands = 0 : i64, tpu.core_type = #tpu.core_type<tc>, window_params = [{transform_indices = @transform_0, window_bounds = array<i64: 1, 16, 4>}, {pipeline_mode = #tpu.pipeline_mode<synchronous>, transform_indices = @transform_1, window_bounds = array<i64: 824, 128>}, {transform_indices = @transform_2, window_bounds = array<i64: 1, 8, 4>}]} {
    %0 = tpu.iota {dimensions = array<i32: 0>} : vector<16x16xi32>
    %1 = tpu.iota {dimensions = array<i32: 1>} : vector<16x16xi32>
    %2 = arith.subi %1, %0 : vector<16x16xi32>
    %c1_i32 = arith.constant 1 : i32
    %3 = vector.broadcast %c1_i32 : i32 to vector<16x16xi32>
    %4 = arith.addi %2, %3 : vector<16x16xi32>
    %c0_i32 = arith.constant 0 : i32
    %5 = vector.broadcast %c0_i32 : i32 to vector<16x16xi32>
    %6 = arith.cmpi eq, %4, %5 : vector<16x16xi32>
    %c16_i32 = arith.constant 16 : i32
    %7 = vector.broadcast %c16_i32 : i32 to vector<16x16xi32>
    %8 = arith.cmpi eq, %4, %7 : vector<16x16xi32>
    %9 = arith.ori %6, %8 : vector<16x16xi1>
    %c-16_i32 = arith.constant -16 : i32
    %10 = vector.broadcast %c-16_i32 : i32 to vector<16x16xi32>
    %11 = arith.cmpi eq, %4, %10 : vector<16x16xi32>
    %12 = arith.ori %9, %11 : vector<16x16xi1>
    %13 = arith.extui %12 : vector<16x16xi1> to vector<16x16xi32>
    %14 = arith.sitofp %13 : vector<16x16xi32> to vector<16x16xf32>
    %15 = tpu.iota {dimensions = array<i32: 0>} : vector<16x16xi32>
    %16 = tpu.iota {dimensions = array<i32: 1>} : vector<16x16xi32>
    %17 = arith.subi %16, %15 : vector<16x16xi32>
    %c-1_i32 = arith.constant -1 : i32
    %18 = vector.broadcast %c-1_i32 : i32 to vector<16x16xi32>
    %19 = arith.addi %17, %18 : vector<16x16xi32>
    %c0_i32_0 = arith.constant 0 : i32
    %20 = vector.broadcast %c0_i32_0 : i32 to vector<16x16xi32>
    %21 = arith.cmpi eq, %19, %20 : vector<16x16xi32>
    %c16_i32_1 = arith.constant 16 : i32
    %22 = vector.broadcast %c16_i32_1 : i32 to vector<16x16xi32>
    %23 = arith.cmpi eq, %19, %22 : vector<16x16xi32>
    %24 = arith.ori %21, %23 : vector<16x16xi1>
    %c-16_i32_2 = arith.constant -16 : i32
    %25 = vector.broadcast %c-16_i32_2 : i32 to vector<16x16xi32>
    %26 = arith.cmpi eq, %19, %25 : vector<16x16xi32>
    %27 = arith.ori %24, %26 : vector<16x16xi1>
    %28 = arith.extui %27 : vector<16x16xi1> to vector<16x16xi32>
    %29 = arith.sitofp %28 : vector<16x16xi32> to vector<16x16xf32>
    %30 = tpu.iota {dimensions = array<i32: 0>} : vector<4x4xi32>
    %31 = tpu.iota {dimensions = array<i32: 1>} : vector<4x4xi32>
    %32 = arith.subi %31, %30 : vector<4x4xi32>
    %c1_i32_3 = arith.constant 1 : i32
    %33 = vector.broadcast %c1_i32_3 : i32 to vector<4x4xi32>
    %34 = arith.addi %32, %33 : vector<4x4xi32>
    %c0_i32_4 = arith.constant 0 : i32
    %35 = vector.broadcast %c0_i32_4 : i32 to vector<4x4xi32>
    %36 = arith.cmpi eq, %34, %35 : vector<4x4xi32>
    %c4_i32 = arith.constant 4 : i32
    %37 = vector.broadcast %c4_i32 : i32 to vector<4x4xi32>
    %38 = arith.cmpi eq, %34, %37 : vector<4x4xi32>
    %39 = arith.ori %36, %38 : vector<4x4xi1>
    %c-4_i32 = arith.constant -4 : i32
    %40 = vector.broadcast %c-4_i32 : i32 to vector<4x4xi32>
    %41 = arith.cmpi eq, %34, %40 : vector<4x4xi32>
    %42 = arith.ori %39, %41 : vector<4x4xi1>
    %43 = arith.extui %42 : vector<4x4xi1> to vector<4x4xi32>
    %44 = arith.sitofp %43 : vector<4x4xi32> to vector<4x4xf32>
    %45 = tpu.iota {dimensions = array<i32: 0>} : vector<4x4xi32>
    %46 = tpu.iota {dimensions = array<i32: 1>} : vector<4x4xi32>
    %47 = arith.subi %46, %45 : vector<4x4xi32>
    %c-1_i32_5 = arith.constant -1 : i32
    %48 = vector.broadcast %c-1_i32_5 : i32 to vector<4x4xi32>
    %49 = arith.addi %47, %48 : vector<4x4xi32>
    %c0_i32_6 = arith.constant 0 : i32
    %50 = vector.broadcast %c0_i32_6 : i32 to vector<4x4xi32>
    %51 = arith.cmpi eq, %49, %50 : vector<4x4xi32>
    %c4_i32_7 = arith.constant 4 : i32
    %52 = vector.broadcast %c4_i32_7 : i32 to vector<4x4xi32>
    %53 = arith.cmpi eq, %49, %52 : vector<4x4xi32>
    %54 = arith.ori %51, %53 : vector<4x4xi1>
    %c-4_i32_8 = arith.constant -4 : i32
    %55 = vector.broadcast %c-4_i32_8 : i32 to vector<4x4xi32>
    %56 = arith.cmpi eq, %49, %55 : vector<4x4xi32>
    %57 = arith.ori %54, %56 : vector<4x4xi1>
    %58 = arith.extui %57 : vector<4x4xi1> to vector<4x4xi32>
    %59 = arith.sitofp %58 : vector<4x4xi32> to vector<4x4xf32>
    %60 = tpu.iota {dimensions = array<i32: 0>} : vector<16x16xi32>
    %61 = tpu.iota {dimensions = array<i32: 1>} : vector<16x16xi32>
    %c8_i32 = arith.constant 8 : i32
    %62 = vector.broadcast %c8_i32 : i32 to vector<16x16xi32>
    %63 = arith.cmpi slt, %60, %62 : vector<16x16xi32>
    %c8_i32_9 = arith.constant 8 : i32
    %64 = vector.broadcast %c8_i32_9 : i32 to vector<16x16xi32>
    %65 = arith.addi %60, %64 : vector<16x16xi32>
    %66 = arith.cmpi eq, %61, %65 : vector<16x16xi32>
    %67 = arith.andi %63, %66 : vector<16x16xi1>
    %68 = arith.extui %67 : vector<16x16xi1> to vector<16x16xi32>
    %69 = arith.sitofp %68 : vector<16x16xi32> to vector<16x16xf32>
    %70 = tpu.iota {dimensions = array<i32: 0>} : vector<16x16xi32>
    %71 = tpu.iota {dimensions = array<i32: 1>} : vector<16x16xi32>
    %72 = arith.cmpi sgt, %71, %70 : vector<16x16xi32>
    %cst = arith.constant -1.000000e+30 : f32
    %cst_10 = arith.constant 0.000000e+00 : f32
    %73 = vector.broadcast %cst : f32 to vector<16x16xf32>
    %74 = vector.broadcast %cst_10 : f32 to vector<16x16xf32>
    %75 = arith.select %72, %73, %74 : vector<16x16xi1>, vector<16x16xf32>
    %c0 = arith.constant 0 : index
    %c0_11 = arith.constant 0 : index
    %76 = vector.load %arg2[%c0, %c0_11] : memref<824x128xf32, #tpu.memory_space<vmem>>, vector<16x32xf32>
    %c0_12 = arith.constant 0 : index
    %c0_13 = arith.constant 0 : index
    %c0_14 = arith.constant 0 : index
    %77 = vector.load %arg1[%c0_12, %c0_13, %c0_14] : memref<1x16x4xf32, #tpu.memory_space<vmem>>, vector<1x16x4xf32>
    %78 = vector.shape_cast %77 : vector<1x16x4xf32> to vector<16x4xf32>
    %cst_15 = arith.constant dense<0.000000e+00> : vector<4xf32>
    %79 = vector.multi_reduction <add>, %78, %cst_15 [0] : vector<16x4xf32> to vector<4xf32>
    %80 = vector.shape_cast %79 : vector<4xf32> to vector<1x4xf32>
    %cst_16 = arith.constant 1.600000e+01 : f32
    %81 = vector.broadcast %cst_16 : f32 to vector<1x4xf32>
    %82 = arith.divf %80, %81 : vector<1x4xf32>
    %83 = vector.broadcast %82 : vector<1x4xf32> to vector<16x4xf32>
    %84 = arith.subf %78, %83 : vector<16x4xf32>
    %85 = arith.mulf %84, %84 : vector<16x4xf32>
    %cst_17 = arith.constant dense<0.000000e+00> : vector<4xf32>
    %86 = vector.multi_reduction <add>, %85, %cst_17 [0] : vector<16x4xf32> to vector<4xf32>
    %87 = vector.shape_cast %86 : vector<4xf32> to vector<1x4xf32>
    %cst_18 = arith.constant 1.600000e+01 : f32
    %88 = vector.broadcast %cst_18 : f32 to vector<1x4xf32>
    %89 = arith.divf %87, %88 : vector<1x4xf32>
    %cst_19 = arith.constant 1.000000e-10 : f32
    %90 = vector.broadcast %cst_19 : f32 to vector<1x4xf32>
    %91 = arith.addf %89, %90 : vector<1x4xf32>
    %92 = math.sqrt %91 : vector<1x4xf32>
    %93 = vector.broadcast %92 : vector<1x4xf32> to vector<16x4xf32>
    %94 = arith.divf %84, %93 : vector<16x4xf32>
    %cst_20 = arith.constant dense<0.000000e+00> : vector<16x4xf32>
    %95 = tpu.matmul %69, %94, %cst_20 {dimension_numbers = #tpu.dot_dimension_numbers<[1], [0], [0], [1], [0, 0, 1, 1], [], []>} : vector<16x16xf32>, vector<16x4xf32>, vector<16x4xf32> -> vector<16x4xf32>
    %c680 = arith.constant 680 : index
    %c0_21 = arith.constant 0 : index
    %96 = vector.load %arg2[%c680, %c0_21] : memref<824x128xf32, #tpu.memory_space<vmem>>, vector<3x16xf32>
    %97 = vector.extract_strided_slice %96 {offsets = [0, 0], sizes = [1, 16], strides = [1, 1]} : vector<3x16xf32> to vector<1x16xf32>
    %cst_22 = arith.constant dense<0.000000e+00> : vector<1x4xf32>
    %98 = tpu.matmul %97, %78, %cst_22 {dimension_numbers = #tpu.dot_dimension_numbers<[1], [0], [0], [1], [0, 0, 1, 1], [], []>} : vector<1x16xf32>, vector<16x4xf32>, vector<1x4xf32> -> vector<1x4xf32>
    %cst_23 = arith.constant dense<0.000000e+00> : vector<1x4xf32>
    %99 = tpu.matmul %98, %59, %cst_23 {dimension_numbers = #tpu.dot_dimension_numbers<[1], [0], [0], [1], [0, 0, 1, 1], [], []>} : vector<1x4xf32>, vector<4x4xf32>, vector<1x4xf32> -> vector<1x4xf32>
    %100 = vector.extract_strided_slice %96 {offsets = [1, 0], sizes = [1, 16], strides = [1, 1]} : vector<3x16xf32> to vector<1x16xf32>
    %cst_24 = arith.constant dense<0.000000e+00> : vector<1x4xf32>
    %101 = tpu.matmul %100, %78, %cst_24 {dimension_numbers = #tpu.dot_dimension_numbers<[1], [0], [0], [1], [0, 0, 1, 1], [], []>} : vector<1x16xf32>, vector<16x4xf32>, vector<1x4xf32> -> vector<1x4xf32>
    %102 = vector.extract_strided_slice %96 {offsets = [2, 0], sizes = [1, 16], strides = [1, 1]} : vector<3x16xf32> to vector<1x16xf32>
    %cst_25 = arith.constant dense<0.000000e+00> : vector<1x4xf32>
    %103 = tpu.matmul %102, %78, %cst_25 {dimension_numbers = #tpu.dot_dimension_numbers<[1], [0], [0], [1], [0, 0, 1, 1], [], []>} : vector<1x16xf32>, vector<16x4xf32>, vector<1x4xf32> -> vector<1x4xf32>
    %cst_26 = arith.constant dense<0.000000e+00> : vector<1x4xf32>
    %104 = tpu.matmul %103, %44, %cst_26 {dimension_numbers = #tpu.dot_dimension_numbers<[1], [0], [0], [1], [0, 0, 1, 1], [], []>} : vector<1x4xf32>, vector<4x4xf32>, vector<1x4xf32> -> vector<1x4xf32>
    %105 = arith.addf %99, %101 : vector<1x4xf32>
    %106 = arith.addf %105, %104 : vector<1x4xf32>
    %c688 = arith.constant 688 : index
    %c0_27 = arith.constant 0 : index
    %107 = vector.load %arg2[%c688, %c0_27] : memref<824x128xf32, #tpu.memory_space<vmem>>, vector<4x16xf32>
    %cst_28 = arith.constant dense<0.000000e+00> : vector<1x16xf32>
    %108 = tpu.matmul %106, %107, %cst_28 {dimension_numbers = #tpu.dot_dimension_numbers<[1], [0], [0], [1], [0, 0, 1, 1], [], []>} : vector<1x4xf32>, vector<4x16xf32>, vector<1x16xf32> -> vector<1x16xf32>
    %c696 = arith.constant 696 : index
    %c0_29 = arith.constant 0 : index
    %109 = vector.load %arg2[%c696, %c0_29] : memref<824x128xf32, #tpu.memory_space<vmem>>, vector<4x16xf32>
    %cst_30 = arith.constant dense<0.000000e+00> : vector<1x16xf32>
    %110 = tpu.matmul %92, %109, %cst_30 {dimension_numbers = #tpu.dot_dimension_numbers<[1], [0], [0], [1], [0, 0, 1, 1], [], []>} : vector<1x4xf32>, vector<4x16xf32>, vector<1x16xf32> -> vector<1x16xf32>
    %111 = arith.addf %108, %110 : vector<1x16xf32>
    %c704 = arith.constant 704 : index
    %c0_31 = arith.constant 0 : index
    %112 = vector.load %arg2[%c704, %c0_31] : memref<824x128xf32, #tpu.memory_space<vmem>>, vector<1x16xf32>
    %113 = arith.addf %111, %112 : vector<1x16xf32>
    %cst_32 = arith.constant 0.000000e+00 : f32
    %114 = vector.broadcast %cst_32 : f32 to vector<1x16xf32>
    %115 = arith.maximumf %113, %114 : vector<1x16xf32>
    %c712 = arith.constant 712 : index
    %c0_33 = arith.constant 0 : index
    %116 = vector.load %arg2[%c712, %c0_33] : memref<824x128xf32, #tpu.memory_space<vmem>>, vector<16x16xf32>
    %cst_34 = arith.constant dense<0.000000e+00> : vector<1x16xf32>
    %117 = tpu.matmul %115, %116, %cst_34 {dimension_numbers = #tpu.dot_dimension_numbers<[1], [0], [0], [1], [0, 0, 1, 1], [], []>} : vector<1x16xf32>, vector<16x16xf32>, vector<1x16xf32> -> vector<1x16xf32>
    %c728 = arith.constant 728 : index
    %c0_35 = arith.constant 0 : index
    %118 = vector.load %arg2[%c728, %c0_35] : memref<824x128xf32, #tpu.memory_space<vmem>>, vector<1x16xf32>
    %119 = arith.addf %117, %118 : vector<1x16xf32>
    %cst_36 = arith.constant 0.000000e+00 : f32
    %120 = vector.broadcast %cst_36 : f32 to vector<1x16xf32>
    %121 = arith.maximumf %119, %120 : vector<1x16xf32>
    %c736 = arith.constant 736 : index
    %c0_37 = arith.constant 0 : index
    %122 = vector.load %arg2[%c736, %c0_37] : memref<824x128xf32, #tpu.memory_space<vmem>>, vector<16x1xf32>
    %cst_38 = arith.constant dense<0.000000e+00> : vector<1x1xf32>
    %123 = tpu.matmul %121, %122, %cst_38 {dimension_numbers = #tpu.dot_dimension_numbers<[1], [0], [0], [1], [0, 0, 1, 1], [], []>} : vector<1x16xf32>, vector<16x1xf32>, vector<1x1xf32> -> vector<1x1xf32>
    %124 = math.exp %123 : vector<1x1xf32>
    %cst_39 = arith.constant 0.353553385 : f32
    %125 = vector.broadcast %cst_39 : f32 to vector<1x1xf32>
    %126 = arith.mulf %124, %125 : vector<1x1xf32>
    %c752 = arith.constant 752 : index
    %c0_40 = arith.constant 0 : index
    %127 = vector.load %arg2[%c752, %c0_40] : memref<824x128xf32, #tpu.memory_space<vmem>>, vector<3x16xf32>
    %128 = vector.extract_strided_slice %127 {offsets = [0, 0], sizes = [1, 16], strides = [1, 1]} : vector<3x16xf32> to vector<1x16xf32>
    %cst_41 = arith.constant dense<0.000000e+00> : vector<1x4xf32>
    %129 = tpu.matmul %128, %78, %cst_41 {dimension_numbers = #tpu.dot_dimension_numbers<[1], [0], [0], [1], [0, 0, 1, 1], [], []>} : vector<1x16xf32>, vector<16x4xf32>, vector<1x4xf32> -> vector<1x4xf32>
    %cst_42 = arith.constant dense<0.000000e+00> : vector<1x4xf32>
    %130 = tpu.matmul %129, %59, %cst_42 {dimension_numbers = #tpu.dot_dimension_numbers<[1], [0], [0], [1], [0, 0, 1, 1], [], []>} : vector<1x4xf32>, vector<4x4xf32>, vector<1x4xf32> -> vector<1x4xf32>
    %131 = vector.extract_strided_slice %127 {offsets = [1, 0], sizes = [1, 16], strides = [1, 1]} : vector<3x16xf32> to vector<1x16xf32>
    %cst_43 = arith.constant dense<0.000000e+00> : vector<1x4xf32>
    %132 = tpu.matmul %131, %78, %cst_43 {dimension_numbers = #tpu.dot_dimension_numbers<[1], [0], [0], [1], [0, 0, 1, 1], [], []>} : vector<1x16xf32>, vector<16x4xf32>, vector<1x4xf32> -> vector<1x4xf32>
    %133 = vector.extract_strided_slice %127 {offsets = [2, 0], sizes = [1, 16], strides = [1, 1]} : vector<3x16xf32> to vector<1x16xf32>
    %cst_44 = arith.constant dense<0.000000e+00> : vector<1x4xf32>
    %134 = tpu.matmul %133, %78, %cst_44 {dimension_numbers = #tpu.dot_dimension_numbers<[1], [0], [0], [1], [0, 0, 1, 1], [], []>} : vector<1x16xf32>, vector<16x4xf32>, vector<1x4xf32> -> vector<1x4xf32>
    %cst_45 = arith.constant dense<0.000000e+00> : vector<1x4xf32>
    %135 = tpu.matmul %134, %44, %cst_45 {dimension_numbers = #tpu.dot_dimension_numbers<[1], [0], [0], [1], [0, 0, 1, 1], [], []>} : vector<1x4xf32>, vector<4x4xf32>, vector<1x4xf32> -> vector<1x4xf32>
    %136 = arith.addf %130, %132 : vector<1x4xf32>
    %137 = arith.addf %136, %135 : vector<1x4xf32>
    %c760 = arith.constant 760 : index
    %c0_46 = arith.constant 0 : index
    %138 = vector.load %arg2[%c760, %c0_46] : memref<824x128xf32, #tpu.memory_space<vmem>>, vector<4x16xf32>
    %cst_47 = arith.constant dense<0.000000e+00> : vector<1x16xf32>
    %139 = tpu.matmul %137, %138, %cst_47 {dimension_numbers = #tpu.dot_dimension_numbers<[1], [0], [0], [1], [0, 0, 1, 1], [], []>} : vector<1x4xf32>, vector<4x16xf32>, vector<1x16xf32> -> vector<1x16xf32>
    %c768 = arith.constant 768 : index
    %c0_48 = arith.constant 0 : index
    %140 = vector.load %arg2[%c768, %c0_48] : memref<824x128xf32, #tpu.memory_space<vmem>>, vector<4x16xf32>
    %cst_49 = arith.constant dense<0.000000e+00> : vector<1x16xf32>
    %141 = tpu.matmul %82, %140, %cst_49 {dimension_numbers = #tpu.dot_dimension_numbers<[1], [0], [0], [1], [0, 0, 1, 1], [], []>} : vector<1x4xf32>, vector<4x16xf32>, vector<1x16xf32> -> vector<1x16xf32>
    %142 = arith.addf %139, %141 : vector<1x16xf32>
    %c776 = arith.constant 776 : index
    %c0_50 = arith.constant 0 : index
    %143 = vector.load %arg2[%c776, %c0_50] : memref<824x128xf32, #tpu.memory_space<vmem>>, vector<1x16xf32>
    %144 = arith.addf %142, %143 : vector<1x16xf32>
    %cst_51 = arith.constant 0.000000e+00 : f32
    %145 = vector.broadcast %cst_51 : f32 to vector<1x16xf32>
    %146 = arith.maximumf %144, %145 : vector<1x16xf32>
    %c784 = arith.constant 784 : index
    %c0_52 = arith.constant 0 : index
    %147 = vector.load %arg2[%c784, %c0_52] : memref<824x128xf32, #tpu.memory_space<vmem>>, vector<16x16xf32>
    %cst_53 = arith.constant dense<0.000000e+00> : vector<1x16xf32>
    %148 = tpu.matmul %146, %147, %cst_53 {dimension_numbers = #tpu.dot_dimension_numbers<[1], [0], [0], [1], [0, 0, 1, 1], [], []>} : vector<1x16xf32>, vector<16x16xf32>, vector<1x16xf32> -> vector<1x16xf32>
    %c800 = arith.constant 800 : index
    %c0_54 = arith.constant 0 : index
    %149 = vector.load %arg2[%c800, %c0_54] : memref<824x128xf32, #tpu.memory_space<vmem>>, vector<1x16xf32>
    %150 = arith.addf %148, %149 : vector<1x16xf32>
    %cst_55 = arith.constant 0.000000e+00 : f32
    %151 = vector.broadcast %cst_55 : f32 to vector<1x16xf32>
    %152 = arith.maximumf %150, %151 : vector<1x16xf32>
    %c808 = arith.constant 808 : index
    %c0_56 = arith.constant 0 : index
    %153 = vector.load %arg2[%c808, %c0_56] : memref<824x128xf32, #tpu.memory_space<vmem>>, vector<16x16xf32>
    %cst_57 = arith.constant dense<0.000000e+00> : vector<1x16xf32>
    %154 = tpu.matmul %152, %153, %cst_57 {dimension_numbers = #tpu.dot_dimension_numbers<[1], [0], [0], [1], [0, 0, 1, 1], [], []>} : vector<1x16xf32>, vector<16x16xf32>, vector<1x16xf32> -> vector<1x16xf32>
    %cst_58 = arith.constant 0.353553385 : f32
    %155 = vector.broadcast %cst_58 : f32 to vector<1x16xf32>
    %156 = arith.mulf %154, %155 : vector<1x16xf32>
    %c16 = arith.constant 16 : index
    %c0_59 = arith.constant 0 : index
    %157 = vector.load %arg2[%c16, %c0_59] : memref<824x128xf32, #tpu.memory_space<vmem>>, vector<4x32xf32>
    %c24 = arith.constant 24 : index
    %c0_60 = arith.constant 0 : index
    %158 = vector.load %arg2[%c24, %c0_60] : memref<824x128xf32, #tpu.memory_space<vmem>>, vector<4x32xf32>
    %c32 = arith.constant 32 : index
    %c0_61 = arith.constant 0 : index
    %159 = vector.load %arg2[%c32, %c0_61] : memref<824x128xf32, #tpu.memory_space<vmem>>, vector<4x32xf32>
    %cst_62 = arith.constant dense<0.000000e+00> : vector<16x4xf32>
    %160 = tpu.matmul %14, %94, %cst_62 {dimension_numbers = #tpu.dot_dimension_numbers<[1], [0], [0], [1], [0, 0, 1, 1], [], []>} : vector<16x16xf32>, vector<16x4xf32>, vector<16x4xf32> -> vector<16x4xf32>
    %161 = arith.truncf %160 : vector<16x4xf32> to vector<16x4xbf16>
    %162 = arith.truncf %157 : vector<4x32xf32> to vector<4x32xbf16>
    %cst_63 = arith.constant dense<0.000000e+00> : vector<16x32xf32>
    %163 = tpu.matmul %161, %162, %cst_63 {dimension_numbers = #tpu.dot_dimension_numbers<[1], [0], [0], [1], [0, 0, 1, 1], [], []>} : vector<16x4xbf16>, vector<4x32xbf16>, vector<16x32xf32> -> vector<16x32xf32>
    %164 = arith.truncf %94 : vector<16x4xf32> to vector<16x4xbf16>
    %165 = arith.truncf %158 : vector<4x32xf32> to vector<4x32xbf16>
    %cst_64 = arith.constant dense<0.000000e+00> : vector<16x32xf32>
    %166 = tpu.matmul %164, %165, %cst_64 {dimension_numbers = #tpu.dot_dimension_numbers<[1], [0], [0], [1], [0, 0, 1, 1], [], []>} : vector<16x4xbf16>, vector<4x32xbf16>, vector<16x32xf32> -> vector<16x32xf32>
    %167 = arith.addf %163, %166 : vector<16x32xf32>
    %cst_65 = arith.constant dense<0.000000e+00> : vector<16x4xf32>
    %168 = tpu.matmul %29, %94, %cst_65 {dimension_numbers = #tpu.dot_dimension_numbers<[1], [0], [0], [1], [0, 0, 1, 1], [], []>} : vector<16x16xf32>, vector<16x4xf32>, vector<16x4xf32> -> vector<16x4xf32>
    %169 = arith.truncf %168 : vector<16x4xf32> to vector<16x4xbf16>
    %170 = arith.truncf %159 : vector<4x32xf32> to vector<4x32xbf16>
    %cst_66 = arith.constant dense<0.000000e+00> : vector<16x32xf32>
    %171 = tpu.matmul %169, %170, %cst_66 {dimension_numbers = #tpu.dot_dimension_numbers<[1], [0], [0], [1], [0, 0, 1, 1], [], []>} : vector<16x4xbf16>, vector<4x32xbf16>, vector<16x32xf32> -> vector<16x32xf32>
    %172 = arith.addf %167, %171 : vector<16x32xf32>
    %173 = arith.addf %172, %76 : vector<16x32xf32>
    %c64 = arith.constant 64 : index
    %c0_67 = arith.constant 0 : index
    %174 = vector.load %arg2[%c64, %c0_67] : memref<824x128xf32, #tpu.memory_space<vmem>>, vector<32x96xf32>
    %c96 = arith.constant 96 : index
    %c0_68 = arith.constant 0 : index
    %175 = vector.load %arg2[%c96, %c0_68] : memref<824x128xf32, #tpu.memory_space<vmem>>, vector<1x96xf32>
    %176 = arith.truncf %173 : vector<16x32xf32> to vector<16x32xbf16>
    %177 = arith.truncf %174 : vector<32x96xf32> to vector<32x96xbf16>
    %cst_69 = arith.constant dense<0.000000e+00> : vector<16x96xf32>
    %178 = tpu.matmul %176, %177, %cst_69 {dimension_numbers = #tpu.dot_dimension_numbers<[1], [0], [0], [1], [0, 0, 1, 1], [], []>} : vector<16x32xbf16>, vector<32x96xbf16>, vector<16x96xf32> -> vector<16x96xf32>
    %179 = vector.broadcast %175 : vector<1x96xf32> to vector<16x96xf32>
    %180 = arith.addf %178, %179 : vector<16x96xf32>
    %181 = vector.extract_strided_slice %180 {offsets = [0, 0], sizes = [16, 32], strides = [1, 1]} : vector<16x96xf32> to vector<16x32xf32>
    %182 = vector.extract_strided_slice %180 {offsets = [0, 32], sizes = [16, 32], strides = [1, 1]} : vector<16x96xf32> to vector<16x32xf32>
    %183 = vector.extract_strided_slice %180 {offsets = [0, 64], sizes = [16, 32], strides = [1, 1]} : vector<16x96xf32> to vector<16x32xf32>
    %184 = vector.broadcast %126 : vector<1x1xf32> to vector<16x32xf32>
    %185 = arith.mulf %181, %184 : vector<16x32xf32>
    %c104 = arith.constant 104 : index
    %c0_70 = arith.constant 0 : index
    %186 = vector.load %arg2[%c104, %c0_70] : memref<824x128xf32, #tpu.memory_space<vmem>>, vector<32x32xf32>
    %187 = vector.extract_strided_slice %185 {offsets = [0, 0], sizes = [16, 8], strides = [1, 1]} : vector<16x32xf32> to vector<16x8xf32>
    %188 = vector.extract_strided_slice %182 {offsets = [0, 0], sizes = [16, 8], strides = [1, 1]} : vector<16x32xf32> to vector<16x8xf32>
    %189 = vector.extract_strided_slice %183 {offsets = [0, 0], sizes = [16, 8], strides = [1, 1]} : vector<16x32xf32> to vector<16x8xf32>
    %190 = arith.truncf %187 : vector<16x8xf32> to vector<16x8xbf16>
    %191 = arith.truncf %188 : vector<16x8xf32> to vector<16x8xbf16>
    %cst_71 = arith.constant dense<0.000000e+00> : vector<16x16xf32>
    %192 = tpu.matmul %190, %191, %cst_71 {dimension_numbers = #tpu.dot_dimension_numbers<[1], [1], [0], [0], [0, 0, 1, 0], [], []>} : vector<16x8xbf16>, vector<16x8xbf16>, vector<16x16xf32> -> vector<16x16xf32>
    %193 = vector.broadcast %156 : vector<1x16xf32> to vector<16x16xf32>
    %194 = arith.addf %192, %193 : vector<16x16xf32>
    %cst_72 = arith.constant dense<0xFF800000> : vector<16xf32>
    %195 = vector.multi_reduction <maximumf>, %194, %cst_72 [1] : vector<16x16xf32> to vector<16xf32>
    %196 = vector.shape_cast %195 : vector<16xf32> to vector<16x1xf32>
    %197 = vector.broadcast %196 : vector<16x1xf32> to vector<16x16xf32>
    %198 = arith.subf %194, %197 : vector<16x16xf32>
    %199 = math.exp %198 : vector<16x16xf32>
    %cst_73 = arith.constant dense<0.000000e+00> : vector<16xf32>
    %200 = vector.multi_reduction <add>, %199, %cst_73 [1] : vector<16x16xf32> to vector<16xf32>
    %201 = vector.shape_cast %200 : vector<16xf32> to vector<16x1xf32>
    %202 = tpu.reciprocal %201 {approx = true} : vector<16x1xf32> -> vector<16x1xf32>
    %203 = vector.broadcast %202 : vector<16x1xf32> to vector<16x16xf32>
    %204 = arith.mulf %199, %203 : vector<16x16xf32>
    %205 = arith.truncf %204 : vector<16x16xf32> to vector<16x16xbf16>
    %206 = arith.truncf %189 : vector<16x8xf32> to vector<16x8xbf16>
    %cst_74 = arith.constant dense<0.000000e+00> : vector<16x8xf32>
    %207 = tpu.matmul %205, %206, %cst_74 {dimension_numbers = #tpu.dot_dimension_numbers<[1], [0], [0], [1], [0, 0, 1, 1], [], []>} : vector<16x16xbf16>, vector<16x8xbf16>, vector<16x8xf32> -> vector<16x8xf32>
    %208 = vector.extract_strided_slice %186 {offsets = [0, 0], sizes = [8, 32], strides = [1, 1]} : vector<32x32xf32> to vector<8x32xf32>
    %209 = arith.truncf %207 : vector<16x8xf32> to vector<16x8xbf16>
    %210 = arith.truncf %208 : vector<8x32xf32> to vector<8x32xbf16>
    %cst_75 = arith.constant dense<0.000000e+00> : vector<16x32xf32>
    %211 = tpu.matmul %209, %210, %cst_75 {dimension_numbers = #tpu.dot_dimension_numbers<[1], [0], [0], [1], [0, 0, 1, 1], [], []>} : vector<16x8xbf16>, vector<8x32xbf16>, vector<16x32xf32> -> vector<16x32xf32>
    %212 = vector.extract_strided_slice %185 {offsets = [0, 8], sizes = [16, 8], strides = [1, 1]} : vector<16x32xf32> to vector<16x8xf32>
    %213 = vector.extract_strided_slice %182 {offsets = [0, 8], sizes = [16, 8], strides = [1, 1]} : vector<16x32xf32> to vector<16x8xf32>
    %214 = vector.extract_strided_slice %183 {offsets = [0, 8], sizes = [16, 8], strides = [1, 1]} : vector<16x32xf32> to vector<16x8xf32>
    %215 = arith.truncf %212 : vector<16x8xf32> to vector<16x8xbf16>
    %216 = arith.truncf %213 : vector<16x8xf32> to vector<16x8xbf16>
    %cst_76 = arith.constant dense<0.000000e+00> : vector<16x16xf32>
    %217 = tpu.matmul %215, %216, %cst_76 {dimension_numbers = #tpu.dot_dimension_numbers<[1], [1], [0], [0], [0, 0, 1, 0], [], []>} : vector<16x8xbf16>, vector<16x8xbf16>, vector<16x16xf32> -> vector<16x16xf32>
    %218 = vector.broadcast %156 : vector<1x16xf32> to vector<16x16xf32>
    %219 = arith.addf %217, %218 : vector<16x16xf32>
    %cst_77 = arith.constant dense<0xFF800000> : vector<16xf32>
    %220 = vector.multi_reduction <maximumf>, %219, %cst_77 [1] : vector<16x16xf32> to vector<16xf32>
    %221 = vector.shape_cast %220 : vector<16xf32> to vector<16x1xf32>
    %222 = vector.broadcast %221 : vector<16x1xf32> to vector<16x16xf32>
    %223 = arith.subf %219, %222 : vector<16x16xf32>
    %224 = math.exp %223 : vector<16x16xf32>
    %cst_78 = arith.constant dense<0.000000e+00> : vector<16xf32>
    %225 = vector.multi_reduction <add>, %224, %cst_78 [1] : vector<16x16xf32> to vector<16xf32>
    %226 = vector.shape_cast %225 : vector<16xf32> to vector<16x1xf32>
    %227 = tpu.reciprocal %226 {approx = true} : vector<16x1xf32> -> vector<16x1xf32>
    %228 = vector.broadcast %227 : vector<16x1xf32> to vector<16x16xf32>
    %229 = arith.mulf %224, %228 : vector<16x16xf32>
    %230 = arith.truncf %229 : vector<16x16xf32> to vector<16x16xbf16>
    %231 = arith.truncf %214 : vector<16x8xf32> to vector<16x8xbf16>
    %cst_79 = arith.constant dense<0.000000e+00> : vector<16x8xf32>
    %232 = tpu.matmul %230, %231, %cst_79 {dimension_numbers = #tpu.dot_dimension_numbers<[1], [0], [0], [1], [0, 0, 1, 1], [], []>} : vector<16x16xbf16>, vector<16x8xbf16>, vector<16x8xf32> -> vector<16x8xf32>
    %233 = vector.extract_strided_slice %186 {offsets = [8, 0], sizes = [8, 32], strides = [1, 1]} : vector<32x32xf32> to vector<8x32xf32>
    %234 = arith.truncf %232 : vector<16x8xf32> to vector<16x8xbf16>
    %235 = arith.truncf %233 : vector<8x32xf32> to vector<8x32xbf16>
    %cst_80 = arith.constant dense<0.000000e+00> : vector<16x32xf32>
    %236 = tpu.matmul %234, %235, %cst_80 {dimension_numbers = #tpu.dot_dimension_numbers<[1], [0], [0], [1], [0, 0, 1, 1], [], []>} : vector<16x8xbf16>, vector<8x32xbf16>, vector<16x32xf32> -> vector<16x32xf32>
    %237 = arith.addf %211, %236 : vector<16x32xf32>
    %238 = vector.extract_strided_slice %185 {offsets = [0, 16], sizes = [16, 8], strides = [1, 1]} : vector<16x32xf32> to vector<16x8xf32>
    %239 = vector.extract_strided_slice %182 {offsets = [0, 16], sizes = [16, 8], strides = [1, 1]} : vector<16x32xf32> to vector<16x8xf32>
    %240 = vector.extract_strided_slice %183 {offsets = [0, 16], sizes = [16, 8], strides = [1, 1]} : vector<16x32xf32> to vector<16x8xf32>
    %241 = arith.truncf %238 : vector<16x8xf32> to vector<16x8xbf16>
    %242 = arith.truncf %239 : vector<16x8xf32> to vector<16x8xbf16>
    %cst_81 = arith.constant dense<0.000000e+00> : vector<16x16xf32>
    %243 = tpu.matmul %241, %242, %cst_81 {dimension_numbers = #tpu.dot_dimension_numbers<[1], [1], [0], [0], [0, 0, 1, 0], [], []>} : vector<16x8xbf16>, vector<16x8xbf16>, vector<16x16xf32> -> vector<16x16xf32>
    %244 = vector.broadcast %156 : vector<1x16xf32> to vector<16x16xf32>
    %245 = arith.addf %243, %244 : vector<16x16xf32>
    %cst_82 = arith.constant dense<0xFF800000> : vector<16xf32>
    %246 = vector.multi_reduction <maximumf>, %245, %cst_82 [1] : vector<16x16xf32> to vector<16xf32>
    %247 = vector.shape_cast %246 : vector<16xf32> to vector<16x1xf32>
    %248 = vector.broadcast %247 : vector<16x1xf32> to vector<16x16xf32>
    %249 = arith.subf %245, %248 : vector<16x16xf32>
    %250 = math.exp %249 : vector<16x16xf32>
    %cst_83 = arith.constant dense<0.000000e+00> : vector<16xf32>
    %251 = vector.multi_reduction <add>, %250, %cst_83 [1] : vector<16x16xf32> to vector<16xf32>
    %252 = vector.shape_cast %251 : vector<16xf32> to vector<16x1xf32>
    %253 = tpu.reciprocal %252 {approx = true} : vector<16x1xf32> -> vector<16x1xf32>
    %254 = vector.broadcast %253 : vector<16x1xf32> to vector<16x16xf32>
    %255 = arith.mulf %250, %254 : vector<16x16xf32>
    %256 = arith.truncf %255 : vector<16x16xf32> to vector<16x16xbf16>
    %257 = arith.truncf %240 : vector<16x8xf32> to vector<16x8xbf16>
    %cst_84 = arith.constant dense<0.000000e+00> : vector<16x8xf32>
    %258 = tpu.matmul %256, %257, %cst_84 {dimension_numbers = #tpu.dot_dimension_numbers<[1], [0], [0], [1], [0, 0, 1, 1], [], []>} : vector<16x16xbf16>, vector<16x8xbf16>, vector<16x8xf32> -> vector<16x8xf32>
    %259 = vector.extract_strided_slice %186 {offsets = [16, 0], sizes = [8, 32], strides = [1, 1]} : vector<32x32xf32> to vector<8x32xf32>
    %260 = arith.truncf %258 : vector<16x8xf32> to vector<16x8xbf16>
    %261 = arith.truncf %259 : vector<8x32xf32> to vector<8x32xbf16>
    %cst_85 = arith.constant dense<0.000000e+00> : vector<16x32xf32>
    %262 = tpu.matmul %260, %261, %cst_85 {dimension_numbers = #tpu.dot_dimension_numbers<[1], [0], [0], [1], [0, 0, 1, 1], [], []>} : vector<16x8xbf16>, vector<8x32xbf16>, vector<16x32xf32> -> vector<16x32xf32>
    %263 = arith.addf %237, %262 : vector<16x32xf32>
    %264 = vector.extract_strided_slice %185 {offsets = [0, 24], sizes = [16, 8], strides = [1, 1]} : vector<16x32xf32> to vector<16x8xf32>
    %265 = vector.extract_strided_slice %182 {offsets = [0, 24], sizes = [16, 8], strides = [1, 1]} : vector<16x32xf32> to vector<16x8xf32>
    %266 = vector.extract_strided_slice %183 {offsets = [0, 24], sizes = [16, 8], strides = [1, 1]} : vector<16x32xf32> to vector<16x8xf32>
    %267 = arith.truncf %264 : vector<16x8xf32> to vector<16x8xbf16>
    %268 = arith.truncf %265 : vector<16x8xf32> to vector<16x8xbf16>
    %cst_86 = arith.constant dense<0.000000e+00> : vector<16x16xf32>
    %269 = tpu.matmul %267, %268, %cst_86 {dimension_numbers = #tpu.dot_dimension_numbers<[1], [1], [0], [0], [0, 0, 1, 0], [], []>} : vector<16x8xbf16>, vector<16x8xbf16>, vector<16x16xf32> -> vector<16x16xf32>
    %270 = vector.broadcast %156 : vector<1x16xf32> to vector<16x16xf32>
    %271 = arith.addf %269, %270 : vector<16x16xf32>
    %cst_87 = arith.constant dense<0xFF800000> : vector<16xf32>
    %272 = vector.multi_reduction <maximumf>, %271, %cst_87 [1] : vector<16x16xf32> to vector<16xf32>
    %273 = vector.shape_cast %272 : vector<16xf32> to vector<16x1xf32>
    %274 = vector.broadcast %273 : vector<16x1xf32> to vector<16x16xf32>
    %275 = arith.subf %271, %274 : vector<16x16xf32>
    %276 = math.exp %275 : vector<16x16xf32>
    %cst_88 = arith.constant dense<0.000000e+00> : vector<16xf32>
    %277 = vector.multi_reduction <add>, %276, %cst_88 [1] : vector<16x16xf32> to vector<16xf32>
    %278 = vector.shape_cast %277 : vector<16xf32> to vector<16x1xf32>
    %279 = tpu.reciprocal %278 {approx = true} : vector<16x1xf32> -> vector<16x1xf32>
    %280 = vector.broadcast %279 : vector<16x1xf32> to vector<16x16xf32>
    %281 = arith.mulf %276, %280 : vector<16x16xf32>
    %282 = arith.truncf %281 : vector<16x16xf32> to vector<16x16xbf16>
    %283 = arith.truncf %266 : vector<16x8xf32> to vector<16x8xbf16>
    %cst_89 = arith.constant dense<0.000000e+00> : vector<16x8xf32>
    %284 = tpu.matmul %282, %283, %cst_89 {dimension_numbers = #tpu.dot_dimension_numbers<[1], [0], [0], [1], [0, 0, 1, 1], [], []>} : vector<16x16xbf16>, vector<16x8xbf16>, vector<16x8xf32> -> vector<16x8xf32>
    %285 = vector.extract_strided_slice %186 {offsets = [24, 0], sizes = [8, 32], strides = [1, 1]} : vector<32x32xf32> to vector<8x32xf32>
    %286 = arith.truncf %284 : vector<16x8xf32> to vector<16x8xbf16>
    %287 = arith.truncf %285 : vector<8x32xf32> to vector<8x32xbf16>
    %cst_90 = arith.constant dense<0.000000e+00> : vector<16x32xf32>
    %288 = tpu.matmul %286, %287, %cst_90 {dimension_numbers = #tpu.dot_dimension_numbers<[1], [0], [0], [1], [0, 0, 1, 1], [], []>} : vector<16x8xbf16>, vector<8x32xbf16>, vector<16x32xf32> -> vector<16x32xf32>
    %289 = arith.addf %263, %288 : vector<16x32xf32>
    %c136 = arith.constant 136 : index
    %c0_91 = arith.constant 0 : index
    %290 = vector.load %arg2[%c136, %c0_91] : memref<824x128xf32, #tpu.memory_space<vmem>>, vector<1x32xf32>
    %291 = vector.broadcast %290 : vector<1x32xf32> to vector<16x32xf32>
    %292 = arith.addf %289, %291 : vector<16x32xf32>
    %293 = arith.addf %173, %292 : vector<16x32xf32>
    %c256 = arith.constant 256 : index
    %c0_92 = arith.constant 0 : index
    %294 = vector.load %arg2[%c256, %c0_92] : memref<824x128xf32, #tpu.memory_space<vmem>>, vector<1x32xf32>
    %c264 = arith.constant 264 : index
    %c0_93 = arith.constant 0 : index
    %295 = vector.load %arg2[%c264, %c0_93] : memref<824x128xf32, #tpu.memory_space<vmem>>, vector<1x32xf32>
    %cst_94 = arith.constant dense<0.000000e+00> : vector<16xf32>
    %296 = vector.multi_reduction <add>, %293, %cst_94 [1] : vector<16x32xf32> to vector<16xf32>
    %297 = vector.shape_cast %296 : vector<16xf32> to vector<16x1xf32>
    %cst_95 = arith.constant 3.200000e+01 : f32
    %298 = vector.broadcast %cst_95 : f32 to vector<16x1xf32>
    %299 = arith.divf %297, %298 : vector<16x1xf32>
    %300 = vector.broadcast %299 : vector<16x1xf32> to vector<16x32xf32>
    %301 = arith.subf %293, %300 : vector<16x32xf32>
    %302 = arith.mulf %301, %301 : vector<16x32xf32>
    %cst_96 = arith.constant dense<0.000000e+00> : vector<16xf32>
    %303 = vector.multi_reduction <add>, %302, %cst_96 [1] : vector<16x32xf32> to vector<16xf32>
    %304 = vector.shape_cast %303 : vector<16xf32> to vector<16x1xf32>
    %cst_97 = arith.constant 3.200000e+01 : f32
    %305 = vector.broadcast %cst_97 : f32 to vector<16x1xf32>
    %306 = arith.divf %304, %305 : vector<16x1xf32>
    %cst_98 = arith.constant 9.99999974E-6 : f32
    %307 = vector.broadcast %cst_98 : f32 to vector<16x1xf32>
    %308 = arith.addf %306, %307 : vector<16x1xf32>
    %309 = math.rsqrt %308 : vector<16x1xf32>
    %310 = vector.broadcast %309 : vector<16x1xf32> to vector<16x32xf32>
    %311 = arith.mulf %301, %310 : vector<16x32xf32>
    %312 = vector.broadcast %294 : vector<1x32xf32> to vector<16x32xf32>
    %313 = arith.mulf %311, %312 : vector<16x32xf32>
    %314 = vector.broadcast %295 : vector<1x32xf32> to vector<16x32xf32>
    %315 = arith.addf %313, %314 : vector<16x32xf32>
    %c144 = arith.constant 144 : index
    %c0_99 = arith.constant 0 : index
    %316 = vector.load %arg2[%c144, %c0_99] : memref<824x128xf32, #tpu.memory_space<vmem>>, vector<32x64xf32>
    %317 = arith.truncf %315 : vector<16x32xf32> to vector<16x32xbf16>
    %318 = arith.truncf %316 : vector<32x64xf32> to vector<32x64xbf16>
    %cst_100 = arith.constant dense<0.000000e+00> : vector<16x64xf32>
    %319 = tpu.matmul %317, %318, %cst_100 {dimension_numbers = #tpu.dot_dimension_numbers<[1], [0], [0], [1], [0, 0, 1, 1], [], []>} : vector<16x32xbf16>, vector<32x64xbf16>, vector<16x64xf32> -> vector<16x64xf32>
    %c176 = arith.constant 176 : index
    %c0_101 = arith.constant 0 : index
    %320 = vector.load %arg2[%c176, %c0_101] : memref<824x128xf32, #tpu.memory_space<vmem>>, vector<1x64xf32>
    %321 = vector.broadcast %320 : vector<1x64xf32> to vector<16x64xf32>
    %322 = arith.addf %319, %321 : vector<16x64xf32>
    %cst_102 = arith.constant 0.000000e+00 : f32
    %323 = vector.broadcast %cst_102 : f32 to vector<16x64xf32>
    %324 = arith.maximumf %322, %323 : vector<16x64xf32>
    %c184 = arith.constant 184 : index
    %c0_103 = arith.constant 0 : index
    %325 = vector.load %arg2[%c184, %c0_103] : memref<824x128xf32, #tpu.memory_space<vmem>>, vector<64x32xf32>
    %326 = arith.truncf %324 : vector<16x64xf32> to vector<16x64xbf16>
    %327 = arith.truncf %325 : vector<64x32xf32> to vector<64x32xbf16>
    %cst_104 = arith.constant dense<0.000000e+00> : vector<16x32xf32>
    %328 = tpu.matmul %326, %327, %cst_104 {dimension_numbers = #tpu.dot_dimension_numbers<[1], [0], [0], [1], [0, 0, 1, 1], [], []>} : vector<16x64xbf16>, vector<64x32xbf16>, vector<16x32xf32> -> vector<16x32xf32>
    %c248 = arith.constant 248 : index
    %c0_105 = arith.constant 0 : index
    %329 = vector.load %arg2[%c248, %c0_105] : memref<824x128xf32, #tpu.memory_space<vmem>>, vector<1x32xf32>
    %330 = vector.broadcast %329 : vector<1x32xf32> to vector<16x32xf32>
    %331 = arith.addf %328, %330 : vector<16x32xf32>
    %332 = arith.addf %315, %331 : vector<16x32xf32>
    %c272 = arith.constant 272 : index
    %c0_106 = arith.constant 0 : index
    %333 = vector.load %arg2[%c272, %c0_106] : memref<824x128xf32, #tpu.memory_space<vmem>>, vector<1x32xf32>
    %c280 = arith.constant 280 : index
    %c0_107 = arith.constant 0 : index
    %334 = vector.load %arg2[%c280, %c0_107] : memref<824x128xf32, #tpu.memory_space<vmem>>, vector<1x32xf32>
    %cst_108 = arith.constant dense<0.000000e+00> : vector<16xf32>
    %335 = vector.multi_reduction <add>, %332, %cst_108 [1] : vector<16x32xf32> to vector<16xf32>
    %336 = vector.shape_cast %335 : vector<16xf32> to vector<16x1xf32>
    %cst_109 = arith.constant 3.200000e+01 : f32
    %337 = vector.broadcast %cst_109 : f32 to vector<16x1xf32>
    %338 = arith.divf %336, %337 : vector<16x1xf32>
    %339 = vector.broadcast %338 : vector<16x1xf32> to vector<16x32xf32>
    %340 = arith.subf %332, %339 : vector<16x32xf32>
    %341 = arith.mulf %340, %340 : vector<16x32xf32>
    %cst_110 = arith.constant dense<0.000000e+00> : vector<16xf32>
    %342 = vector.multi_reduction <add>, %341, %cst_110 [1] : vector<16x32xf32> to vector<16xf32>
    %343 = vector.shape_cast %342 : vector<16xf32> to vector<16x1xf32>
    %cst_111 = arith.constant 3.200000e+01 : f32
    %344 = vector.broadcast %cst_111 : f32 to vector<16x1xf32>
    %345 = arith.divf %343, %344 : vector<16x1xf32>
    %cst_112 = arith.constant 9.99999974E-6 : f32
    %346 = vector.broadcast %cst_112 : f32 to vector<16x1xf32>
    %347 = arith.addf %345, %346 : vector<16x1xf32>
    %348 = math.rsqrt %347 : vector<16x1xf32>
    %349 = vector.broadcast %348 : vector<16x1xf32> to vector<16x32xf32>
    %350 = arith.mulf %340, %349 : vector<16x32xf32>
    %351 = vector.broadcast %333 : vector<1x32xf32> to vector<16x32xf32>
    %352 = arith.mulf %350, %351 : vector<16x32xf32>
    %353 = vector.broadcast %334 : vector<1x32xf32> to vector<16x32xf32>
    %354 = arith.addf %352, %353 : vector<16x32xf32>
    %c288 = arith.constant 288 : index
    %c0_113 = arith.constant 0 : index
    %355 = vector.load %arg2[%c288, %c0_113] : memref<824x128xf32, #tpu.memory_space<vmem>>, vector<1x32xf32>
    %c296 = arith.constant 296 : index
    %c0_114 = arith.constant 0 : index
    %356 = vector.load %arg2[%c296, %c0_114] : memref<824x128xf32, #tpu.memory_space<vmem>>, vector<1x32xf32>
    %cst_115 = arith.constant dense<0.000000e+00> : vector<16xf32>
    %357 = vector.multi_reduction <add>, %354, %cst_115 [1] : vector<16x32xf32> to vector<16xf32>
    %358 = vector.shape_cast %357 : vector<16xf32> to vector<16x1xf32>
    %cst_116 = arith.constant 3.200000e+01 : f32
    %359 = vector.broadcast %cst_116 : f32 to vector<16x1xf32>
    %360 = arith.divf %358, %359 : vector<16x1xf32>
    %361 = vector.broadcast %360 : vector<16x1xf32> to vector<16x32xf32>
    %362 = arith.subf %354, %361 : vector<16x32xf32>
    %363 = arith.mulf %362, %362 : vector<16x32xf32>
    %cst_117 = arith.constant dense<0.000000e+00> : vector<16xf32>
    %364 = vector.multi_reduction <add>, %363, %cst_117 [1] : vector<16x32xf32> to vector<16xf32>
    %365 = vector.shape_cast %364 : vector<16xf32> to vector<16x1xf32>
    %cst_118 = arith.constant 3.200000e+01 : f32
    %366 = vector.broadcast %cst_118 : f32 to vector<16x1xf32>
    %367 = arith.divf %365, %366 : vector<16x1xf32>
    %cst_119 = arith.constant 9.99999974E-6 : f32
    %368 = vector.broadcast %cst_119 : f32 to vector<16x1xf32>
    %369 = arith.addf %367, %368 : vector<16x1xf32>
    %370 = math.rsqrt %369 : vector<16x1xf32>
    %371 = vector.broadcast %370 : vector<16x1xf32> to vector<16x32xf32>
    %372 = arith.mulf %362, %371 : vector<16x32xf32>
    %373 = vector.broadcast %355 : vector<1x32xf32> to vector<16x32xf32>
    %374 = arith.mulf %372, %373 : vector<16x32xf32>
    %375 = vector.broadcast %356 : vector<1x32xf32> to vector<16x32xf32>
    %376 = arith.addf %374, %375 : vector<16x32xf32>
    %c40 = arith.constant 40 : index
    %c0_120 = arith.constant 0 : index
    %377 = vector.load %arg2[%c40, %c0_120] : memref<824x128xf32, #tpu.memory_space<vmem>>, vector<4x32xf32>
    %c48 = arith.constant 48 : index
    %c0_121 = arith.constant 0 : index
    %378 = vector.load %arg2[%c48, %c0_121] : memref<824x128xf32, #tpu.memory_space<vmem>>, vector<4x32xf32>
    %c56 = arith.constant 56 : index
    %c0_122 = arith.constant 0 : index
    %379 = vector.load %arg2[%c56, %c0_122] : memref<824x128xf32, #tpu.memory_space<vmem>>, vector<4x32xf32>
    %cst_123 = arith.constant dense<0.000000e+00> : vector<16x4xf32>
    %380 = tpu.matmul %14, %95, %cst_123 {dimension_numbers = #tpu.dot_dimension_numbers<[1], [0], [0], [1], [0, 0, 1, 1], [], []>} : vector<16x16xf32>, vector<16x4xf32>, vector<16x4xf32> -> vector<16x4xf32>
    %381 = arith.truncf %380 : vector<16x4xf32> to vector<16x4xbf16>
    %382 = arith.truncf %377 : vector<4x32xf32> to vector<4x32xbf16>
    %cst_124 = arith.constant dense<0.000000e+00> : vector<16x32xf32>
    %383 = tpu.matmul %381, %382, %cst_124 {dimension_numbers = #tpu.dot_dimension_numbers<[1], [0], [0], [1], [0, 0, 1, 1], [], []>} : vector<16x4xbf16>, vector<4x32xbf16>, vector<16x32xf32> -> vector<16x32xf32>
    %384 = arith.truncf %95 : vector<16x4xf32> to vector<16x4xbf16>
    %385 = arith.truncf %378 : vector<4x32xf32> to vector<4x32xbf16>
    %cst_125 = arith.constant dense<0.000000e+00> : vector<16x32xf32>
    %386 = tpu.matmul %384, %385, %cst_125 {dimension_numbers = #tpu.dot_dimension_numbers<[1], [0], [0], [1], [0, 0, 1, 1], [], []>} : vector<16x4xbf16>, vector<4x32xbf16>, vector<16x32xf32> -> vector<16x32xf32>
    %387 = arith.addf %383, %386 : vector<16x32xf32>
    %cst_126 = arith.constant dense<0.000000e+00> : vector<16x4xf32>
    %388 = tpu.matmul %29, %95, %cst_126 {dimension_numbers = #tpu.dot_dimension_numbers<[1], [0], [0], [1], [0, 0, 1, 1], [], []>} : vector<16x16xf32>, vector<16x4xf32>, vector<16x4xf32> -> vector<16x4xf32>
    %389 = arith.truncf %388 : vector<16x4xf32> to vector<16x4xbf16>
    %390 = arith.truncf %379 : vector<4x32xf32> to vector<4x32xbf16>
    %cst_127 = arith.constant dense<0.000000e+00> : vector<16x32xf32>
    %391 = tpu.matmul %389, %390, %cst_127 {dimension_numbers = #tpu.dot_dimension_numbers<[1], [0], [0], [1], [0, 0, 1, 1], [], []>} : vector<16x4xbf16>, vector<4x32xbf16>, vector<16x32xf32> -> vector<16x32xf32>
    %392 = arith.addf %387, %391 : vector<16x32xf32>
    %393 = arith.addf %392, %76 : vector<16x32xf32>
    %c304 = arith.constant 304 : index
    %c0_128 = arith.constant 0 : index
    %394 = vector.load %arg2[%c304, %c0_128] : memref<824x128xf32, #tpu.memory_space<vmem>>, vector<32x96xf32>
    %c336 = arith.constant 336 : index
    %c0_129 = arith.constant 0 : index
    %395 = vector.load %arg2[%c336, %c0_129] : memref<824x128xf32, #tpu.memory_space<vmem>>, vector<1x96xf32>
    %396 = arith.truncf %393 : vector<16x32xf32> to vector<16x32xbf16>
    %397 = arith.truncf %394 : vector<32x96xf32> to vector<32x96xbf16>
    %cst_130 = arith.constant dense<0.000000e+00> : vector<16x96xf32>
    %398 = tpu.matmul %396, %397, %cst_130 {dimension_numbers = #tpu.dot_dimension_numbers<[1], [0], [0], [1], [0, 0, 1, 1], [], []>} : vector<16x32xbf16>, vector<32x96xbf16>, vector<16x96xf32> -> vector<16x96xf32>
    %399 = vector.broadcast %395 : vector<1x96xf32> to vector<16x96xf32>
    %400 = arith.addf %398, %399 : vector<16x96xf32>
    %401 = vector.extract_strided_slice %400 {offsets = [0, 0], sizes = [16, 32], strides = [1, 1]} : vector<16x96xf32> to vector<16x32xf32>
    %402 = vector.extract_strided_slice %400 {offsets = [0, 32], sizes = [16, 32], strides = [1, 1]} : vector<16x96xf32> to vector<16x32xf32>
    %403 = vector.extract_strided_slice %400 {offsets = [0, 64], sizes = [16, 32], strides = [1, 1]} : vector<16x96xf32> to vector<16x32xf32>
    %404 = vector.broadcast %126 : vector<1x1xf32> to vector<16x32xf32>
    %405 = arith.mulf %401, %404 : vector<16x32xf32>
    %c344 = arith.constant 344 : index
    %c0_131 = arith.constant 0 : index
    %406 = vector.load %arg2[%c344, %c0_131] : memref<824x128xf32, #tpu.memory_space<vmem>>, vector<32x32xf32>
    %407 = vector.extract_strided_slice %405 {offsets = [0, 0], sizes = [16, 8], strides = [1, 1]} : vector<16x32xf32> to vector<16x8xf32>
    %408 = vector.extract_strided_slice %402 {offsets = [0, 0], sizes = [16, 8], strides = [1, 1]} : vector<16x32xf32> to vector<16x8xf32>
    %409 = vector.extract_strided_slice %403 {offsets = [0, 0], sizes = [16, 8], strides = [1, 1]} : vector<16x32xf32> to vector<16x8xf32>
    %410 = arith.truncf %407 : vector<16x8xf32> to vector<16x8xbf16>
    %411 = arith.truncf %408 : vector<16x8xf32> to vector<16x8xbf16>
    %cst_132 = arith.constant dense<0.000000e+00> : vector<16x16xf32>
    %412 = tpu.matmul %410, %411, %cst_132 {dimension_numbers = #tpu.dot_dimension_numbers<[1], [1], [0], [0], [0, 0, 1, 0], [], []>} : vector<16x8xbf16>, vector<16x8xbf16>, vector<16x16xf32> -> vector<16x16xf32>
    %413 = arith.addf %412, %75 : vector<16x16xf32>
    %cst_133 = arith.constant dense<0xFF800000> : vector<16xf32>
    %414 = vector.multi_reduction <maximumf>, %413, %cst_133 [1] : vector<16x16xf32> to vector<16xf32>
    %415 = vector.shape_cast %414 : vector<16xf32> to vector<16x1xf32>
    %416 = vector.broadcast %415 : vector<16x1xf32> to vector<16x16xf32>
    %417 = arith.subf %413, %416 : vector<16x16xf32>
    %418 = math.exp %417 : vector<16x16xf32>
    %cst_134 = arith.constant dense<0.000000e+00> : vector<16xf32>
    %419 = vector.multi_reduction <add>, %418, %cst_134 [1] : vector<16x16xf32> to vector<16xf32>
    %420 = vector.shape_cast %419 : vector<16xf32> to vector<16x1xf32>
    %421 = tpu.reciprocal %420 {approx = true} : vector<16x1xf32> -> vector<16x1xf32>
    %422 = vector.broadcast %421 : vector<16x1xf32> to vector<16x16xf32>
    %423 = arith.mulf %418, %422 : vector<16x16xf32>
    %424 = arith.truncf %423 : vector<16x16xf32> to vector<16x16xbf16>
    %425 = arith.truncf %409 : vector<16x8xf32> to vector<16x8xbf16>
    %cst_135 = arith.constant dense<0.000000e+00> : vector<16x8xf32>
    %426 = tpu.matmul %424, %425, %cst_135 {dimension_numbers = #tpu.dot_dimension_numbers<[1], [0], [0], [1], [0, 0, 1, 1], [], []>} : vector<16x16xbf16>, vector<16x8xbf16>, vector<16x8xf32> -> vector<16x8xf32>
    %427 = vector.extract_strided_slice %406 {offsets = [0, 0], sizes = [8, 32], strides = [1, 1]} : vector<32x32xf32> to vector<8x32xf32>
    %428 = arith.truncf %426 : vector<16x8xf32> to vector<16x8xbf16>
    %429 = arith.truncf %427 : vector<8x32xf32> to vector<8x32xbf16>
    %cst_136 = arith.constant dense<0.000000e+00> : vector<16x32xf32>
    %430 = tpu.matmul %428, %429, %cst_136 {dimension_numbers = #tpu.dot_dimension_numbers<[1], [0], [0], [1], [0, 0, 1, 1], [], []>} : vector<16x8xbf16>, vector<8x32xbf16>, vector<16x32xf32> -> vector<16x32xf32>
    %431 = vector.extract_strided_slice %405 {offsets = [0, 8], sizes = [16, 8], strides = [1, 1]} : vector<16x32xf32> to vector<16x8xf32>
    %432 = vector.extract_strided_slice %402 {offsets = [0, 8], sizes = [16, 8], strides = [1, 1]} : vector<16x32xf32> to vector<16x8xf32>
    %433 = vector.extract_strided_slice %403 {offsets = [0, 8], sizes = [16, 8], strides = [1, 1]} : vector<16x32xf32> to vector<16x8xf32>
    %434 = arith.truncf %431 : vector<16x8xf32> to vector<16x8xbf16>
    %435 = arith.truncf %432 : vector<16x8xf32> to vector<16x8xbf16>
    %cst_137 = arith.constant dense<0.000000e+00> : vector<16x16xf32>
    %436 = tpu.matmul %434, %435, %cst_137 {dimension_numbers = #tpu.dot_dimension_numbers<[1], [1], [0], [0], [0, 0, 1, 0], [], []>} : vector<16x8xbf16>, vector<16x8xbf16>, vector<16x16xf32> -> vector<16x16xf32>
    %437 = arith.addf %436, %75 : vector<16x16xf32>
    %cst_138 = arith.constant dense<0xFF800000> : vector<16xf32>
    %438 = vector.multi_reduction <maximumf>, %437, %cst_138 [1] : vector<16x16xf32> to vector<16xf32>
    %439 = vector.shape_cast %438 : vector<16xf32> to vector<16x1xf32>
    %440 = vector.broadcast %439 : vector<16x1xf32> to vector<16x16xf32>
    %441 = arith.subf %437, %440 : vector<16x16xf32>
    %442 = math.exp %441 : vector<16x16xf32>
    %cst_139 = arith.constant dense<0.000000e+00> : vector<16xf32>
    %443 = vector.multi_reduction <add>, %442, %cst_139 [1] : vector<16x16xf32> to vector<16xf32>
    %444 = vector.shape_cast %443 : vector<16xf32> to vector<16x1xf32>
    %445 = tpu.reciprocal %444 {approx = true} : vector<16x1xf32> -> vector<16x1xf32>
    %446 = vector.broadcast %445 : vector<16x1xf32> to vector<16x16xf32>
    %447 = arith.mulf %442, %446 : vector<16x16xf32>
    %448 = arith.truncf %447 : vector<16x16xf32> to vector<16x16xbf16>
    %449 = arith.truncf %433 : vector<16x8xf32> to vector<16x8xbf16>
    %cst_140 = arith.constant dense<0.000000e+00> : vector<16x8xf32>
    %450 = tpu.matmul %448, %449, %cst_140 {dimension_numbers = #tpu.dot_dimension_numbers<[1], [0], [0], [1], [0, 0, 1, 1], [], []>} : vector<16x16xbf16>, vector<16x8xbf16>, vector<16x8xf32> -> vector<16x8xf32>
    %451 = vector.extract_strided_slice %406 {offsets = [8, 0], sizes = [8, 32], strides = [1, 1]} : vector<32x32xf32> to vector<8x32xf32>
    %452 = arith.truncf %450 : vector<16x8xf32> to vector<16x8xbf16>
    %453 = arith.truncf %451 : vector<8x32xf32> to vector<8x32xbf16>
    %cst_141 = arith.constant dense<0.000000e+00> : vector<16x32xf32>
    %454 = tpu.matmul %452, %453, %cst_141 {dimension_numbers = #tpu.dot_dimension_numbers<[1], [0], [0], [1], [0, 0, 1, 1], [], []>} : vector<16x8xbf16>, vector<8x32xbf16>, vector<16x32xf32> -> vector<16x32xf32>
    %455 = arith.addf %430, %454 : vector<16x32xf32>
    %456 = vector.extract_strided_slice %405 {offsets = [0, 16], sizes = [16, 8], strides = [1, 1]} : vector<16x32xf32> to vector<16x8xf32>
    %457 = vector.extract_strided_slice %402 {offsets = [0, 16], sizes = [16, 8], strides = [1, 1]} : vector<16x32xf32> to vector<16x8xf32>
    %458 = vector.extract_strided_slice %403 {offsets = [0, 16], sizes = [16, 8], strides = [1, 1]} : vector<16x32xf32> to vector<16x8xf32>
    %459 = arith.truncf %456 : vector<16x8xf32> to vector<16x8xbf16>
    %460 = arith.truncf %457 : vector<16x8xf32> to vector<16x8xbf16>
    %cst_142 = arith.constant dense<0.000000e+00> : vector<16x16xf32>
    %461 = tpu.matmul %459, %460, %cst_142 {dimension_numbers = #tpu.dot_dimension_numbers<[1], [1], [0], [0], [0, 0, 1, 0], [], []>} : vector<16x8xbf16>, vector<16x8xbf16>, vector<16x16xf32> -> vector<16x16xf32>
    %462 = arith.addf %461, %75 : vector<16x16xf32>
    %cst_143 = arith.constant dense<0xFF800000> : vector<16xf32>
    %463 = vector.multi_reduction <maximumf>, %462, %cst_143 [1] : vector<16x16xf32> to vector<16xf32>
    %464 = vector.shape_cast %463 : vector<16xf32> to vector<16x1xf32>
    %465 = vector.broadcast %464 : vector<16x1xf32> to vector<16x16xf32>
    %466 = arith.subf %462, %465 : vector<16x16xf32>
    %467 = math.exp %466 : vector<16x16xf32>
    %cst_144 = arith.constant dense<0.000000e+00> : vector<16xf32>
    %468 = vector.multi_reduction <add>, %467, %cst_144 [1] : vector<16x16xf32> to vector<16xf32>
    %469 = vector.shape_cast %468 : vector<16xf32> to vector<16x1xf32>
    %470 = tpu.reciprocal %469 {approx = true} : vector<16x1xf32> -> vector<16x1xf32>
    %471 = vector.broadcast %470 : vector<16x1xf32> to vector<16x16xf32>
    %472 = arith.mulf %467, %471 : vector<16x16xf32>
    %473 = arith.truncf %472 : vector<16x16xf32> to vector<16x16xbf16>
    %474 = arith.truncf %458 : vector<16x8xf32> to vector<16x8xbf16>
    %cst_145 = arith.constant dense<0.000000e+00> : vector<16x8xf32>
    %475 = tpu.matmul %473, %474, %cst_145 {dimension_numbers = #tpu.dot_dimension_numbers<[1], [0], [0], [1], [0, 0, 1, 1], [], []>} : vector<16x16xbf16>, vector<16x8xbf16>, vector<16x8xf32> -> vector<16x8xf32>
    %476 = vector.extract_strided_slice %406 {offsets = [16, 0], sizes = [8, 32], strides = [1, 1]} : vector<32x32xf32> to vector<8x32xf32>
    %477 = arith.truncf %475 : vector<16x8xf32> to vector<16x8xbf16>
    %478 = arith.truncf %476 : vector<8x32xf32> to vector<8x32xbf16>
    %cst_146 = arith.constant dense<0.000000e+00> : vector<16x32xf32>
    %479 = tpu.matmul %477, %478, %cst_146 {dimension_numbers = #tpu.dot_dimension_numbers<[1], [0], [0], [1], [0, 0, 1, 1], [], []>} : vector<16x8xbf16>, vector<8x32xbf16>, vector<16x32xf32> -> vector<16x32xf32>
    %480 = arith.addf %455, %479 : vector<16x32xf32>
    %481 = vector.extract_strided_slice %405 {offsets = [0, 24], sizes = [16, 8], strides = [1, 1]} : vector<16x32xf32> to vector<16x8xf32>
    %482 = vector.extract_strided_slice %402 {offsets = [0, 24], sizes = [16, 8], strides = [1, 1]} : vector<16x32xf32> to vector<16x8xf32>
    %483 = vector.extract_strided_slice %403 {offsets = [0, 24], sizes = [16, 8], strides = [1, 1]} : vector<16x32xf32> to vector<16x8xf32>
    %484 = arith.truncf %481 : vector<16x8xf32> to vector<16x8xbf16>
    %485 = arith.truncf %482 : vector<16x8xf32> to vector<16x8xbf16>
    %cst_147 = arith.constant dense<0.000000e+00> : vector<16x16xf32>
    %486 = tpu.matmul %484, %485, %cst_147 {dimension_numbers = #tpu.dot_dimension_numbers<[1], [1], [0], [0], [0, 0, 1, 0], [], []>} : vector<16x8xbf16>, vector<16x8xbf16>, vector<16x16xf32> -> vector<16x16xf32>
    %487 = arith.addf %486, %75 : vector<16x16xf32>
    %cst_148 = arith.constant dense<0xFF800000> : vector<16xf32>
    %488 = vector.multi_reduction <maximumf>, %487, %cst_148 [1] : vector<16x16xf32> to vector<16xf32>
    %489 = vector.shape_cast %488 : vector<16xf32> to vector<16x1xf32>
    %490 = vector.broadcast %489 : vector<16x1xf32> to vector<16x16xf32>
    %491 = arith.subf %487, %490 : vector<16x16xf32>
    %492 = math.exp %491 : vector<16x16xf32>
    %cst_149 = arith.constant dense<0.000000e+00> : vector<16xf32>
    %493 = vector.multi_reduction <add>, %492, %cst_149 [1] : vector<16x16xf32> to vector<16xf32>
    %494 = vector.shape_cast %493 : vector<16xf32> to vector<16x1xf32>
    %495 = tpu.reciprocal %494 {approx = true} : vector<16x1xf32> -> vector<16x1xf32>
    %496 = vector.broadcast %495 : vector<16x1xf32> to vector<16x16xf32>
    %497 = arith.mulf %492, %496 : vector<16x16xf32>
    %498 = arith.truncf %497 : vector<16x16xf32> to vector<16x16xbf16>
    %499 = arith.truncf %483 : vector<16x8xf32> to vector<16x8xbf16>
    %cst_150 = arith.constant dense<0.000000e+00> : vector<16x8xf32>
    %500 = tpu.matmul %498, %499, %cst_150 {dimension_numbers = #tpu.dot_dimension_numbers<[1], [0], [0], [1], [0, 0, 1, 1], [], []>} : vector<16x16xbf16>, vector<16x8xbf16>, vector<16x8xf32> -> vector<16x8xf32>
    %501 = vector.extract_strided_slice %406 {offsets = [24, 0], sizes = [8, 32], strides = [1, 1]} : vector<32x32xf32> to vector<8x32xf32>
    %502 = arith.truncf %500 : vector<16x8xf32> to vector<16x8xbf16>
    %503 = arith.truncf %501 : vector<8x32xf32> to vector<8x32xbf16>
    %cst_151 = arith.constant dense<0.000000e+00> : vector<16x32xf32>
    %504 = tpu.matmul %502, %503, %cst_151 {dimension_numbers = #tpu.dot_dimension_numbers<[1], [0], [0], [1], [0, 0, 1, 1], [], []>} : vector<16x8xbf16>, vector<8x32xbf16>, vector<16x32xf32> -> vector<16x32xf32>
    %505 = arith.addf %480, %504 : vector<16x32xf32>
    %c376 = arith.constant 376 : index
    %c0_152 = arith.constant 0 : index
    %506 = vector.load %arg2[%c376, %c0_152] : memref<824x128xf32, #tpu.memory_space<vmem>>, vector<1x32xf32>
    %507 = vector.broadcast %506 : vector<1x32xf32> to vector<16x32xf32>
    %508 = arith.addf %505, %507 : vector<16x32xf32>
    %509 = arith.addf %393, %508 : vector<16x32xf32>
    %c576 = arith.constant 576 : index
    %c0_153 = arith.constant 0 : index
    %510 = vector.load %arg2[%c576, %c0_153] : memref<824x128xf32, #tpu.memory_space<vmem>>, vector<1x32xf32>
    %c584 = arith.constant 584 : index
    %c0_154 = arith.constant 0 : index
    %511 = vector.load %arg2[%c584, %c0_154] : memref<824x128xf32, #tpu.memory_space<vmem>>, vector<1x32xf32>
    %cst_155 = arith.constant dense<0.000000e+00> : vector<16xf32>
    %512 = vector.multi_reduction <add>, %509, %cst_155 [1] : vector<16x32xf32> to vector<16xf32>
    %513 = vector.shape_cast %512 : vector<16xf32> to vector<16x1xf32>
    %cst_156 = arith.constant 3.200000e+01 : f32
    %514 = vector.broadcast %cst_156 : f32 to vector<16x1xf32>
    %515 = arith.divf %513, %514 : vector<16x1xf32>
    %516 = vector.broadcast %515 : vector<16x1xf32> to vector<16x32xf32>
    %517 = arith.subf %509, %516 : vector<16x32xf32>
    %518 = arith.mulf %517, %517 : vector<16x32xf32>
    %cst_157 = arith.constant dense<0.000000e+00> : vector<16xf32>
    %519 = vector.multi_reduction <add>, %518, %cst_157 [1] : vector<16x32xf32> to vector<16xf32>
    %520 = vector.shape_cast %519 : vector<16xf32> to vector<16x1xf32>
    %cst_158 = arith.constant 3.200000e+01 : f32
    %521 = vector.broadcast %cst_158 : f32 to vector<16x1xf32>
    %522 = arith.divf %520, %521 : vector<16x1xf32>
    %cst_159 = arith.constant 9.99999974E-6 : f32
    %523 = vector.broadcast %cst_159 : f32 to vector<16x1xf32>
    %524 = arith.addf %522, %523 : vector<16x1xf32>
    %525 = math.rsqrt %524 : vector<16x1xf32>
    %526 = vector.broadcast %525 : vector<16x1xf32> to vector<16x32xf32>
    %527 = arith.mulf %517, %526 : vector<16x32xf32>
    %528 = vector.broadcast %510 : vector<1x32xf32> to vector<16x32xf32>
    %529 = arith.mulf %527, %528 : vector<16x32xf32>
    %530 = vector.broadcast %511 : vector<1x32xf32> to vector<16x32xf32>
    %531 = arith.addf %529, %530 : vector<16x32xf32>
    %c384 = arith.constant 384 : index
    %c0_160 = arith.constant 0 : index
    %532 = vector.load %arg2[%c384, %c0_160] : memref<824x128xf32, #tpu.memory_space<vmem>>, vector<32x96xf32>
    %c416 = arith.constant 416 : index
    %c0_161 = arith.constant 0 : index
    %533 = vector.load %arg2[%c416, %c0_161] : memref<824x128xf32, #tpu.memory_space<vmem>>, vector<1x96xf32>
    %534 = vector.extract_strided_slice %532 {offsets = [0, 0], sizes = [32, 32], strides = [1, 1]} : vector<32x96xf32> to vector<32x32xf32>
    %535 = arith.truncf %531 : vector<16x32xf32> to vector<16x32xbf16>
    %536 = arith.truncf %534 : vector<32x32xf32> to vector<32x32xbf16>
    %cst_162 = arith.constant dense<0.000000e+00> : vector<16x32xf32>
    %537 = tpu.matmul %535, %536, %cst_162 {dimension_numbers = #tpu.dot_dimension_numbers<[1], [0], [0], [1], [0, 0, 1, 1], [], []>} : vector<16x32xbf16>, vector<32x32xbf16>, vector<16x32xf32> -> vector<16x32xf32>
    %538 = vector.extract_strided_slice %533 {offsets = [0, 0], sizes = [1, 32], strides = [1, 1]} : vector<1x96xf32> to vector<1x32xf32>
    %539 = vector.broadcast %538 : vector<1x32xf32> to vector<16x32xf32>
    %540 = arith.addf %537, %539 : vector<16x32xf32>
    %541 = vector.extract_strided_slice %532 {offsets = [0, 32], sizes = [32, 64], strides = [1, 1]} : vector<32x96xf32> to vector<32x64xf32>
    %542 = arith.truncf %376 : vector<16x32xf32> to vector<16x32xbf16>
    %543 = arith.truncf %541 : vector<32x64xf32> to vector<32x64xbf16>
    %cst_163 = arith.constant dense<0.000000e+00> : vector<16x64xf32>
    %544 = tpu.matmul %542, %543, %cst_163 {dimension_numbers = #tpu.dot_dimension_numbers<[1], [0], [0], [1], [0, 0, 1, 1], [], []>} : vector<16x32xbf16>, vector<32x64xbf16>, vector<16x64xf32> -> vector<16x64xf32>
    %545 = vector.extract_strided_slice %533 {offsets = [0, 32], sizes = [1, 64], strides = [1, 1]} : vector<1x96xf32> to vector<1x64xf32>
    %546 = vector.broadcast %545 : vector<1x64xf32> to vector<16x64xf32>
    %547 = arith.addf %544, %546 : vector<16x64xf32>
    %548 = vector.extract_strided_slice %547 {offsets = [0, 0], sizes = [16, 32], strides = [1, 1]} : vector<16x64xf32> to vector<16x32xf32>
    %549 = vector.extract_strided_slice %547 {offsets = [0, 32], sizes = [16, 32], strides = [1, 1]} : vector<16x64xf32> to vector<16x32xf32>
    %550 = vector.broadcast %126 : vector<1x1xf32> to vector<16x32xf32>
    %551 = arith.mulf %540, %550 : vector<16x32xf32>
    %c424 = arith.constant 424 : index
    %c0_164 = arith.constant 0 : index
    %552 = vector.load %arg2[%c424, %c0_164] : memref<824x128xf32, #tpu.memory_space<vmem>>, vector<32x32xf32>
    %553 = vector.extract_strided_slice %551 {offsets = [0, 0], sizes = [16, 8], strides = [1, 1]} : vector<16x32xf32> to vector<16x8xf32>
    %554 = vector.extract_strided_slice %548 {offsets = [0, 0], sizes = [16, 8], strides = [1, 1]} : vector<16x32xf32> to vector<16x8xf32>
    %555 = vector.extract_strided_slice %549 {offsets = [0, 0], sizes = [16, 8], strides = [1, 1]} : vector<16x32xf32> to vector<16x8xf32>
    %556 = arith.truncf %553 : vector<16x8xf32> to vector<16x8xbf16>
    %557 = arith.truncf %554 : vector<16x8xf32> to vector<16x8xbf16>
    %cst_165 = arith.constant dense<0.000000e+00> : vector<16x16xf32>
    %558 = tpu.matmul %556, %557, %cst_165 {dimension_numbers = #tpu.dot_dimension_numbers<[1], [1], [0], [0], [0, 0, 1, 0], [], []>} : vector<16x8xbf16>, vector<16x8xbf16>, vector<16x16xf32> -> vector<16x16xf32>
    %559 = vector.broadcast %156 : vector<1x16xf32> to vector<16x16xf32>
    %560 = arith.addf %558, %559 : vector<16x16xf32>
    %cst_166 = arith.constant dense<0xFF800000> : vector<16xf32>
    %561 = vector.multi_reduction <maximumf>, %560, %cst_166 [1] : vector<16x16xf32> to vector<16xf32>
    %562 = vector.shape_cast %561 : vector<16xf32> to vector<16x1xf32>
    %563 = vector.broadcast %562 : vector<16x1xf32> to vector<16x16xf32>
    %564 = arith.subf %560, %563 : vector<16x16xf32>
    %565 = math.exp %564 : vector<16x16xf32>
    %cst_167 = arith.constant dense<0.000000e+00> : vector<16xf32>
    %566 = vector.multi_reduction <add>, %565, %cst_167 [1] : vector<16x16xf32> to vector<16xf32>
    %567 = vector.shape_cast %566 : vector<16xf32> to vector<16x1xf32>
    %568 = tpu.reciprocal %567 {approx = true} : vector<16x1xf32> -> vector<16x1xf32>
    %569 = vector.broadcast %568 : vector<16x1xf32> to vector<16x16xf32>
    %570 = arith.mulf %565, %569 : vector<16x16xf32>
    %571 = arith.truncf %570 : vector<16x16xf32> to vector<16x16xbf16>
    %572 = arith.truncf %555 : vector<16x8xf32> to vector<16x8xbf16>
    %cst_168 = arith.constant dense<0.000000e+00> : vector<16x8xf32>
    %573 = tpu.matmul %571, %572, %cst_168 {dimension_numbers = #tpu.dot_dimension_numbers<[1], [0], [0], [1], [0, 0, 1, 1], [], []>} : vector<16x16xbf16>, vector<16x8xbf16>, vector<16x8xf32> -> vector<16x8xf32>
    %574 = vector.extract_strided_slice %552 {offsets = [0, 0], sizes = [8, 32], strides = [1, 1]} : vector<32x32xf32> to vector<8x32xf32>
    %575 = arith.truncf %573 : vector<16x8xf32> to vector<16x8xbf16>
    %576 = arith.truncf %574 : vector<8x32xf32> to vector<8x32xbf16>
    %cst_169 = arith.constant dense<0.000000e+00> : vector<16x32xf32>
    %577 = tpu.matmul %575, %576, %cst_169 {dimension_numbers = #tpu.dot_dimension_numbers<[1], [0], [0], [1], [0, 0, 1, 1], [], []>} : vector<16x8xbf16>, vector<8x32xbf16>, vector<16x32xf32> -> vector<16x32xf32>
    %578 = vector.extract_strided_slice %551 {offsets = [0, 8], sizes = [16, 8], strides = [1, 1]} : vector<16x32xf32> to vector<16x8xf32>
    %579 = vector.extract_strided_slice %548 {offsets = [0, 8], sizes = [16, 8], strides = [1, 1]} : vector<16x32xf32> to vector<16x8xf32>
    %580 = vector.extract_strided_slice %549 {offsets = [0, 8], sizes = [16, 8], strides = [1, 1]} : vector<16x32xf32> to vector<16x8xf32>
    %581 = arith.truncf %578 : vector<16x8xf32> to vector<16x8xbf16>
    %582 = arith.truncf %579 : vector<16x8xf32> to vector<16x8xbf16>
    %cst_170 = arith.constant dense<0.000000e+00> : vector<16x16xf32>
    %583 = tpu.matmul %581, %582, %cst_170 {dimension_numbers = #tpu.dot_dimension_numbers<[1], [1], [0], [0], [0, 0, 1, 0], [], []>} : vector<16x8xbf16>, vector<16x8xbf16>, vector<16x16xf32> -> vector<16x16xf32>
    %584 = vector.broadcast %156 : vector<1x16xf32> to vector<16x16xf32>
    %585 = arith.addf %583, %584 : vector<16x16xf32>
    %cst_171 = arith.constant dense<0xFF800000> : vector<16xf32>
    %586 = vector.multi_reduction <maximumf>, %585, %cst_171 [1] : vector<16x16xf32> to vector<16xf32>
    %587 = vector.shape_cast %586 : vector<16xf32> to vector<16x1xf32>
    %588 = vector.broadcast %587 : vector<16x1xf32> to vector<16x16xf32>
    %589 = arith.subf %585, %588 : vector<16x16xf32>
    %590 = math.exp %589 : vector<16x16xf32>
    %cst_172 = arith.constant dense<0.000000e+00> : vector<16xf32>
    %591 = vector.multi_reduction <add>, %590, %cst_172 [1] : vector<16x16xf32> to vector<16xf32>
    %592 = vector.shape_cast %591 : vector<16xf32> to vector<16x1xf32>
    %593 = tpu.reciprocal %592 {approx = true} : vector<16x1xf32> -> vector<16x1xf32>
    %594 = vector.broadcast %593 : vector<16x1xf32> to vector<16x16xf32>
    %595 = arith.mulf %590, %594 : vector<16x16xf32>
    %596 = arith.truncf %595 : vector<16x16xf32> to vector<16x16xbf16>
    %597 = arith.truncf %580 : vector<16x8xf32> to vector<16x8xbf16>
    %cst_173 = arith.constant dense<0.000000e+00> : vector<16x8xf32>
    %598 = tpu.matmul %596, %597, %cst_173 {dimension_numbers = #tpu.dot_dimension_numbers<[1], [0], [0], [1], [0, 0, 1, 1], [], []>} : vector<16x16xbf16>, vector<16x8xbf16>, vector<16x8xf32> -> vector<16x8xf32>
    %599 = vector.extract_strided_slice %552 {offsets = [8, 0], sizes = [8, 32], strides = [1, 1]} : vector<32x32xf32> to vector<8x32xf32>
    %600 = arith.truncf %598 : vector<16x8xf32> to vector<16x8xbf16>
    %601 = arith.truncf %599 : vector<8x32xf32> to vector<8x32xbf16>
    %cst_174 = arith.constant dense<0.000000e+00> : vector<16x32xf32>
    %602 = tpu.matmul %600, %601, %cst_174 {dimension_numbers = #tpu.dot_dimension_numbers<[1], [0], [0], [1], [0, 0, 1, 1], [], []>} : vector<16x8xbf16>, vector<8x32xbf16>, vector<16x32xf32> -> vector<16x32xf32>
    %603 = arith.addf %577, %602 : vector<16x32xf32>
    %604 = vector.extract_strided_slice %551 {offsets = [0, 16], sizes = [16, 8], strides = [1, 1]} : vector<16x32xf32> to vector<16x8xf32>
    %605 = vector.extract_strided_slice %548 {offsets = [0, 16], sizes = [16, 8], strides = [1, 1]} : vector<16x32xf32> to vector<16x8xf32>
    %606 = vector.extract_strided_slice %549 {offsets = [0, 16], sizes = [16, 8], strides = [1, 1]} : vector<16x32xf32> to vector<16x8xf32>
    %607 = arith.truncf %604 : vector<16x8xf32> to vector<16x8xbf16>
    %608 = arith.truncf %605 : vector<16x8xf32> to vector<16x8xbf16>
    %cst_175 = arith.constant dense<0.000000e+00> : vector<16x16xf32>
    %609 = tpu.matmul %607, %608, %cst_175 {dimension_numbers = #tpu.dot_dimension_numbers<[1], [1], [0], [0], [0, 0, 1, 0], [], []>} : vector<16x8xbf16>, vector<16x8xbf16>, vector<16x16xf32> -> vector<16x16xf32>
    %610 = vector.broadcast %156 : vector<1x16xf32> to vector<16x16xf32>
    %611 = arith.addf %609, %610 : vector<16x16xf32>
    %cst_176 = arith.constant dense<0xFF800000> : vector<16xf32>
    %612 = vector.multi_reduction <maximumf>, %611, %cst_176 [1] : vector<16x16xf32> to vector<16xf32>
    %613 = vector.shape_cast %612 : vector<16xf32> to vector<16x1xf32>
    %614 = vector.broadcast %613 : vector<16x1xf32> to vector<16x16xf32>
    %615 = arith.subf %611, %614 : vector<16x16xf32>
    %616 = math.exp %615 : vector<16x16xf32>
    %cst_177 = arith.constant dense<0.000000e+00> : vector<16xf32>
    %617 = vector.multi_reduction <add>, %616, %cst_177 [1] : vector<16x16xf32> to vector<16xf32>
    %618 = vector.shape_cast %617 : vector<16xf32> to vector<16x1xf32>
    %619 = tpu.reciprocal %618 {approx = true} : vector<16x1xf32> -> vector<16x1xf32>
    %620 = vector.broadcast %619 : vector<16x1xf32> to vector<16x16xf32>
    %621 = arith.mulf %616, %620 : vector<16x16xf32>
    %622 = arith.truncf %621 : vector<16x16xf32> to vector<16x16xbf16>
    %623 = arith.truncf %606 : vector<16x8xf32> to vector<16x8xbf16>
    %cst_178 = arith.constant dense<0.000000e+00> : vector<16x8xf32>
    %624 = tpu.matmul %622, %623, %cst_178 {dimension_numbers = #tpu.dot_dimension_numbers<[1], [0], [0], [1], [0, 0, 1, 1], [], []>} : vector<16x16xbf16>, vector<16x8xbf16>, vector<16x8xf32> -> vector<16x8xf32>
    %625 = vector.extract_strided_slice %552 {offsets = [16, 0], sizes = [8, 32], strides = [1, 1]} : vector<32x32xf32> to vector<8x32xf32>
    %626 = arith.truncf %624 : vector<16x8xf32> to vector<16x8xbf16>
    %627 = arith.truncf %625 : vector<8x32xf32> to vector<8x32xbf16>
    %cst_179 = arith.constant dense<0.000000e+00> : vector<16x32xf32>
    %628 = tpu.matmul %626, %627, %cst_179 {dimension_numbers = #tpu.dot_dimension_numbers<[1], [0], [0], [1], [0, 0, 1, 1], [], []>} : vector<16x8xbf16>, vector<8x32xbf16>, vector<16x32xf32> -> vector<16x32xf32>
    %629 = arith.addf %603, %628 : vector<16x32xf32>
    %630 = vector.extract_strided_slice %551 {offsets = [0, 24], sizes = [16, 8], strides = [1, 1]} : vector<16x32xf32> to vector<16x8xf32>
    %631 = vector.extract_strided_slice %548 {offsets = [0, 24], sizes = [16, 8], strides = [1, 1]} : vector<16x32xf32> to vector<16x8xf32>
    %632 = vector.extract_strided_slice %549 {offsets = [0, 24], sizes = [16, 8], strides = [1, 1]} : vector<16x32xf32> to vector<16x8xf32>
    %633 = arith.truncf %630 : vector<16x8xf32> to vector<16x8xbf16>
    %634 = arith.truncf %631 : vector<16x8xf32> to vector<16x8xbf16>
    %cst_180 = arith.constant dense<0.000000e+00> : vector<16x16xf32>
    %635 = tpu.matmul %633, %634, %cst_180 {dimension_numbers = #tpu.dot_dimension_numbers<[1], [1], [0], [0], [0, 0, 1, 0], [], []>} : vector<16x8xbf16>, vector<16x8xbf16>, vector<16x16xf32> -> vector<16x16xf32>
    %636 = vector.broadcast %156 : vector<1x16xf32> to vector<16x16xf32>
    %637 = arith.addf %635, %636 : vector<16x16xf32>
    %cst_181 = arith.constant dense<0xFF800000> : vector<16xf32>
    %638 = vector.multi_reduction <maximumf>, %637, %cst_181 [1] : vector<16x16xf32> to vector<16xf32>
    %639 = vector.shape_cast %638 : vector<16xf32> to vector<16x1xf32>
    %640 = vector.broadcast %639 : vector<16x1xf32> to vector<16x16xf32>
    %641 = arith.subf %637, %640 : vector<16x16xf32>
    %642 = math.exp %641 : vector<16x16xf32>
    %cst_182 = arith.constant dense<0.000000e+00> : vector<16xf32>
    %643 = vector.multi_reduction <add>, %642, %cst_182 [1] : vector<16x16xf32> to vector<16xf32>
    %644 = vector.shape_cast %643 : vector<16xf32> to vector<16x1xf32>
    %645 = tpu.reciprocal %644 {approx = true} : vector<16x1xf32> -> vector<16x1xf32>
    %646 = vector.broadcast %645 : vector<16x1xf32> to vector<16x16xf32>
    %647 = arith.mulf %642, %646 : vector<16x16xf32>
    %648 = arith.truncf %647 : vector<16x16xf32> to vector<16x16xbf16>
    %649 = arith.truncf %632 : vector<16x8xf32> to vector<16x8xbf16>
    %cst_183 = arith.constant dense<0.000000e+00> : vector<16x8xf32>
    %650 = tpu.matmul %648, %649, %cst_183 {dimension_numbers = #tpu.dot_dimension_numbers<[1], [0], [0], [1], [0, 0, 1, 1], [], []>} : vector<16x16xbf16>, vector<16x8xbf16>, vector<16x8xf32> -> vector<16x8xf32>
    %651 = vector.extract_strided_slice %552 {offsets = [24, 0], sizes = [8, 32], strides = [1, 1]} : vector<32x32xf32> to vector<8x32xf32>
    %652 = arith.truncf %650 : vector<16x8xf32> to vector<16x8xbf16>
    %653 = arith.truncf %651 : vector<8x32xf32> to vector<8x32xbf16>
    %cst_184 = arith.constant dense<0.000000e+00> : vector<16x32xf32>
    %654 = tpu.matmul %652, %653, %cst_184 {dimension_numbers = #tpu.dot_dimension_numbers<[1], [0], [0], [1], [0, 0, 1, 1], [], []>} : vector<16x8xbf16>, vector<8x32xbf16>, vector<16x32xf32> -> vector<16x32xf32>
    %655 = arith.addf %629, %654 : vector<16x32xf32>
    %c456 = arith.constant 456 : index
    %c0_185 = arith.constant 0 : index
    %656 = vector.load %arg2[%c456, %c0_185] : memref<824x128xf32, #tpu.memory_space<vmem>>, vector<1x32xf32>
    %657 = vector.broadcast %656 : vector<1x32xf32> to vector<16x32xf32>
    %658 = arith.addf %655, %657 : vector<16x32xf32>
    %659 = arith.addf %531, %658 : vector<16x32xf32>
    %c592 = arith.constant 592 : index
    %c0_186 = arith.constant 0 : index
    %660 = vector.load %arg2[%c592, %c0_186] : memref<824x128xf32, #tpu.memory_space<vmem>>, vector<1x32xf32>
    %c600 = arith.constant 600 : index
    %c0_187 = arith.constant 0 : index
    %661 = vector.load %arg2[%c600, %c0_187] : memref<824x128xf32, #tpu.memory_space<vmem>>, vector<1x32xf32>
    %cst_188 = arith.constant dense<0.000000e+00> : vector<16xf32>
    %662 = vector.multi_reduction <add>, %659, %cst_188 [1] : vector<16x32xf32> to vector<16xf32>
    %663 = vector.shape_cast %662 : vector<16xf32> to vector<16x1xf32>
    %cst_189 = arith.constant 3.200000e+01 : f32
    %664 = vector.broadcast %cst_189 : f32 to vector<16x1xf32>
    %665 = arith.divf %663, %664 : vector<16x1xf32>
    %666 = vector.broadcast %665 : vector<16x1xf32> to vector<16x32xf32>
    %667 = arith.subf %659, %666 : vector<16x32xf32>
    %668 = arith.mulf %667, %667 : vector<16x32xf32>
    %cst_190 = arith.constant dense<0.000000e+00> : vector<16xf32>
    %669 = vector.multi_reduction <add>, %668, %cst_190 [1] : vector<16x32xf32> to vector<16xf32>
    %670 = vector.shape_cast %669 : vector<16xf32> to vector<16x1xf32>
    %cst_191 = arith.constant 3.200000e+01 : f32
    %671 = vector.broadcast %cst_191 : f32 to vector<16x1xf32>
    %672 = arith.divf %670, %671 : vector<16x1xf32>
    %cst_192 = arith.constant 9.99999974E-6 : f32
    %673 = vector.broadcast %cst_192 : f32 to vector<16x1xf32>
    %674 = arith.addf %672, %673 : vector<16x1xf32>
    %675 = math.rsqrt %674 : vector<16x1xf32>
    %676 = vector.broadcast %675 : vector<16x1xf32> to vector<16x32xf32>
    %677 = arith.mulf %667, %676 : vector<16x32xf32>
    %678 = vector.broadcast %660 : vector<1x32xf32> to vector<16x32xf32>
    %679 = arith.mulf %677, %678 : vector<16x32xf32>
    %680 = vector.broadcast %661 : vector<1x32xf32> to vector<16x32xf32>
    %681 = arith.addf %679, %680 : vector<16x32xf32>
    %c464 = arith.constant 464 : index
    %c0_193 = arith.constant 0 : index
    %682 = vector.load %arg2[%c464, %c0_193] : memref<824x128xf32, #tpu.memory_space<vmem>>, vector<32x64xf32>
    %683 = arith.truncf %681 : vector<16x32xf32> to vector<16x32xbf16>
    %684 = arith.truncf %682 : vector<32x64xf32> to vector<32x64xbf16>
    %cst_194 = arith.constant dense<0.000000e+00> : vector<16x64xf32>
    %685 = tpu.matmul %683, %684, %cst_194 {dimension_numbers = #tpu.dot_dimension_numbers<[1], [0], [0], [1], [0, 0, 1, 1], [], []>} : vector<16x32xbf16>, vector<32x64xbf16>, vector<16x64xf32> -> vector<16x64xf32>
    %c496 = arith.constant 496 : index
    %c0_195 = arith.constant 0 : index
    %686 = vector.load %arg2[%c496, %c0_195] : memref<824x128xf32, #tpu.memory_space<vmem>>, vector<1x64xf32>
    %687 = vector.broadcast %686 : vector<1x64xf32> to vector<16x64xf32>
    %688 = arith.addf %685, %687 : vector<16x64xf32>
    %cst_196 = arith.constant 0.000000e+00 : f32
    %689 = vector.broadcast %cst_196 : f32 to vector<16x64xf32>
    %690 = arith.maximumf %688, %689 : vector<16x64xf32>
    %c504 = arith.constant 504 : index
    %c0_197 = arith.constant 0 : index
    %691 = vector.load %arg2[%c504, %c0_197] : memref<824x128xf32, #tpu.memory_space<vmem>>, vector<64x32xf32>
    %692 = arith.truncf %690 : vector<16x64xf32> to vector<16x64xbf16>
    %693 = arith.truncf %691 : vector<64x32xf32> to vector<64x32xbf16>
    %cst_198 = arith.constant dense<0.000000e+00> : vector<16x32xf32>
    %694 = tpu.matmul %692, %693, %cst_198 {dimension_numbers = #tpu.dot_dimension_numbers<[1], [0], [0], [1], [0, 0, 1, 1], [], []>} : vector<16x64xbf16>, vector<64x32xbf16>, vector<16x32xf32> -> vector<16x32xf32>
    %c568 = arith.constant 568 : index
    %c0_199 = arith.constant 0 : index
    %695 = vector.load %arg2[%c568, %c0_199] : memref<824x128xf32, #tpu.memory_space<vmem>>, vector<1x32xf32>
    %696 = vector.broadcast %695 : vector<1x32xf32> to vector<16x32xf32>
    %697 = arith.addf %694, %696 : vector<16x32xf32>
    %698 = arith.addf %681, %697 : vector<16x32xf32>
    %c608 = arith.constant 608 : index
    %c0_200 = arith.constant 0 : index
    %699 = vector.load %arg2[%c608, %c0_200] : memref<824x128xf32, #tpu.memory_space<vmem>>, vector<1x32xf32>
    %c616 = arith.constant 616 : index
    %c0_201 = arith.constant 0 : index
    %700 = vector.load %arg2[%c616, %c0_201] : memref<824x128xf32, #tpu.memory_space<vmem>>, vector<1x32xf32>
    %cst_202 = arith.constant dense<0.000000e+00> : vector<16xf32>
    %701 = vector.multi_reduction <add>, %698, %cst_202 [1] : vector<16x32xf32> to vector<16xf32>
    %702 = vector.shape_cast %701 : vector<16xf32> to vector<16x1xf32>
    %cst_203 = arith.constant 3.200000e+01 : f32
    %703 = vector.broadcast %cst_203 : f32 to vector<16x1xf32>
    %704 = arith.divf %702, %703 : vector<16x1xf32>
    %705 = vector.broadcast %704 : vector<16x1xf32> to vector<16x32xf32>
    %706 = arith.subf %698, %705 : vector<16x32xf32>
    %707 = arith.mulf %706, %706 : vector<16x32xf32>
    %cst_204 = arith.constant dense<0.000000e+00> : vector<16xf32>
    %708 = vector.multi_reduction <add>, %707, %cst_204 [1] : vector<16x32xf32> to vector<16xf32>
    %709 = vector.shape_cast %708 : vector<16xf32> to vector<16x1xf32>
    %cst_205 = arith.constant 3.200000e+01 : f32
    %710 = vector.broadcast %cst_205 : f32 to vector<16x1xf32>
    %711 = arith.divf %709, %710 : vector<16x1xf32>
    %cst_206 = arith.constant 9.99999974E-6 : f32
    %712 = vector.broadcast %cst_206 : f32 to vector<16x1xf32>
    %713 = arith.addf %711, %712 : vector<16x1xf32>
    %714 = math.rsqrt %713 : vector<16x1xf32>
    %715 = vector.broadcast %714 : vector<16x1xf32> to vector<16x32xf32>
    %716 = arith.mulf %706, %715 : vector<16x32xf32>
    %717 = vector.broadcast %699 : vector<1x32xf32> to vector<16x32xf32>
    %718 = arith.mulf %716, %717 : vector<16x32xf32>
    %719 = vector.broadcast %700 : vector<1x32xf32> to vector<16x32xf32>
    %720 = arith.addf %718, %719 : vector<16x32xf32>
    %c624 = arith.constant 624 : index
    %c0_207 = arith.constant 0 : index
    %721 = vector.load %arg2[%c624, %c0_207] : memref<824x128xf32, #tpu.memory_space<vmem>>, vector<1x32xf32>
    %c632 = arith.constant 632 : index
    %c0_208 = arith.constant 0 : index
    %722 = vector.load %arg2[%c632, %c0_208] : memref<824x128xf32, #tpu.memory_space<vmem>>, vector<1x32xf32>
    %cst_209 = arith.constant dense<0.000000e+00> : vector<16xf32>
    %723 = vector.multi_reduction <add>, %720, %cst_209 [1] : vector<16x32xf32> to vector<16xf32>
    %724 = vector.shape_cast %723 : vector<16xf32> to vector<16x1xf32>
    %cst_210 = arith.constant 3.200000e+01 : f32
    %725 = vector.broadcast %cst_210 : f32 to vector<16x1xf32>
    %726 = arith.divf %724, %725 : vector<16x1xf32>
    %727 = vector.broadcast %726 : vector<16x1xf32> to vector<16x32xf32>
    %728 = arith.subf %720, %727 : vector<16x32xf32>
    %729 = arith.mulf %728, %728 : vector<16x32xf32>
    %cst_211 = arith.constant dense<0.000000e+00> : vector<16xf32>
    %730 = vector.multi_reduction <add>, %729, %cst_211 [1] : vector<16x32xf32> to vector<16xf32>
    %731 = vector.shape_cast %730 : vector<16xf32> to vector<16x1xf32>
    %cst_212 = arith.constant 3.200000e+01 : f32
    %732 = vector.broadcast %cst_212 : f32 to vector<16x1xf32>
    %733 = arith.divf %731, %732 : vector<16x1xf32>
    %cst_213 = arith.constant 9.99999974E-6 : f32
    %734 = vector.broadcast %cst_213 : f32 to vector<16x1xf32>
    %735 = arith.addf %733, %734 : vector<16x1xf32>
    %736 = math.rsqrt %735 : vector<16x1xf32>
    %737 = vector.broadcast %736 : vector<16x1xf32> to vector<16x32xf32>
    %738 = arith.mulf %728, %737 : vector<16x32xf32>
    %739 = vector.broadcast %721 : vector<1x32xf32> to vector<16x32xf32>
    %740 = arith.mulf %738, %739 : vector<16x32xf32>
    %741 = vector.broadcast %722 : vector<1x32xf32> to vector<16x32xf32>
    %742 = arith.addf %740, %741 : vector<16x32xf32>
    %c640 = arith.constant 640 : index
    %c0_214 = arith.constant 0 : index
    %743 = vector.load %arg2[%c640, %c0_214] : memref<824x128xf32, #tpu.memory_space<vmem>>, vector<32x4xf32>
    %744 = arith.truncf %742 : vector<16x32xf32> to vector<16x32xbf16>
    %745 = arith.truncf %743 : vector<32x4xf32> to vector<32x4xbf16>
    %cst_215 = arith.constant dense<0.000000e+00> : vector<16x4xf32>
    %746 = tpu.matmul %744, %745, %cst_215 {dimension_numbers = #tpu.dot_dimension_numbers<[1], [0], [0], [1], [0, 0, 1, 1], [], []>} : vector<16x32xbf16>, vector<32x4xbf16>, vector<16x4xf32> -> vector<16x4xf32>
    %c672 = arith.constant 672 : index
    %c0_216 = arith.constant 0 : index
    %747 = vector.load %arg2[%c672, %c0_216] : memref<824x128xf32, #tpu.memory_space<vmem>>, vector<1x4xf32>
    %748 = vector.broadcast %747 : vector<1x4xf32> to vector<16x4xf32>
    %749 = arith.addf %746, %748 : vector<16x4xf32>
    %750 = vector.broadcast %92 : vector<1x4xf32> to vector<16x4xf32>
    %751 = arith.mulf %749, %750 : vector<16x4xf32>
    %752 = vector.broadcast %82 : vector<1x4xf32> to vector<16x4xf32>
    %753 = arith.addf %751, %752 : vector<16x4xf32>
    %754 = vector.extract_strided_slice %753 {offsets = [8, 0], sizes = [8, 4], strides = [1, 1]} : vector<16x4xf32> to vector<8x4xf32>
    %c0_217 = arith.constant 0 : index
    %c0_218 = arith.constant 0 : index
    %c0_219 = arith.constant 0 : index
    %755 = vector.load %arg3[%c0_217, %c0_218, %c0_219] : memref<1x8x4xf32, #tpu.memory_space<vmem>>, vector<1x8x4xf32>
    %756 = vector.shape_cast %755 : vector<1x8x4xf32> to vector<8x4xf32>
    %757 = vector.shape_cast %754 : vector<8x4xf32> to vector<1x8x4xf32>
    tpu.vector_store %arg3[%c0_217, %c0_218, %c0_219], %757 {strides = array<i32>} : memref<1x8x4xf32, #tpu.memory_space<vmem>>, vector<1x8x4xf32>,
    return
  }
  func.func @transform_0(%arg0: i32) -> (i32, i32, i32) {
    %c0_i32 = arith.constant 0 : i32
    %c0_i32_0 = arith.constant 0 : i32
    %c0_i32_1 = arith.constant 0 : i32
    return %arg0, %c0_i32, %c0_i32_0 : i32, i32, i32
  }
  func.func @transform_1(%arg0: i32) -> (i32, i32) {
    %c0_i32 = arith.constant 0 : i32
    %c0_i32_0 = arith.constant 0 : i32
    %c0_i32_1 = arith.constant 0 : i32
    return %c0_i32, %c0_i32_0 : i32, i32
  }
  func.func @transform_2(%arg0: i32) -> (i32, i32, i32) {
    %c0_i32 = arith.constant 0 : i32
    %c0_i32_0 = arith.constant 0 : i32
    %c0_i32_1 = arith.constant 0 : i32
    return %arg0, %c0_i32, %c0_i32_0 : i32, i32, i32
  }
}

</mosaic_0001>

<llo_original>
// kernel: forward.1
$region0: #{forward.1}
  #allocation0 [shape = 'u32[]', space=smem, size = 0x4, offset = 0x4, fixed_abs, tag = 'smem constant byte address 0x4 - core index']
  #allocation1 [shape = 'u32[144,128]{1,0:T(1,128)}', space=vmem, size = 0x12000, scoped, tag = 'internal scratch']
  %s0 = inlined_call_operand.vmem [shape: f32[2,16,4], index: 0, kind: input, shape index: {}]
  %s1 = inlined_call_operand.hbm [shape: f32[824,128], index: 1, kind: input, shape index: {}]
  %s2 = inlined_call_operand.vmem [shape: f32[2,8,4], index: 2, kind: output, shape index: {}]
  %s3 = sld [smem:[#allocation0]]
  $region45: #{forward.1} parent=0
    _
  %s5 = ssub.s32 1, %s3
  %s6 = scalar_select 0, %s5, %s3
  $region1: #{forward.1} parent=0
    #allocation2 [shape = 'u8[421888]{0}', space=vmem, size = 0x67000, scoped, tag = 'input window, operand 1, single buffered']
    #allocation3 [shape = 's32[2]{0}', space=sflag, size = 0x8, scoped, tag = 'scoped memory for forward.1']
    %7 = vsyncpa [#allocation3], 0
    loop: start=0, step=1, limit=4
    $region2: #{forward.1} parent=1 // loop_pre_header
      _
    $region3: #{forward.1} parent=1 // loop_header
      %s9 = sphi 0, %s13
      %p10 = scmp.ge.s32.totalorder %s9, 4
      %s19 = sphi 0, %s21
      %s22 = sphi 0, %s19
      %s23 = sphi 0, %s22
      %s39 = sphi 0, %s23
      %s43 = sphi 0, %s43
      %s45 = sphi 0, %s43
      %s46 = sphi 0, %s45
      %s60 = sphi 0, %s46
      %s66 = sphi 0, %s68
      %s69 = sphi 0, %s66
      %s70 = sphi 0, %s69
      %s86 = sphi 0, %s70
    $region4: #{forward.1} parent=1 // loop_header_branch
      %12 = sbr.rel (%p10) target = $region8
    $region5: #{forward.1} parent=1 // loop_body
      %s14 = ssub.s32 %s9, 1
      %s15 = ssub.s32 %s9, 2
      %s16 = sadd.s32 %s9, 1
      %s17 = ssub.s32 %s9, %s16
      %p18 = scmp.eq.s32.totalorder %s17, 0
      %s20 = sadd.s32 %s19, 1
      %s21 = scalar_select %p18, %s19, %s20
      %p24 = pneg %p18
      %p25 = scmp.eq.s32.totalorder %s9, 1
      %p26 = por %p24, %p25
      %p27 = scmp.ne.s32.totalorder %s19, %s22
      %p28 = scmp.eq.s32.totalorder %s9, 0
      %p29 = por %p27, %p28
      %p30 = scmp.ne.s32.totalorder %s19, %s22
      %p31 = scmp.eq.s32.totalorder %s14, 1
      %p32 = por %p30, %p31
      %p33 = scmp.ne.s32.totalorder %s22, %s23
      %p34 = scmp.eq.s32.totalorder %s14, 0
      %p35 = por %p33, %p34
      %p36 = scmp.ne.s32.totalorder %s22, %s23
      %p37 = scmp.eq.s32.totalorder %s15, 1
      %p38 = por %p36, %p37
      %p40 = scmp.ne.s32.totalorder %s23, %s39
      %p41 = scmp.eq.s32.totalorder %s15, 0
      %p42 = por %p40, %p41
      %s44 = sadd.s32 %s43, 1
      %p47 = scmp.eq.s32.totalorder %s9, 1
      %p48 = scmp.ne.s32.totalorder %s43, %s45
      %p49 = scmp.eq.s32.totalorder %s9, 0
      %p50 = por %p48, %p49
      %p51 = scmp.ne.s32.totalorder %s43, %s45
      %p52 = scmp.eq.s32.totalorder %s14, 1
      %p53 = por %p51, %p52
      %p54 = scmp.ne.s32.totalorder %s45, %s46
      %p55 = scmp.eq.s32.totalorder %s14, 0
      %p56 = por %p54, %p55
      %p57 = scmp.ne.s32.totalorder %s45, %s46
      %p58 = scmp.eq.s32.totalorder %s15, 1
      %p59 = por %p57, %p58
      %p61 = scmp.ne.s32.totalorder %s46, %s60
      %p62 = scmp.eq.s32.totalorder %s15, 0
      %p63 = por %p61, %p62
      %s64 = ssub.s32 %s9, %s16
      %p65 = scmp.eq.s32.totalorder %s64, 0
      %s67 = sadd.s32 %s66, 1
      %s68 = scalar_select %p65, %s66, %s67
      %p71 = pneg %p65
      %p72 = scmp.eq.s32.totalorder %s9, 1
      %p73 = por %p71, %p72
      %p74 = scmp.ne.s32.totalorder %s66, %s69
      %p75 = scmp.eq.s32.totalorder %s9, 0
      %p76 = por %p74, %p75
      %p77 = scmp.ne.s32.totalorder %s66, %s69
      %p78 = scmp.eq.s32.totalorder %s14, 1
      %p79 = por %p77, %p78
      %p80 = scmp.ne.s32.totalorder %s69, %s70
      %p81 = scmp.eq.s32.totalorder %s14, 0
      %p82 = por %p80, %p81
      %p83 = scmp.ne.s32.totalorder %s69, %s70
      %p84 = scmp.eq.s32.totalorder %s15, 1
      %p85 = por %p83, %p84
      %p87 = scmp.ne.s32.totalorder %s70, %s86
      %p88 = scmp.eq.s32.totalorder %s15, 0
      %p89 = por %p87, %p88
      %p90 = scmp.le.s32.totalorder 1, %s9
      %p91 = scmp.lt.s32.totalorder %s9, 3
      %p92 = pnand %p90, %p91
      %p93 = pneg %p92
      // Predicated region
      $region9: #{forward.1} parent=5 // pred_check
        _
      $region10: #{forward.1} parent=5 // pred_check_branch
        %95 = sbr.rel (%p92) target = $region12
      $region11: #{forward.1} parent=5 // pred_region
        %s96 = ssub.s32 %s9, 1
        // Predicated region
        $region13: #{forward.1} parent=11 // pred_check
          %p97 = pneg %p56
        $region14: #{forward.1} parent=11 // pred_check_branch
          %99 = sbr.rel (%p97) target = $region16
        $region15: #{forward.1} parent=11 // pred_region
          %s101 = ssub.s32 13184, 13184
          %102 = vsyncadd [#allocation3], %s101
          %s103 = sshll.u32 [#allocation2], 4
          %s104 = int_to_ptr.vmem [resolvable:$true] %s103
          %109 = dma.hbm_to_vmem [thread:$0]  %s1, 13184, %s104, [#allocation3], 128, 128, 8
        $region16: #{forward.1} parent=11 // pred_fallthru
          _
      $region12: #{forward.1} parent=5 // pred_fallthru
        _
      %p110 = scmp.lt.s32.totalorder %s9, 2
      // Predicated region
      $region17: #{forward.1} parent=5 // pred_check
        %p111 = pneg %p110
      $region18: #{forward.1} parent=5 // pred_check_branch
        %113 = sbr.rel (%p111) target = $region20
      $region19: #{forward.1} parent=5 // pred_region
        // Predicated region
        $region21: #{forward.1} parent=19 // pred_check
          %p114 = pneg %p29
        $region22: #{forward.1} parent=19 // pred_check_branch
          %116 = sbr.rel (%p114) target = $region24
        $region23: #{forward.1} parent=19 // pred_region
          %p117 = scmp.lt.s32.totalorder %s9, 1
          %s118 = scalar_select %p117, %s9, 1
          %s119 = smul.addr %s118, 2
          %s120 = smul.addr %s119, 8
          %s121 = scalar_lea.vmem %s0, %s120
        $region24: #{forward.1} parent=19 // pred_fallthru
          _
      $region20: #{forward.1} parent=5 // pred_fallthru
        _
      %p122 = scmp.le.s32.totalorder 1, %s9
      %p123 = scmp.lt.s32.totalorder %s9, 3
      %p124 = pnand %p122, %p123
      %p125 = pneg %p124
      // Predicated region
      $region25: #{forward.1} parent=5 // pred_check
        _
      $region26: #{forward.1} parent=5 // pred_check_branch
        %127 = sbr.rel (%p124) target = $region28
      $region27: #{forward.1} parent=5 // pred_region
        %s128 = ssub.s32 %s9, 1
        // Predicated region
        $region29: #{forward.1} parent=27 // pred_check
          %p129 = pneg %p56
        $region30: #{forward.1} parent=27 // pred_check_branch
          %131 = sbr.rel (%p129) target = $region32
        $region31: #{forward.1} parent=27 // pred_region
          %132 = dma.done [#allocation3], 13184
        $region32: #{forward.1} parent=27 // pred_fallthru
          _
        %p133 = scmp.lt.s32.totalorder %s14, 1
        %s134 = scalar_select %p133, %s14, 1
        %s135 = smul.addr %s134, 2
        %s136 = smul.addr %s135, 8
        %s137 = scalar_lea.vmem %s0, %s136
        %p138 = pneg %p35
        %p139 = pneg %p32
        %p140 = pneg %p56
        %p141 = pneg %p53
        %p142 = pneg %p82
        %p143 = pneg %p79
        %p144 = scmp.lt.s32.totalorder %s14, 1
        %s145 = scalar_select %p144, %s14, 1
        %s146 = smul.addr %s145, 8
        %s147 = scalar_lea.vmem %s2, %s146
        %p148 = scmp.lt.s32.totalorder %s14, 1
        %s149 = scalar_select %p148, %s14, 1
        %s150 = smul.addr %s149, 2
        %s151 = smul.addr %s150, 8
        %s152 = scalar_lea.vmem %s0, %s151
        %p153 = scmp.lt.s32.totalorder %s14, 1
        %s154 = scalar_select %p153, %s14, 1
        %s155 = smul.addr %s154, 8
        %s156 = scalar_lea.vmem %s2, %s155
        %v158 = vlaneseq
        %v159 = vshrl.u32 %v158, 7
        %v160 = vadd.s32 %v159, 8
        %v161 = vlaneseq
        %v162 = vand.u32 %v161, 127
        %v163 = vsub.s32 %v162, %v159
        %v164 = vsub.s32 %v162, %v160
        %v165 = vadd.s32 %v163, 1
        %v166 = vadd.s32 %v164, 1
        %vm167 = vcmp.eq.s32.totalorder %v165, 0
        %vm168 = vcmp.eq.s32.totalorder %v166, 0
        %vm169 = vcmp.eq.s32.totalorder %v165, 16
        %vm170 = vcmp.eq.s32.totalorder %v166, 16
        %vm171 = vmor %vm167, %vm169
        %vm172 = vmor %vm168, %vm170
        %vm173 = vcmp.eq.s32.totalorder %v165, 4294967280
        %vm174 = vcmp.eq.s32.totalorder %v166, 4294967280
        %vm175 = vmor %vm171, %vm173
        %vm176 = vmor %vm172, %vm174
        %v177 = vsel %vm175, 1, 0
        %v178 = vsel %vm176, 1, 0
        %v179 = vcvt.s32.f32 %v177
        %v180 = vcvt.s32.f32 %v178
        %v181 = vadd.s32 %v163, 4294967295
        %v182 = vadd.s32 %v164, 4294967295
        %vm183 = vcmp.eq.s32.totalorder %v181, 0
        %vm184 = vcmp.eq.s32.totalorder %v182, 0
        %vm185 = vcmp.eq.s32.totalorder %v181, 16
        %vm186 = vcmp.eq.s32.totalorder %v182, 16
        %vm187 = vmor %vm183, %vm185
        %vm188 = vmor %vm184, %vm186
        %vm189 = vcmp.eq.s32.totalorder %v181, 4294967280
        %vm190 = vcmp.eq.s32.totalorder %v182, 4294967280
        %vm191 = vmor %vm187, %vm189
        %vm192 = vmor %vm188, %vm190
        %v193 = vsel %vm191, 1, 0
        %v194 = vsel %vm192, 1, 0
        %v195 = vcvt.s32.f32 %v193
        %v196 = vcvt.s32.f32 %v194
        %vm197 = vcmp.eq.s32.totalorder %v165, 4
        %vm198 = vmor %vm167, %vm197
        %vm199 = vcmp.eq.s32.totalorder %v165, 4294967292
        %vm200 = vmor %vm198, %vm199
        %v201 = vsel %vm200, 1, 0
        %v202 = vcvt.s32.f32 %v201
        %vm203 = vcmp.eq.s32.totalorder %v181, 4
        %vm204 = vmor %vm183, %vm203
        %vm205 = vcmp.eq.s32.totalorder %v181, 4294967292
        %vm206 = vmor %vm204, %vm205
        %v207 = vsel %vm206, 1, 0
        %v208 = vcvt.s32.f32 %v207
        %vm209 = vcmp.lt.s32.totalorder %v159, 8
        %vm210 = vcmp.lt.s32.totalorder %v160, 8
        %v211 = vadd.s32 %v160, 8
        %vm212 = vcmp.eq.s32.totalorder %v162, %v160
        %vm213 = vcmp.eq.s32.totalorder %v162, %v211
        %vm214 = vmand %vm209, %vm212
        %vm215 = vmand %vm210, %vm213
        %v216 = vsel %vm214, 1, 0
        %v217 = vsel %vm215, 1, 0
        %v218 = vcvt.s32.f32 %v216
        %v219 = vcvt.s32.f32 %v217
        %vm220 = vcmp.gt.s32.totalorder %v162, %v159
        %vm221 = vcmp.gt.s32.totalorder %v162, %v160
        %v222 = vsel %vm220, -1e+30, 0.0
        %v223 = vsel %vm221, -1e+30, 0.0
        %v224 = vld [vmem:[#allocation2] sm:$0xff]
        %v225 = vld [vmem:[#allocation2 + $0x8] sm:$0xff]
        %v226 = vld [vmem:[%s152] sm:$0xff]
        %v227 = vld [vmem:[%s152 + $0x8] sm:$0xff]
        %vm228 = vcmask 31744
        %v229 = vsel %vm228, %v226, 0.0
        %v230 = vsel %vm228, %v227, 0.0
        %v231 = vadd.f32 %v229, %v230
        %v232 = vrot.slane %v231, 4
        %v233 = vadd.f32 %v231, %v232
        %v234 = vrot.slane %v233, 2
        %v235 = vadd.f32 %v233, %v234
        %v236 = vrot.slane %v235, 1
        %v237 = vadd.f32 %v235, %v236
        %v238 = vrcp.pop 16.0
        %v239 = vmul.f32 %v237, %v238
        %v240 = vsub.f32 %v226, %v239
        %v241 = vsub.f32 %v227, %v239
        %v242 = vmul.f32 %v240, %v240
        %v243 = vmul.f32 %v241, %v241
        %v244 = vsel %vm228, %v242, 0.0
        %v245 = vsel %vm228, %v243, 0.0
        %v246 = vadd.f32 %v244, %v245
        %v247 = vrot.slane %v246, 4
        %v248 = vadd.f32 %v246, %v247
        %v249 = vrot.slane %v248, 2
        %v250 = vadd.f32 %v248, %v249
        %v251 = vrot.slane %v250, 1
        %v252 = vadd.f32 %v250, %v251
        %v253 = vmul.f32 %v252, %v238
        %v254 = vadd.f32 %v253, 1e-10
        %v255 = vrsqrt.pop %v254
        %v256 = vmul.f32 %v254, %v255
        %vm257 = vcmp.eq.f32.partialorder %v254, inf
        %v258 = vsel %vm257, %v254, %v256
        %vm259 = vcmp.eq.f32.partialorder %v254, 0.0
        %v260 = vand.u32 %v254, 2147483648
        %v261 = vsel %vm259, %v260, %v258
        %v262 = vrcp.pop %v261
        %v263 = vmul.f32 %v240, %v262
        %v264 = vmul.f32 %v241, %v262
        %vm265 = vcmask 130048
        %v267 = vsel %vm265, %v218, 0
        %v270 = vsel %vm265, %v219, 0
        %272 = vmatprep.subr.mxu0 0.0
        %273 = vmatpush1.msra.mxu0 %v263
        %274 = vmatprep.subr.mxu0 0.0
        %275 = vmatpush1.msra.mxu0 %v264
        %276 = vmatprep.subr.mxu0 0.0
        %277 = vmatpush1.msra.mxu0 0.0
        %278 = vmatprep.subr.mxu0 0.0
        %279 = vmatpush1.msra.mxu0 0.0
        %280 = vmatprep.subr.mxu0 0.0
        %281 = vmatpush1.msra.mxu0 0.0
        %282 = vmatprep.subr.mxu0 0.0
        %283 = vmatpush1.msra.mxu0 0.0
        %284 = vmatprep.subr.mxu0 0.0
        %285 = vmatpush1.msra.mxu0 0.0
        %286 = vmatprep.subr.mxu0 0.0
        %287 = vmatpush1.msra.mxu0 0.0
        %288 = vmatprep.subr.mxu0 0.0
        %289 = vmatpush1.msra.mxu0 0.0
        %290 = vmatprep.subr.mxu0 0.0
        %291 = vmatpush1.msra.mxu0 0.0
        %292 = vmatprep.subr.mxu0 0.0
        %293 = vmatpush1.msra.mxu0 0.0
        %294 = vmatprep.subr.mxu0 0.0
        %295 = vmatpush1.msra.mxu0 0.0
        %296 = vmatprep.subr.mxu0 0.0
        %297 = vmatpush1.msra.mxu0 0.0
        %298 = vmatprep.subr.mxu0 0.0
        %299 = vmatpush1.msra.mxu0 0.0
        %300 = vmatprep.subr.mxu0 0.0
        %301 = vmatpush1.msra.mxu0 0.0
        %302 = vmatprep.subr.mxu0 0.0
        %303 = vmatpush1.msra.mxu0 0.0
        %304 = vmatprep.subr.mxu0 0.0
        %305 = vmatpush1.msra.mxu0 0.0
        %306 = vmatprep.subr.mxu0 0.0
        %307 = vmatpush1.msra.mxu0 0.0
        %308 = vmatprep.subr.mxu0 0.0
        %309 = vmatpush1.msra.mxu0 0.0
        %310 = vmatprep.subr.mxu0 0.0
        %311 = vmatpush1.msra.mxu0 0.0
        %312 = vmatprep.subr.mxu0 0.0
        %313 = vmatpush1.msra.mxu0 0.0
        %314 = vmatprep.subr.mxu0 0.0
        %315 = vmatpush1.msra.mxu0 0.0
        %316 = vmatprep.subr.mxu0 0.0
        %317 = vmatpush1.msra.mxu0 0.0
        %318 = vmatprep.subr.mxu0 0.0
        %319 = vmatpush1.msra.mxu0 0.0
        %320 = vmatprep.subr.mxu0 0.0
        %321 = vmatpush1.msra.mxu0 0.0
        %322 = vmatprep.subr.mxu0 0.0
        %323 = vmatpush1.msra.mxu0 0.0
        %324 = vmatprep.subr.mxu0 0.0
        %325 = vmatpush1.msra.mxu0 0.0
        %326 = vmatprep.subr.mxu0 0.0
        %327 = vmatpush1.msra.mxu0 0.0
        %328 = vmatprep.subr.mxu0 0.0
        %329 = vmatpush1.msra.mxu0 0.0
        %330 = vmatprep.subr.mxu0 0.0
        %331 = vmatpush1.msra.mxu0 0.0
        %332 = vmatprep.subr.mxu0 0.0
        %333 = vmatpush1.msra.mxu0 0.0
        %334 = vmatprep.subr.mxu0 0.0
        %335 = vmatpush1.msra.mxu0 0.0
        %336 = vmatprep.mubr.f32.mxu0 0.0
        %337 = vmatmul.mubr.f32.gmra.mrb[0].mxu0 %v267
        %v338 = vpop.f32.mrb[0].mxu0
        %v339 = vadd.f32 0.0, %v338
        %v340 = vpop.f32.mrb[0].mxu0
        %341 = vmatprep.mubr.f32.mxu0 0.0
        %342 = vmatmul.mubr.f32.gmra.mrb[0].mxu0 %v270
        %v343 = vpop.f32.mrb[0].mxu0
        %v344 = vadd.f32 0.0, %v343
        %v345 = vpop.f32.mrb[0].mxu0
        %346 = vdwg.mxu0
        %v347 = vld [vmem:[#allocation2 + $0x2a8] sm:$0x7]
        %v349 = vsel %vm265, %v347, 0
        %351 = vmatprep.subr.mxu0 0.0
        %352 = vmatpush1.msra.mxu0 %v226
        %353 = vmatprep.subr.mxu0 0.0
        %354 = vmatpush1.msra.mxu0 %v227
        %355 = vmatprep.subr.mxu0 0.0
        %356 = vmatpush1.msra.mxu0 0.0
        %357 = vmatprep.subr.mxu0 0.0
        %358 = vmatpush1.msra.mxu0 0.0
        %359 = vmatprep.subr.mxu0 0.0
        %360 = vmatpush1.msra.mxu0 0.0
        %361 = vmatprep.subr.mxu0 0.0
        %362 = vmatpush1.msra.mxu0 0.0
        %363 = vmatprep.subr.mxu0 0.0
        %364 = vmatpush1.msra.mxu0 0.0
        %365 = vmatprep.subr.mxu0 0.0
        %366 = vmatpush1.msra.mxu0 0.0
        %367 = vmatprep.subr.mxu0 0.0
        %368 = vmatpush1.msra.mxu0 0.0
        %369 = vmatprep.subr.mxu0 0.0
        %370 = vmatpush1.msra.mxu0 0.0
        %371 = vmatprep.subr.mxu0 0.0
        %372 = vmatpush1.msra.mxu0 0.0
        %373 = vmatprep.subr.mxu0 0.0
        %374 = vmatpush1.msra.mxu0 0.0
        %375 = vmatprep.subr.mxu0 0.0
        %376 = vmatpush1.msra.mxu0 0.0
        %377 = vmatprep.subr.mxu0 0.0
        %378 = vmatpush1.msra.mxu0 0.0
        %379 = vmatprep.subr.mxu0 0.0
        %380 = vmatpush1.msra.mxu0 0.0
        %381 = vmatprep.subr.mxu0 0.0
        %382 = vmatpush1.msra.mxu0 0.0
        %383 = vmatprep.subr.mxu0 0.0
        %384 = vmatpush1.msra.mxu0 0.0
        %385 = vmatprep.subr.mxu0 0.0
        %386 = vmatpush1.msra.mxu0 0.0
        %387 = vmatprep.subr.mxu0 0.0
        %388 = vmatpush1.msra.mxu0 0.0
        %389 = vmatprep.subr.mxu0 0.0
        %390 = vmatpush1.msra.mxu0 0.0
        %391 = vmatprep.subr.mxu0 0.0
        %392 = vmatpush1.msra.mxu0 0.0
        %393 = vmatprep.subr.mxu0 0.0
        %394 = vmatpush1.msra.mxu0 0.0
        %395 = vmatprep.subr.mxu0 0.0
        %396 = vmatpush1.msra.mxu0 0.0
        %397 = vmatprep.subr.mxu0 0.0
        %398 = vmatpush1.msra.mxu0 0.0
        %399 = vmatprep.subr.mxu0 0.0
        %400 = vmatpush1.msra.mxu0 0.0
        %401 = vmatprep.subr.mxu0 0.0
        %402 = vmatpush1.msra.mxu0 0.0
        %403 = vmatprep.subr.mxu0 0.0
        %404 = vmatpush1.msra.mxu0 0.0
        %405 = vmatprep.subr.mxu0 0.0
        %406 = vmatpush1.msra.mxu0 0.0
        %407 = vmatprep.subr.mxu0 0.0
        %408 = vmatpush1.msra.mxu0 0.0
        %409 = vmatprep.subr.mxu0 0.0
        %410 = vmatpush1.msra.mxu0 0.0
        %411 = vmatprep.subr.mxu0 0.0
        %412 = vmatpush1.msra.mxu0 0.0
        %413 = vmatprep.subr.mxu0 0.0
        %414 = vmatpush1.msra.mxu0 0.0
        %415 = vmatprep.mubr.f32.mxu0 0.0
        %416 = vmatmul.mubr.f32.gmra.mrb[0].mxu0 %v349
        %v417 = vpop.f32.mrb[0].mxu0
        %v418 = vadd.f32 0.0, %v417
        %v419 = vpop.f32.mrb[0].mxu0
        %420 = vdwg.mxu0
        %v421 = vrot.slane %v347, 1
        %v422 = vsel %vm265, %v421, 0
        %424 = vmatprep.subr.mxu0 0.0
        %425 = vmatpush1.msra.mxu0 %v226
        %426 = vmatprep.subr.mxu0 0.0
        %427 = vmatpush1.msra.mxu0 %v227
        %428 = vmatprep.subr.mxu0 0.0
        %429 = vmatpush1.msra.mxu0 0.0
        %430 = vmatprep.subr.mxu0 0.0
        %431 = vmatpush1.msra.mxu0 0.0
        %432 = vmatprep.subr.mxu0 0.0
        %433 = vmatpush1.msra.mxu0 0.0
        %434 = vmatprep.subr.mxu0 0.0
        %435 = vmatpush1.msra.mxu0 0.0
        %436 = vmatprep.subr.mxu0 0.0
        %437 = vmatpush1.msra.mxu0 0.0
        %438 = vmatprep.subr.mxu0 0.0
        %439 = vmatpush1.msra.mxu0 0.0
        %440 = vmatprep.subr.mxu0 0.0
        %441 = vmatpush1.msra.mxu0 0.0
        %442 = vmatprep.subr.mxu0 0.0
        %443 = vmatpush1.msra.mxu0 0.0
        %444 = vmatprep.subr.mxu0 0.0
        %445 = vmatpush1.msra.mxu0 0.0
        %446 = vmatprep.subr.mxu0 0.0
        %447 = vmatpush1.msra.mxu0 0.0
        %448 = vmatprep.subr.mxu0 0.0
        %449 = vmatpush1.msra.mxu0 0.0
        %450 = vmatprep.subr.mxu0 0.0
        %451 = vmatpush1.msra.mxu0 0.0
        %452 = vmatprep.subr.mxu0 0.0
        %453 = vmatpush1.msra.mxu0 0.0
        %454 = vmatprep.subr.mxu0 0.0
        %455 = vmatpush1.msra.mxu0 0.0
        %456 = vmatprep.subr.mxu0 0.0
        %457 = vmatpush1.msra.mxu0 0.0
        %458 = vmatprep.subr.mxu0 0.0
        %459 = vmatpush1.msra.mxu0 0.0
        %460 = vmatprep.subr.mxu0 0.0
        %461 = vmatpush1.msra.mxu0 0.0
        %462 = vmatprep.subr.mxu0 0.0
        %463 = vmatpush1.msra.mxu0 0.0
        %464 = vmatprep.subr.mxu0 0.0
        %465 = vmatpush1.msra.mxu0 0.0
        %466 = vmatprep.subr.mxu0 0.0
        %467 = vmatpush1.msra.mxu0 0.0
        %468 = vmatprep.subr.mxu0 0.0
        %469 = vmatpush1.msra.mxu0 0.0
        %470 = vmatprep.subr.mxu0 0.0
        %471 = vmatpush1.msra.mxu0 0.0
        %472 = vmatprep.subr.mxu0 0.0
        %473 = vmatpush1.msra.mxu0 0.0
        %474 = vmatprep.subr.mxu0 0.0
        %475 = vmatpush1.msra.mxu0 0.0
        %476 = vmatprep.subr.mxu0 0.0
        %477 = vmatpush1.msra.mxu0 0.0
        %478 = vmatprep.subr.mxu0 0.0
        %479 = vmatpush1.msra.mxu0 0.0
        %480 = vmatprep.subr.mxu0 0.0
        %481 = vmatpush1.msra.mxu0 0.0
        %482 = vmatprep.subr.mxu0 0.0
        %483 = vmatpush1.msra.mxu0 0.0
        %484 = vmatprep.subr.mxu0 0.0
        %485 = vmatpush1.msra.mxu0 0.0
        %486 = vmatprep.subr.mxu0 0.0
        %487 = vmatpush1.msra.mxu0 0.0
        %488 = vmatprep.mubr.f32.mxu0 0.0
        %489 = vmatmul.mubr.f32.gmra.mrb[0].mxu0 %v422
        %v490 = vpop.f32.mrb[0].mxu0
        %v491 = vadd.f32 0.0, %v490
        %v492 = vpop.f32.mrb[0].mxu0
        %493 = vdwg.mxu0
        %v494 = vrot.slane %v347, 2
        %v495 = vsel %vm265, %v494, 0
        %497 = vmatprep.subr.mxu0 0.0
        %498 = vmatpush1.msra.mxu0 %v226
        %499 = vmatprep.subr.mxu0 0.0
        %500 = vmatpush1.msra.mxu0 %v227
        %501 = vmatprep.subr.mxu0 0.0
        %502 = vmatpush1.msra.mxu0 0.0
        %503 = vmatprep.subr.mxu0 0.0
        %504 = vmatpush1.msra.mxu0 0.0
        %505 = vmatprep.subr.mxu0 0.0
        %506 = vmatpush1.msra.mxu0 0.0
        %507 = vmatprep.subr.mxu0 0.0
        %508 = vmatpush1.msra.mxu0 0.0
        %509 = vmatprep.subr.mxu0 0.0
        %510 = vmatpush1.msra.mxu0 0.0
        %511 = vmatprep.subr.mxu0 0.0
        %512 = vmatpush1.msra.mxu0 0.0
        %513 = vmatprep.subr.mxu0 0.0
        %514 = vmatpush1.msra.mxu0 0.0
        %515 = vmatprep.subr.mxu0 0.0
        %516 = vmatpush1.msra.mxu0 0.0
        %517 = vmatprep.subr.mxu0 0.0
        %518 = vmatpush1.msra.mxu0 0.0
        %519 = vmatprep.subr.mxu0 0.0
        %520 = vmatpush1.msra.mxu0 0.0
        %521 = vmatprep.subr.mxu0 0.0
        %522 = vmatpush1.msra.mxu0 0.0
        %523 = vmatprep.subr.mxu0 0.0
        %524 = vmatpush1.msra.mxu0 0.0
        %525 = vmatprep.subr.mxu0 0.0
        %526 = vmatpush1.msra.mxu0 0.0
        %527 = vmatprep.subr.mxu0 0.0
        %528 = vmatpush1.msra.mxu0 0.0
        %529 = vmatprep.subr.mxu0 0.0
        %530 = vmatpush1.msra.mxu0 0.0
        %531 = vmatprep.subr.mxu0 0.0
        %532 = vmatpush1.msra.mxu0 0.0
        %533 = vmatprep.subr.mxu0 0.0
        %534 = vmatpush1.msra.mxu0 0.0
        %535 = vmatprep.subr.mxu0 0.0
        %536 = vmatpush1.msra.mxu0 0.0
        %537 = vmatprep.subr.mxu0 0.0
        %538 = vmatpush1.msra.mxu0 0.0
        %539 = vmatprep.subr.mxu0 0.0
        %540 = vmatpush1.msra.mxu0 0.0
        %541 = vmatprep.subr.mxu0 0.0
        %542 = vmatpush1.msra.mxu0 0.0
        %543 = vmatprep.subr.mxu0 0.0
        %544 = vmatpush1.msra.mxu0 0.0
        %545 = vmatprep.subr.mxu0 0.0
        %546 = vmatpush1.msra.mxu0 0.0
        %547 = vmatprep.subr.mxu0 0.0
        %548 = vmatpush1.msra.mxu0 0.0
        %549 = vmatprep.subr.mxu0 0.0
        %550 = vmatpush1.msra.mxu0 0.0
        %551 = vmatprep.subr.mxu0 0.0
        %552 = vmatpush1.msra.mxu0 0.0
        %553 = vmatprep.subr.mxu0 0.0
        %554 = vmatpush1.msra.mxu0 0.0
        %555 = vmatprep.subr.mxu0 0.0
        %556 = vmatpush1.msra.mxu0 0.0
        %557 = vmatprep.subr.mxu0 0.0
        %558 = vmatpush1.msra.mxu0 0.0
        %559 = vmatprep.subr.mxu0 0.0
        %560 = vmatpush1.msra.mxu0 0.0
        %561 = vmatprep.mubr.f32.mxu0 0.0
        %562 = vmatmul.mubr.f32.gmra.mrb[0].mxu0 %v495
        %v563 = vpop.f32.mrb[0].mxu0
        %v564 = vadd.f32 0.0, %v563
        %v565 = vpop.f32.mrb[0].mxu0
        %566 = vdwg.mxu0
        %v568 = vsel %vm228, %v564, 0
        %vm570 = vcmask 1043456
        %v572 = vsel %vm570, %v202, 0
        %574 = vmatprep.subr.mxu0 0.0
        %575 = vmatpush1.msra.mxu0 %v572
        %576 = vmatprep.subr.mxu0 0.0
        %577 = vmatpush1.msra.mxu0 0.0
        %578 = vmatprep.subr.mxu0 0.0
        %579 = vmatpush1.msra.mxu0 0.0
        %580 = vmatprep.subr.mxu0 0.0
        %581 = vmatpush1.msra.mxu0 0.0
        %582 = vmatprep.subr.mxu0 0.0
        %583 = vmatpush1.msra.mxu0 0.0
        %584 = vmatprep.subr.mxu0 0.0
        %585 = vmatpush1.msra.mxu0 0.0
        %586 = vmatprep.subr.mxu0 0.0
        %587 = vmatpush1.msra.mxu0 0.0
        %588 = vmatprep.subr.mxu0 0.0
        %589 = vmatpush1.msra.mxu0 0.0
        %590 = vmatprep.subr.mxu0 0.0
        %591 = vmatpush1.msra.mxu0 0.0
        %592 = vmatprep.subr.mxu0 0.0
        %593 = vmatpush1.msra.mxu0 0.0
        %594 = vmatprep.subr.mxu0 0.0
        %595 = vmatpush1.msra.mxu0 0.0
        %596 = vmatprep.subr.mxu0 0.0
        %597 = vmatpush1.msra.mxu0 0.0
        %598 = vmatprep.subr.mxu0 0.0
        %599 = vmatpush1.msra.mxu0 0.0
        %600 = vmatprep.subr.mxu0 0.0
        %601 = vmatpush1.msra.mxu0 0.0
        %602 = vmatprep.subr.mxu0 0.0
        %603 = vmatpush1.msra.mxu0 0.0
        %604 = vmatprep.subr.mxu0 0.0
        %605 = vmatpush1.msra.mxu0 0.0
        %606 = vmatprep.subr.mxu0 0.0
        %607 = vmatpush1.msra.mxu0 0.0
        %608 = vmatprep.subr.mxu0 0.0
        %609 = vmatpush1.msra.mxu0 0.0
        %610 = vmatprep.subr.mxu0 0.0
        %611 = vmatpush1.msra.mxu0 0.0
        %612 = vmatprep.subr.mxu0 0.0
        %613 = vmatpush1.msra.mxu0 0.0
        %614 = vmatprep.subr.mxu0 0.0
        %615 = vmatpush1.msra.mxu0 0.0
        %616 = vmatprep.subr.mxu0 0.0
        %617 = vmatpush1.msra.mxu0 0.0
        %618 = vmatprep.subr.mxu0 0.0
        %619 = vmatpush1.msra.mxu0 0.0
        %620 = vmatprep.subr.mxu0 0.0
        %621 = vmatpush1.msra.mxu0 0.0
        %622 = vmatprep.subr.mxu0 0.0
        %623 = vmatpush1.msra.mxu0 0.0
        %624 = vmatprep.subr.mxu0 0.0
        %625 = vmatpush1.msra.mxu0 0.0
        %626 = vmatprep.subr.mxu0 0.0
        %627 = vmatpush1.msra.mxu0 0.0
        %628 = vmatprep.subr.mxu0 0.0
        %629 = vmatpush1.msra.mxu0 0.0
        %630 = vmatprep.subr.mxu0 0.0
        %631 = vmatpush1.msra.mxu0 0.0
        %632 = vmatprep.subr.mxu0 0.0
        %633 = vmatpush1.msra.mxu0 0.0
        %634 = vmatprep.subr.mxu0 0.0
        %635 = vmatpush1.msra.mxu0 0.0
        %636 = vmatprep.subr.mxu0 0.0
        %637 = vmatpush1.msra.mxu0 0.0
        %638 = vmatprep.mubr.f32.mxu0 0.0
        %639 = vmatmul.mubr.f32.gmra.mrb[0].mxu0 %v568
        %v640 = vpop.f32.mrb[0].mxu0
        %v641 = vadd.f32 0.0, %v640
        %v642 = vpop.f32.mrb[0].mxu0
        %643 = vdwg.mxu0
        %v645 = vsel %vm228, %v418, 0
        %v648 = vsel %vm570, %v208, 0
        %650 = vmatprep.subr.mxu0 0.0
        %651 = vmatpush1.msra.mxu0 %v648
        %652 = vmatprep.subr.mxu0 0.0
        %653 = vmatpush1.msra.mxu0 0.0
        %654 = vmatprep.subr.mxu0 0.0
        %655 = vmatpush1.msra.mxu0 0.0
        %656 = vmatprep.subr.mxu0 0.0
        %657 = vmatpush1.msra.mxu0 0.0
        %658 = vmatprep.subr.mxu0 0.0
        %659 = vmatpush1.msra.mxu0 0.0
        %660 = vmatprep.subr.mxu0 0.0
        %661 = vmatpush1.msra.mxu0 0.0
        %662 = vmatprep.subr.mxu0 0.0
        %663 = vmatpush1.msra.mxu0 0.0
        %664 = vmatprep.subr.mxu0 0.0
        %665 = vmatpush1.msra.mxu0 0.0
        %666 = vmatprep.subr.mxu0 0.0
        %667 = vmatpush1.msra.mxu0 0.0
        %668 = vmatprep.subr.mxu0 0.0
        %669 = vmatpush1.msra.mxu0 0.0
        %670 = vmatprep.subr.mxu0 0.0
        %671 = vmatpush1.msra.mxu0 0.0
        %672 = vmatprep.subr.mxu0 0.0
        %673 = vmatpush1.msra.mxu0 0.0
        %674 = vmatprep.subr.mxu0 0.0
        %675 = vmatpush1.msra.mxu0 0.0
        %676 = vmatprep.subr.mxu0 0.0
        %677 = vmatpush1.msra.mxu0 0.0
        %678 = vmatprep.subr.mxu0 0.0
        %679 = vmatpush1.msra.mxu0 0.0
        %680 = vmatprep.subr.mxu0 0.0
        %681 = vmatpush1.msra.mxu0 0.0
        %682 = vmatprep.subr.mxu0 0.0
        %683 = vmatpush1.msra.mxu0 0.0
        %684 = vmatprep.subr.mxu0 0.0
        %685 = vmatpush1.msra.mxu0 0.0
        %686 = vmatprep.subr.mxu0 0.0
        %687 = vmatpush1.msra.mxu0 0.0
        %688 = vmatprep.subr.mxu0 0.0
        %689 = vmatpush1.msra.mxu0 0.0
        %690 = vmatprep.subr.mxu0 0.0
        %691 = vmatpush1.msra.mxu0 0.0
        %692 = vmatprep.subr.mxu0 0.0
        %693 = vmatpush1.msra.mxu0 0.0
        %694 = vmatprep.subr.mxu0 0.0
        %695 = vmatpush1.msra.mxu0 0.0
        %696 = vmatprep.subr.mxu0 0.0
        %697 = vmatpush1.msra.mxu0 0.0
        %698 = vmatprep.subr.mxu0 0.0
        %699 = vmatpush1.msra.mxu0 0.0
        %700 = vmatprep.subr.mxu0 0.0
        %701 = vmatpush1.msra.mxu0 0.0
        %702 = vmatprep.subr.mxu0 0.0
        %703 = vmatpush1.msra.mxu0 0.0
        %704 = vmatprep.subr.mxu0 0.0
        %705 = vmatpush1.msra.mxu0 0.0
        %706 = vmatprep.subr.mxu0 0.0
        %707 = vmatpush1.msra.mxu0 0.0
        %708 = vmatprep.subr.mxu0 0.0
        %709 = vmatpush1.msra.mxu0 0.0
        %710 = vmatprep.subr.mxu0 0.0
        %711 = vmatpush1.msra.mxu0 0.0
        %712 = vmatprep.subr.mxu0 0.0
        %713 = vmatpush1.msra.mxu0 0.0
        %714 = vmatprep.mubr.f32.mxu0 0.0
        %715 = vmatmul.mubr.f32.gmra.mrb[0].mxu0 %v645
        %v716 = vpop.f32.mrb[0].mxu0
        %v717 = vadd.f32 %v491, %v716
        %v718 = vpop.f32.mrb[0].mxu0
        %719 = vdwg.mxu0
        %v720 = vadd.f32 %v717, %v641
        %v721 = vld [vmem:[#allocation2 + $0x2b0] sm:$0xf]
        %v722 = vld [vmem:[#allocation2 + $0x2b8] sm:$0xf]
        %v724 = vsel %vm228, %v261, 0
        %v727 = vsel %vm570, %v722, 0
        %729 = vmatprep.subr.mxu0 0.0
        %730 = vmatpush1.msra.mxu0 %v727
        %731 = vmatprep.subr.mxu0 0.0
        %732 = vmatpush1.msra.mxu0 0.0
        %733 = vmatprep.subr.mxu0 0.0
        %734 = vmatpush1.msra.mxu0 0.0
        %735 = vmatprep.subr.mxu0 0.0
        %736 = vmatpush1.msra.mxu0 0.0
        %737 = vmatprep.subr.mxu0 0.0
        %738 = vmatpush1.msra.mxu0 0.0
        %739 = vmatprep.subr.mxu0 0.0
        %740 = vmatpush1.msra.mxu0 0.0
        %741 = vmatprep.subr.mxu0 0.0
        %742 = vmatpush1.msra.mxu0 0.0
        %743 = vmatprep.subr.mxu0 0.0
        %744 = vmatpush1.msra.mxu0 0.0
        %745 = vmatprep.subr.mxu0 0.0
        %746 = vmatpush1.msra.mxu0 0.0
        %747 = vmatprep.subr.mxu0 0.0
        %748 = vmatpush1.msra.mxu0 0.0
        %749 = vmatprep.subr.mxu0 0.0
        %750 = vmatpush1.msra.mxu0 0.0
        %751 = vmatprep.subr.mxu0 0.0
        %752 = vmatpush1.msra.mxu0 0.0
        %753 = vmatprep.subr.mxu0 0.0
        %754 = vmatpush1.msra.mxu0 0.0
        %755 = vmatprep.subr.mxu0 0.0
        %756 = vmatpush1.msra.mxu0 0.0
        %757 = vmatprep.subr.mxu0 0.0
        %758 = vmatpush1.msra.mxu0 0.0
        %759 = vmatprep.subr.mxu0 0.0
        %760 = vmatpush1.msra.mxu0 0.0
        %761 = vmatprep.subr.mxu0 0.0
        %762 = vmatpush1.msra.mxu0 0.0
        %763 = vmatprep.subr.mxu0 0.0
        %764 = vmatpush1.msra.mxu0 0.0
        %765 = vmatprep.subr.mxu0 0.0
        %766 = vmatpush1.msra.mxu0 0.0
        %767 = vmatprep.subr.mxu0 0.0
        %768 = vmatpush1.msra.mxu0 0.0
        %769 = vmatprep.subr.mxu0 0.0
        %770 = vmatpush1.msra.mxu0 0.0
        %771 = vmatprep.subr.mxu0 0.0
        %772 = vmatpush1.msra.mxu0 0.0
        %773 = vmatprep.subr.mxu0 0.0
        %774 = vmatpush1.msra.mxu0 0.0
        %775 = vmatprep.subr.mxu0 0.0
        %776 = vmatpush1.msra.mxu0 0.0
        %777 = vmatprep.subr.mxu0 0.0
        %778 = vmatpush1.msra.mxu0 0.0
        %779 = vmatprep.subr.mxu0 0.0
        %780 = vmatpush1.msra.mxu0 0.0
        %781 = vmatprep.subr.mxu0 0.0
        %782 = vmatpush1.msra.mxu0 0.0
        %783 = vmatprep.subr.mxu0 0.0
        %784 = vmatpush1.msra.mxu0 0.0
        %785 = vmatprep.subr.mxu0 0.0
        %786 = vmatpush1.msra.mxu0 0.0
        %787 = vmatprep.subr.mxu0 0.0
        %788 = vmatpush1.msra.mxu0 0.0
        %789 = vmatprep.subr.mxu0 0.0
        %790 = vmatpush1.msra.mxu0 0.0
        %791 = vmatprep.subr.mxu0 0.0
        %792 = vmatpush1.msra.mxu0 0.0
        %793 = vmatprep.mubr.f32.mxu0 0.0
        %794 = vmatmul.mubr.f32.gmra.mrb[0].mxu0 %v724
        %v795 = vpop.f32.mrb[0].mxu0
        %v796 = vadd.f32 0.0, %v795
        %v797 = vpop.f32.mrb[0].mxu0
        %798 = vdwg.mxu0
        %v800 = vsel %vm228, %v720, 0
        %v803 = vsel %vm570, %v721, 0
        %805 = vmatprep.subr.mxu0 0.0
        %806 = vmatpush1.msra.mxu0 %v803
        %807 = vmatprep.subr.mxu0 0.0
        %808 = vmatpush1.msra.mxu0 0.0
        %809 = vmatprep.subr.mxu0 0.0
        %810 = vmatpush1.msra.mxu0 0.0
        %811 = vmatprep.subr.mxu0 0.0
        %812 = vmatpush1.msra.mxu0 0.0
        %813 = vmatprep.subr.mxu0 0.0
        %814 = vmatpush1.msra.mxu0 0.0
        %815 = vmatprep.subr.mxu0 0.0
        %816 = vmatpush1.msra.mxu0 0.0
        %817 = vmatprep.subr.mxu0 0.0
        %818 = vmatpush1.msra.mxu0 0.0
        %819 = vmatprep.subr.mxu0 0.0
        %820 = vmatpush1.msra.mxu0 0.0
        %821 = vmatprep.subr.mxu0 0.0
        %822 = vmatpush1.msra.mxu0 0.0
        %823 = vmatprep.subr.mxu0 0.0
        %824 = vmatpush1.msra.mxu0 0.0
        %825 = vmatprep.subr.mxu0 0.0
        %826 = vmatpush1.msra.mxu0 0.0
        %827 = vmatprep.subr.mxu0 0.0
        %828 = vmatpush1.msra.mxu0 0.0
        %829 = vmatprep.subr.mxu0 0.0
        %830 = vmatpush1.msra.mxu0 0.0
        %831 = vmatprep.subr.mxu0 0.0
        %832 = vmatpush1.msra.mxu0 0.0
        %833 = vmatprep.subr.mxu0 0.0
        %834 = vmatpush1.msra.mxu0 0.0
        %835 = vmatprep.subr.mxu0 0.0
        %836 = vmatpush1.msra.mxu0 0.0
        %837 = vmatprep.subr.mxu0 0.0
        %838 = vmatpush1.msra.mxu0 0.0
        %839 = vmatprep.subr.mxu0 0.0
        %840 = vmatpush1.msra.mxu0 0.0
        %841 = vmatprep.subr.mxu0 0.0
        %842 = vmatpush1.msra.mxu0 0.0
        %843 = vmatprep.subr.mxu0 0.0
        %844 = vmatpush1.msra.mxu0 0.0
        %845 = vmatprep.subr.mxu0 0.0
        %846 = vmatpush1.msra.mxu0 0.0
        %847 = vmatprep.subr.mxu0 0.0
        %848 = vmatpush1.msra.mxu0 0.0
        %849 = vmatprep.subr.mxu0 0.0
        %850 = vmatpush1.msra.mxu0 0.0
        %851 = vmatprep.subr.mxu0 0.0
        %852 = vmatpush1.msra.mxu0 0.0
        %853 = vmatprep.subr.mxu0 0.0
        %854 = vmatpush1.msra.mxu0 0.0
        %855 = vmatprep.subr.mxu0 0.0
        %856 = vmatpush1.msra.mxu0 0.0
        %857 = vmatprep.subr.mxu0 0.0
        %858 = vmatpush1.msra.mxu0 0.0
        %859 = vmatprep.subr.mxu0 0.0
        %860 = vmatpush1.msra.mxu0 0.0
        %861 = vmatprep.subr.mxu0 0.0
        %862 = vmatpush1.msra.mxu0 0.0
        %863 = vmatprep.subr.mxu0 0.0
        %864 = vmatpush1.msra.mxu0 0.0
        %865 = vmatprep.subr.mxu0 0.0
        %866 = vmatpush1.msra.mxu0 0.0
        %867 = vmatprep.subr.mxu0 0.0
        %868 = vmatpush1.msra.mxu0 0.0
        %869 = vmatprep.mubr.f32.mxu0 0.0
        %870 = vmatmul.mubr.f32.gmra.mrb[0].mxu0 %v800
        %v871 = vpop.f32.mrb[0].mxu0
        %v872 = vadd.f32 %v796, %v871
        %v873 = vpop.f32.mrb[0].mxu0
        %874 = vdwg.mxu0
        %v875 = vld [vmem:[#allocation2 + $0x2c0] sm:$0x1]
        %v876 = vadd.f32 %v872, %v875
        %v877 = vmax.f32 %v876, 0.0
        %v878 = vld [vmem:[#allocation2 + $0x2c8] sm:$0xff]
        %v879 = vld [vmem:[#allocation2 + $0x2d0] sm:$0xff]
        %v880 = vld [vmem:[#allocation2 + $0x2d8] sm:$0x1]
        %v882 = vsel %vm265, %v877, 0
        %884 = vmatprep.subr.mxu0 0.0
        %885 = vmatpush1.msra.mxu0 %v878
        %886 = vmatprep.subr.mxu0 0.0
        %887 = vmatpush1.msra.mxu0 %v879
        %888 = vmatprep.subr.mxu0 0.0
        %889 = vmatpush1.msra.mxu0 0.0
        %890 = vmatprep.subr.mxu0 0.0
        %891 = vmatpush1.msra.mxu0 0.0
        %892 = vmatprep.subr.mxu0 0.0
        %893 = vmatpush1.msra.mxu0 0.0
        %894 = vmatprep.subr.mxu0 0.0
        %895 = vmatpush1.msra.mxu0 0.0
        %896 = vmatprep.subr.mxu0 0.0
        %897 = vmatpush1.msra.mxu0 0.0
        %898 = vmatprep.subr.mxu0 0.0
        %899 = vmatpush1.msra.mxu0 0.0
        %900 = vmatprep.subr.mxu0 0.0
        %901 = vmatpush1.msra.mxu0 0.0
        %902 = vmatprep.subr.mxu0 0.0
        %903 = vmatpush1.msra.mxu0 0.0
        %904 = vmatprep.subr.mxu0 0.0
        %905 = vmatpush1.msra.mxu0 0.0
        %906 = vmatprep.subr.mxu0 0.0
        %907 = vmatpush1.msra.mxu0 0.0
        %908 = vmatprep.subr.mxu0 0.0
        %909 = vmatpush1.msra.mxu0 0.0
        %910 = vmatprep.subr.mxu0 0.0
        %911 = vmatpush1.msra.mxu0 0.0
        %912 = vmatprep.subr.mxu0 0.0
        %913 = vmatpush1.msra.mxu0 0.0
        %914 = vmatprep.subr.mxu0 0.0
        %915 = vmatpush1.msra.mxu0 0.0
        %916 = vmatprep.subr.mxu0 0.0
        %917 = vmatpush1.msra.mxu0 0.0
        %918 = vmatprep.subr.mxu0 0.0
        %919 = vmatpush1.msra.mxu0 0.0
        %920 = vmatprep.subr.mxu0 0.0
        %921 = vmatpush1.msra.mxu0 0.0
        %922 = vmatprep.subr.mxu0 0.0
        %923 = vmatpush1.msra.mxu0 0.0
        %924 = vmatprep.subr.mxu0 0.0
        %925 = vmatpush1.msra.mxu0 0.0
        %926 = vmatprep.subr.mxu0 0.0
        %927 = vmatpush1.msra.mxu0 0.0
        %928 = vmatprep.subr.mxu0 0.0
        %929 = vmatpush1.msra.mxu0 0.0
        %930 = vmatprep.subr.mxu0 0.0
        %931 = vmatpush1.msra.mxu0 0.0
        %932 = vmatprep.subr.mxu0 0.0
        %933 = vmatpush1.msra.mxu0 0.0
        %934 = vmatprep.subr.mxu0 0.0
        %935 = vmatpush1.msra.mxu0 0.0
        %936 = vmatprep.subr.mxu0 0.0
        %937 = vmatpush1.msra.mxu0 0.0
        %938 = vmatprep.subr.mxu0 0.0
        %939 = vmatpush1.msra.mxu0 0.0
        %940 = vmatprep.subr.mxu0 0.0
        %941 = vmatpush1.msra.mxu0 0.0
        %942 = vmatprep.subr.mxu0 0.0
        %943 = vmatpush1.msra.mxu0 0.0
        %944 = vmatprep.subr.mxu0 0.0
        %945 = vmatpush1.msra.mxu0 0.0
        %946 = vmatprep.subr.mxu0 0.0
        %947 = vmatpush1.msra.mxu0 0.0
        %948 = vmatprep.mubr.f32.mxu0 0.0
        %949 = vmatmul.mubr.f32.gmra.mrb[0].mxu0 %v882
        %v950 = vpop.f32.mrb[0].mxu0
        %v951 = vadd.f32 %v880, %v950
        %v952 = vpop.f32.mrb[0].mxu0
        %953 = vdwg.mxu0
        %v954 = vmax.f32 %v951, 0.0
        %v955 = vld [vmem:[#allocation2 + $0x2e0] sm:$0xff]
        %v956 = vld [vmem:[#allocation2 + $0x2e8] sm:$0xff]
        %v958 = vsel %vm265, %v954, 0
        %960 = vmatprep.subr.mxu0 0.0
        %961 = vmatpush1.msra.mxu0 %v955
        %962 = vmatprep.subr.mxu0 0.0
        %963 = vmatpush1.msra.mxu0 %v956
        %964 = vmatprep.subr.mxu0 0.0
        %965 = vmatpush1.msra.mxu0 0.0
        %966 = vmatprep.subr.mxu0 0.0
        %967 = vmatpush1.msra.mxu0 0.0
        %968 = vmatprep.subr.mxu0 0.0
        %969 = vmatpush1.msra.mxu0 0.0
        %970 = vmatprep.subr.mxu0 0.0
        %971 = vmatpush1.msra.mxu0 0.0
        %972 = vmatprep.subr.mxu0 0.0
        %973 = vmatpush1.msra.mxu0 0.0
        %974 = vmatprep.subr.mxu0 0.0
        %975 = vmatpush1.msra.mxu0 0.0
        %976 = vmatprep.subr.mxu0 0.0
        %977 = vmatpush1.msra.mxu0 0.0
        %978 = vmatprep.subr.mxu0 0.0
        %979 = vmatpush1.msra.mxu0 0.0
        %980 = vmatprep.subr.mxu0 0.0
        %981 = vmatpush1.msra.mxu0 0.0
        %982 = vmatprep.subr.mxu0 0.0
        %983 = vmatpush1.msra.mxu0 0.0
        %984 = vmatprep.subr.mxu0 0.0
        %985 = vmatpush1.msra.mxu0 0.0
        %986 = vmatprep.subr.mxu0 0.0
        %987 = vmatpush1.msra.mxu0 0.0
        %988 = vmatprep.subr.mxu0 0.0
        %989 = vmatpush1.msra.mxu0 0.0
        %990 = vmatprep.subr.mxu0 0.0
        %991 = vmatpush1.msra.mxu0 0.0
        %992 = vmatprep.subr.mxu0 0.0
        %993 = vmatpush1.msra.mxu0 0.0
        %994 = vmatprep.subr.mxu0 0.0
        %995 = vmatpush1.msra.mxu0 0.0
        %996 = vmatprep.subr.mxu0 0.0
        %997 = vmatpush1.msra.mxu0 0.0
        %998 = vmatprep.subr.mxu0 0.0
        %999 = vmatpush1.msra.mxu0 0.0
        %1000 = vmatprep.subr.mxu0 0.0
        %1001 = vmatpush1.msra.mxu0 0.0
        %1002 = vmatprep.subr.mxu0 0.0
        %1003 = vmatpush1.msra.mxu0 0.0
        %1004 = vmatprep.subr.mxu0 0.0
        %1005 = vmatpush1.msra.mxu0 0.0
        %1006 = vmatprep.subr.mxu0 0.0
        %1007 = vmatpush1.msra.mxu0 0.0
        %1008 = vmatprep.subr.mxu0 0.0
        %1009 = vmatpush1.msra.mxu0 0.0
        %1010 = vmatprep.subr.mxu0 0.0
        %1011 = vmatpush1.msra.mxu0 0.0
        %1012 = vmatprep.subr.mxu0 0.0
        %1013 = vmatpush1.msra.mxu0 0.0
        %1014 = vmatprep.subr.mxu0 0.0
        %1015 = vmatpush1.msra.mxu0 0.0
        %1016 = vmatprep.subr.mxu0 0.0
        %1017 = vmatpush1.msra.mxu0 0.0
        %1018 = vmatprep.subr.mxu0 0.0
        %1019 = vmatpush1.msra.mxu0 0.0
        %1020 = vmatprep.subr.mxu0 0.0
        %1021 = vmatpush1.msra.mxu0 0.0
        %1022 = vmatprep.subr.mxu0 0.0
        %1023 = vmatpush1.msra.mxu0 0.0
        %1024 = vmatprep.mubr.f32.mxu0 0.0
        %1025 = vmatmul.mubr.f32.gmra.mrb[0].mxu0 %v958
        %v1026 = vpop.f32.mrb[0].mxu0
        %v1027 = vadd.f32 0.0, %v1026
        %v1028 = vpop.f32.mrb[0].mxu0
        %1029 = vdwg.mxu0
        %v1030 = vmul.f32 %v1027, 1.442695
        %v1031 = vpow.pop %v1030
        %v1032 = vmul.f32 %v1031, 0.35355338
        %v1033 = vld [vmem:[#allocation2 + $0x2f0] sm:$0x7]
        %v1035 = vsel %vm265, %v1033, 0
        %1037 = vmatprep.subr.mxu0 0.0
        %1038 = vmatpush1.msra.mxu0 %v226
        %1039 = vmatprep.subr.mxu0 0.0
        %1040 = vmatpush1.msra.mxu0 %v227
        %1041 = vmatprep.subr.mxu0 0.0
        %1042 = vmatpush1.msra.mxu0 0.0
        %1043 = vmatprep.subr.mxu0 0.0
        %1044 = vmatpush1.msra.mxu0 0.0
        %1045 = vmatprep.subr.mxu0 0.0
        %1046 = vmatpush1.msra.mxu0 0.0
        %1047 = vmatprep.subr.mxu0 0.0
        %1048 = vmatpush1.msra.mxu0 0.0
        %1049 = vmatprep.subr.mxu0 0.0
        %1050 = vmatpush1.msra.mxu0 0.0
        %1051 = vmatprep.subr.mxu0 0.0
        %1052 = vmatpush1.msra.mxu0 0.0
        %1053 = vmatprep.subr.mxu0 0.0
        %1054 = vmatpush1.msra.mxu0 0.0
        %1055 = vmatprep.subr.mxu0 0.0
        %1056 = vmatpush1.msra.mxu0 0.0
        %1057 = vmatprep.subr.mxu0 0.0
        %1058 = vmatpush1.msra.mxu0 0.0
        %1059 = vmatprep.subr.mxu0 0.0
        %1060 = vmatpush1.msra.mxu0 0.0
        %1061 = vmatprep.subr.mxu0 0.0
        %1062 = vmatpush1.msra.mxu0 0.0
        %1063 = vmatprep.subr.mxu0 0.0
        %1064 = vmatpush1.msra.mxu0 0.0
        %1065 = vmatprep.subr.mxu0 0.0
        %1066 = vmatpush1.msra.mxu0 0.0
        %1067 = vmatprep.subr.mxu0 0.0
        %1068 = vmatpush1.msra.mxu0 0.0
        %1069 = vmatprep.subr.mxu0 0.0
        %1070 = vmatpush1.msra.mxu0 0.0
        %1071 = vmatprep.subr.mxu0 0.0
        %1072 = vmatpush1.msra.mxu0 0.0
        %1073 = vmatprep.subr.mxu0 0.0
        %1074 = vmatpush1.msra.mxu0 0.0
        %1075 = vmatprep.subr.mxu0 0.0
        %1076 = vmatpush1.msra.mxu0 0.0
        %1077 = vmatprep.subr.mxu0 0.0
        %1078 = vmatpush1.msra.mxu0 0.0
        %1079 = vmatprep.subr.mxu0 0.0
        %1080 = vmatpush1.msra.mxu0 0.0
        %1081 = vmatprep.subr.mxu0 0.0
        %1082 = vmatpush1.msra.mxu0 0.0
        %1083 = vmatprep.subr.mxu0 0.0
        %1084 = vmatpush1.msra.mxu0 0.0
        %1085 = vmatprep.subr.mxu0 0.0
        %1086 = vmatpush1.msra.mxu0 0.0
        %1087 = vmatprep.subr.mxu0 0.0
        %1088 = vmatpush1.msra.mxu0 0.0
        %1089 = vmatprep.subr.mxu0 0.0
        %1090 = vmatpush1.msra.mxu0 0.0
        %1091 = vmatprep.subr.mxu0 0.0
        %1092 = vmatpush1.msra.mxu0 0.0
        %1093 = vmatprep.subr.mxu0 0.0
        %1094 = vmatpush1.msra.mxu0 0.0
        %1095 = vmatprep.subr.mxu0 0.0
        %1096 = vmatpush1.msra.mxu0 0.0
        %1097 = vmatprep.subr.mxu0 0.0
        %1098 = vmatpush1.msra.mxu0 0.0
        %1099 = vmatprep.subr.mxu0 0.0
        %1100 = vmatpush1.msra.mxu0 0.0
        %1101 = vmatprep.mubr.f32.mxu0 0.0
        %1102 = vmatmul.mubr.f32.gmra.mrb[0].mxu0 %v1035
        %v1103 = vpop.f32.mrb[0].mxu0
        %v1104 = vadd.f32 0.0, %v1103
        %v1105 = vpop.f32.mrb[0].mxu0
        %1106 = vdwg.mxu0
        %v1107 = vrot.slane %v1033, 1
        %v1108 = vsel %vm265, %v1107, 0
        %1110 = vmatprep.subr.mxu0 0.0
        %1111 = vmatpush1.msra.mxu0 %v226
        %1112 = vmatprep.subr.mxu0 0.0
        %1113 = vmatpush1.msra.mxu0 %v227
        %1114 = vmatprep.subr.mxu0 0.0
        %1115 = vmatpush1.msra.mxu0 0.0
        %1116 = vmatprep.subr.mxu0 0.0
        %1117 = vmatpush1.msra.mxu0 0.0
        %1118 = vmatprep.subr.mxu0 0.0
        %1119 = vmatpush1.msra.mxu0 0.0
        %1120 = vmatprep.subr.mxu0 0.0
        %1121 = vmatpush1.msra.mxu0 0.0
        %1122 = vmatprep.subr.mxu0 0.0
        %1123 = vmatpush1.msra.mxu0 0.0
        %1124 = vmatprep.subr.mxu0 0.0
        %1125 = vmatpush1.msra.mxu0 0.0
        %1126 = vmatprep.subr.mxu0 0.0
        %1127 = vmatpush1.msra.mxu0 0.0
        %1128 = vmatprep.subr.mxu0 0.0
        %1129 = vmatpush1.msra.mxu0 0.0
        %1130 = vmatprep.subr.mxu0 0.0
        %1131 = vmatpush1.msra.mxu0 0.0
        %1132 = vmatprep.subr.mxu0 0.0
        %1133 = vmatpush1.msra.mxu0 0.0
        %1134 = vmatprep.subr.mxu0 0.0
        %1135 = vmatpush1.msra.mxu0 0.0
        %1136 = vmatprep.subr.mxu0 0.0
        %1137 = vmatpush1.msra.mxu0 0.0
        %1138 = vmatprep.subr.mxu0 0.0
        %1139 = vmatpush1.msra.mxu0 0.0
        %1140 = vmatprep.subr.mxu0 0.0
        %1141 = vmatpush1.msra.mxu0 0.0
        %1142 = vmatprep.subr.mxu0 0.0
        %1143 = vmatpush1.msra.mxu0 0.0
        %1144 = vmatprep.subr.mxu0 0.0
        %1145 = vmatpush1.msra.mxu0 0.0
        %1146 = vmatprep.subr.mxu0 0.0
        %1147 = vmatpush1.msra.mxu0 0.0
        %1148 = vmatprep.subr.mxu0 0.0
        %1149 = vmatpush1.msra.mxu0 0.0
        %1150 = vmatprep.subr.mxu0 0.0
        %1151 = vmatpush1.msra.mxu0 0.0
        %1152 = vmatprep.subr.mxu0 0.0
        %1153 = vmatpush1.msra.mxu0 0.0
        %1154 = vmatprep.subr.mxu0 0.0
        %1155 = vmatpush1.msra.mxu0 0.0
        %1156 = vmatprep.subr.mxu0 0.0
        %1157 = vmatpush1.msra.mxu0 0.0
        %1158 = vmatprep.subr.mxu0 0.0
        %1159 = vmatpush1.msra.mxu0 0.0
        %1160 = vmatprep.subr.mxu0 0.0
        %1161 = vmatpush1.msra.mxu0 0.0
        %1162 = vmatprep.subr.mxu0 0.0
        %1163 = vmatpush1.msra.mxu0 0.0
        %1164 = vmatprep.subr.mxu0 0.0
        %1165 = vmatpush1.msra.mxu0 0.0
        %1166 = vmatprep.subr.mxu0 0.0
        %1167 = vmatpush1.msra.mxu0 0.0
        %1168 = vmatprep.subr.mxu0 0.0
        %1169 = vmatpush1.msra.mxu0 0.0
        %1170 = vmatprep.subr.mxu0 0.0
        %1171 = vmatpush1.msra.mxu0 0.0
        %1172 = vmatprep.subr.mxu0 0.0
        %1173 = vmatpush1.msra.mxu0 0.0
        %1174 = vmatprep.mubr.f32.mxu0 0.0
        %1175 = vmatmul.mubr.f32.gmra.mrb[0].mxu0 %v1108
        %v1176 = vpop.f32.mrb[0].mxu0
        %v1177 = vadd.f32 0.0, %v1176
        %v1178 = vpop.f32.mrb[0].mxu0
        %1179 = vdwg.mxu0
        %v1180 = vrot.slane %v1033, 2
        %v1181 = vsel %vm265, %v1180, 0
        %1183 = vmatprep.subr.mxu0 0.0
        %1184 = vmatpush1.msra.mxu0 %v226
        %1185 = vmatprep.subr.mxu0 0.0
        %1186 = vmatpush1.msra.mxu0 %v227
        %1187 = vmatprep.subr.mxu0 0.0
        %1188 = vmatpush1.msra.mxu0 0.0
        %1189 = vmatprep.subr.mxu0 0.0
        %1190 = vmatpush1.msra.mxu0 0.0
        %1191 = vmatprep.subr.mxu0 0.0
        %1192 = vmatpush1.msra.mxu0 0.0
        %1193 = vmatprep.subr.mxu0 0.0
        %1194 = vmatpush1.msra.mxu0 0.0
        %1195 = vmatprep.subr.mxu0 0.0
        %1196 = vmatpush1.msra.mxu0 0.0
        %1197 = vmatprep.subr.mxu0 0.0
        %1198 = vmatpush1.msra.mxu0 0.0
        %1199 = vmatprep.subr.mxu0 0.0
        %1200 = vmatpush1.msra.mxu0 0.0
        %1201 = vmatprep.subr.mxu0 0.0
        %1202 = vmatpush1.msra.mxu0 0.0
        %1203 = vmatprep.subr.mxu0 0.0
        %1204 = vmatpush1.msra.mxu0 0.0
        %1205 = vmatprep.subr.mxu0 0.0
        %1206 = vmatpush1.msra.mxu0 0.0
        %1207 = vmatprep.subr.mxu0 0.0
        %1208 = vmatpush1.msra.mxu0 0.0
        %1209 = vmatprep.subr.mxu0 0.0
        %1210 = vmatpush1.msra.mxu0 0.0
        %1211 = vmatprep.subr.mxu0 0.0
        %1212 = vmatpush1.msra.mxu0 0.0
        %1213 = vmatprep.subr.mxu0 0.0
        %1214 = vmatpush1.msra.mxu0 0.0
        %1215 = vmatprep.subr.mxu0 0.0
        %1216 = vmatpush1.msra.mxu0 0.0
        %1217 = vmatprep.subr.mxu0 0.0
        %1218 = vmatpush1.msra.mxu0 0.0
        %1219 = vmatprep.subr.mxu0 0.0
        %1220 = vmatpush1.msra.mxu0 0.0
        %1221 = vmatprep.subr.mxu0 0.0
        %1222 = vmatpush1.msra.mxu0 0.0
        %1223 = vmatprep.subr.mxu0 0.0
        %1224 = vmatpush1.msra.mxu0 0.0
        %1225 = vmatprep.subr.mxu0 0.0
        %1226 = vmatpush1.msra.mxu0 0.0
        %1227 = vmatprep.subr.mxu0 0.0
        %1228 = vmatpush1.msra.mxu0 0.0
        %1229 = vmatprep.subr.mxu0 0.0
        %1230 = vmatpush1.msra.mxu0 0.0
        %1231 = vmatprep.subr.mxu0 0.0
        %1232 = vmatpush1.msra.mxu0 0.0
        %1233 = vmatprep.subr.mxu0 0.0
        %1234 = vmatpush1.msra.mxu0 0.0
        %1235 = vmatprep.subr.mxu0 0.0
        %1236 = vmatpush1.msra.mxu0 0.0
        %1237 = vmatprep.subr.mxu0 0.0
        %1238 = vmatpush1.msra.mxu0 0.0
        %1239 = vmatprep.subr.mxu0 0.0
        %1240 = vmatpush1.msra.mxu0 0.0
        %1241 = vmatprep.subr.mxu0 0.0
        %1242 = vmatpush1.msra.mxu0 0.0
        %1243 = vmatprep.subr.mxu0 0.0
        %1244 = vmatpush1.msra.mxu0 0.0
        %1245 = vmatprep.subr.mxu0 0.0
        %1246 = vmatpush1.msra.mxu0 0.0
        %1247 = vmatprep.mubr.f32.mxu0 0.0
        %1248 = vmatmul.mubr.f32.gmra.mrb[0].mxu0 %v1181
        %v1249 = vpop.f32.mrb[0].mxu0
        %v1250 = vadd.f32 0.0, %v1249
        %v1251 = vpop.f32.mrb[0].mxu0
        %1252 = vdwg.mxu0
        %v1254 = vsel %vm228, %v1250, 0
        %1256 = vmatprep.subr.mxu0 0.0
        %1257 = vmatpush1.msra.mxu0 %v572
        %1258 = vmatprep.subr.mxu0 0.0
        %1259 = vmatpush1.msra.mxu0 0.0
        %1260 = vmatprep.subr.mxu0 0.0
        %1261 = vmatpush1.msra.mxu0 0.0
        %1262 = vmatprep.subr.mxu0 0.0
        %1263 = vmatpush1.msra.mxu0 0.0
        %1264 = vmatprep.subr.mxu0 0.0
        %1265 = vmatpush1.msra.mxu0 0.0
        %1266 = vmatprep.subr.mxu0 0.0
        %1267 = vmatpush1.msra.mxu0 0.0
        %1268 = vmatprep.subr.mxu0 0.0
        %1269 = vmatpush1.msra.mxu0 0.0
        %1270 = vmatprep.subr.mxu0 0.0
        %1271 = vmatpush1.msra.mxu0 0.0
        %1272 = vmatprep.subr.mxu0 0.0
        %1273 = vmatpush1.msra.mxu0 0.0
        %1274 = vmatprep.subr.mxu0 0.0
        %1275 = vmatpush1.msra.mxu0 0.0
        %1276 = vmatprep.subr.mxu0 0.0
        %1277 = vmatpush1.msra.mxu0 0.0
        %1278 = vmatprep.subr.mxu0 0.0
        %1279 = vmatpush1.msra.mxu0 0.0
        %1280 = vmatprep.subr.mxu0 0.0
        %1281 = vmatpush1.msra.mxu0 0.0
        %1282 = vmatprep.subr.mxu0 0.0
        %1283 = vmatpush1.msra.mxu0 0.0
        %1284 = vmatprep.subr.mxu0 0.0
        %1285 = vmatpush1.msra.mxu0 0.0
        %1286 = vmatprep.subr.mxu0 0.0
        %1287 = vmatpush1.msra.mxu0 0.0
        %1288 = vmatprep.subr.mxu0 0.0
        %1289 = vmatpush1.msra.mxu0 0.0
        %1290 = vmatprep.subr.mxu0 0.0
        %1291 = vmatpush1.msra.mxu0 0.0
        %1292 = vmatprep.subr.mxu0 0.0
        %1293 = vmatpush1.msra.mxu0 0.0
        %1294 = vmatprep.subr.mxu0 0.0
        %1295 = vmatpush1.msra.mxu0 0.0
        %1296 = vmatprep.subr.mxu0 0.0
        %1297 = vmatpush1.msra.mxu0 0.0
        %1298 = vmatprep.subr.mxu0 0.0
        %1299 = vmatpush1.msra.mxu0 0.0
        %1300 = vmatprep.subr.mxu0 0.0
        %1301 = vmatpush1.msra.mxu0 0.0
        %1302 = vmatprep.subr.mxu0 0.0
        %1303 = vmatpush1.msra.mxu0 0.0
        %1304 = vmatprep.subr.mxu0 0.0
        %1305 = vmatpush1.msra.mxu0 0.0
        %1306 = vmatprep.subr.mxu0 0.0
        %1307 = vmatpush1.msra.mxu0 0.0
        %1308 = vmatprep.subr.mxu0 0.0
        %1309 = vmatpush1.msra.mxu0 0.0
        %1310 = vmatprep.subr.mxu0 0.0
        %1311 = vmatpush1.msra.mxu0 0.0
        %1312 = vmatprep.subr.mxu0 0.0
        %1313 = vmatpush1.msra.mxu0 0.0
        %1314 = vmatprep.subr.mxu0 0.0
        %1315 = vmatpush1.msra.mxu0 0.0
        %1316 = vmatprep.subr.mxu0 0.0
        %1317 = vmatpush1.msra.mxu0 0.0
        %1318 = vmatprep.subr.mxu0 0.0
        %1319 = vmatpush1.msra.mxu0 0.0
        %1320 = vmatprep.mubr.f32.mxu0 0.0
        %1321 = vmatmul.mubr.f32.gmra.mrb[0].mxu0 %v1254
        %v1322 = vpop.f32.mrb[0].mxu0
        %v1323 = vadd.f32 0.0, %v1322
        %v1324 = vpop.f32.mrb[0].mxu0
        %1325 = vdwg.mxu0
        %v1327 = vsel %vm228, %v1104, 0
        %1329 = vmatprep.subr.mxu0 0.0
        %1330 = vmatpush1.msra.mxu0 %v648
        %1331 = vmatprep.subr.mxu0 0.0
        %1332 = vmatpush1.msra.mxu0 0.0
        %1333 = vmatprep.subr.mxu0 0.0
        %1334 = vmatpush1.msra.mxu0 0.0
        %1335 = vmatprep.subr.mxu0 0.0
        %1336 = vmatpush1.msra.mxu0 0.0
        %1337 = vmatprep.subr.mxu0 0.0
        %1338 = vmatpush1.msra.mxu0 0.0
        %1339 = vmatprep.subr.mxu0 0.0
        %1340 = vmatpush1.msra.mxu0 0.0
        %1341 = vmatprep.subr.mxu0 0.0
        %1342 = vmatpush1.msra.mxu0 0.0
        %1343 = vmatprep.subr.mxu0 0.0
        %1344 = vmatpush1.msra.mxu0 0.0
        %1345 = vmatprep.subr.mxu0 0.0
        %1346 = vmatpush1.msra.mxu0 0.0
        %1347 = vmatprep.subr.mxu0 0.0
        %1348 = vmatpush1.msra.mxu0 0.0
        %1349 = vmatprep.subr.mxu0 0.0
        %1350 = vmatpush1.msra.mxu0 0.0
        %1351 = vmatprep.subr.mxu0 0.0
        %1352 = vmatpush1.msra.mxu0 0.0
        %1353 = vmatprep.subr.mxu0 0.0
        %1354 = vmatpush1.msra.mxu0 0.0
        %1355 = vmatprep.subr.mxu0 0.0
        %1356 = vmatpush1.msra.mxu0 0.0
        %1357 = vmatprep.subr.mxu0 0.0
        %1358 = vmatpush1.msra.mxu0 0.0
        %1359 = vmatprep.subr.mxu0 0.0
        %1360 = vmatpush1.msra.mxu0 0.0
        %1361 = vmatprep.subr.mxu0 0.0
        %1362 = vmatpush1.msra.mxu0 0.0
        %1363 = vmatprep.subr.mxu0 0.0
        %1364 = vmatpush1.msra.mxu0 0.0
        %1365 = vmatprep.subr.mxu0 0.0
        %1366 = vmatpush1.msra.mxu0 0.0
        %1367 = vmatprep.subr.mxu0 0.0
        %1368 = vmatpush1.msra.mxu0 0.0
        %1369 = vmatprep.subr.mxu0 0.0
        %1370 = vmatpush1.msra.mxu0 0.0
        %1371 = vmatprep.subr.mxu0 0.0
        %1372 = vmatpush1.msra.mxu0 0.0
        %1373 = vmatprep.subr.mxu0 0.0
        %1374 = vmatpush1.msra.mxu0 0.0
        %1375 = vmatprep.subr.mxu0 0.0
        %1376 = vmatpush1.msra.mxu0 0.0
        %1377 = vmatprep.subr.mxu0 0.0
        %1378 = vmatpush1.msra.mxu0 0.0
        %1379 = vmatprep.subr.mxu0 0.0
        %1380 = vmatpush1.msra.mxu0 0.0
        %1381 = vmatprep.subr.mxu0 0.0
        %1382 = vmatpush1.msra.mxu0 0.0
        %1383 = vmatprep.subr.mxu0 0.0
        %1384 = vmatpush1.msra.mxu0 0.0
        %1385 = vmatprep.subr.mxu0 0.0
        %1386 = vmatpush1.msra.mxu0 0.0
        %1387 = vmatprep.subr.mxu0 0.0
        %1388 = vmatpush1.msra.mxu0 0.0
        %1389 = vmatprep.subr.mxu0 0.0
        %1390 = vmatpush1.msra.mxu0 0.0
        %1391 = vmatprep.subr.mxu0 0.0
        %1392 = vmatpush1.msra.mxu0 0.0
        %1393 = vmatprep.mubr.f32.mxu0 0.0
        %1394 = vmatmul.mubr.f32.gmra.mrb[0].mxu0 %v1327
        %v1395 = vpop.f32.mrb[0].mxu0
        %v1396 = vadd.f32 %v1177, %v1395
        %v1397 = vpop.f32.mrb[0].mxu0
        %1398 = vdwg.mxu0
        %v1399 = vadd.f32 %v1396, %v1323
        %v1400 = vld [vmem:[#allocation2 + $0x2f8] sm:$0xf]
        %v1401 = vld [vmem:[#allocation2 + $0x300] sm:$0xf]
        %v1403 = vsel %vm228, %v239, 0
        %v1406 = vsel %vm570, %v1401, 0
        %1408 = vmatprep.subr.mxu0 0.0
        %1409 = vmatpush1.msra.mxu0 %v1406
        %1410 = vmatprep.subr.mxu0 0.0
        %1411 = vmatpush1.msra.mxu0 0.0
        %1412 = vmatprep.subr.mxu0 0.0
        %1413 = vmatpush1.msra.mxu0 0.0
        %1414 = vmatprep.subr.mxu0 0.0
        %1415 = vmatpush1.msra.mxu0 0.0
        %1416 = vmatprep.subr.mxu0 0.0
        %1417 = vmatpush1.msra.mxu0 0.0
        %1418 = vmatprep.subr.mxu0 0.0
        %1419 = vmatpush1.msra.mxu0 0.0
        %1420 = vmatprep.subr.mxu0 0.0
        %1421 = vmatpush1.msra.mxu0 0.0
        %1422 = vmatprep.subr.mxu0 0.0
        %1423 = vmatpush1.msra.mxu0 0.0
        %1424 = vmatprep.subr.mxu0 0.0
        %1425 = vmatpush1.msra.mxu0 0.0
        %1426 = vmatprep.subr.mxu0 0.0
        %1427 = vmatpush1.msra.mxu0 0.0
        %1428 = vmatprep.subr.mxu0 0.0
        %1429 = vmatpush1.msra.mxu0 0.0
        %1430 = vmatprep.subr.mxu0 0.0
        %1431 = vmatpush1.msra.mxu0 0.0
        %1432 = vmatprep.subr.mxu0 0.0
        %1433 = vmatpush1.msra.mxu0 0.0
        %1434 = vmatprep.subr.mxu0 0.0
        %1435 = vmatpush1.msra.mxu0 0.0
        %1436 = vmatprep.subr.mxu0 0.0
        %1437 = vmatpush1.msra.mxu0 0.0
        %1438 = vmatprep.subr.mxu0 0.0
        %1439 = vmatpush1.msra.mxu0 0.0
        %1440 = vmatprep.subr.mxu0 0.0
        %1441 = vmatpush1.msra.mxu0 0.0
        %1442 = vmatprep.subr.mxu0 0.0
        %1443 = vmatpush1.msra.mxu0 0.0
        %1444 = vmatprep.subr.mxu0 0.0
        %1445 = vmatpush1.msra.mxu0 0.0
        %1446 = vmatprep.subr.mxu0 0.0
        %1447 = vmatpush1.msra.mxu0 0.0
        %1448 = vmatprep.subr.mxu0 0.0
        %1449 = vmatpush1.msra.mxu0 0.0
        %1450 = vmatprep.subr.mxu0 0.0
        %1451 = vmatpush1.msra.mxu0 0.0
        %1452 = vmatprep.subr.mxu0 0.0
        %1453 = vmatpush1.msra.mxu0 0.0
        %1454 = vmatprep.subr.mxu0 0.0
        %1455 = vmatpush1.msra.mxu0 0.0
        %1456 = vmatprep.subr.mxu0 0.0
        %1457 = vmatpush1.msra.mxu0 0.0
        %1458 = vmatprep.subr.mxu0 0.0
        %1459 = vmatpush1.msra.mxu0 0.0
        %1460 = vmatprep.subr.mxu0 0.0
        %1461 = vmatpush1.msra.mxu0 0.0
        %1462 = vmatprep.subr.mxu0 0.0
        %1463 = vmatpush1.msra.mxu0 0.0
        %1464 = vmatprep.subr.mxu0 0.0
        %1465 = vmatpush1.msra.mxu0 0.0
        %1466 = vmatprep.subr.mxu0 0.0
        %1467 = vmatpush1.msra.mxu0 0.0
        %1468 = vmatprep.subr.mxu0 0.0
        %1469 = vmatpush1.msra.mxu0 0.0
        %1470 = vmatprep.subr.mxu0 0.0
        %1471 = vmatpush1.msra.mxu0 0.0
        %1472 = vmatprep.mubr.f32.mxu0 0.0
        %1473 = vmatmul.mubr.f32.gmra.mrb[0].mxu0 %v1403
        %v1474 = vpop.f32.mrb[0].mxu0
        %v1475 = vadd.f32 0.0, %v1474
        %v1476 = vpop.f32.mrb[0].mxu0
        %1477 = vdwg.mxu0
        %v1479 = vsel %vm228, %v1399, 0
        %v1482 = vsel %vm570, %v1400, 0
        %1484 = vmatprep.subr.mxu0 0.0
        %1485 = vmatpush1.msra.mxu0 %v1482
        %1486 = vmatprep.subr.mxu0 0.0
        %1487 = vmatpush1.msra.mxu0 0.0
        %1488 = vmatprep.subr.mxu0 0.0
        %1489 = vmatpush1.msra.mxu0 0.0
        %1490 = vmatprep.subr.mxu0 0.0
        %1491 = vmatpush1.msra.mxu0 0.0
        %1492 = vmatprep.subr.mxu0 0.0
        %1493 = vmatpush1.msra.mxu0 0.0
        %1494 = vmatprep.subr.mxu0 0.0
        %1495 = vmatpush1.msra.mxu0 0.0
        %1496 = vmatprep.subr.mxu0 0.0
        %1497 = vmatpush1.msra.mxu0 0.0
        %1498 = vmatprep.subr.mxu0 0.0
        %1499 = vmatpush1.msra.mxu0 0.0
        %1500 = vmatprep.subr.mxu0 0.0
        %1501 = vmatpush1.msra.mxu0 0.0
        %1502 = vmatprep.subr.mxu0 0.0
        %1503 = vmatpush1.msra.mxu0 0.0
        %1504 = vmatprep.subr.mxu0 0.0
        %1505 = vmatpush1.msra.mxu0 0.0
        %1506 = vmatprep.subr.mxu0 0.0
        %1507 = vmatpush1.msra.mxu0 0.0
        %1508 = vmatprep.subr.mxu0 0.0
        %1509 = vmatpush1.msra.mxu0 0.0
        %1510 = vmatprep.subr.mxu0 0.0
        %1511 = vmatpush1.msra.mxu0 0.0
        %1512 = vmatprep.subr.mxu0 0.0
        %1513 = vmatpush1.msra.mxu0 0.0
        %1514 = vmatprep.subr.mxu0 0.0
        %1515 = vmatpush1.msra.mxu0 0.0
        %1516 = vmatprep.subr.mxu0 0.0
        %1517 = vmatpush1.msra.mxu0 0.0
        %1518 = vmatprep.subr.mxu0 0.0
        %1519 = vmatpush1.msra.mxu0 0.0
        %1520 = vmatprep.subr.mxu0 0.0
        %1521 = vmatpush1.msra.mxu0 0.0
        %1522 = vmatprep.subr.mxu0 0.0
        %1523 = vmatpush1.msra.mxu0 0.0
        %1524 = vmatprep.subr.mxu0 0.0
        %1525 = vmatpush1.msra.mxu0 0.0
        %1526 = vmatprep.subr.mxu0 0.0
        %1527 = vmatpush1.msra.mxu0 0.0
        %1528 = vmatprep.subr.mxu0 0.0
        %1529 = vmatpush1.msra.mxu0 0.0
        %1530 = vmatprep.subr.mxu0 0.0
        %1531 = vmatpush1.msra.mxu0 0.0
        %1532 = vmatprep.subr.mxu0 0.0
        %1533 = vmatpush1.msra.mxu0 0.0
        %1534 = vmatprep.subr.mxu0 0.0
        %1535 = vmatpush1.msra.mxu0 0.0
        %1536 = vmatprep.subr.mxu0 0.0
        %1537 = vmatpush1.msra.mxu0 0.0
        %1538 = vmatprep.subr.mxu0 0.0
        %1539 = vmatpush1.msra.mxu0 0.0
        %1540 = vmatprep.subr.mxu0 0.0
        %1541 = vmatpush1.msra.mxu0 0.0
        %1542 = vmatprep.subr.mxu0 0.0
        %1543 = vmatpush1.msra.mxu0 0.0
        %1544 = vmatprep.subr.mxu0 0.0
        %1545 = vmatpush1.msra.mxu0 0.0
        %1546 = vmatprep.subr.mxu0 0.0
        %1547 = vmatpush1.msra.mxu0 0.0
        %1548 = vmatprep.mubr.f32.mxu0 0.0
        %1549 = vmatmul.mubr.f32.gmra.mrb[0].mxu0 %v1479
        %v1550 = vpop.f32.mrb[0].mxu0
        %v1551 = vadd.f32 %v1475, %v1550
        %v1552 = vpop.f32.mrb[0].mxu0
        %1553 = vdwg.mxu0
        %v1554 = vld [vmem:[#allocation2 + $0x308] sm:$0x1]
        %v1555 = vadd.f32 %v1551, %v1554
        %v1556 = vmax.f32 %v1555, 0.0
        %v1557 = vld [vmem:[#allocation2 + $0x310] sm:$0xff]
        %v1558 = vld [vmem:[#allocation2 + $0x318] sm:$0xff]
        %v1559 = vld [vmem:[#allocation2 + $0x320] sm:$0x1]
        %v1561 = vsel %vm265, %v1556, 0
        %1563 = vmatprep.subr.mxu0 0.0
        %1564 = vmatpush1.msra.mxu0 %v1557
        %1565 = vmatprep.subr.mxu0 0.0
        %1566 = vmatpush1.msra.mxu0 %v1558
        %1567 = vmatprep.subr.mxu0 0.0
        %1568 = vmatpush1.msra.mxu0 0.0
        %1569 = vmatprep.subr.mxu0 0.0
        %1570 = vmatpush1.msra.mxu0 0.0
        %1571 = vmatprep.subr.mxu0 0.0
        %1572 = vmatpush1.msra.mxu0 0.0
        %1573 = vmatprep.subr.mxu0 0.0
        %1574 = vmatpush1.msra.mxu0 0.0
        %1575 = vmatprep.subr.mxu0 0.0
        %1576 = vmatpush1.msra.mxu0 0.0
        %1577 = vmatprep.subr.mxu0 0.0
        %1578 = vmatpush1.msra.mxu0 0.0
        %1579 = vmatprep.subr.mxu0 0.0
        %1580 = vmatpush1.msra.mxu0 0.0
        %1581 = vmatprep.subr.mxu0 0.0
        %1582 = vmatpush1.msra.mxu0 0.0
        %1583 = vmatprep.subr.mxu0 0.0
        %1584 = vmatpush1.msra.mxu0 0.0
        %1585 = vmatprep.subr.mxu0 0.0
        %1586 = vmatpush1.msra.mxu0 0.0
        %1587 = vmatprep.subr.mxu0 0.0
        %1588 = vmatpush1.msra.mxu0 0.0
        %1589 = vmatprep.subr.mxu0 0.0
        %1590 = vmatpush1.msra.mxu0 0.0
        %1591 = vmatprep.subr.mxu0 0.0
        %1592 = vmatpush1.msra.mxu0 0.0
        %1593 = vmatprep.subr.mxu0 0.0
        %1594 = vmatpush1.msra.mxu0 0.0
        %1595 = vmatprep.subr.mxu0 0.0
        %1596 = vmatpush1.msra.mxu0 0.0
        %1597 = vmatprep.subr.mxu0 0.0
        %1598 = vmatpush1.msra.mxu0 0.0
        %1599 = vmatprep.subr.mxu0 0.0
        %1600 = vmatpush1.msra.mxu0 0.0
        %1601 = vmatprep.subr.mxu0 0.0
        %1602 = vmatpush1.msra.mxu0 0.0
        %1603 = vmatprep.subr.mxu0 0.0
        %1604 = vmatpush1.msra.mxu0 0.0
        %1605 = vmatprep.subr.mxu0 0.0
        %1606 = vmatpush1.msra.mxu0 0.0
        %1607 = vmatprep.subr.mxu0 0.0
        %1608 = vmatpush1.msra.mxu0 0.0
        %1609 = vmatprep.subr.mxu0 0.0
        %1610 = vmatpush1.msra.mxu0 0.0
        %1611 = vmatprep.subr.mxu0 0.0
        %1612 = vmatpush1.msra.mxu0 0.0
        %1613 = vmatprep.subr.mxu0 0.0
        %1614 = vmatpush1.msra.mxu0 0.0
        %1615 = vmatprep.subr.mxu0 0.0
        %1616 = vmatpush1.msra.mxu0 0.0
        %1617 = vmatprep.subr.mxu0 0.0
        %1618 = vmatpush1.msra.mxu0 0.0
        %1619 = vmatprep.subr.mxu0 0.0
        %1620 = vmatpush1.msra.mxu0 0.0
        %1621 = vmatprep.subr.mxu0 0.0
        %1622 = vmatpush1.msra.mxu0 0.0
        %1623 = vmatprep.subr.mxu0 0.0
        %1624 = vmatpush1.msra.mxu0 0.0
        %1625 = vmatprep.subr.mxu0 0.0
        %1626 = vmatpush1.msra.mxu0 0.0
        %1627 = vmatprep.mubr.f32.mxu0 0.0
        %1628 = vmatmul.mubr.f32.gmra.mrb[0].mxu0 %v1561
        %v1629 = vpop.f32.mrb[0].mxu0
        %v1630 = vadd.f32 %v1559, %v1629
        %v1631 = vpop.f32.mrb[0].mxu0
        %1632 = vdwg.mxu0
        %v1633 = vmax.f32 %v1630, 0.0
        %v1634 = vld [vmem:[#allocation2 + $0x328] sm:$0xff]
        %v1635 = vld [vmem:[#allocation2 + $0x330] sm:$0xff]
        %v1637 = vsel %vm265, %v1633, 0
        %1639 = vmatprep.subr.mxu0 0.0
        %1640 = vmatpush1.msra.mxu0 %v1634
        %1641 = vmatprep.subr.mxu0 0.0
        %1642 = vmatpush1.msra.mxu0 %v1635
        %1643 = vmatprep.subr.mxu0 0.0
        %1644 = vmatpush1.msra.mxu0 0.0
        %1645 = vmatprep.subr.mxu0 0.0
        %1646 = vmatpush1.msra.mxu0 0.0
        %1647 = vmatprep.subr.mxu0 0.0
        %1648 = vmatpush1.msra.mxu0 0.0
        %1649 = vmatprep.subr.mxu0 0.0
        %1650 = vmatpush1.msra.mxu0 0.0
        %1651 = vmatprep.subr.mxu0 0.0
        %1652 = vmatpush1.msra.mxu0 0.0
        %1653 = vmatprep.subr.mxu0 0.0
        %1654 = vmatpush1.msra.mxu0 0.0
        %1655 = vmatprep.subr.mxu0 0.0
        %1656 = vmatpush1.msra.mxu0 0.0
        %1657 = vmatprep.subr.mxu0 0.0
        %1658 = vmatpush1.msra.mxu0 0.0
        %1659 = vmatprep.subr.mxu0 0.0
        %1660 = vmatpush1.msra.mxu0 0.0
        %1661 = vmatprep.subr.mxu0 0.0
        %1662 = vmatpush1.msra.mxu0 0.0
        %1663 = vmatprep.subr.mxu0 0.0
        %1664 = vmatpush1.msra.mxu0 0.0
        %1665 = vmatprep.subr.mxu0 0.0
        %1666 = vmatpush1.msra.mxu0 0.0
        %1667 = vmatprep.subr.mxu0 0.0
        %1668 = vmatpush1.msra.mxu0 0.0
        %1669 = vmatprep.subr.mxu0 0.0
        %1670 = vmatpush1.msra.mxu0 0.0
        %1671 = vmatprep.subr.mxu0 0.0
        %1672 = vmatpush1.msra.mxu0 0.0
        %1673 = vmatprep.subr.mxu0 0.0
        %1674 = vmatpush1.msra.mxu0 0.0
        %1675 = vmatprep.subr.mxu0 0.0
        %1676 = vmatpush1.msra.mxu0 0.0
        %1677 = vmatprep.subr.mxu0 0.0
        %1678 = vmatpush1.msra.mxu0 0.0
        %1679 = vmatprep.subr.mxu0 0.0
        %1680 = vmatpush1.msra.mxu0 0.0
        %1681 = vmatprep.subr.mxu0 0.0
        %1682 = vmatpush1.msra.mxu0 0.0
        %1683 = vmatprep.subr.mxu0 0.0
        %1684 = vmatpush1.msra.mxu0 0.0
        %1685 = vmatprep.subr.mxu0 0.0
        %1686 = vmatpush1.msra.mxu0 0.0
        %1687 = vmatprep.subr.mxu0 0.0
        %1688 = vmatpush1.msra.mxu0 0.0
        %1689 = vmatprep.subr.mxu0 0.0
        %1690 = vmatpush1.msra.mxu0 0.0
        %1691 = vmatprep.subr.mxu0 0.0
        %1692 = vmatpush1.msra.mxu0 0.0
        %1693 = vmatprep.subr.mxu0 0.0
        %1694 = vmatpush1.msra.mxu0 0.0
        %1695 = vmatprep.subr.mxu0 0.0
        %1696 = vmatpush1.msra.mxu0 0.0
        %1697 = vmatprep.subr.mxu0 0.0
        %1698 = vmatpush1.msra.mxu0 0.0
        %1699 = vmatprep.subr.mxu0 0.0
        %1700 = vmatpush1.msra.mxu0 0.0
        %1701 = vmatprep.subr.mxu0 0.0
        %1702 = vmatpush1.msra.mxu0 0.0
        %1703 = vmatprep.mubr.f32.mxu0 0.0
        %1704 = vmatmul.mubr.f32.gmra.mrb[0].mxu0 %v1637
        %v1705 = vpop.f32.mrb[0].mxu0
        %v1706 = vadd.f32 0.0, %v1705
        %v1707 = vpop.f32.mrb[0].mxu0
        %1708 = vdwg.mxu0
        %v1709 = vmul.f32 %v1706, 0.35355338
        %v1710 = vld [vmem:[#allocation2 + $0x10] sm:$0xf]
        %v1711 = vld [vmem:[#allocation2 + $0x18] sm:$0xf]
        %v1712 = vld [vmem:[#allocation2 + $0x20] sm:$0xf]
        %v1714 = vsel %vm265, %v179, 0
        %v1717 = vsel %vm265, %v180, 0
        %1719 = vmatprep.subr.mxu0 0.0
        %1720 = vmatpush1.msra.mxu0 %v263
        %1721 = vmatprep.subr.mxu0 0.0
        %1722 = vmatpush1.msra.mxu0 %v264
        %1723 = vmatprep.subr.mxu0 0.0
        %1724 = vmatpush1.msra.mxu0 0.0
        %1725 = vmatprep.subr.mxu0 0.0
        %1726 = vmatpush1.msra.mxu0 0.0
        %1727 = vmatprep.subr.mxu0 0.0
        %1728 = vmatpush1.msra.mxu0 0.0
        %1729 = vmatprep.subr.mxu0 0.0
        %1730 = vmatpush1.msra.mxu0 0.0
        %1731 = vmatprep.subr.mxu0 0.0
        %1732 = vmatpush1.msra.mxu0 0.0
        %1733 = vmatprep.subr.mxu0 0.0
        %1734 = vmatpush1.msra.mxu0 0.0
        %1735 = vmatprep.subr.mxu0 0.0
        %1736 = vmatpush1.msra.mxu0 0.0
        %1737 = vmatprep.subr.mxu0 0.0
        %1738 = vmatpush1.msra.mxu0 0.0
        %1739 = vmatprep.subr.mxu0 0.0
        %1740 = vmatpush1.msra.mxu0 0.0
        %1741 = vmatprep.subr.mxu0 0.0
        %1742 = vmatpush1.msra.mxu0 0.0
        %1743 = vmatprep.subr.mxu0 0.0
        %1744 = vmatpush1.msra.mxu0 0.0
        %1745 = vmatprep.subr.mxu0 0.0
        %1746 = vmatpush1.msra.mxu0 0.0
        %1747 = vmatprep.subr.mxu0 0.0
        %1748 = vmatpush1.msra.mxu0 0.0
        %1749 = vmatprep.subr.mxu0 0.0
        %1750 = vmatpush1.msra.mxu0 0.0
        %1751 = vmatprep.subr.mxu0 0.0
        %1752 = vmatpush1.msra.mxu0 0.0
        %1753 = vmatprep.subr.mxu0 0.0
        %1754 = vmatpush1.msra.mxu0 0.0
        %1755 = vmatprep.subr.mxu0 0.0
        %1756 = vmatpush1.msra.mxu0 0.0
        %1757 = vmatprep.subr.mxu0 0.0
        %1758 = vmatpush1.msra.mxu0 0.0
        %1759 = vmatprep.subr.mxu0 0.0
        %1760 = vmatpush1.msra.mxu0 0.0
        %1761 = vmatprep.subr.mxu0 0.0
        %1762 = vmatpush1.msra.mxu0 0.0
        %1763 = vmatprep.subr.mxu0 0.0
        %1764 = vmatpush1.msra.mxu0 0.0
        %1765 = vmatprep.subr.mxu0 0.0
        %1766 = vmatpush1.msra.mxu0 0.0
        %1767 = vmatprep.subr.mxu0 0.0
        %1768 = vmatpush1.msra.mxu0 0.0
        %1769 = vmatprep.subr.mxu0 0.0
        %1770 = vmatpush1.msra.mxu0 0.0
        %1771 = vmatprep.subr.mxu0 0.0
        %1772 = vmatpush1.msra.mxu0 0.0
        %1773 = vmatprep.subr.mxu0 0.0
        %1774 = vmatpush1.msra.mxu0 0.0
        %1775 = vmatprep.subr.mxu0 0.0
        %1776 = vmatpush1.msra.mxu0 0.0
        %1777 = vmatprep.subr.mxu0 0.0
        %1778 = vmatpush1.msra.mxu0 0.0
        %1779 = vmatprep.subr.mxu0 0.0
        %1780 = vmatpush1.msra.mxu0 0.0
        %1781 = vmatprep.subr.mxu0 0.0
        %1782 = vmatpush1.msra.mxu0 0.0
        %1783 = vmatprep.mubr.f32.mxu0 0.0
        %1784 = vmatmul.mubr.f32.gmra.mrb[0].mxu0 %v1714
        %v1785 = vpop.f32.mrb[0].mxu0
        %v1786 = vadd.f32 0.0, %v1785
        %v1787 = vpop.f32.mrb[0].mxu0
        %1788 = vmatprep.mubr.f32.mxu0 0.0
        %1789 = vmatmul.mubr.f32.gmra.mrb[0].mxu0 %v1717
        %v1790 = vpop.f32.mrb[0].mxu0
        %v1791 = vadd.f32 0.0, %v1790
        %v1792 = vpop.f32.mrb[0].mxu0
        %1793 = vdwg.mxu0
        %v1794 = vpack.c.bf16 %v1791, %v1786
        %v1795 = vpack.c.bf16 %v1710, %v1710
        %v1796 = vpack.c.bf16 %v264, %v263
        %v1797 = vpack.c.bf16 %v1711, %v1711
        %v1799 = vsel %vm228, %v1796, 0
        %vm1801 = vcmask 1041408
        %v1803 = vsel %vm1801, %v1797, 0
        %1805 = vmatprep.subr.bf16.mxu0 0
        %1806 = vmatpush1.bf16.msra.mxu0 %v1803
        %1807 = vmatprep.subr.bf16.mxu0 0
        %1808 = vmatpush1.bf16.msra.mxu0 0
        %1809 = vmatprep.subr.bf16.mxu0 0
        %1810 = vmatpush1.bf16.msra.mxu0 0
        %1811 = vmatprep.subr.bf16.mxu0 0
        %1812 = vmatpush1.bf16.msra.mxu0 0
        %1813 = vmatprep.subr.bf16.mxu0 0
        %1814 = vmatpush1.bf16.msra.mxu0 0
        %1815 = vmatprep.subr.bf16.mxu0 0
        %1816 = vmatpush1.bf16.msra.mxu0 0
        %1817 = vmatprep.subr.bf16.mxu0 0
        %1818 = vmatpush1.bf16.msra.mxu0 0
        %1819 = vmatprep.subr.bf16.mxu0 0
        %1820 = vmatpush1.bf16.msra.mxu0 0
        %1821 = vmatprep.subr.bf16.mxu0 0
        %1822 = vmatpush1.bf16.msra.mxu0 0
        %1823 = vmatprep.subr.bf16.mxu0 0
        %1824 = vmatpush1.bf16.msra.mxu0 0
        %1825 = vmatprep.subr.bf16.mxu0 0
        %1826 = vmatpush1.bf16.msra.mxu0 0
        %1827 = vmatprep.subr.bf16.mxu0 0
        %1828 = vmatpush1.bf16.msra.mxu0 0
        %1829 = vmatprep.subr.bf16.mxu0 0
        %1830 = vmatpush1.bf16.msra.mxu0 0
        %1831 = vmatprep.subr.bf16.mxu0 0
        %1832 = vmatpush1.bf16.msra.mxu0 0
        %1833 = vmatprep.subr.bf16.mxu0 0
        %1834 = vmatpush1.bf16.msra.mxu0 0
        %1835 = vmatprep.subr.bf16.mxu0 0
        %1836 = vmatpush1.bf16.msra.mxu0 0
        %1837 = vmatprep.mubr.bf16.mxu0 0
        %1838 = vmatmul.mubr.bf16.gmra.mrb[0].mxu0 %v1799
        %v1839 = vpop.f32.mrb[0].mxu0
        %v1840 = vadd.f32 0.0, %v1839
        %v1841 = vpop.f32.mrb[0].mxu0
        %v1842 = vpop.f32.mrb[0].mxu0
        %v1843 = vadd.f32 0.0, %v1842
        %v1844 = vpop.f32.mrb[0].mxu0
        %1845 = vdwg.mxu0
        %v1847 = vsel %vm228, %v1794, 0
        %v1850 = vsel %vm1801, %v1795, 0
        %1852 = vmatprep.subr.bf16.mxu0 0
        %1853 = vmatpush1.bf16.msra.mxu0 %v1850
        %1854 = vmatprep.subr.bf16.mxu0 0
        %1855 = vmatpush1.bf16.msra.mxu0 0
        %1856 = vmatprep.subr.bf16.mxu0 0
        %1857 = vmatpush1.bf16.msra.mxu0 0
        %1858 = vmatprep.subr.bf16.mxu0 0
        %1859 = vmatpush1.bf16.msra.mxu0 0
        %1860 = vmatprep.subr.bf16.mxu0 0
        %1861 = vmatpush1.bf16.msra.mxu0 0
        %1862 = vmatprep.subr.bf16.mxu0 0
        %1863 = vmatpush1.bf16.msra.mxu0 0
        %1864 = vmatprep.subr.bf16.mxu0 0
        %1865 = vmatpush1.bf16.msra.mxu0 0
        %1866 = vmatprep.subr.bf16.mxu0 0
        %1867 = vmatpush1.bf16.msra.mxu0 0
        %1868 = vmatprep.subr.bf16.mxu0 0
        %1869 = vmatpush1.bf16.msra.mxu0 0
        %1870 = vmatprep.subr.bf16.mxu0 0
        %1871 = vmatpush1.bf16.msra.mxu0 0
        %1872 = vmatprep.subr.bf16.mxu0 0
        %1873 = vmatpush1.bf16.msra.mxu0 0
        %1874 = vmatprep.subr.bf16.mxu0 0
        %1875 = vmatpush1.bf16.msra.mxu0 0
        %1876 = vmatprep.subr.bf16.mxu0 0
        %1877 = vmatpush1.bf16.msra.mxu0 0
        %1878 = vmatprep.subr.bf16.mxu0 0
        %1879 = vmatpush1.bf16.msra.mxu0 0
        %1880 = vmatprep.subr.bf16.mxu0 0
        %1881 = vmatpush1.bf16.msra.mxu0 0
        %1882 = vmatprep.subr.bf16.mxu0 0
        %1883 = vmatpush1.bf16.msra.mxu0 0
        %1884 = vmatprep.mubr.bf16.mxu0 0
        %1885 = vmatmul.mubr.bf16.gmra.mrb[0].mxu0 %v1847
        %v1886 = vpop.f32.mrb[0].mxu0
        %v1887 = vadd.f32 %v1840, %v1886
        %v1888 = vpop.f32.mrb[0].mxu0
        %v1889 = vpop.f32.mrb[0].mxu0
        %v1890 = vadd.f32 %v1843, %v1889
        %v1891 = vpop.f32.mrb[0].mxu0
        %1892 = vdwg.mxu0
        %v1894 = vsel %vm265, %v195, 0
        %v1897 = vsel %vm265, %v196, 0
        %1899 = vmatprep.subr.mxu0 0.0
        %1900 = vmatpush1.msra.mxu0 %v263
        %1901 = vmatprep.subr.mxu0 0.0
        %1902 = vmatpush1.msra.mxu0 %v264
        %1903 = vmatprep.subr.mxu0 0.0
        %1904 = vmatpush1.msra.mxu0 0.0
        %1905 = vmatprep.subr.mxu0 0.0
        %1906 = vmatpush1.msra.mxu0 0.0
        %1907 = vmatprep.subr.mxu0 0.0
        %1908 = vmatpush1.msra.mxu0 0.0
        %1909 = vmatprep.subr.mxu0 0.0
        %1910 = vmatpush1.msra.mxu0 0.0
        %1911 = vmatprep.subr.mxu0 0.0
        %1912 = vmatpush1.msra.mxu0 0.0
        %1913 = vmatprep.subr.mxu0 0.0
        %1914 = vmatpush1.msra.mxu0 0.0
        %1915 = vmatprep.subr.mxu0 0.0
        %1916 = vmatpush1.msra.mxu0 0.0
        %1917 = vmatprep.subr.mxu0 0.0
        %1918 = vmatpush1.msra.mxu0 0.0
        %1919 = vmatprep.subr.mxu0 0.0
        %1920 = vmatpush1.msra.mxu0 0.0
        %1921 = vmatprep.subr.mxu0 0.0
        %1922 = vmatpush1.msra.mxu0 0.0
        %1923 = vmatprep.subr.mxu0 0.0
        %1924 = vmatpush1.msra.mxu0 0.0
        %1925 = vmatprep.subr.mxu0 0.0
        %1926 = vmatpush1.msra.mxu0 0.0
        %1927 = vmatprep.subr.mxu0 0.0
        %1928 = vmatpush1.msra.mxu0 0.0
        %1929 = vmatprep.subr.mxu0 0.0
        %1930 = vmatpush1.msra.mxu0 0.0
        %1931 = vmatprep.subr.mxu0 0.0
        %1932 = vmatpush1.msra.mxu0 0.0
        %1933 = vmatprep.subr.mxu0 0.0
        %1934 = vmatpush1.msra.mxu0 0.0
        %1935 = vmatprep.subr.mxu0 0.0
        %1936 = vmatpush1.msra.mxu0 0.0
        %1937 = vmatprep.subr.mxu0 0.0
        %1938 = vmatpush1.msra.mxu0 0.0
        %1939 = vmatprep.subr.mxu0 0.0
        %1940 = vmatpush1.msra.mxu0 0.0
        %1941 = vmatprep.subr.mxu0 0.0
        %1942 = vmatpush1.msra.mxu0 0.0
        %1943 = vmatprep.subr.mxu0 0.0
        %1944 = vmatpush1.msra.mxu0 0.0
        %1945 = vmatprep.subr.mxu0 0.0
        %1946 = vmatpush1.msra.mxu0 0.0
        %1947 = vmatprep.subr.mxu0 0.0
        %1948 = vmatpush1.msra.mxu0 0.0
        %1949 = vmatprep.subr.mxu0 0.0
        %1950 = vmatpush1.msra.mxu0 0.0
        %1951 = vmatprep.subr.mxu0 0.0
        %1952 = vmatpush1.msra.mxu0 0.0
        %1953 = vmatprep.subr.mxu0 0.0
        %1954 = vmatpush1.msra.mxu0 0.0
        %1955 = vmatprep.subr.mxu0 0.0
        %1956 = vmatpush1.msra.mxu0 0.0
        %1957 = vmatprep.subr.mxu0 0.0
        %1958 = vmatpush1.msra.mxu0 0.0
        %1959 = vmatprep.subr.mxu0 0.0
        %1960 = vmatpush1.msra.mxu0 0.0
        %1961 = vmatprep.subr.mxu0 0.0
        %1962 = vmatpush1.msra.mxu0 0.0
        %1963 = vmatprep.mubr.f32.mxu0 0.0
        %1964 = vmatmul.mubr.f32.gmra.mrb[0].mxu0 %v1894
        %v1965 = vpop.f32.mrb[0].mxu0
        %v1966 = vadd.f32 0.0, %v1965
        %v1967 = vpop.f32.mrb[0].mxu0
        %1968 = vmatprep.mubr.f32.mxu0 0.0
        %1969 = vmatmul.mubr.f32.gmra.mrb[0].mxu0 %v1897
        %v1970 = vpop.f32.mrb[0].mxu0
        %v1971 = vadd.f32 0.0, %v1970
        %v1972 = vpop.f32.mrb[0].mxu0
        %1973 = vdwg.mxu0
        %v1974 = vpack.c.bf16 %v1971, %v1966
        %v1975 = vpack.c.bf16 %v1712, %v1712
        %v1977 = vsel %vm228, %v1974, 0
        %v1980 = vsel %vm1801, %v1975, 0
        %1982 = vmatprep.subr.bf16.mxu0 0
        %1983 = vmatpush1.bf16.msra.mxu0 %v1980
        %1984 = vmatprep.subr.bf16.mxu0 0
        %1985 = vmatpush1.bf16.msra.mxu0 0
        %1986 = vmatprep.subr.bf16.mxu0 0
        %1987 = vmatpush1.bf16.msra.mxu0 0
        %1988 = vmatprep.subr.bf16.mxu0 0
        %1989 = vmatpush1.bf16.msra.mxu0 0
        %1990 = vmatprep.subr.bf16.mxu0 0
        %1991 = vmatpush1.bf16.msra.mxu0 0
        %1992 = vmatprep.subr.bf16.mxu0 0
        %1993 = vmatpush1.bf16.msra.mxu0 0
        %1994 = vmatprep.subr.bf16.mxu0 0
        %1995 = vmatpush1.bf16.msra.mxu0 0
        %1996 = vmatprep.subr.bf16.mxu0 0
        %1997 = vmatpush1.bf16.msra.mxu0 0
        %1998 = vmatprep.subr.bf16.mxu0 0
        %1999 = vmatpush1.bf16.msra.mxu0 0
        %2000 = vmatprep.subr.bf16.mxu0 0
        %2001 = vmatpush1.bf16.msra.mxu0 0
        %2002 = vmatprep.subr.bf16.mxu0 0
        %2003 = vmatpush1.bf16.msra.mxu0 0
        %2004 = vmatprep.subr.bf16.mxu0 0
        %2005 = vmatpush1.bf16.msra.mxu0 0
        %2006 = vmatprep.subr.bf16.mxu0 0
        %2007 = vmatpush1.bf16.msra.mxu0 0
        %2008 = vmatprep.subr.bf16.mxu0 0
        %2009 = vmatpush1.bf16.msra.mxu0 0
        %2010 = vmatprep.subr.bf16.mxu0 0
        %2011 = vmatpush1.bf16.msra.mxu0 0
        %2012 = vmatprep.subr.bf16.mxu0 0
        %2013 = vmatpush1.bf16.msra.mxu0 0
        %2014 = vmatprep.mubr.bf16.mxu0 0
        %2015 = vmatmul.mubr.bf16.gmra.mrb[0].mxu0 %v1977
        %v2016 = vpop.f32.mrb[0].mxu0
        %v2017 = vadd.f32 0.0, %v2016
        %v2018 = vpop.f32.mrb[0].mxu0
        %v2019 = vpop.f32.mrb[0].mxu0
        %v2020 = vadd.f32 0.0, %v2019
        %v2021 = vpop.f32.mrb[0].mxu0
        %2022 = vdwg.mxu0
        %v2023 = vadd.f32 %v1887, %v2017
        %v2024 = vadd.f32 %v1890, %v2020
        %v2025 = vadd.f32 %v2023, %v224
        %v2026 = vadd.f32 %v2024, %v225
        %v2027 = vld [vmem:[#allocation2 + $0x40] sm:$0xff]
        %v2028 = vld [vmem:[#allocation2 + $0x48] sm:$0xff]
        %v2029 = vld [vmem:[#allocation2 + $0x50] sm:$0xff]
        %v2030 = vld [vmem:[#allocation2 + $0x58] sm:$0xff]
        %v2031 = vld [vmem:[#allocation2 + $0x60] sm:$0x1]
        %v2032 = vpack.c.bf16 %v2026, %v2025
        %v2033 = vpack.c.bf16 %v2028, %v2027
        %v2034 = vpack.c.bf16 %v2030, %v2029
        %v2035 = vlaneseq
        %v2036 = vshrl.u32 %v2035, 7
        %v2037 = vsub.s32 0, %v2036
        %v2038 = vrot.slane %v2031, %v2037
        %vm2039 = vcmask 261120
        %v2041 = vsel %vm2039, %v2032, 0
        %2043 = vmatprep.subr.bf16.mxu0 0
        %2044 = vmatpush1.bf16.msra.mxu0 %v2033
        %2045 = vmatprep.subr.bf16.mxu0 0
        %2046 = vmatpush1.bf16.msra.mxu0 %v2034
        %2047 = vmatprep.subr.bf16.mxu0 0
        %2048 = vmatpush1.bf16.msra.mxu0 0
        %2049 = vmatprep.subr.bf16.mxu0 0
        %2050 = vmatpush1.bf16.msra.mxu0 0
        %2051 = vmatprep.subr.bf16.mxu0 0
        %2052 = vmatpush1.bf16.msra.mxu0 0
        %2053 = vmatprep.subr.bf16.mxu0 0
        %2054 = vmatpush1.bf16.msra.mxu0 0
        %2055 = vmatprep.subr.bf16.mxu0 0
        %2056 = vmatpush1.bf16.msra.mxu0 0
        %2057 = vmatprep.subr.bf16.mxu0 0
        %2058 = vmatpush1.bf16.msra.mxu0 0
        %2059 = vmatprep.subr.bf16.mxu0 0
        %2060 = vmatpush1.bf16.msra.mxu0 0
        %2061 = vmatprep.subr.bf16.mxu0 0
        %2062 = vmatpush1.bf16.msra.mxu0 0
        %2063 = vmatprep.subr.bf16.mxu0 0
        %2064 = vmatpush1.bf16.msra.mxu0 0
        %2065 = vmatprep.subr.bf16.mxu0 0
        %2066 = vmatpush1.bf16.msra.mxu0 0
        %2067 = vmatprep.subr.bf16.mxu0 0
        %2068 = vmatpush1.bf16.msra.mxu0 0
        %2069 = vmatprep.subr.bf16.mxu0 0
        %2070 = vmatpush1.bf16.msra.mxu0 0
        %2071 = vmatprep.subr.bf16.mxu0 0
        %2072 = vmatpush1.bf16.msra.mxu0 0
        %2073 = vmatprep.subr.bf16.mxu0 0
        %2074 = vmatpush1.bf16.msra.mxu0 0
        %2075 = vmatprep.mubr.bf16.mxu0 0
        %2076 = vmatmul.mubr.bf16.gmra.mrb[0].mxu0 %v2041
        %v2077 = vpop.f32.mrb[0].mxu0
        %v2078 = vadd.f32 %v2038, %v2077
        %v2079 = vpop.f32.mrb[0].mxu0
        %v2080 = vpop.f32.mrb[0].mxu0
        %v2081 = vadd.f32 %v2038, %v2080
        %v2082 = vpop.f32.mrb[0].mxu0
        %2083 = vdwg.mxu0
        %s2085 = vtos %v1032
        %v2086 = vstv %s2085
        %v2088 = vmul.f32 %v2078, %v2086
        %v2089 = vmul.f32 %v2081, %v2086
        %v2090 = vld [vmem:[#allocation2 + $0x68] sm:$0xff]
        %v2091 = vld [vmem:[#allocation2 + $0x70] sm:$0xff]
        %v2092 = vld [vmem:[#allocation2 + $0x78] sm:$0xff]
        %v2093 = vld [vmem:[#allocation2 + $0x80] sm:$0xff]
        %v2094 = vpack.c.bf16 %v2089, %v2088
        %v2095 = vpack.c.bf16 %v2081, %v2078
        %v2096 = vlaneseq
        %v2097 = vshrl.u32 %v2096, 7
        %v2098 = vsub.s32 0, %v2097
        %v2099 = vrot.slane %v1709, %v2098
        %2101 = vrot.lane.b32.xlu0 %v2095, 96
        %v2102 = vpop.permute.xlu0 %2101
        %vm2103 = vcmask 64512
        %v2105 = vsel %vm2103, %v2094, 0
        %v2108 = vsel %vm2103, %v2102, 0
        %2110 = vmatprep.subr.bf16.mxu0 0
        %2111 = vmatpush1.bf16.xpose.msra.mxu0 %v2108
        %2112 = vmatprep.subr.bf16.mxu0 0
        %2113 = vmatpush1.bf16.xpose.msra.mxu0 0
        %2114 = vmatprep.subr.bf16.mxu0 0
        %2115 = vmatpush1.bf16.xpose.msra.mxu0 0
        %2116 = vmatprep.subr.bf16.mxu0 0
        %2117 = vmatpush1.bf16.xpose.msra.mxu0 0
        %2118 = vmatprep.subr.bf16.mxu0 0
        %2119 = vmatpush1.bf16.xpose.msra.mxu0 0
        %2120 = vmatprep.subr.bf16.mxu0 0
        %2121 = vmatpush1.bf16.xpose.msra.mxu0 0
        %2122 = vmatprep.subr.bf16.mxu0 0
        %2123 = vmatpush1.bf16.xpose.msra.mxu0 0
        %2124 = vmatprep.subr.bf16.mxu0 0
        %2125 = vmatpush1.bf16.xpose.msra.mxu0 0
        %2126 = vmatprep.subr.bf16.mxu0 0
        %2127 = vmatpush1.bf16.xpose.msra.mxu0 0
        %2128 = vmatprep.subr.bf16.mxu0 0
        %2129 = vmatpush1.bf16.xpose.msra.mxu0 0
        %2130 = vmatprep.subr.bf16.mxu0 0
        %2131 = vmatpush1.bf16.xpose.msra.mxu0 0
        %2132 = vmatprep.subr.bf16.mxu0 0
        %2133 = vmatpush1.bf16.xpose.msra.mxu0 0
        %2134 = vmatprep.subr.bf16.mxu0 0
        %2135 = vmatpush1.bf16.xpose.msra.mxu0 0
        %2136 = vmatprep.subr.bf16.mxu0 0
        %2137 = vmatpush1.bf16.xpose.msra.mxu0 0
        %2138 = vmatprep.subr.bf16.mxu0 0
        %2139 = vmatpush1.bf16.xpose.msra.mxu0 0
        %2140 = vmatprep.subr.bf16.mxu0 0
        %2141 = vmatpush1.bf16.xpose.msra.mxu0 0
        %2142 = vmatprep.mubr.bf16.mxu0 0
        %2143 = vmatmul.mubr.bf16.gmra.mrb[0].mxu0 %v2105
        %v2144 = vpop.f32.mrb[0].mxu0
        %v2145 = vadd.f32 %v2099, %v2144
        %v2146 = vpop.f32.mrb[0].mxu0
        %v2147 = vpop.f32.mrb[0].mxu0
        %v2148 = vadd.f32 %v2099, %v2147
        %v2149 = vpop.f32.mrb[0].mxu0
        %2150 = vdwg.mxu0
        %v2151 = vsel %vm265, %v2145, -inf
        %2152 = vmax.xlane.f32.xlu0 %v2151
        %v2153 = vpop.xlane.xlu0 %2152
        %v2154 = vsel %vm265, %v2148, -inf
        %2155 = vmax.xlane.f32.xlu0 %v2154
        %v2156 = vpop.xlane.xlu0 %2155
        %v2157 = vsub.f32 %v2145, %v2153
        %v2158 = vsub.f32 %v2148, %v2156
        %v2159 = vmul.f32 %v2157, 1.442695
        %v2160 = vpow.pop %v2159
        %v2161 = vmul.f32 %v2158, 1.442695
        %v2162 = vpow.pop %v2161
        %v2163 = vsel %vm265, %v2160, 0.0
        %2164 = vadd.xlane.f32.xlu0 %v2163
        %v2165 = vpop.xlane.xlu0 %2164
        %v2166 = vsel %vm265, %v2162, 0.0
        %2167 = vadd.xlane.f32.xlu0 %v2166
        %v2168 = vpop.xlane.xlu0 %2167
        %v2169 = vrcp.pop %v2165
        %v2170 = vrcp.pop %v2168
        %v2171 = vmul.f32 %v2160, %v2169
        %v2172 = vmul.f32 %v2162, %v2170
        %v2173 = vpack.c.bf16 %v2172, %v2171
        %2174 = vrot.lane.b32.xlu0 %v2095, 64
        %v2175 = vpop.permute.xlu0 %2174
        %v2178 = vsel %vm265, %v2173, 0
        %2180 = vmatprep.subr.bf16.mxu0 0
        %2181 = vmatpush1.bf16.msra.mxu0 %v2175
        %2182 = vmatprep.subr.bf16.mxu0 0
        %2183 = vmatpush1.bf16.msra.mxu0 0
        %2184 = vmatprep.subr.bf16.mxu0 0
        %2185 = vmatpush1.bf16.msra.mxu0 0
        %2186 = vmatprep.subr.bf16.mxu0 0
        %2187 = vmatpush1.bf16.msra.mxu0 0
        %2188 = vmatprep.subr.bf16.mxu0 0
        %2189 = vmatpush1.bf16.msra.mxu0 0
        %2190 = vmatprep.subr.bf16.mxu0 0
        %2191 = vmatpush1.bf16.msra.mxu0 0
        %2192 = vmatprep.subr.bf16.mxu0 0
        %2193 = vmatpush1.bf16.msra.mxu0 0
        %2194 = vmatprep.subr.bf16.mxu0 0
        %2195 = vmatpush1.bf16.msra.mxu0 0
        %2196 = vmatprep.subr.bf16.mxu0 0
        %2197 = vmatpush1.bf16.msra.mxu0 0
        %2198 = vmatprep.subr.bf16.mxu0 0
        %2199 = vmatpush1.bf16.msra.mxu0 0
        %2200 = vmatprep.subr.bf16.mxu0 0
        %2201 = vmatpush1.bf16.msra.mxu0 0
        %2202 = vmatprep.subr.bf16.mxu0 0
        %2203 = vmatpush1.bf16.msra.mxu0 0
        %2204 = vmatprep.subr.bf16.mxu0 0
        %2205 = vmatpush1.bf16.msra.mxu0 0
        %2206 = vmatprep.subr.bf16.mxu0 0
        %2207 = vmatpush1.bf16.msra.mxu0 0
        %2208 = vmatprep.subr.bf16.mxu0 0
        %2209 = vmatpush1.bf16.msra.mxu0 0
        %2210 = vmatprep.subr.bf16.mxu0 0
        %2211 = vmatpush1.bf16.msra.mxu0 0
        %2212 = vmatprep.mubr.bf16.mxu0 0
        %2213 = vmatmul.mubr.bf16.gmra.mrb[0].mxu0 %v2178
        %v2214 = vpop.f32.mrb[0].mxu0
        %v2215 = vadd.f32 0.0, %v2214
        %v2216 = vpop.f32.mrb[0].mxu0
        %v2217 = vpop.f32.mrb[0].mxu0
        %v2218 = vadd.f32 0.0, %v2217
        %v2219 = vpop.f32.mrb[0].mxu0
        %2220 = vdwg.mxu0
        %v2221 = vpack.c.bf16 %v2218, %v2215
        %v2222 = vpack.c.bf16 %v2090, %v2090
        %2224 = vrot.lane.b32.xlu0 %v2094, 120
        %v2225 = vpop.permute.xlu0 %2224
        %2226 = vrot.lane.b32.xlu0 %v2095, 88
        %v2227 = vpop.permute.xlu0 %2226
        %v2229 = vsel %vm2103, %v2225, 0
        %v2232 = vsel %vm2103, %v2227, 0
        %2234 = vmatprep.subr.bf16.mxu0 0
        %2235 = vmatpush1.bf16.xpose.msra.mxu0 %v2232
        %2236 = vmatprep.subr.bf16.mxu0 0
        %2237 = vmatpush1.bf16.xpose.msra.mxu0 0
        %2238 = vmatprep.subr.bf16.mxu0 0
        %2239 = vmatpush1.bf16.xpose.msra.mxu0 0
        %2240 = vmatprep.subr.bf16.mxu0 0
        %2241 = vmatpush1.bf16.xpose.msra.mxu0 0
        %2242 = vmatprep.subr.bf16.mxu0 0
        %2243 = vmatpush1.bf16.xpose.msra.mxu0 0
        %2244 = vmatprep.subr.bf16.mxu0 0
        %2245 = vmatpush1.bf16.xpose.msra.mxu0 0
        %2246 = vmatprep.subr.bf16.mxu0 0
        %2247 = vmatpush1.bf16.xpose.msra.mxu0 0
        %2248 = vmatprep.subr.bf16.mxu0 0
        %2249 = vmatpush1.bf16.xpose.msra.mxu0 0
        %2250 = vmatprep.subr.bf16.mxu0 0
        %2251 = vmatpush1.bf16.xpose.msra.mxu0 0
        %2252 = vmatprep.subr.bf16.mxu0 0
        %2253 = vmatpush1.bf16.xpose.msra.mxu0 0
        %2254 = vmatprep.subr.bf16.mxu0 0
        %2255 = vmatpush1.bf16.xpose.msra.mxu0 0
        %2256 = vmatprep.subr.bf16.mxu0 0
        %2257 = vmatpush1.bf16.xpose.msra.mxu0 0
        %2258 = vmatprep.subr.bf16.mxu0 0
        %2259 = vmatpush1.bf16.xpose.msra.mxu0 0
        %2260 = vmatprep.subr.bf16.mxu0 0
        %2261 = vmatpush1.bf16.xpose.msra.mxu0 0
        %2262 = vmatprep.subr.bf16.mxu0 0
        %2263 = vmatpush1.bf16.xpose.msra.mxu0 0
        %2264 = vmatprep.subr.bf16.mxu0 0
        %2265 = vmatpush1.bf16.xpose.msra.mxu0 0
        %2266 = vmatprep.mubr.bf16.mxu0 0
        %2267 = vmatmul.mubr.bf16.gmra.mrb[0].mxu0 %v2229
        %v2268 = vpop.f32.mrb[0].mxu0
        %v2269 = vadd.f32 %v2099, %v2268
        %v2270 = vpop.f32.mrb[0].mxu0
        %v2271 = vpop.f32.mrb[0].mxu0
        %v2272 = vadd.f32 %v2099, %v2271
        %v2273 = vpop.f32.mrb[0].mxu0
        %2274 = vdwg.mxu0
        %v2275 = vsel %vm265, %v2269, -inf
        %2276 = vmax.xlane.f32.xlu0 %v2275
        %v2277 = vpop.xlane.xlu0 %2276
        %v2278 = vsel %vm265, %v2272, -inf
        %2279 = vmax.xlane.f32.xlu0 %v2278
        %v2280 = vpop.xlane.xlu0 %2279
        %v2281 = vsub.f32 %v2269, %v2277
        %v2282 = vsub.f32 %v2272, %v2280
        %v2283 = vmul.f32 %v2281, 1.442695
        %v2284 = vpow.pop %v2283
        %v2285 = vmul.f32 %v2282, 1.442695
        %v2286 = vpow.pop %v2285
        %v2287 = vsel %vm265, %v2284, 0.0
        %2288 = vadd.xlane.f32.xlu0 %v2287
        %v2289 = vpop.xlane.xlu0 %2288
        %v2290 = vsel %vm265, %v2286, 0.0
        %2291 = vadd.xlane.f32.xlu0 %v2290
        %v2292 = vpop.xlane.xlu0 %2291
        %v2293 = vrcp.pop %v2289
        %v2294 = vrcp.pop %v2292
        %v2295 = vmul.f32 %v2284, %v2293
        %v2296 = vmul.f32 %v2286, %v2294
        %v2297 = vpack.c.bf16 %v2296, %v2295
        %2298 = vrot.lane.b32.xlu0 %v2095, 56
        %v2299 = vpop.permute.xlu0 %2298
        %v2302 = vsel %vm265, %v2297, 0
        %2304 = vmatprep.subr.bf16.mxu0 0
        %2305 = vmatpush1.bf16.msra.mxu0 %v2299
        %2306 = vmatprep.subr.bf16.mxu0 0
        %2307 = vmatpush1.bf16.msra.mxu0 0
        %2308 = vmatprep.subr.bf16.mxu0 0
        %2309 = vmatpush1.bf16.msra.mxu0 0
        %2310 = vmatprep.subr.bf16.mxu0 0
        %2311 = vmatpush1.bf16.msra.mxu0 0
        %2312 = vmatprep.subr.bf16.mxu0 0
        %2313 = vmatpush1.bf16.msra.mxu0 0
        %2314 = vmatprep.subr.bf16.mxu0 0
        %2315 = vmatpush1.bf16.msra.mxu0 0
        %2316 = vmatprep.subr.bf16.mxu0 0
        %2317 = vmatpush1.bf16.msra.mxu0 0
        %2318 = vmatprep.subr.bf16.mxu0 0
        %2319 = vmatpush1.bf16.msra.mxu0 0
        %2320 = vmatprep.subr.bf16.mxu0 0
        %2321 = vmatpush1.bf16.msra.mxu0 0
        %2322 = vmatprep.subr.bf16.mxu0 0
        %2323 = vmatpush1.bf16.msra.mxu0 0
        %2324 = vmatprep.subr.bf16.mxu0 0
        %2325 = vmatpush1.bf16.msra.mxu0 0
        %2326 = vmatprep.subr.bf16.mxu0 0
        %2327 = vmatpush1.bf16.msra.mxu0 0
        %2328 = vmatprep.subr.bf16.mxu0 0
        %2329 = vmatpush1.bf16.msra.mxu0 0
        %2330 = vmatprep.subr.bf16.mxu0 0
        %2331 = vmatpush1.bf16.msra.mxu0 0
        %2332 = vmatprep.subr.bf16.mxu0 0
        %2333 = vmatpush1.bf16.msra.mxu0 0
        %2334 = vmatprep.subr.bf16.mxu0 0
        %2335 = vmatpush1.bf16.msra.mxu0 0
        %2336 = vmatprep.mubr.bf16.mxu0 0
        %2337 = vmatmul.mubr.bf16.gmra.mrb[0].mxu0 %v2302
        %v2338 = vpop.f32.mrb[0].mxu0
        %v2339 = vadd.f32 0.0, %v2338
        %v2340 = vpop.f32.mrb[0].mxu0
        %v2341 = vpop.f32.mrb[0].mxu0
        %v2342 = vadd.f32 0.0, %v2341
        %v2343 = vpop.f32.mrb[0].mxu0
        %2344 = vdwg.mxu0
        %v2345 = vpack.c.bf16 %v2342, %v2339
        %v2346 = vpack.c.bf16 %v2091, %v2091
        %v2348 = vsel %vm2103, %v2345, 0
        %v2351 = vsel %vm570, %v2346, 0
        %2353 = vmatprep.subr.bf16.mxu0 0
        %2354 = vmatpush1.bf16.msra.mxu0 %v2351
        %2355 = vmatprep.subr.bf16.mxu0 0
        %2356 = vmatpush1.bf16.msra.mxu0 0
        %2357 = vmatprep.subr.bf16.mxu0 0
        %2358 = vmatpush1.bf16.msra.mxu0 0
        %2359 = vmatprep.subr.bf16.mxu0 0
        %2360 = vmatpush1.bf16.msra.mxu0 0
        %2361 = vmatprep.subr.bf16.mxu0 0
        %2362 = vmatpush1.bf16.msra.mxu0 0
        %2363 = vmatprep.subr.bf16.mxu0 0
        %2364 = vmatpush1.bf16.msra.mxu0 0
        %2365 = vmatprep.subr.bf16.mxu0 0
        %2366 = vmatpush1.bf16.msra.mxu0 0
        %2367 = vmatprep.subr.bf16.mxu0 0
        %2368 = vmatpush1.bf16.msra.mxu0 0
        %2369 = vmatprep.subr.bf16.mxu0 0
        %2370 = vmatpush1.bf16.msra.mxu0 0
        %2371 = vmatprep.subr.bf16.mxu0 0
        %2372 = vmatpush1.bf16.msra.mxu0 0
        %2373 = vmatprep.subr.bf16.mxu0 0
        %2374 = vmatpush1.bf16.msra.mxu0 0
        %2375 = vmatprep.subr.bf16.mxu0 0
        %2376 = vmatpush1.bf16.msra.mxu0 0
        %2377 = vmatprep.subr.bf16.mxu0 0
        %2378 = vmatpush1.bf16.msra.mxu0 0
        %2379 = vmatprep.subr.bf16.mxu0 0
        %2380 = vmatpush1.bf16.msra.mxu0 0
        %2381 = vmatprep.subr.bf16.mxu0 0
        %2382 = vmatpush1.bf16.msra.mxu0 0
        %2383 = vmatprep.subr.bf16.mxu0 0
        %2384 = vmatpush1.bf16.msra.mxu0 0
        %2385 = vmatprep.mubr.bf16.mxu0 0
        %2386 = vmatmul.mubr.bf16.gmra.mrb[0].mxu0 %v2348
        %v2387 = vpop.f32.mrb[0].mxu0
        %v2388 = vadd.f32 0.0, %v2387
        %v2389 = vpop.f32.mrb[0].mxu0
        %v2390 = vpop.f32.mrb[0].mxu0
        %v2391 = vadd.f32 0.0, %v2390
        %v2392 = vpop.f32.mrb[0].mxu0
        %2393 = vdwg.mxu0
        %v2395 = vsel %vm2103, %v2221, 0
        %v2398 = vsel %vm570, %v2222, 0
        %2400 = vmatprep.subr.bf16.mxu0 0
        %2401 = vmatpush1.bf16.msra.mxu0 %v2398
        %2402 = vmatprep.subr.bf16.mxu0 0
        %2403 = vmatpush1.bf16.msra.mxu0 0
        %2404 = vmatprep.subr.bf16.mxu0 0
        %2405 = vmatpush1.bf16.msra.mxu0 0
        %2406 = vmatprep.subr.bf16.mxu0 0
        %2407 = vmatpush1.bf16.msra.mxu0 0
        %2408 = vmatprep.subr.bf16.mxu0 0
        %2409 = vmatpush1.bf16.msra.mxu0 0
        %2410 = vmatprep.subr.bf16.mxu0 0
        %2411 = vmatpush1.bf16.msra.mxu0 0
        %2412 = vmatprep.subr.bf16.mxu0 0
        %2413 = vmatpush1.bf16.msra.mxu0 0
        %2414 = vmatprep.subr.bf16.mxu0 0
        %2415 = vmatpush1.bf16.msra.mxu0 0
        %2416 = vmatprep.subr.bf16.mxu0 0
        %2417 = vmatpush1.bf16.msra.mxu0 0
        %2418 = vmatprep.subr.bf16.mxu0 0
        %2419 = vmatpush1.bf16.msra.mxu0 0
        %2420 = vmatprep.subr.bf16.mxu0 0
        %2421 = vmatpush1.bf16.msra.mxu0 0
        %2422 = vmatprep.subr.bf16.mxu0 0
        %2423 = vmatpush1.bf16.msra.mxu0 0
        %2424 = vmatprep.subr.bf16.mxu0 0
        %2425 = vmatpush1.bf16.msra.mxu0 0
        %2426 = vmatprep.subr.bf16.mxu0 0
        %2427 = vmatpush1.bf16.msra.mxu0 0
        %2428 = vmatprep.subr.bf16.mxu0 0
        %2429 = vmatpush1.bf16.msra.mxu0 0
        %2430 = vmatprep.subr.bf16.mxu0 0
        %2431 = vmatpush1.bf16.msra.mxu0 0
        %2432 = vmatprep.mubr.bf16.mxu0 0
        %2433 = vmatmul.mubr.bf16.gmra.mrb[0].mxu0 %v2395
        %v2434 = vpop.f32.mrb[0].mxu0
        %v2435 = vadd.f32 %v2388, %v2434
        %v2436 = vpop.f32.mrb[0].mxu0
        %v2437 = vpop.f32.mrb[0].mxu0
        %v2438 = vadd.f32 %v2391, %v2437
        %v2439 = vpop.f32.mrb[0].mxu0
        %2440 = vdwg.mxu0
        %2441 = vrot.lane.b32.xlu0 %v2094, 112
        %v2442 = vpop.permute.xlu0 %2441
        %2443 = vrot.lane.b32.xlu0 %v2095, 80
        %v2444 = vpop.permute.xlu0 %2443
        %v2446 = vsel %vm2103, %v2442, 0
        %v2449 = vsel %vm2103, %v2444, 0
        %2451 = vmatprep.subr.bf16.mxu0 0
        %2452 = vmatpush1.bf16.xpose.msra.mxu0 %v2449
        %2453 = vmatprep.subr.bf16.mxu0 0
        %2454 = vmatpush1.bf16.xpose.msra.mxu0 0
        %2455 = vmatprep.subr.bf16.mxu0 0
        %2456 = vmatpush1.bf16.xpose.msra.mxu0 0
        %2457 = vmatprep.subr.bf16.mxu0 0
        %2458 = vmatpush1.bf16.xpose.msra.mxu0 0
        %2459 = vmatprep.subr.bf16.mxu0 0
        %2460 = vmatpush1.bf16.xpose.msra.mxu0 0
        %2461 = vmatprep.subr.bf16.mxu0 0
        %2462 = vmatpush1.bf16.xpose.msra.mxu0 0
        %2463 = vmatprep.subr.bf16.mxu0 0
        %2464 = vmatpush1.bf16.xpose.msra.mxu0 0
        %2465 = vmatprep.subr.bf16.mxu0 0
        %2466 = vmatpush1.bf16.xpose.msra.mxu0 0
        %2467 = vmatprep.subr.bf16.mxu0 0
        %2468 = vmatpush1.bf16.xpose.msra.mxu0 0
        %2469 = vmatprep.subr.bf16.mxu0 0
        %2470 = vmatpush1.bf16.xpose.msra.mxu0 0
        %2471 = vmatprep.subr.bf16.mxu0 0
        %2472 = vmatpush1.bf16.xpose.msra.mxu0 0
        %2473 = vmatprep.subr.bf16.mxu0 0
        %2474 = vmatpush1.bf16.xpose.msra.mxu0 0
        %2475 = vmatprep.subr.bf16.mxu0 0
        %2476 = vmatpush1.bf16.xpose.msra.mxu0 0
        %2477 = vmatprep.subr.bf16.mxu0 0
        %2478 = vmatpush1.bf16.xpose.msra.mxu0 0
        %2479 = vmatprep.subr.bf16.mxu0 0
        %2480 = vmatpush1.bf16.xpose.msra.mxu0 0
        %2481 = vmatprep.subr.bf16.mxu0 0
        %2482 = vmatpush1.bf16.xpose.msra.mxu0 0
        %2483 = vmatprep.mubr.bf16.mxu0 0
        %2484 = vmatmul.mubr.bf16.gmra.mrb[0].mxu0 %v2446
        %v2485 = vpop.f32.mrb[0].mxu0
        %v2486 = vadd.f32 %v2099, %v2485
        %v2487 = vpop.f32.mrb[0].mxu0
        %v2488 = vpop.f32.mrb[0].mxu0
        %v2489 = vadd.f32 %v2099, %v2488
        %v2490 = vpop.f32.mrb[0].mxu0
        %2491 = vdwg.mxu0
        %v2492 = vsel %vm265, %v2486, -inf
        %2493 = vmax.xlane.f32.xlu0 %v2492
        %v2494 = vpop.xlane.xlu0 %2493
        %v2495 = vsel %vm265, %v2489, -inf
        %2496 = vmax.xlane.f32.xlu0 %v2495
        %v2497 = vpop.xlane.xlu0 %2496
        %v2498 = vsub.f32 %v2486, %v2494
        %v2499 = vsub.f32 %v2489, %v2497
        %v2500 = vmul.f32 %v2498, 1.442695
        %v2501 = vpow.pop %v2500
        %v2502 = vmul.f32 %v2499, 1.442695
        %v2503 = vpow.pop %v2502
        %v2504 = vsel %vm265, %v2501, 0.0
        %2505 = vadd.xlane.f32.xlu0 %v2504
        %v2506 = vpop.xlane.xlu0 %2505
        %v2507 = vsel %vm265, %v2503, 0.0
        %2508 = vadd.xlane.f32.xlu0 %v2507
        %v2509 = vpop.xlane.xlu0 %2508
        %v2510 = vrcp.pop %v2506
        %v2511 = vrcp.pop %v2509
        %v2512 = vmul.f32 %v2501, %v2510
        %v2513 = vmul.f32 %v2503, %v2511
        %v2514 = vpack.c.bf16 %v2513, %v2512
        %2515 = vrot.lane.b32.xlu0 %v2095, 48
        %v2516 = vpop.permute.xlu0 %2515
        %v2519 = vsel %vm265, %v2514, 0
        %2521 = vmatprep.subr.bf16.mxu0 0
        %2522 = vmatpush1.bf16.msra.mxu0 %v2516
        %2523 = vmatprep.subr.bf16.mxu0 0
        %2524 = vmatpush1.bf16.msra.mxu0 0
        %2525 = vmatprep.subr.bf16.mxu0 0
        %2526 = vmatpush1.bf16.msra.mxu0 0
        %2527 = vmatprep.subr.bf16.mxu0 0
        %2528 = vmatpush1.bf16.msra.mxu0 0
        %2529 = vmatprep.subr.bf16.mxu0 0
        %2530 = vmatpush1.bf16.msra.mxu0 0
        %2531 = vmatprep.subr.bf16.mxu0 0
        %2532 = vmatpush1.bf16.msra.mxu0 0
        %2533 = vmatprep.subr.bf16.mxu0 0
        %2534 = vmatpush1.bf16.msra.mxu0 0
        %2535 = vmatprep.subr.bf16.mxu0 0
        %2536 = vmatpush1.bf16.msra.mxu0 0
        %2537 = vmatprep.subr.bf16.mxu0 0
        %2538 = vmatpush1.bf16.msra.mxu0 0
        %2539 = vmatprep.subr.bf16.mxu0 0
        %2540 = vmatpush1.bf16.msra.mxu0 0
        %2541 = vmatprep.subr.bf16.mxu0 0
        %2542 = vmatpush1.bf16.msra.mxu0 0
        %2543 = vmatprep.subr.bf16.mxu0 0
        %2544 = vmatpush1.bf16.msra.mxu0 0
        %2545 = vmatprep.subr.bf16.mxu0 0
        %2546 = vmatpush1.bf16.msra.mxu0 0
        %2547 = vmatprep.subr.bf16.mxu0 0
        %2548 = vmatpush1.bf16.msra.mxu0 0
        %2549 = vmatprep.subr.bf16.mxu0 0
        %2550 = vmatpush1.bf16.msra.mxu0 0
        %2551 = vmatprep.subr.bf16.mxu0 0
        %2552 = vmatpush1.bf16.msra.mxu0 0
        %2553 = vmatprep.mubr.bf16.mxu0 0
        %2554 = vmatmul.mubr.bf16.gmra.mrb[0].mxu0 %v2519
        %v2555 = vpop.f32.mrb[0].mxu0
        %v2556 = vadd.f32 0.0, %v2555
        %v2557 = vpop.f32.mrb[0].mxu0
        %v2558 = vpop.f32.mrb[0].mxu0
        %v2559 = vadd.f32 0.0, %v2558
        %v2560 = vpop.f32.mrb[0].mxu0
        %2561 = vdwg.mxu0
        %v2562 = vpack.c.bf16 %v2559, %v2556
        %v2563 = vpack.c.bf16 %v2092, %v2092
        %v2565 = vsel %vm2103, %v2562, 0
        %v2568 = vsel %vm570, %v2563, 0
        %2570 = vmatprep.subr.bf16.mxu0 0
        %2571 = vmatpush1.bf16.msra.mxu0 %v2568
        %2572 = vmatprep.subr.bf16.mxu0 0
        %2573 = vmatpush1.bf16.msra.mxu0 0
        %2574 = vmatprep.subr.bf16.mxu0 0
        %2575 = vmatpush1.bf16.msra.mxu0 0
        %2576 = vmatprep.subr.bf16.mxu0 0
        %2577 = vmatpush1.bf16.msra.mxu0 0
        %2578 = vmatprep.subr.bf16.mxu0 0
        %2579 = vmatpush1.bf16.msra.mxu0 0
        %2580 = vmatprep.subr.bf16.mxu0 0
        %2581 = vmatpush1.bf16.msra.mxu0 0
        %2582 = vmatprep.subr.bf16.mxu0 0
        %2583 = vmatpush1.bf16.msra.mxu0 0
        %2584 = vmatprep.subr.bf16.mxu0 0
        %2585 = vmatpush1.bf16.msra.mxu0 0
        %2586 = vmatprep.subr.bf16.mxu0 0
        %2587 = vmatpush1.bf16.msra.mxu0 0
        %2588 = vmatprep.subr.bf16.mxu0 0
        %2589 = vmatpush1.bf16.msra.mxu0 0
        %2590 = vmatprep.subr.bf16.mxu0 0
        %2591 = vmatpush1.bf16.msra.mxu0 0
        %2592 = vmatprep.subr.bf16.mxu0 0
        %2593 = vmatpush1.bf16.msra.mxu0 0
        %2594 = vmatprep.subr.bf16.mxu0 0
        %2595 = vmatpush1.bf16.msra.mxu0 0
        %2596 = vmatprep.subr.bf16.mxu0 0
        %2597 = vmatpush1.bf16.msra.mxu0 0
        %2598 = vmatprep.subr.bf16.mxu0 0
        %2599 = vmatpush1.bf16.msra.mxu0 0
        %2600 = vmatprep.subr.bf16.mxu0 0
        %2601 = vmatpush1.bf16.msra.mxu0 0
        %2602 = vmatprep.mubr.bf16.mxu0 0
        %2603 = vmatmul.mubr.bf16.gmra.mrb[0].mxu0 %v2565
        %v2604 = vpop.f32.mrb[0].mxu0
        %v2605 = vadd.f32 0.0, %v2604
        %v2606 = vpop.f32.mrb[0].mxu0
        %v2607 = vpop.f32.mrb[0].mxu0
        %v2608 = vadd.f32 0.0, %v2607
        %v2609 = vpop.f32.mrb[0].mxu0
        %2610 = vdwg.mxu0
        %v2611 = vadd.f32 %v2435, %v2605
        %v2612 = vadd.f32 %v2438, %v2608
        %2613 = vrot.lane.b32.xlu0 %v2094, 104
        %v2614 = vpop.permute.xlu0 %2613
        %2615 = vrot.lane.b32.xlu0 %v2095, 72
        %v2616 = vpop.permute.xlu0 %2615
        %v2618 = vsel %vm2103, %v2614, 0
        %v2621 = vsel %vm2103, %v2616, 0
        %2623 = vmatprep.subr.bf16.mxu0 0
        %2624 = vmatpush1.bf16.xpose.msra.mxu0 %v2621
        %2625 = vmatprep.subr.bf16.mxu0 0
        %2626 = vmatpush1.bf16.xpose.msra.mxu0 0
        %2627 = vmatprep.subr.bf16.mxu0 0
        %2628 = vmatpush1.bf16.xpose.msra.mxu0 0
        %2629 = vmatprep.subr.bf16.mxu0 0
        %2630 = vmatpush1.bf16.xpose.msra.mxu0 0
        %2631 = vmatprep.subr.bf16.mxu0 0
        %2632 = vmatpush1.bf16.xpose.msra.mxu0 0
        %2633 = vmatprep.subr.bf16.mxu0 0
        %2634 = vmatpush1.bf16.xpose.msra.mxu0 0
        %2635 = vmatprep.subr.bf16.mxu0 0
        %2636 = vmatpush1.bf16.xpose.msra.mxu0 0
        %2637 = vmatprep.subr.bf16.mxu0 0
        %2638 = vmatpush1.bf16.xpose.msra.mxu0 0
        %2639 = vmatprep.subr.bf16.mxu0 0
        %2640 = vmatpush1.bf16.xpose.msra.mxu0 0
        %2641 = vmatprep.subr.bf16.mxu0 0
        %2642 = vmatpush1.bf16.xpose.msra.mxu0 0
        %2643 = vmatprep.subr.bf16.mxu0 0
        %2644 = vmatpush1.bf16.xpose.msra.mxu0 0
        %2645 = vmatprep.subr.bf16.mxu0 0
        %2646 = vmatpush1.bf16.xpose.msra.mxu0 0
        %2647 = vmatprep.subr.bf16.mxu0 0
        %2648 = vmatpush1.bf16.xpose.msra.mxu0 0
        %2649 = vmatprep.subr.bf16.mxu0 0
        %2650 = vmatpush1.bf16.xpose.msra.mxu0 0
        %2651 = vmatprep.subr.bf16.mxu0 0
        %2652 = vmatpush1.bf16.xpose.msra.mxu0 0
        %2653 = vmatprep.subr.bf16.mxu0 0
        %2654 = vmatpush1.bf16.xpose.msra.mxu0 0
        %2655 = vmatprep.mubr.bf16.mxu0 0
        %2656 = vmatmul.mubr.bf16.gmra.mrb[0].mxu0 %v2618
        %v2657 = vpop.f32.mrb[0].mxu0
        %v2658 = vadd.f32 %v2099, %v2657
        %v2659 = vpop.f32.mrb[0].mxu0
        %v2660 = vpop.f32.mrb[0].mxu0
        %v2661 = vadd.f32 %v2099, %v2660
        %v2662 = vpop.f32.mrb[0].mxu0
        %2663 = vdwg.mxu0
        %v2664 = vsel %vm265, %v2658, -inf
        %2665 = vmax.xlane.f32.xlu0 %v2664
        %v2666 = vpop.xlane.xlu0 %2665
        %v2667 = vsel %vm265, %v2661, -inf
        %2668 = vmax.xlane.f32.xlu0 %v2667
        %v2669 = vpop.xlane.xlu0 %2668
        %v2670 = vsub.f32 %v2658, %v2666
        %v2671 = vsub.f32 %v2661, %v2669
        %v2672 = vmul.f32 %v2670, 1.442695
        %v2673 = vpow.pop %v2672
        %v2674 = vmul.f32 %v2671, 1.442695
        %v2675 = vpow.pop %v2674
        %v2676 = vsel %vm265, %v2673, 0.0
        %2677 = vadd.xlane.f32.xlu0 %v2676
        %v2678 = vpop.xlane.xlu0 %2677
        %v2679 = vsel %vm265, %v2675, 0.0
        %2680 = vadd.xlane.f32.xlu0 %v2679
        %v2681 = vpop.xlane.xlu0 %2680
        %v2682 = vrcp.pop %v2678
        %v2683 = vrcp.pop %v2681
        %v2684 = vmul.f32 %v2673, %v2682
        %v2685 = vmul.f32 %v2675, %v2683
        %v2686 = vpack.c.bf16 %v2685, %v2684
        %2687 = vrot.lane.b32.xlu0 %v2095, 40
        %v2688 = vpop.permute.xlu0 %2687
        %v2691 = vsel %vm265, %v2686, 0
        %2693 = vmatprep.subr.bf16.mxu0 0
        %2694 = vmatpush1.bf16.msra.mxu0 %v2688
        %2695 = vmatprep.subr.bf16.mxu0 0
        %2696 = vmatpush1.bf16.msra.mxu0 0
        %2697 = vmatprep.subr.bf16.mxu0 0
        %2698 = vmatpush1.bf16.msra.mxu0 0
        %2699 = vmatprep.subr.bf16.mxu0 0
        %2700 = vmatpush1.bf16.msra.mxu0 0
        %2701 = vmatprep.subr.bf16.mxu0 0
        %2702 = vmatpush1.bf16.msra.mxu0 0
        %2703 = vmatprep.subr.bf16.mxu0 0
        %2704 = vmatpush1.bf16.msra.mxu0 0
        %2705 = vmatprep.subr.bf16.mxu0 0
        %2706 = vmatpush1.bf16.msra.mxu0 0
        %2707 = vmatprep.subr.bf16.mxu0 0
        %2708 = vmatpush1.bf16.msra.mxu0 0
        %2709 = vmatprep.subr.bf16.mxu0 0
        %2710 = vmatpush1.bf16.msra.mxu0 0
        %2711 = vmatprep.subr.bf16.mxu0 0
        %2712 = vmatpush1.bf16.msra.mxu0 0
        %2713 = vmatprep.subr.bf16.mxu0 0
        %2714 = vmatpush1.bf16.msra.mxu0 0
        %2715 = vmatprep.subr.bf16.mxu0 0
        %2716 = vmatpush1.bf16.msra.mxu0 0
        %2717 = vmatprep.subr.bf16.mxu0 0
        %2718 = vmatpush1.bf16.msra.mxu0 0
        %2719 = vmatprep.subr.bf16.mxu0 0
        %2720 = vmatpush1.bf16.msra.mxu0 0
        %2721 = vmatprep.subr.bf16.mxu0 0
        %2722 = vmatpush1.bf16.msra.mxu0 0
        %2723 = vmatprep.subr.bf16.mxu0 0
        %2724 = vmatpush1.bf16.msra.mxu0 0
        %2725 = vmatprep.mubr.bf16.mxu0 0
        %2726 = vmatmul.mubr.bf16.gmra.mrb[0].mxu0 %v2691
        %v2727 = vpop.f32.mrb[0].mxu0
        %v2728 = vadd.f32 0.0, %v2727
        %v2729 = vpop.f32.mrb[0].mxu0
        %v2730 = vpop.f32.mrb[0].mxu0
        %v2731 = vadd.f32 0.0, %v2730
        %v2732 = vpop.f32.mrb[0].mxu0
        %2733 = vdwg.mxu0
        %v2734 = vpack.c.bf16 %v2731, %v2728
        %v2735 = vpack.c.bf16 %v2093, %v2093
        %v2737 = vsel %vm2103, %v2734, 0
        %v2740 = vsel %vm570, %v2735, 0
        %2742 = vmatprep.subr.bf16.mxu0 0
        %2743 = vmatpush1.bf16.msra.mxu0 %v2740
        %2744 = vmatprep.subr.bf16.mxu0 0
        %2745 = vmatpush1.bf16.msra.mxu0 0
        %2746 = vmatprep.subr.bf16.mxu0 0
        %2747 = vmatpush1.bf16.msra.mxu0 0
        %2748 = vmatprep.subr.bf16.mxu0 0
        %2749 = vmatpush1.bf16.msra.mxu0 0
        %2750 = vmatprep.subr.bf16.mxu0 0
        %2751 = vmatpush1.bf16.msra.mxu0 0
        %2752 = vmatprep.subr.bf16.mxu0 0
        %2753 = vmatpush1.bf16.msra.mxu0 0
        %2754 = vmatprep.subr.bf16.mxu0 0
        %2755 = vmatpush1.bf16.msra.mxu0 0
        %2756 = vmatprep.subr.bf16.mxu0 0
        %2757 = vmatpush1.bf16.msra.mxu0 0
        %2758 = vmatprep.subr.bf16.mxu0 0
        %2759 = vmatpush1.bf16.msra.mxu0 0
        %2760 = vmatprep.subr.bf16.mxu0 0
        %2761 = vmatpush1.bf16.msra.mxu0 0
        %2762 = vmatprep.subr.bf16.mxu0 0
        %2763 = vmatpush1.bf16.msra.mxu0 0
        %2764 = vmatprep.subr.bf16.mxu0 0
        %2765 = vmatpush1.bf16.msra.mxu0 0
        %2766 = vmatprep.subr.bf16.mxu0 0
        %2767 = vmatpush1.bf16.msra.mxu0 0
        %2768 = vmatprep.subr.bf16.mxu0 0
        %2769 = vmatpush1.bf16.msra.mxu0 0
        %2770 = vmatprep.subr.bf16.mxu0 0
        %2771 = vmatpush1.bf16.msra.mxu0 0
        %2772 = vmatprep.subr.bf16.mxu0 0
        %2773 = vmatpush1.bf16.msra.mxu0 0
        %2774 = vmatprep.mubr.bf16.mxu0 0
        %2775 = vmatmul.mubr.bf16.gmra.mrb[0].mxu0 %v2737
        %v2776 = vpop.f32.mrb[0].mxu0
        %v2777 = vadd.f32 0.0, %v2776
        %v2778 = vpop.f32.mrb[0].mxu0
        %v2779 = vpop.f32.mrb[0].mxu0
        %v2780 = vadd.f32 0.0, %v2779
        %v2781 = vpop.f32.mrb[0].mxu0
        %2782 = vdwg.mxu0
        %v2783 = vadd.f32 %v2611, %v2777
        %v2784 = vadd.f32 %v2612, %v2780
        %v2785 = vld [vmem:[#allocation2 + $0x88] sm:$0x1]
        %v2786 = vlaneseq
        %v2787 = vshrl.u32 %v2786, 7
        %v2788 = vsub.s32 0, %v2787
        %v2789 = vrot.slane %v2785, %v2788
        %v2790 = vadd.f32 %v2783, %v2789
        %v2791 = vadd.f32 %v2784, %v2789
        %v2792 = vadd.f32 %v2025, %v2790
        %v2793 = vadd.f32 %v2026, %v2791
        %v2794 = vld [vmem:[#allocation2 + $0x100] sm:$0x1]
        %v2795 = vld [vmem:[#allocation2 + $0x108] sm:$0x1]
        %v2796 = vsel %vm2039, %v2792, 0.0
        %2797 = vadd.xlane.f32.xlu0 %v2796
        %v2798 = vpop.xlane.xlu0 %2797
        %v2799 = vsel %vm2039, %v2793, 0.0
        %2800 = vadd.xlane.f32.xlu0 %v2799
        %v2801 = vpop.xlane.xlu0 %2800
        %v2802 = vrcp.pop 32.0
        %v2803 = vmul.f32 %v2798, %v2802
        %v2804 = vmul.f32 %v2801, %v2802
        %v2805 = vsub.f32 %v2792, %v2803
        %v2806 = vsub.f32 %v2793, %v2804
        %v2807 = vmul.f32 %v2805, %v2805
        %v2808 = vmul.f32 %v2806, %v2806
        %v2809 = vsel %vm2039, %v2807, 0.0
        %2810 = vadd.xlane.f32.xlu0 %v2809
        %v2811 = vpop.xlane.xlu0 %2810
        %v2812 = vsel %vm2039, %v2808, 0.0
        %2813 = vadd.xlane.f32.xlu0 %v2812
        %v2814 = vpop.xlane.xlu0 %2813
        %v2815 = vmul.f32 %v2811, %v2802
        %v2816 = vmul.f32 %v2814, %v2802
        %v2817 = vadd.f32 %v2815, 1e-05
        %v2818 = vadd.f32 %v2816, 1e-05
        %v2819 = vrsqrt.pop %v2817
        %v2820 = vrsqrt.pop %v2818
        %v2821 = vmul.f32 %v2805, %v2819
        %v2822 = vmul.f32 %v2806, %v2820
        %v2823 = vlaneseq
        %v2824 = vshrl.u32 %v2823, 7
        %v2825 = vsub.s32 0, %v2824
        %v2826 = vrot.slane %v2794, %v2825
        %v2827 = vmul.f32 %v2821, %v2826
        %v2828 = vmul.f32 %v2822, %v2826
        %v2829 = vlaneseq
        %v2830 = vshrl.u32 %v2829, 7
        %v2831 = vsub.s32 0, %v2830
        %v2832 = vrot.slane %v2795, %v2831
        %v2833 = vadd.f32 %v2827, %v2832
        %v2834 = vadd.f32 %v2828, %v2832
        %v2835 = vld [vmem:[#allocation2 + $0x90] sm:$0xff]
        %v2836 = vld [vmem:[#allocation2 + $0x98] sm:$0xff]
        %v2837 = vld [vmem:[#allocation2 + $0xa0] sm:$0xff]
        %v2838 = vld [vmem:[#allocation2 + $0xa8] sm:$0xff]
        %v2839 = vpack.c.bf16 %v2834, %v2833
        %v2840 = vpack.c.bf16 %v2836, %v2835
        %v2841 = vpack.c.bf16 %v2838, %v2837
        %v2842 = vld [vmem:[#allocation2 + $0xb0] sm:$0x1]
        %v2843 = vlaneseq
        %v2844 = vshrl.u32 %v2843, 7
        %v2845 = vsub.s32 0, %v2844
        %v2846 = vrot.slane %v2842, %v2845
        %v2848 = vsel %vm2039, %v2839, 0
        %2850 = vmatprep.subr.bf16.mxu0 0
        %2851 = vmatpush1.bf16.msra.mxu0 %v2840
        %2852 = vmatprep.subr.bf16.mxu0 0
        %2853 = vmatpush1.bf16.msra.mxu0 %v2841
        %2854 = vmatprep.subr.bf16.mxu0 0
        %2855 = vmatpush1.bf16.msra.mxu0 0
        %2856 = vmatprep.subr.bf16.mxu0 0
        %2857 = vmatpush1.bf16.msra.mxu0 0
        %2858 = vmatprep.subr.bf16.mxu0 0
        %2859 = vmatpush1.bf16.msra.mxu0 0
        %2860 = vmatprep.subr.bf16.mxu0 0
        %2861 = vmatpush1.bf16.msra.mxu0 0
        %2862 = vmatprep.subr.bf16.mxu0 0
        %2863 = vmatpush1.bf16.msra.mxu0 0
        %2864 = vmatprep.subr.bf16.mxu0 0
        %2865 = vmatpush1.bf16.msra.mxu0 0
        %2866 = vmatprep.subr.bf16.mxu0 0
        %2867 = vmatpush1.bf16.msra.mxu0 0
        %2868 = vmatprep.subr.bf16.mxu0 0
        %2869 = vmatpush1.bf16.msra.mxu0 0
        %2870 = vmatprep.subr.bf16.mxu0 0
        %2871 = vmatpush1.bf16.msra.mxu0 0
        %2872 = vmatprep.subr.bf16.mxu0 0
        %2873 = vmatpush1.bf16.msra.mxu0 0
        %2874 = vmatprep.subr.bf16.mxu0 0
        %2875 = vmatpush1.bf16.msra.mxu0 0
        %2876 = vmatprep.subr.bf16.mxu0 0
        %2877 = vmatpush1.bf16.msra.mxu0 0
        %2878 = vmatprep.subr.bf16.mxu0 0
        %2879 = vmatpush1.bf16.msra.mxu0 0
        %2880 = vmatprep.subr.bf16.mxu0 0
        %2881 = vmatpush1.bf16.msra.mxu0 0
        %2882 = vmatprep.mubr.bf16.mxu0 0
        %2883 = vmatmul.mubr.bf16.gmra.mrb[0].mxu0 %v2848
        %v2884 = vpop.f32.mrb[0].mxu0
        %v2885 = vadd.f32 %v2846, %v2884
        %v2886 = vpop.f32.mrb[0].mxu0
        %v2887 = vpop.f32.mrb[0].mxu0
        %v2888 = vadd.f32 %v2846, %v2887
        %v2889 = vpop.f32.mrb[0].mxu0
        %2890 = vdwg.mxu0
        %v2891 = vmax.f32 %v2885, 0.0
        %v2892 = vmax.f32 %v2888, 0.0
        %v2893 = vld [vmem:[#allocation2 + $0xb8] sm:$0xff]
        %v2894 = vld [vmem:[#allocation2 + $0xc0] sm:$0xff]
        %v2895 = vld [vmem:[#allocation2 + $0xc8] sm:$0xff]
        %v2896 = vld [vmem:[#allocation2 + $0xd0] sm:$0xff]
        %v2897 = vld [vmem:[#allocation2 + $0xd8] sm:$0xff]
        %v2898 = vld [vmem:[#allocation2 + $0xe0] sm:$0xff]
        %v2899 = vld [vmem:[#allocation2 + $0xe8] sm:$0xff]
        %v2900 = vld [vmem:[#allocation2 + $0xf0] sm:$0xff]
        %v2901 = vpack.c.bf16 %v2892, %v2891
        %v2902 = vpack.c.bf16 %v2894, %v2893
        %v2903 = vpack.c.bf16 %v2896, %v2895
        %v2904 = vpack.c.bf16 %v2898, %v2897
        %v2905 = vpack.c.bf16 %v2900, %v2899
        %v2906 = vld [vmem:[#allocation2 + $0xf8] sm:$0x1]
        %v2907 = vlaneseq
        %v2908 = vshrl.u32 %v2907, 7
        %v2909 = vsub.s32 0, %v2908
        %v2910 = vrot.slane %v2906, %v2909
        %vm2911 = vcmask 523264
        %v2913 = vsel %vm2911, %v2901, 0
        %2915 = vmatprep.subr.bf16.mxu0 0
        %2916 = vmatpush1.bf16.msra.mxu0 %v2902
        %2917 = vmatprep.subr.bf16.mxu0 0
        %2918 = vmatpush1.bf16.msra.mxu0 %v2903
        %2919 = vmatprep.subr.bf16.mxu0 0
        %2920 = vmatpush1.bf16.msra.mxu0 %v2904
        %2921 = vmatprep.subr.bf16.mxu0 0
        %2922 = vmatpush1.bf16.msra.mxu0 %v2905
        %2923 = vmatprep.subr.bf16.mxu0 0
        %2924 = vmatpush1.bf16.msra.mxu0 0
        %2925 = vmatprep.subr.bf16.mxu0 0
        %2926 = vmatpush1.bf16.msra.mxu0 0
        %2927 = vmatprep.subr.bf16.mxu0 0
        %2928 = vmatpush1.bf16.msra.mxu0 0
        %2929 = vmatprep.subr.bf16.mxu0 0
        %2930 = vmatpush1.bf16.msra.mxu0 0
        %2931 = vmatprep.subr.bf16.mxu0 0
        %2932 = vmatpush1.bf16.msra.mxu0 0
        %2933 = vmatprep.subr.bf16.mxu0 0
        %2934 = vmatpush1.bf16.msra.mxu0 0
        %2935 = vmatprep.subr.bf16.mxu0 0
        %2936 = vmatpush1.bf16.msra.mxu0 0
        %2937 = vmatprep.subr.bf16.mxu0 0
        %2938 = vmatpush1.bf16.msra.mxu0 0
        %2939 = vmatprep.subr.bf16.mxu0 0
        %2940 = vmatpush1.bf16.msra.mxu0 0
        %2941 = vmatprep.subr.bf16.mxu0 0
        %2942 = vmatpush1.bf16.msra.mxu0 0
        %2943 = vmatprep.subr.bf16.mxu0 0
        %2944 = vmatpush1.bf16.msra.mxu0 0
        %2945 = vmatprep.subr.bf16.mxu0 0
        %2946 = vmatpush1.bf16.msra.mxu0 0
        %2947 = vmatprep.mubr.bf16.mxu0 0
        %2948 = vmatmul.mubr.bf16.gmra.mrb[0].mxu0 %v2913
        %v2949 = vpop.f32.mrb[0].mxu0
        %v2950 = vadd.f32 %v2910, %v2949
        %v2951 = vpop.f32.mrb[0].mxu0
        %v2952 = vpop.f32.mrb[0].mxu0
        %v2953 = vadd.f32 %v2910, %v2952
        %v2954 = vpop.f32.mrb[0].mxu0
        %2955 = vdwg.mxu0
        %v2956 = vadd.f32 %v2833, %v2950
        %v2957 = vadd.f32 %v2834, %v2953
        %v2958 = vld [vmem:[#allocation2 + $0x110] sm:$0x1]
        %v2959 = vld [vmem:[#allocation2 + $0x118] sm:$0x1]
        %v2960 = vsel %vm2039, %v2956, 0.0
        %2961 = vadd.xlane.f32.xlu0 %v2960
        %v2962 = vpop.xlane.xlu0 %2961
        %v2963 = vsel %vm2039, %v2957, 0.0
        %2964 = vadd.xlane.f32.xlu0 %v2963
        %v2965 = vpop.xlane.xlu0 %2964
        %v2966 = vmul.f32 %v2962, %v2802
        %v2967 = vmul.f32 %v2965, %v2802
        %v2968 = vsub.f32 %v2956, %v2966
        %v2969 = vsub.f32 %v2957, %v2967
        %v2970 = vmul.f32 %v2968, %v2968
        %v2971 = vmul.f32 %v2969, %v2969
        %v2972 = vsel %vm2039, %v2970, 0.0
        %2973 = vadd.xlane.f32.xlu0 %v2972
        %v2974 = vpop.xlane.xlu0 %2973
        %v2975 = vsel %vm2039, %v2971, 0.0
        %2976 = vadd.xlane.f32.xlu0 %v2975
        %v2977 = vpop.xlane.xlu0 %2976
        %v2978 = vmul.f32 %v2974, %v2802
        %v2979 = vmul.f32 %v2977, %v2802
        %v2980 = vadd.f32 %v2978, 1e-05
        %v2981 = vadd.f32 %v2979, 1e-05
        %v2982 = vrsqrt.pop %v2980
        %v2983 = vrsqrt.pop %v2981
        %v2984 = vmul.f32 %v2968, %v2982
        %v2985 = vmul.f32 %v2969, %v2983
        %v2986 = vlaneseq
        %v2987 = vshrl.u32 %v2986, 7
        %v2988 = vsub.s32 0, %v2987
        %v2989 = vrot.slane %v2958, %v2988
        %v2990 = vmul.f32 %v2984, %v2989
        %v2991 = vmul.f32 %v2985, %v2989
        %v2992 = vlaneseq
        %v2993 = vshrl.u32 %v2992, 7
        %v2994 = vsub.s32 0, %v2993
        %v2995 = vrot.slane %v2959, %v2994
        %v2996 = vadd.f32 %v2990, %v2995
        %v2997 = vadd.f32 %v2991, %v2995
        %v2998 = vld [vmem:[#allocation2 + $0x120] sm:$0x1]
        %v2999 = vld [vmem:[#allocation2 + $0x128] sm:$0x1]
        %v3000 = vsel %vm2039, %v2996, 0.0
        %3001 = vadd.xlane.f32.xlu0 %v3000
        %v3002 = vpop.xlane.xlu0 %3001
        %v3003 = vsel %vm2039, %v2997, 0.0
        %3004 = vadd.xlane.f32.xlu0 %v3003
        %v3005 = vpop.xlane.xlu0 %3004
        %v3006 = vmul.f32 %v3002, %v2802
        %v3007 = vmul.f32 %v3005, %v2802
        %v3008 = vsub.f32 %v2996, %v3006
        %v3009 = vsub.f32 %v2997, %v3007
        %v3010 = vmul.f32 %v3008, %v3008
        %v3011 = vmul.f32 %v3009, %v3009
        %v3012 = vsel %vm2039, %v3010, 0.0
        %3013 = vadd.xlane.f32.xlu0 %v3012
        %v3014 = vpop.xlane.xlu0 %3013
        %v3015 = vsel %vm2039, %v3011, 0.0
        %3016 = vadd.xlane.f32.xlu0 %v3015
        %v3017 = vpop.xlane.xlu0 %3016
        %v3018 = vmul.f32 %v3014, %v2802
        %v3019 = vmul.f32 %v3017, %v2802
        %v3020 = vadd.f32 %v3018, 1e-05
        %v3021 = vadd.f32 %v3019, 1e-05
        %v3022 = vrsqrt.pop %v3020
        %v3023 = vrsqrt.pop %v3021
        %v3024 = vmul.f32 %v3008, %v3022
        %v3025 = vmul.f32 %v3009, %v3023
        %v3026 = vlaneseq
        %v3027 = vshrl.u32 %v3026, 7
        %v3028 = vsub.s32 0, %v3027
        %v3029 = vrot.slane %v2998, %v3028
        %v3030 = vmul.f32 %v3024, %v3029
        %v3031 = vmul.f32 %v3025, %v3029
        %v3032 = vlaneseq
        %v3033 = vshrl.u32 %v3032, 7
        %v3034 = vsub.s32 0, %v3033
        %v3035 = vrot.slane %v2999, %v3034
        %v3036 = vadd.f32 %v3030, %v3035
        %v3037 = vadd.f32 %v3031, %v3035
        %v3038 = vld [vmem:[#allocation2 + $0x28] sm:$0xf]
        %v3039 = vld [vmem:[#allocation2 + $0x30] sm:$0xf]
        %v3040 = vld [vmem:[#allocation2 + $0x38] sm:$0xf]
        %3041 = vmatprep.subr.mxu0 0.0
        %3042 = vmatpush1.msra.mxu0 %v339
        %3043 = vmatprep.subr.mxu0 0.0
        %3044 = vmatpush1.msra.mxu0 %v344
        %3045 = vmatprep.subr.mxu0 0.0
        %3046 = vmatpush1.msra.mxu0 0.0
        %3047 = vmatprep.subr.mxu0 0.0
        %3048 = vmatpush1.msra.mxu0 0.0
        %3049 = vmatprep.subr.mxu0 0.0
        %3050 = vmatpush1.msra.mxu0 0.0
        %3051 = vmatprep.subr.mxu0 0.0
        %3052 = vmatpush1.msra.mxu0 0.0
        %3053 = vmatprep.subr.mxu0 0.0
        %3054 = vmatpush1.msra.mxu0 0.0
        %3055 = vmatprep.subr.mxu0 0.0
        %3056 = vmatpush1.msra.mxu0 0.0
        %3057 = vmatprep.subr.mxu0 0.0
        %3058 = vmatpush1.msra.mxu0 0.0
        %3059 = vmatprep.subr.mxu0 0.0
        %3060 = vmatpush1.msra.mxu0 0.0
        %3061 = vmatprep.subr.mxu0 0.0
        %3062 = vmatpush1.msra.mxu0 0.0
        %3063 = vmatprep.subr.mxu0 0.0
        %3064 = vmatpush1.msra.mxu0 0.0
        %3065 = vmatprep.subr.mxu0 0.0
        %3066 = vmatpush1.msra.mxu0 0.0
        %3067 = vmatprep.subr.mxu0 0.0
        %3068 = vmatpush1.msra.mxu0 0.0
        %3069 = vmatprep.subr.mxu0 0.0
        %3070 = vmatpush1.msra.mxu0 0.0
        %3071 = vmatprep.subr.mxu0 0.0
        %3072 = vmatpush1.msra.mxu0 0.0
        %3073 = vmatprep.subr.mxu0 0.0
        %3074 = vmatpush1.msra.mxu0 0.0
        %3075 = vmatprep.subr.mxu0 0.0
        %3076 = vmatpush1.msra.mxu0 0.0
        %3077 = vmatprep.subr.mxu0 0.0
        %3078 = vmatpush1.msra.mxu0 0.0
        %3079 = vmatprep.subr.mxu0 0.0
        %3080 = vmatpush1.msra.mxu0 0.0
        %3081 = vmatprep.subr.mxu0 0.0
        %3082 = vmatpush1.msra.mxu0 0.0
        %3083 = vmatprep.subr.mxu0 0.0
        %3084 = vmatpush1.msra.mxu0 0.0
        %3085 = vmatprep.subr.mxu0 0.0
        %3086 = vmatpush1.msra.mxu0 0.0
        %3087 = vmatprep.subr.mxu0 0.0
        %3088 = vmatpush1.msra.mxu0 0.0
        %3089 = vmatprep.subr.mxu0 0.0
        %3090 = vmatpush1.msra.mxu0 0.0
        %3091 = vmatprep.subr.mxu0 0.0
        %3092 = vmatpush1.msra.mxu0 0.0
        %3093 = vmatprep.subr.mxu0 0.0
        %3094 = vmatpush1.msra.mxu0 0.0
        %3095 = vmatprep.subr.mxu0 0.0
        %3096 = vmatpush1.msra.mxu0 0.0
        %3097 = vmatprep.subr.mxu0 0.0
        %3098 = vmatpush1.msra.mxu0 0.0
        %3099 = vmatprep.subr.mxu0 0.0
        %3100 = vmatpush1.msra.mxu0 0.0
        %3101 = vmatprep.subr.mxu0 0.0
        %3102 = vmatpush1.msra.mxu0 0.0
        %3103 = vmatprep.subr.mxu0 0.0
        %3104 = vmatpush1.msra.mxu0 0.0
        %3105 = vmatprep.mubr.f32.mxu0 0.0
        %3106 = vmatmul.mubr.f32.gmra.mrb[0].mxu0 %v1714
        %v3107 = vpop.f32.mrb[0].mxu0
        %v3108 = vadd.f32 0.0, %v3107
        %v3109 = vpop.f32.mrb[0].mxu0
        %3110 = vmatprep.mubr.f32.mxu0 0.0
        %3111 = vmatmul.mubr.f32.gmra.mrb[0].mxu0 %v1717
        %v3112 = vpop.f32.mrb[0].mxu0
        %v3113 = vadd.f32 0.0, %v3112
        %v3114 = vpop.f32.mrb[0].mxu0
        %3115 = vdwg.mxu0
        %v3116 = vpack.c.bf16 %v3113, %v3108
        %v3117 = vpack.c.bf16 %v3038, %v3038
        %v3118 = vpack.c.bf16 %v344, %v339
        %v3119 = vpack.c.bf16 %v3039, %v3039
        %v3121 = vsel %vm228, %v3118, 0
        %v3124 = vsel %vm1801, %v3119, 0
        %3126 = vmatprep.subr.bf16.mxu0 0
        %3127 = vmatpush1.bf16.msra.mxu0 %v3124
        %3128 = vmatprep.subr.bf16.mxu0 0
        %3129 = vmatpush1.bf16.msra.mxu0 0
        %3130 = vmatprep.subr.bf16.mxu0 0
        %3131 = vmatpush1.bf16.msra.mxu0 0
        %3132 = vmatprep.subr.bf16.mxu0 0
        %3133 = vmatpush1.bf16.msra.mxu0 0
        %3134 = vmatprep.subr.bf16.mxu0 0
        %3135 = vmatpush1.bf16.msra.mxu0 0
        %3136 = vmatprep.subr.bf16.mxu0 0
        %3137 = vmatpush1.bf16.msra.mxu0 0
        %3138 = vmatprep.subr.bf16.mxu0 0
        %3139 = vmatpush1.bf16.msra.mxu0 0
        %3140 = vmatprep.subr.bf16.mxu0 0
        %3141 = vmatpush1.bf16.msra.mxu0 0
        %3142 = vmatprep.subr.bf16.mxu0 0
        %3143 = vmatpush1.bf16.msra.mxu0 0
        %3144 = vmatprep.subr.bf16.mxu0 0
        %3145 = vmatpush1.bf16.msra.mxu0 0
        %3146 = vmatprep.subr.bf16.mxu0 0
        %3147 = vmatpush1.bf16.msra.mxu0 0
        %3148 = vmatprep.subr.bf16.mxu0 0
        %3149 = vmatpush1.bf16.msra.mxu0 0
        %3150 = vmatprep.subr.bf16.mxu0 0
        %3151 = vmatpush1.bf16.msra.mxu0 0
        %3152 = vmatprep.subr.bf16.mxu0 0
        %3153 = vmatpush1.bf16.msra.mxu0 0
        %3154 = vmatprep.subr.bf16.mxu0 0
        %3155 = vmatpush1.bf16.msra.mxu0 0
        %3156 = vmatprep.subr.bf16.mxu0 0
        %3157 = vmatpush1.bf16.msra.mxu0 0
        %3158 = vmatprep.mubr.bf16.mxu0 0
        %3159 = vmatmul.mubr.bf16.gmra.mrb[0].mxu0 %v3121
        %v3160 = vpop.f32.mrb[0].mxu0
        %v3161 = vadd.f32 0.0, %v3160
        %v3162 = vpop.f32.mrb[0].mxu0
        %v3163 = vpop.f32.mrb[0].mxu0
        %v3164 = vadd.f32 0.0, %v3163
        %v3165 = vpop.f32.mrb[0].mxu0
        %3166 = vdwg.mxu0
        %v3168 = vsel %vm228, %v3116, 0
        %v3171 = vsel %vm1801, %v3117, 0
        %3173 = vmatprep.subr.bf16.mxu0 0
        %3174 = vmatpush1.bf16.msra.mxu0 %v3171
        %3175 = vmatprep.subr.bf16.mxu0 0
        %3176 = vmatpush1.bf16.msra.mxu0 0
        %3177 = vmatprep.subr.bf16.mxu0 0
        %3178 = vmatpush1.bf16.msra.mxu0 0
        %3179 = vmatprep.subr.bf16.mxu0 0
        %3180 = vmatpush1.bf16.msra.mxu0 0
        %3181 = vmatprep.subr.bf16.mxu0 0
        %3182 = vmatpush1.bf16.msra.mxu0 0
        %3183 = vmatprep.subr.bf16.mxu0 0
        %3184 = vmatpush1.bf16.msra.mxu0 0
        %3185 = vmatprep.subr.bf16.mxu0 0
        %3186 = vmatpush1.bf16.msra.mxu0 0
        %3187 = vmatprep.subr.bf16.mxu0 0
        %3188 = vmatpush1.bf16.msra.mxu0 0
        %3189 = vmatprep.subr.bf16.mxu0 0
        %3190 = vmatpush1.bf16.msra.mxu0 0
        %3191 = vmatprep.subr.bf16.mxu0 0
        %3192 = vmatpush1.bf16.msra.mxu0 0
        %3193 = vmatprep.subr.bf16.mxu0 0
        %3194 = vmatpush1.bf16.msra.mxu0 0
        %3195 = vmatprep.subr.bf16.mxu0 0
        %3196 = vmatpush1.bf16.msra.mxu0 0
        %3197 = vmatprep.subr.bf16.mxu0 0
        %3198 = vmatpush1.bf16.msra.mxu0 0
        %3199 = vmatprep.subr.bf16.mxu0 0
        %3200 = vmatpush1.bf16.msra.mxu0 0
        %3201 = vmatprep.subr.bf16.mxu0 0
        %3202 = vmatpush1.bf16.msra.mxu0 0
        %3203 = vmatprep.subr.bf16.mxu0 0
        %3204 = vmatpush1.bf16.msra.mxu0 0
        %3205 = vmatprep.mubr.bf16.mxu0 0
        %3206 = vmatmul.mubr.bf16.gmra.mrb[0].mxu0 %v3168
        %v3207 = vpop.f32.mrb[0].mxu0
        %v3208 = vadd.f32 %v3161, %v3207
        %v3209 = vpop.f32.mrb[0].mxu0
        %v3210 = vpop.f32.mrb[0].mxu0
        %v3211 = vadd.f32 %v3164, %v3210
        %v3212 = vpop.f32.mrb[0].mxu0
        %3213 = vdwg.mxu0
        %3214 = vmatprep.subr.mxu0 0.0
        %3215 = vmatpush1.msra.mxu0 %v339
        %3216 = vmatprep.subr.mxu0 0.0
        %3217 = vmatpush1.msra.mxu0 %v344
        %3218 = vmatprep.subr.mxu0 0.0
        %3219 = vmatpush1.msra.mxu0 0.0
        %3220 = vmatprep.subr.mxu0 0.0
        %3221 = vmatpush1.msra.mxu0 0.0
        %3222 = vmatprep.subr.mxu0 0.0
        %3223 = vmatpush1.msra.mxu0 0.0
        %3224 = vmatprep.subr.mxu0 0.0
        %3225 = vmatpush1.msra.mxu0 0.0
        %3226 = vmatprep.subr.mxu0 0.0
        %3227 = vmatpush1.msra.mxu0 0.0
        %3228 = vmatprep.subr.mxu0 0.0
        %3229 = vmatpush1.msra.mxu0 0.0
        %3230 = vmatprep.subr.mxu0 0.0
        %3231 = vmatpush1.msra.mxu0 0.0
        %3232 = vmatprep.subr.mxu0 0.0
        %3233 = vmatpush1.msra.mxu0 0.0
        %3234 = vmatprep.subr.mxu0 0.0
        %3235 = vmatpush1.msra.mxu0 0.0
        %3236 = vmatprep.subr.mxu0 0.0
        %3237 = vmatpush1.msra.mxu0 0.0
        %3238 = vmatprep.subr.mxu0 0.0
        %3239 = vmatpush1.msra.mxu0 0.0
        %3240 = vmatprep.subr.mxu0 0.0
        %3241 = vmatpush1.msra.mxu0 0.0
        %3242 = vmatprep.subr.mxu0 0.0
        %3243 = vmatpush1.msra.mxu0 0.0
        %3244 = vmatprep.subr.mxu0 0.0
        %3245 = vmatpush1.msra.mxu0 0.0
        %3246 = vmatprep.subr.mxu0 0.0
        %3247 = vmatpush1.msra.mxu0 0.0
        %3248 = vmatprep.subr.mxu0 0.0
        %3249 = vmatpush1.msra.mxu0 0.0
        %3250 = vmatprep.subr.mxu0 0.0
        %3251 = vmatpush1.msra.mxu0 0.0
        %3252 = vmatprep.subr.mxu0 0.0
        %3253 = vmatpush1.msra.mxu0 0.0
        %3254 = vmatprep.subr.mxu0 0.0
        %3255 = vmatpush1.msra.mxu0 0.0
        %3256 = vmatprep.subr.mxu0 0.0
        %3257 = vmatpush1.msra.mxu0 0.0
        %3258 = vmatprep.subr.mxu0 0.0
        %3259 = vmatpush1.msra.mxu0 0.0
        %3260 = vmatprep.subr.mxu0 0.0
        %3261 = vmatpush1.msra.mxu0 0.0
        %3262 = vmatprep.subr.mxu0 0.0
        %3263 = vmatpush1.msra.mxu0 0.0
        %3264 = vmatprep.subr.mxu0 0.0
        %3265 = vmatpush1.msra.mxu0 0.0
        %3266 = vmatprep.subr.mxu0 0.0
        %3267 = vmatpush1.msra.mxu0 0.0
        %3268 = vmatprep.subr.mxu0 0.0
        %3269 = vmatpush1.msra.mxu0 0.0
        %3270 = vmatprep.subr.mxu0 0.0
        %3271 = vmatpush1.msra.mxu0 0.0
        %3272 = vmatprep.subr.mxu0 0.0
        %3273 = vmatpush1.msra.mxu0 0.0
        %3274 = vmatprep.subr.mxu0 0.0
        %3275 = vmatpush1.msra.mxu0 0.0
        %3276 = vmatprep.subr.mxu0 0.0
        %3277 = vmatpush1.msra.mxu0 0.0
        %3278 = vmatprep.mubr.f32.mxu0 0.0
        %3279 = vmatmul.mubr.f32.gmra.mrb[0].mxu0 %v1894
        %v3280 = vpop.f32.mrb[0].mxu0
        %v3281 = vadd.f32 0.0, %v3280
        %v3282 = vpop.f32.mrb[0].mxu0
        %3283 = vmatprep.mubr.f32.mxu0 0.0
        %3284 = vmatmul.mubr.f32.gmra.mrb[0].mxu0 %v1897
        %v3285 = vpop.f32.mrb[0].mxu0
        %v3286 = vadd.f32 0.0, %v3285
        %v3287 = vpop.f32.mrb[0].mxu0
        %3288 = vdwg.mxu0
        %v3289 = vpack.c.bf16 %v3286, %v3281
        %v3290 = vpack.c.bf16 %v3040, %v3040
        %v3292 = vsel %vm228, %v3289, 0
        %v3295 = vsel %vm1801, %v3290, 0
        %3297 = vmatprep.subr.bf16.mxu0 0
        %3298 = vmatpush1.bf16.msra.mxu0 %v3295
        %3299 = vmatprep.subr.bf16.mxu0 0
        %3300 = vmatpush1.bf16.msra.mxu0 0
        %3301 = vmatprep.subr.bf16.mxu0 0
        %3302 = vmatpush1.bf16.msra.mxu0 0
        %3303 = vmatprep.subr.bf16.mxu0 0
        %3304 = vmatpush1.bf16.msra.mxu0 0
        %3305 = vmatprep.subr.bf16.mxu0 0
        %3306 = vmatpush1.bf16.msra.mxu0 0
        %3307 = vmatprep.subr.bf16.mxu0 0
        %3308 = vmatpush1.bf16.msra.mxu0 0
        %3309 = vmatprep.subr.bf16.mxu0 0
        %3310 = vmatpush1.bf16.msra.mxu0 0
        %3311 = vmatprep.subr.bf16.mxu0 0
        %3312 = vmatpush1.bf16.msra.mxu0 0
        %3313 = vmatprep.subr.bf16.mxu0 0
        %3314 = vmatpush1.bf16.msra.mxu0 0
        %3315 = vmatprep.subr.bf16.mxu0 0
        %3316 = vmatpush1.bf16.msra.mxu0 0
        %3317 = vmatprep.subr.bf16.mxu0 0
        %3318 = vmatpush1.bf16.msra.mxu0 0
        %3319 = vmatprep.subr.bf16.mxu0 0
        %3320 = vmatpush1.bf16.msra.mxu0 0
        %3321 = vmatprep.subr.bf16.mxu0 0
        %3322 = vmatpush1.bf16.msra.mxu0 0
        %3323 = vmatprep.subr.bf16.mxu0 0
        %3324 = vmatpush1.bf16.msra.mxu0 0
        %3325 = vmatprep.subr.bf16.mxu0 0
        %3326 = vmatpush1.bf16.msra.mxu0 0
        %3327 = vmatprep.subr.bf16.mxu0 0
        %3328 = vmatpush1.bf16.msra.mxu0 0
        %3329 = vmatprep.mubr.bf16.mxu0 0
        %3330 = vmatmul.mubr.bf16.gmra.mrb[0].mxu0 %v3292
        %v3331 = vpop.f32.mrb[0].mxu0
        %v3332 = vadd.f32 0.0, %v3331
        %v3333 = vpop.f32.mrb[0].mxu0
        %v3334 = vpop.f32.mrb[0].mxu0
        %v3335 = vadd.f32 0.0, %v3334
        %v3336 = vpop.f32.mrb[0].mxu0
        %3337 = vdwg.mxu0
        %v3338 = vadd.f32 %v3208, %v3332
        %v3339 = vadd.f32 %v3211, %v3335
        %v3340 = vadd.f32 %v3338, %v224
        %v3341 = vadd.f32 %v3339, %v225
        %v3342 = vld [vmem:[#allocation2 + $0x130] sm:$0xff]
        %v3343 = vld [vmem:[#allocation2 + $0x138] sm:$0xff]
        %v3344 = vld [vmem:[#allocation2 + $0x140] sm:$0xff]
        %v3345 = vld [vmem:[#allocation2 + $0x148] sm:$0xff]
        %v3346 = vld [vmem:[#allocation2 + $0x150] sm:$0x1]
        %v3347 = vpack.c.bf16 %v3341, %v3340
        %v3348 = vpack.c.bf16 %v3343, %v3342
        %v3349 = vpack.c.bf16 %v3345, %v3344
        %v3350 = vlaneseq
        %v3351 = vshrl.u32 %v3350, 7
        %v3352 = vsub.s32 0, %v3351
        %v3353 = vrot.slane %v3346, %v3352
        %v3355 = vsel %vm2039, %v3347, 0
        %3357 = vmatprep.subr.bf16.mxu0 0
        %3358 = vmatpush1.bf16.msra.mxu0 %v3348
        %3359 = vmatprep.subr.bf16.mxu0 0
        %3360 = vmatpush1.bf16.msra.mxu0 %v3349
        %3361 = vmatprep.subr.bf16.mxu0 0
        %3362 = vmatpush1.bf16.msra.mxu0 0
        %3363 = vmatprep.subr.bf16.mxu0 0
        %3364 = vmatpush1.bf16.msra.mxu0 0
        %3365 = vmatprep.subr.bf16.mxu0 0
        %3366 = vmatpush1.bf16.msra.mxu0 0
        %3367 = vmatprep.subr.bf16.mxu0 0
        %3368 = vmatpush1.bf16.msra.mxu0 0
        %3369 = vmatprep.subr.bf16.mxu0 0
        %3370 = vmatpush1.bf16.msra.mxu0 0
        %3371 = vmatprep.subr.bf16.mxu0 0
        %3372 = vmatpush1.bf16.msra.mxu0 0
        %3373 = vmatprep.subr.bf16.mxu0 0
        %3374 = vmatpush1.bf16.msra.mxu0 0
        %3375 = vmatprep.subr.bf16.mxu0 0
        %3376 = vmatpush1.bf16.msra.mxu0 0
        %3377 = vmatprep.subr.bf16.mxu0 0
        %3378 = vmatpush1.bf16.msra.mxu0 0
        %3379 = vmatprep.subr.bf16.mxu0 0
        %3380 = vmatpush1.bf16.msra.mxu0 0
        %3381 = vmatprep.subr.bf16.mxu0 0
        %3382 = vmatpush1.bf16.msra.mxu0 0
        %3383 = vmatprep.subr.bf16.mxu0 0
        %3384 = vmatpush1.bf16.msra.mxu0 0
        %3385 = vmatprep.subr.bf16.mxu0 0
        %3386 = vmatpush1.bf16.msra.mxu0 0
        %3387 = vmatprep.subr.bf16.mxu0 0
        %3388 = vmatpush1.bf16.msra.mxu0 0
        %3389 = vmatprep.mubr.bf16.mxu0 0
        %3390 = vmatmul.mubr.bf16.gmra.mrb[0].mxu0 %v3355
        %v3391 = vpop.f32.mrb[0].mxu0
        %v3392 = vadd.f32 %v3353, %v3391
        %v3393 = vpop.f32.mrb[0].mxu0
        %v3394 = vpop.f32.mrb[0].mxu0
        %v3395 = vadd.f32 %v3353, %v3394
        %v3396 = vpop.f32.mrb[0].mxu0
        %3397 = vdwg.mxu0
        %v3398 = vmul.f32 %v3392, %v2086
        %v3399 = vmul.f32 %v3395, %v2086
        %v3400 = vld [vmem:[#allocation2 + $0x158] sm:$0xff]
        %v3401 = vld [vmem:[#allocation2 + $0x160] sm:$0xff]
        %v3402 = vld [vmem:[#allocation2 + $0x168] sm:$0xff]
        %v3403 = vld [vmem:[#allocation2 + $0x170] sm:$0xff]
        %v3404 = vpack.c.bf16 %v3399, %v3398
        %v3405 = vpack.c.bf16 %v3395, %v3392
        %3407 = vrot.lane.b32.xlu0 %v3405, 96
        %v3408 = vpop.permute.xlu0 %3407
        %v3410 = vsel %vm2103, %v3404, 0
        %v3413 = vsel %vm2103, %v3408, 0
        %3415 = vmatprep.subr.bf16.mxu0 0
        %3416 = vmatpush1.bf16.xpose.msra.mxu0 %v3413
        %3417 = vmatprep.subr.bf16.mxu0 0
        %3418 = vmatpush1.bf16.xpose.msra.mxu0 0
        %3419 = vmatprep.subr.bf16.mxu0 0
        %3420 = vmatpush1.bf16.xpose.msra.mxu0 0
        %3421 = vmatprep.subr.bf16.mxu0 0
        %3422 = vmatpush1.bf16.xpose.msra.mxu0 0
        %3423 = vmatprep.subr.bf16.mxu0 0
        %3424 = vmatpush1.bf16.xpose.msra.mxu0 0
        %3425 = vmatprep.subr.bf16.mxu0 0
        %3426 = vmatpush1.bf16.xpose.msra.mxu0 0
        %3427 = vmatprep.subr.bf16.mxu0 0
        %3428 = vmatpush1.bf16.xpose.msra.mxu0 0
        %3429 = vmatprep.subr.bf16.mxu0 0
        %3430 = vmatpush1.bf16.xpose.msra.mxu0 0
        %3431 = vmatprep.subr.bf16.mxu0 0
        %3432 = vmatpush1.bf16.xpose.msra.mxu0 0
        %3433 = vmatprep.subr.bf16.mxu0 0
        %3434 = vmatpush1.bf16.xpose.msra.mxu0 0
        %3435 = vmatprep.subr.bf16.mxu0 0
        %3436 = vmatpush1.bf16.xpose.msra.mxu0 0
        %3437 = vmatprep.subr.bf16.mxu0 0
        %3438 = vmatpush1.bf16.xpose.msra.mxu0 0
        %3439 = vmatprep.subr.bf16.mxu0 0
        %3440 = vmatpush1.bf16.xpose.msra.mxu0 0
        %3441 = vmatprep.subr.bf16.mxu0 0
        %3442 = vmatpush1.bf16.xpose.msra.mxu0 0
        %3443 = vmatprep.subr.bf16.mxu0 0
        %3444 = vmatpush1.bf16.xpose.msra.mxu0 0
        %3445 = vmatprep.subr.bf16.mxu0 0
        %3446 = vmatpush1.bf16.xpose.msra.mxu0 0
        %3447 = vmatprep.mubr.bf16.mxu0 0
        %3448 = vmatmul.mubr.bf16.gmra.mrb[0].mxu0 %v3410
        %v3449 = vpop.f32.mrb[0].mxu0
        %v3450 = vadd.f32 %v222, %v3449
        %v3451 = vpop.f32.mrb[0].mxu0
        %v3452 = vpop.f32.mrb[0].mxu0
        %v3453 = vadd.f32 %v223, %v3452
        %v3454 = vpop.f32.mrb[0].mxu0
        %3455 = vdwg.mxu0
        %v3456 = vsel %vm265, %v3450, -inf
        %3457 = vmax.xlane.f32.xlu0 %v3456
        %v3458 = vpop.xlane.xlu0 %3457
        %v3459 = vsel %vm265, %v3453, -inf
        %3460 = vmax.xlane.f32.xlu0 %v3459
        %v3461 = vpop.xlane.xlu0 %3460
        %v3462 = vsub.f32 %v3450, %v3458
        %v3463 = vsub.f32 %v3453, %v3461
        %v3464 = vmul.f32 %v3462, 1.442695
        %v3465 = vpow.pop %v3464
        %v3466 = vmul.f32 %v3463, 1.442695
        %v3467 = vpow.pop %v3466
        %v3468 = vsel %vm265, %v3465, 0.0
        %3469 = vadd.xlane.f32.xlu0 %v3468
        %v3470 = vpop.xlane.xlu0 %3469
        %v3471 = vsel %vm265, %v3467, 0.0
        %3472 = vadd.xlane.f32.xlu0 %v3471
        %v3473 = vpop.xlane.xlu0 %3472
        %v3474 = vrcp.pop %v3470
        %v3475 = vrcp.pop %v3473
        %v3476 = vmul.f32 %v3465, %v3474
        %v3477 = vmul.f32 %v3467, %v3475
        %v3478 = vpack.c.bf16 %v3477, %v3476
        %3479 = vrot.lane.b32.xlu0 %v3405, 64
        %v3480 = vpop.permute.xlu0 %3479
        %v3483 = vsel %vm265, %v3478, 0
        %3485 = vmatprep.subr.bf16.mxu0 0
        %3486 = vmatpush1.bf16.msra.mxu0 %v3480
        %3487 = vmatprep.subr.bf16.mxu0 0
        %3488 = vmatpush1.bf16.msra.mxu0 0
        %3489 = vmatprep.subr.bf16.mxu0 0
        %3490 = vmatpush1.bf16.msra.mxu0 0
        %3491 = vmatprep.subr.bf16.mxu0 0
        %3492 = vmatpush1.bf16.msra.mxu0 0
        %3493 = vmatprep.subr.bf16.mxu0 0
        %3494 = vmatpush1.bf16.msra.mxu0 0
        %3495 = vmatprep.subr.bf16.mxu0 0
        %3496 = vmatpush1.bf16.msra.mxu0 0
        %3497 = vmatprep.subr.bf16.mxu0 0
        %3498 = vmatpush1.bf16.msra.mxu0 0
        %3499 = vmatprep.subr.bf16.mxu0 0
        %3500 = vmatpush1.bf16.msra.mxu0 0
        %3501 = vmatprep.subr.bf16.mxu0 0
        %3502 = vmatpush1.bf16.msra.mxu0 0
        %3503 = vmatprep.subr.bf16.mxu0 0
        %3504 = vmatpush1.bf16.msra.mxu0 0
        %3505 = vmatprep.subr.bf16.mxu0 0
        %3506 = vmatpush1.bf16.msra.mxu0 0
        %3507 = vmatprep.subr.bf16.mxu0 0
        %3508 = vmatpush1.bf16.msra.mxu0 0
        %3509 = vmatprep.subr.bf16.mxu0 0
        %3510 = vmatpush1.bf16.msra.mxu0 0
        %3511 = vmatprep.subr.bf16.mxu0 0
        %3512 = vmatpush1.bf16.msra.mxu0 0
        %3513 = vmatprep.subr.bf16.mxu0 0
        %3514 = vmatpush1.bf16.msra.mxu0 0
        %3515 = vmatprep.subr.bf16.mxu0 0
        %3516 = vmatpush1.bf16.msra.mxu0 0
        %3517 = vmatprep.mubr.bf16.mxu0 0
        %3518 = vmatmul.mubr.bf16.gmra.mrb[0].mxu0 %v3483
        %v3519 = vpop.f32.mrb[0].mxu0
        %v3520 = vadd.f32 0.0, %v3519
        %v3521 = vpop.f32.mrb[0].mxu0
        %v3522 = vpop.f32.mrb[0].mxu0
        %v3523 = vadd.f32 0.0, %v3522
        %v3524 = vpop.f32.mrb[0].mxu0
        %3525 = vdwg.mxu0
        %v3526 = vpack.c.bf16 %v3523, %v3520
        %v3527 = vpack.c.bf16 %v3400, %v3400
        %3529 = vrot.lane.b32.xlu0 %v3404, 120
        %v3530 = vpop.permute.xlu0 %3529
        %3531 = vrot.lane.b32.xlu0 %v3405, 88
        %v3532 = vpop.permute.xlu0 %3531
        %v3534 = vsel %vm2103, %v3530, 0
        %v3537 = vsel %vm2103, %v3532, 0
        %3539 = vmatprep.subr.bf16.mxu0 0
        %3540 = vmatpush1.bf16.xpose.msra.mxu0 %v3537
        %3541 = vmatprep.subr.bf16.mxu0 0
        %3542 = vmatpush1.bf16.xpose.msra.mxu0 0
        %3543 = vmatprep.subr.bf16.mxu0 0
        %3544 = vmatpush1.bf16.xpose.msra.mxu0 0
        %3545 = vmatprep.subr.bf16.mxu0 0
        %3546 = vmatpush1.bf16.xpose.msra.mxu0 0
        %3547 = vmatprep.subr.bf16.mxu0 0
        %3548 = vmatpush1.bf16.xpose.msra.mxu0 0
        %3549 = vmatprep.subr.bf16.mxu0 0
        %3550 = vmatpush1.bf16.xpose.msra.mxu0 0
        %3551 = vmatprep.subr.bf16.mxu0 0
        %3552 = vmatpush1.bf16.xpose.msra.mxu0 0
        %3553 = vmatprep.subr.bf16.mxu0 0
        %3554 = vmatpush1.bf16.xpose.msra.mxu0 0
        %3555 = vmatprep.subr.bf16.mxu0 0
        %3556 = vmatpush1.bf16.xpose.msra.mxu0 0
        %3557 = vmatprep.subr.bf16.mxu0 0
        %3558 = vmatpush1.bf16.xpose.msra.mxu0 0
        %3559 = vmatprep.subr.bf16.mxu0 0
        %3560 = vmatpush1.bf16.xpose.msra.mxu0 0
        %3561 = vmatprep.subr.bf16.mxu0 0
        %3562 = vmatpush1.bf16.xpose.msra.mxu0 0
        %3563 = vmatprep.subr.bf16.mxu0 0
        %3564 = vmatpush1.bf16.xpose.msra.mxu0 0
        %3565 = vmatprep.subr.bf16.mxu0 0
        %3566 = vmatpush1.bf16.xpose.msra.mxu0 0
        %3567 = vmatprep.subr.bf16.mxu0 0
        %3568 = vmatpush1.bf16.xpose.msra.mxu0 0
        %3569 = vmatprep.subr.bf16.mxu0 0
        %3570 = vmatpush1.bf16.xpose.msra.mxu0 0
        %3571 = vmatprep.mubr.bf16.mxu0 0
        %3572 = vmatmul.mubr.bf16.gmra.mrb[0].mxu0 %v3534
        %v3573 = vpop.f32.mrb[0].mxu0
        %v3574 = vadd.f32 %v222, %v3573
        %v3575 = vpop.f32.mrb[0].mxu0
        %v3576 = vpop.f32.mrb[0].mxu0
        %v3577 = vadd.f32 %v223, %v3576
        %v3578 = vpop.f32.mrb[0].mxu0
        %3579 = vdwg.mxu0
        %v3580 = vsel %vm265, %v3574, -inf
        %3581 = vmax.xlane.f32.xlu0 %v3580
        %v3582 = vpop.xlane.xlu0 %3581
        %v3583 = vsel %vm265, %v3577, -inf
        %3584 = vmax.xlane.f32.xlu0 %v3583
        %v3585 = vpop.xlane.xlu0 %3584
        %v3586 = vsub.f32 %v3574, %v3582
        %v3587 = vsub.f32 %v3577, %v3585
        %v3588 = vmul.f32 %v3586, 1.442695
        %v3589 = vpow.pop %v3588
        %v3590 = vmul.f32 %v3587, 1.442695
        %v3591 = vpow.pop %v3590
        %v3592 = vsel %vm265, %v3589, 0.0
        %3593 = vadd.xlane.f32.xlu0 %v3592
        %v3594 = vpop.xlane.xlu0 %3593
        %v3595 = vsel %vm265, %v3591, 0.0
        %3596 = vadd.xlane.f32.xlu0 %v3595
        %v3597 = vpop.xlane.xlu0 %3596
        %v3598 = vrcp.pop %v3594
        %v3599 = vrcp.pop %v3597
        %v3600 = vmul.f32 %v3589, %v3598
        %v3601 = vmul.f32 %v3591, %v3599
        %v3602 = vpack.c.bf16 %v3601, %v3600
        %3603 = vrot.lane.b32.xlu0 %v3405, 56
        %v3604 = vpop.permute.xlu0 %3603
        %v3607 = vsel %vm265, %v3602, 0
        %3609 = vmatprep.subr.bf16.mxu0 0
        %3610 = vmatpush1.bf16.msra.mxu0 %v3604
        %3611 = vmatprep.subr.bf16.mxu0 0
        %3612 = vmatpush1.bf16.msra.mxu0 0
        %3613 = vmatprep.subr.bf16.mxu0 0
        %3614 = vmatpush1.bf16.msra.mxu0 0
        %3615 = vmatprep.subr.bf16.mxu0 0
        %3616 = vmatpush1.bf16.msra.mxu0 0
        %3617 = vmatprep.subr.bf16.mxu0 0
        %3618 = vmatpush1.bf16.msra.mxu0 0
        %3619 = vmatprep.subr.bf16.mxu0 0
        %3620 = vmatpush1.bf16.msra.mxu0 0
        %3621 = vmatprep.subr.bf16.mxu0 0
        %3622 = vmatpush1.bf16.msra.mxu0 0
        %3623 = vmatprep.subr.bf16.mxu0 0
        %3624 = vmatpush1.bf16.msra.mxu0 0
        %3625 = vmatprep.subr.bf16.mxu0 0
        %3626 = vmatpush1.bf16.msra.mxu0 0
        %3627 = vmatprep.subr.bf16.mxu0 0
        %3628 = vmatpush1.bf16.msra.mxu0 0
        %3629 = vmatprep.subr.bf16.mxu0 0
        %3630 = vmatpush1.bf16.msra.mxu0 0
        %3631 = vmatprep.subr.bf16.mxu0 0
        %3632 = vmatpush1.bf16.msra.mxu0 0
        %3633 = vmatprep.subr.bf16.mxu0 0
        %3634 = vmatpush1.bf16.msra.mxu0 0
        %3635 = vmatprep.subr.bf16.mxu0 0
        %3636 = vmatpush1.bf16.msra.mxu0 0
        %3637 = vmatprep.subr.bf16.mxu0 0
        %3638 = vmatpush1.bf16.msra.mxu0 0
        %3639 = vmatprep.subr.bf16.mxu0 0
        %3640 = vmatpush1.bf16.msra.mxu0 0
        %3641 = vmatprep.mubr.bf16.mxu0 0
        %3642 = vmatmul.mubr.bf16.gmra.mrb[0].mxu0 %v3607
        %v3643 = vpop.f32.mrb[0].mxu0
        %v3644 = vadd.f32 0.0, %v3643
        %v3645 = vpop.f32.mrb[0].mxu0
        %v3646 = vpop.f32.mrb[0].mxu0
        %v3647 = vadd.f32 0.0, %v3646
        %v3648 = vpop.f32.mrb[0].mxu0
        %3649 = vdwg.mxu0
        %v3650 = vpack.c.bf16 %v3647, %v3644
        %v3651 = vpack.c.bf16 %v3401, %v3401
        %v3653 = vsel %vm2103, %v3650, 0
        %v3656 = vsel %vm570, %v3651, 0
        %3658 = vmatprep.subr.bf16.mxu0 0
        %3659 = vmatpush1.bf16.msra.mxu0 %v3656
        %3660 = vmatprep.subr.bf16.mxu0 0
        %3661 = vmatpush1.bf16.msra.mxu0 0
        %3662 = vmatprep.subr.bf16.mxu0 0
        %3663 = vmatpush1.bf16.msra.mxu0 0
        %3664 = vmatprep.subr.bf16.mxu0 0
        %3665 = vmatpush1.bf16.msra.mxu0 0
        %3666 = vmatprep.subr.bf16.mxu0 0
        %3667 = vmatpush1.bf16.msra.mxu0 0
        %3668 = vmatprep.subr.bf16.mxu0 0
        %3669 = vmatpush1.bf16.msra.mxu0 0
        %3670 = vmatprep.subr.bf16.mxu0 0
        %3671 = vmatpush1.bf16.msra.mxu0 0
        %3672 = vmatprep.subr.bf16.mxu0 0
        %3673 = vmatpush1.bf16.msra.mxu0 0
        %3674 = vmatprep.subr.bf16.mxu0 0
        %3675 = vmatpush1.bf16.msra.mxu0 0
        %3676 = vmatprep.subr.bf16.mxu0 0
        %3677 = vmatpush1.bf16.msra.mxu0 0
        %3678 = vmatprep.subr.bf16.mxu0 0
        %3679 = vmatpush1.bf16.msra.mxu0 0
        %3680 = vmatprep.subr.bf16.mxu0 0
        %3681 = vmatpush1.bf16.msra.mxu0 0
        %3682 = vmatprep.subr.bf16.mxu0 0
        %3683 = vmatpush1.bf16.msra.mxu0 0
        %3684 = vmatprep.subr.bf16.mxu0 0
        %3685 = vmatpush1.bf16.msra.mxu0 0
        %3686 = vmatprep.subr.bf16.mxu0 0
        %3687 = vmatpush1.bf16.msra.mxu0 0
        %3688 = vmatprep.subr.bf16.mxu0 0
        %3689 = vmatpush1.bf16.msra.mxu0 0
        %3690 = vmatprep.mubr.bf16.mxu0 0
        %3691 = vmatmul.mubr.bf16.gmra.mrb[0].mxu0 %v3653
        %v3692 = vpop.f32.mrb[0].mxu0
        %v3693 = vadd.f32 0.0, %v3692
        %v3694 = vpop.f32.mrb[0].mxu0
        %v3695 = vpop.f32.mrb[0].mxu0
        %v3696 = vadd.f32 0.0, %v3695
        %v3697 = vpop.f32.mrb[0].mxu0
        %3698 = vdwg.mxu0
        %v3700 = vsel %vm2103, %v3526, 0
        %v3703 = vsel %vm570, %v3527, 0
        %3705 = vmatprep.subr.bf16.mxu0 0
        %3706 = vmatpush1.bf16.msra.mxu0 %v3703
        %3707 = vmatprep.subr.bf16.mxu0 0
        %3708 = vmatpush1.bf16.msra.mxu0 0
        %3709 = vmatprep.subr.bf16.mxu0 0
        %3710 = vmatpush1.bf16.msra.mxu0 0
        %3711 = vmatprep.subr.bf16.mxu0 0
        %3712 = vmatpush1.bf16.msra.mxu0 0
        %3713 = vmatprep.subr.bf16.mxu0 0
        %3714 = vmatpush1.bf16.msra.mxu0 0
        %3715 = vmatprep.subr.bf16.mxu0 0
        %3716 = vmatpush1.bf16.msra.mxu0 0
        %3717 = vmatprep.subr.bf16.mxu0 0
        %3718 = vmatpush1.bf16.msra.mxu0 0
        %3719 = vmatprep.subr.bf16.mxu0 0
        %3720 = vmatpush1.bf16.msra.mxu0 0
        %3721 = vmatprep.subr.bf16.mxu0 0
        %3722 = vmatpush1.bf16.msra.mxu0 0
        %3723 = vmatprep.subr.bf16.mxu0 0
        %3724 = vmatpush1.bf16.msra.mxu0 0
        %3725 = vmatprep.subr.bf16.mxu0 0
        %3726 = vmatpush1.bf16.msra.mxu0 0
        %3727 = vmatprep.subr.bf16.mxu0 0
        %3728 = vmatpush1.bf16.msra.mxu0 0
        %3729 = vmatprep.subr.bf16.mxu0 0
        %3730 = vmatpush1.bf16.msra.mxu0 0
        %3731 = vmatprep.subr.bf16.mxu0 0
        %3732 = vmatpush1.bf16.msra.mxu0 0
        %3733 = vmatprep.subr.bf16.mxu0 0
        %3734 = vmatpush1.bf16.msra.mxu0 0
        %3735 = vmatprep.subr.bf16.mxu0 0
        %3736 = vmatpush1.bf16.msra.mxu0 0
        %3737 = vmatprep.mubr.bf16.mxu0 0
        %3738 = vmatmul.mubr.bf16.gmra.mrb[0].mxu0 %v3700
        %v3739 = vpop.f32.mrb[0].mxu0
        %v3740 = vadd.f32 %v3693, %v3739
        %v3741 = vpop.f32.mrb[0].mxu0
        %v3742 = vpop.f32.mrb[0].mxu0
        %v3743 = vadd.f32 %v3696, %v3742
        %v3744 = vpop.f32.mrb[0].mxu0
        %3745 = vdwg.mxu0
        %3746 = vrot.lane.b32.xlu0 %v3404, 112
        %v3747 = vpop.permute.xlu0 %3746
        %3748 = vrot.lane.b32.xlu0 %v3405, 80
        %v3749 = vpop.permute.xlu0 %3748
        %v3751 = vsel %vm2103, %v3747, 0
        %v3754 = vsel %vm2103, %v3749, 0
        %3756 = vmatprep.subr.bf16.mxu0 0
        %3757 = vmatpush1.bf16.xpose.msra.mxu0 %v3754
        %3758 = vmatprep.subr.bf16.mxu0 0
        %3759 = vmatpush1.bf16.xpose.msra.mxu0 0
        %3760 = vmatprep.subr.bf16.mxu0 0
        %3761 = vmatpush1.bf16.xpose.msra.mxu0 0
        %3762 = vmatprep.subr.bf16.mxu0 0
        %3763 = vmatpush1.bf16.xpose.msra.mxu0 0
        %3764 = vmatprep.subr.bf16.mxu0 0
        %3765 = vmatpush1.bf16.xpose.msra.mxu0 0
        %3766 = vmatprep.subr.bf16.mxu0 0
        %3767 = vmatpush1.bf16.xpose.msra.mxu0 0
        %3768 = vmatprep.subr.bf16.mxu0 0
        %3769 = vmatpush1.bf16.xpose.msra.mxu0 0
        %3770 = vmatprep.subr.bf16.mxu0 0
        %3771 = vmatpush1.bf16.xpose.msra.mxu0 0
        %3772 = vmatprep.subr.bf16.mxu0 0
        %3773 = vmatpush1.bf16.xpose.msra.mxu0 0
        %3774 = vmatprep.subr.bf16.mxu0 0
        %3775 = vmatpush1.bf16.xpose.msra.mxu0 0
        %3776 = vmatprep.subr.bf16.mxu0 0
        %3777 = vmatpush1.bf16.xpose.msra.mxu0 0
        %3778 = vmatprep.subr.bf16.mxu0 0
        %3779 = vmatpush1.bf16.xpose.msra.mxu0 0
        %3780 = vmatprep.subr.bf16.mxu0 0
        %3781 = vmatpush1.bf16.xpose.msra.mxu0 0
        %3782 = vmatprep.subr.bf16.mxu0 0
        %3783 = vmatpush1.bf16.xpose.msra.mxu0 0
        %3784 = vmatprep.subr.bf16.mxu0 0
        %3785 = vmatpush1.bf16.xpose.msra.mxu0 0
        %3786 = vmatprep.subr.bf16.mxu0 0
        %3787 = vmatpush1.bf16.xpose.msra.mxu0 0
        %3788 = vmatprep.mubr.bf16.mxu0 0
        %3789 = vmatmul.mubr.bf16.gmra.mrb[0].mxu0 %v3751
        %v3790 = vpop.f32.mrb[0].mxu0
        %v3791 = vadd.f32 %v222, %v3790
        %v3792 = vpop.f32.mrb[0].mxu0
        %v3793 = vpop.f32.mrb[0].mxu0
        %v3794 = vadd.f32 %v223, %v3793
        %v3795 = vpop.f32.mrb[0].mxu0
        %3796 = vdwg.mxu0
        %v3797 = vsel %vm265, %v3791, -inf
        %3798 = vmax.xlane.f32.xlu0 %v3797
        %v3799 = vpop.xlane.xlu0 %3798
        %v3800 = vsel %vm265, %v3794, -inf
        %3801 = vmax.xlane.f32.xlu0 %v3800
        %v3802 = vpop.xlane.xlu0 %3801
        %v3803 = vsub.f32 %v3791, %v3799
        %v3804 = vsub.f32 %v3794, %v3802
        %v3805 = vmul.f32 %v3803, 1.442695
        %v3806 = vpow.pop %v3805
        %v3807 = vmul.f32 %v3804, 1.442695
        %v3808 = vpow.pop %v3807
        %v3809 = vsel %vm265, %v3806, 0.0
        %3810 = vadd.xlane.f32.xlu0 %v3809
        %v3811 = vpop.xlane.xlu0 %3810
        %v3812 = vsel %vm265, %v3808, 0.0
        %3813 = vadd.xlane.f32.xlu0 %v3812
        %v3814 = vpop.xlane.xlu0 %3813
        %v3815 = vrcp.pop %v3811
        %v3816 = vrcp.pop %v3814
        %v3817 = vmul.f32 %v3806, %v3815
        %v3818 = vmul.f32 %v3808, %v3816
        %v3819 = vpack.c.bf16 %v3818, %v3817
        %3820 = vrot.lane.b32.xlu0 %v3405, 48
        %v3821 = vpop.permute.xlu0 %3820
        %v3824 = vsel %vm265, %v3819, 0
        %3826 = vmatprep.subr.bf16.mxu0 0
        %3827 = vmatpush1.bf16.msra.mxu0 %v3821
        %3828 = vmatprep.subr.bf16.mxu0 0
        %3829 = vmatpush1.bf16.msra.mxu0 0
        %3830 = vmatprep.subr.bf16.mxu0 0
        %3831 = vmatpush1.bf16.msra.mxu0 0
        %3832 = vmatprep.subr.bf16.mxu0 0
        %3833 = vmatpush1.bf16.msra.mxu0 0
        %3834 = vmatprep.subr.bf16.mxu0 0
        %3835 = vmatpush1.bf16.msra.mxu0 0
        %3836 = vmatprep.subr.bf16.mxu0 0
        %3837 = vmatpush1.bf16.msra.mxu0 0
        %3838 = vmatprep.subr.bf16.mxu0 0
        %3839 = vmatpush1.bf16.msra.mxu0 0
        %3840 = vmatprep.subr.bf16.mxu0 0
        %3841 = vmatpush1.bf16.msra.mxu0 0
        %3842 = vmatprep.subr.bf16.mxu0 0
        %3843 = vmatpush1.bf16.msra.mxu0 0
        %3844 = vmatprep.subr.bf16.mxu0 0
        %3845 = vmatpush1.bf16.msra.mxu0 0
        %3846 = vmatprep.subr.bf16.mxu0 0
        %3847 = vmatpush1.bf16.msra.mxu0 0
        %3848 = vmatprep.subr.bf16.mxu0 0
        %3849 = vmatpush1.bf16.msra.mxu0 0
        %3850 = vmatprep.subr.bf16.mxu0 0
        %3851 = vmatpush1.bf16.msra.mxu0 0
        %3852 = vmatprep.subr.bf16.mxu0 0
        %3853 = vmatpush1.bf16.msra.mxu0 0
        %3854 = vmatprep.subr.bf16.mxu0 0
        %3855 = vmatpush1.bf16.msra.mxu0 0
        %3856 = vmatprep.subr.bf16.mxu0 0
        %3857 = vmatpush1.bf16.msra.mxu0 0
        %3858 = vmatprep.mubr.bf16.mxu0 0
        %3859 = vmatmul.mubr.bf16.gmra.mrb[0].mxu0 %v3824
        %v3860 = vpop.f32.mrb[0].mxu0
        %v3861 = vadd.f32 0.0, %v3860
        %v3862 = vpop.f32.mrb[0].mxu0
        %v3863 = vpop.f32.mrb[0].mxu0
        %v3864 = vadd.f32 0.0, %v3863
        %v3865 = vpop.f32.mrb[0].mxu0
        %3866 = vdwg.mxu0
        %v3867 = vpack.c.bf16 %v3864, %v3861
        %v3868 = vpack.c.bf16 %v3402, %v3402
        %v3870 = vsel %vm2103, %v3867, 0
        %v3873 = vsel %vm570, %v3868, 0
        %3875 = vmatprep.subr.bf16.mxu0 0
        %3876 = vmatpush1.bf16.msra.mxu0 %v3873
        %3877 = vmatprep.subr.bf16.mxu0 0
        %3878 = vmatpush1.bf16.msra.mxu0 0
        %3879 = vmatprep.subr.bf16.mxu0 0
        %3880 = vmatpush1.bf16.msra.mxu0 0
        %3881 = vmatprep.subr.bf16.mxu0 0
        %3882 = vmatpush1.bf16.msra.mxu0 0
        %3883 = vmatprep.subr.bf16.mxu0 0
        %3884 = vmatpush1.bf16.msra.mxu0 0
        %3885 = vmatprep.subr.bf16.mxu0 0
        %3886 = vmatpush1.bf16.msra.mxu0 0
        %3887 = vmatprep.subr.bf16.mxu0 0
        %3888 = vmatpush1.bf16.msra.mxu0 0
        %3889 = vmatprep.subr.bf16.mxu0 0
        %3890 = vmatpush1.bf16.msra.mxu0 0
        %3891 = vmatprep.subr.bf16.mxu0 0
        %3892 = vmatpush1.bf16.msra.mxu0 0
        %3893 = vmatprep.subr.bf16.mxu0 0
        %3894 = vmatpush1.bf16.msra.mxu0 0
        %3895 = vmatprep.subr.bf16.mxu0 0
        %3896 = vmatpush1.bf16.msra.mxu0 0
        %3897 = vmatprep.subr.bf16.mxu0 0
        %3898 = vmatpush1.bf16.msra.mxu0 0
        %3899 = vmatprep.subr.bf16.mxu0 0
        %3900 = vmatpush1.bf16.msra.mxu0 0
        %3901 = vmatprep.subr.bf16.mxu0 0
        %3902 = vmatpush1.bf16.msra.mxu0 0
        %3903 = vmatprep.subr.bf16.mxu0 0
        %3904 = vmatpush1.bf16.msra.mxu0 0
        %3905 = vmatprep.subr.bf16.mxu0 0
        %3906 = vmatpush1.bf16.msra.mxu0 0
        %3907 = vmatprep.mubr.bf16.mxu0 0
        %3908 = vmatmul.mubr.bf16.gmra.mrb[0].mxu0 %v3870
        %v3909 = vpop.f32.mrb[0].mxu0
        %v3910 = vadd.f32 0.0, %v3909
        %v3911 = vpop.f32.mrb[0].mxu0
        %v3912 = vpop.f32.mrb[0].mxu0
        %v3913 = vadd.f32 0.0, %v3912
        %v3914 = vpop.f32.mrb[0].mxu0
        %3915 = vdwg.mxu0
        %v3916 = vadd.f32 %v3740, %v3910
        %v3917 = vadd.f32 %v3743, %v3913
        %3918 = vrot.lane.b32.xlu0 %v3404, 104
        %v3919 = vpop.permute.xlu0 %3918
        %3920 = vrot.lane.b32.xlu0 %v3405, 72
        %v3921 = vpop.permute.xlu0 %3920
        %v3923 = vsel %vm2103, %v3919, 0
        %v3926 = vsel %vm2103, %v3921, 0
        %3928 = vmatprep.subr.bf16.mxu0 0
        %3929 = vmatpush1.bf16.xpose.msra.mxu0 %v3926
        %3930 = vmatprep.subr.bf16.mxu0 0
        %3931 = vmatpush1.bf16.xpose.msra.mxu0 0
        %3932 = vmatprep.subr.bf16.mxu0 0
        %3933 = vmatpush1.bf16.xpose.msra.mxu0 0
        %3934 = vmatprep.subr.bf16.mxu0 0
        %3935 = vmatpush1.bf16.xpose.msra.mxu0 0
        %3936 = vmatprep.subr.bf16.mxu0 0
        %3937 = vmatpush1.bf16.xpose.msra.mxu0 0
        %3938 = vmatprep.subr.bf16.mxu0 0
        %3939 = vmatpush1.bf16.xpose.msra.mxu0 0
        %3940 = vmatprep.subr.bf16.mxu0 0
        %3941 = vmatpush1.bf16.xpose.msra.mxu0 0
        %3942 = vmatprep.subr.bf16.mxu0 0
        %3943 = vmatpush1.bf16.xpose.msra.mxu0 0
        %3944 = vmatprep.subr.bf16.mxu0 0
        %3945 = vmatpush1.bf16.xpose.msra.mxu0 0
        %3946 = vmatprep.subr.bf16.mxu0 0
        %3947 = vmatpush1.bf16.xpose.msra.mxu0 0
        %3948 = vmatprep.subr.bf16.mxu0 0
        %3949 = vmatpush1.bf16.xpose.msra.mxu0 0
        %3950 = vmatprep.subr.bf16.mxu0 0
        %3951 = vmatpush1.bf16.xpose.msra.mxu0 0
        %3952 = vmatprep.subr.bf16.mxu0 0
        %3953 = vmatpush1.bf16.xpose.msra.mxu0 0
        %3954 = vmatprep.subr.bf16.mxu0 0
        %3955 = vmatpush1.bf16.xpose.msra.mxu0 0
        %3956 = vmatprep.subr.bf16.mxu0 0
        %3957 = vmatpush1.bf16.xpose.msra.mxu0 0
        %3958 = vmatprep.subr.bf16.mxu0 0
        %3959 = vmatpush1.bf16.xpose.msra.mxu0 0
        %3960 = vmatprep.mubr.bf16.mxu0 0
        %3961 = vmatmul.mubr.bf16.gmra.mrb[0].mxu0 %v3923
        %v3962 = vpop.f32.mrb[0].mxu0
        %v3963 = vadd.f32 %v222, %v3962
        %v3964 = vpop.f32.mrb[0].mxu0
        %v3965 = vpop.f32.mrb[0].mxu0
        %v3966 = vadd.f32 %v223, %v3965
        %v3967 = vpop.f32.mrb[0].mxu0
        %3968 = vdwg.mxu0
        %v3969 = vsel %vm265, %v3963, -inf
        %3970 = vmax.xlane.f32.xlu0 %v3969
        %v3971 = vpop.xlane.xlu0 %3970
        %v3972 = vsel %vm265, %v3966, -inf
        %3973 = vmax.xlane.f32.xlu0 %v3972
        %v3974 = vpop.xlane.xlu0 %3973
        %v3975 = vsub.f32 %v3963, %v3971
        %v3976 = vsub.f32 %v3966, %v3974
        %v3977 = vmul.f32 %v3975, 1.442695
        %v3978 = vpow.pop %v3977
        %v3979 = vmul.f32 %v3976, 1.442695
        %v3980 = vpow.pop %v3979
        %v3981 = vsel %vm265, %v3978, 0.0
        %3982 = vadd.xlane.f32.xlu0 %v3981
        %v3983 = vpop.xlane.xlu0 %3982
        %v3984 = vsel %vm265, %v3980, 0.0
        %3985 = vadd.xlane.f32.xlu0 %v3984
        %v3986 = vpop.xlane.xlu0 %3985
        %v3987 = vrcp.pop %v3983
        %v3988 = vrcp.pop %v3986
        %v3989 = vmul.f32 %v3978, %v3987
        %v3990 = vmul.f32 %v3980, %v3988
        %v3991 = vpack.c.bf16 %v3990, %v3989
        %3992 = vrot.lane.b32.xlu0 %v3405, 40
        %v3993 = vpop.permute.xlu0 %3992
        %v3996 = vsel %vm265, %v3991, 0
        %3998 = vmatprep.subr.bf16.mxu0 0
        %3999 = vmatpush1.bf16.msra.mxu0 %v3993
        %4000 = vmatprep.subr.bf16.mxu0 0
        %4001 = vmatpush1.bf16.msra.mxu0 0
        %4002 = vmatprep.subr.bf16.mxu0 0
        %4003 = vmatpush1.bf16.msra.mxu0 0
        %4004 = vmatprep.subr.bf16.mxu0 0
        %4005 = vmatpush1.bf16.msra.mxu0 0
        %4006 = vmatprep.subr.bf16.mxu0 0
        %4007 = vmatpush1.bf16.msra.mxu0 0
        %4008 = vmatprep.subr.bf16.mxu0 0
        %4009 = vmatpush1.bf16.msra.mxu0 0
        %4010 = vmatprep.subr.bf16.mxu0 0
        %4011 = vmatpush1.bf16.msra.mxu0 0
        %4012 = vmatprep.subr.bf16.mxu0 0
        %4013 = vmatpush1.bf16.msra.mxu0 0
        %4014 = vmatprep.subr.bf16.mxu0 0
        %4015 = vmatpush1.bf16.msra.mxu0 0
        %4016 = vmatprep.subr.bf16.mxu0 0
        %4017 = vmatpush1.bf16.msra.mxu0 0
        %4018 = vmatprep.subr.bf16.mxu0 0
        %4019 = vmatpush1.bf16.msra.mxu0 0
        %4020 = vmatprep.subr.bf16.mxu0 0
        %4021 = vmatpush1.bf16.msra.mxu0 0
        %4022 = vmatprep.subr.bf16.mxu0 0
        %4023 = vmatpush1.bf16.msra.mxu0 0
        %4024 = vmatprep.subr.bf16.mxu0 0
        %4025 = vmatpush1.bf16.msra.mxu0 0
        %4026 = vmatprep.subr.bf16.mxu0 0
        %4027 = vmatpush1.bf16.msra.mxu0 0
        %4028 = vmatprep.subr.bf16.mxu0 0
        %4029 = vmatpush1.bf16.msra.mxu0 0
        %4030 = vmatprep.mubr.bf16.mxu0 0
        %4031 = vmatmul.mubr.bf16.gmra.mrb[0].mxu0 %v3996
        %v4032 = vpop.f32.mrb[0].mxu0
        %v4033 = vadd.f32 0.0, %v4032
        %v4034 = vpop.f32.mrb[0].mxu0
        %v4035 = vpop.f32.mrb[0].mxu0
        %v4036 = vadd.f32 0.0, %v4035
        %v4037 = vpop.f32.mrb[0].mxu0
        %4038 = vdwg.mxu0
        %v4039 = vpack.c.bf16 %v4036, %v4033
        %v4040 = vpack.c.bf16 %v3403, %v3403
        %v4042 = vsel %vm2103, %v4039, 0
        %v4045 = vsel %vm570, %v4040, 0
        %4047 = vmatprep.subr.bf16.mxu0 0
        %4048 = vmatpush1.bf16.msra.mxu0 %v4045
        %4049 = vmatprep.subr.bf16.mxu0 0
        %4050 = vmatpush1.bf16.msra.mxu0 0
        %4051 = vmatprep.subr.bf16.mxu0 0
        %4052 = vmatpush1.bf16.msra.mxu0 0
        %4053 = vmatprep.subr.bf16.mxu0 0
        %4054 = vmatpush1.bf16.msra.mxu0 0
        %4055 = vmatprep.subr.bf16.mxu0 0
        %4056 = vmatpush1.bf16.msra.mxu0 0
        %4057 = vmatprep.subr.bf16.mxu0 0
        %4058 = vmatpush1.bf16.msra.mxu0 0
        %4059 = vmatprep.subr.bf16.mxu0 0
        %4060 = vmatpush1.bf16.msra.mxu0 0
        %4061 = vmatprep.subr.bf16.mxu0 0
        %4062 = vmatpush1.bf16.msra.mxu0 0
        %4063 = vmatprep.subr.bf16.mxu0 0
        %4064 = vmatpush1.bf16.msra.mxu0 0
        %4065 = vmatprep.subr.bf16.mxu0 0
        %4066 = vmatpush1.bf16.msra.mxu0 0
        %4067 = vmatprep.subr.bf16.mxu0 0
        %4068 = vmatpush1.bf16.msra.mxu0 0
        %4069 = vmatprep.subr.bf16.mxu0 0
        %4070 = vmatpush1.bf16.msra.mxu0 0
        %4071 = vmatprep.subr.bf16.mxu0 0
        %4072 = vmatpush1.bf16.msra.mxu0 0
        %4073 = vmatprep.subr.bf16.mxu0 0
        %4074 = vmatpush1.bf16.msra.mxu0 0
        %4075 = vmatprep.subr.bf16.mxu0 0
        %4076 = vmatpush1.bf16.msra.mxu0 0
        %4077 = vmatprep.subr.bf16.mxu0 0
        %4078 = vmatpush1.bf16.msra.mxu0 0
        %4079 = vmatprep.mubr.bf16.mxu0 0
        %4080 = vmatmul.mubr.bf16.gmra.mrb[0].mxu0 %v4042
        %v4081 = vpop.f32.mrb[0].mxu0
        %v4082 = vadd.f32 0.0, %v4081
        %v4083 = vpop.f32.mrb[0].mxu0
        %v4084 = vpop.f32.mrb[0].mxu0
        %v4085 = vadd.f32 0.0, %v4084
        %v4086 = vpop.f32.mrb[0].mxu0
        %4087 = vdwg.mxu0
        %v4088 = vadd.f32 %v3916, %v4082
        %v4089 = vadd.f32 %v3917, %v4085
        %v4090 = vld [vmem:[#allocation2 + $0x178] sm:$0x1]
        %v4091 = vlaneseq
        %v4092 = vshrl.u32 %v4091, 7
        %v4093 = vsub.s32 0, %v4092
        %v4094 = vrot.slane %v4090, %v4093
        %v4095 = vadd.f32 %v4088, %v4094
        %v4096 = vadd.f32 %v4089, %v4094
        %v4097 = vadd.f32 %v3340, %v4095
        %v4098 = vadd.f32 %v3341, %v4096
        %v4099 = vld [vmem:[#allocation2 + $0x240] sm:$0x1]
        %v4100 = vld [vmem:[#allocation2 + $0x248] sm:$0x1]
        %v4101 = vsel %vm2039, %v4097, 0.0
        %4102 = vadd.xlane.f32.xlu0 %v4101
        %v4103 = vpop.xlane.xlu0 %4102
        %v4104 = vsel %vm2039, %v4098, 0.0
        %4105 = vadd.xlane.f32.xlu0 %v4104
        %v4106 = vpop.xlane.xlu0 %4105
        %v4107 = vmul.f32 %v4103, %v2802
        %v4108 = vmul.f32 %v4106, %v2802
        %v4109 = vsub.f32 %v4097, %v4107
        %v4110 = vsub.f32 %v4098, %v4108
        %v4111 = vmul.f32 %v4109, %v4109
        %v4112 = vmul.f32 %v4110, %v4110
        %v4113 = vsel %vm2039, %v4111, 0.0
        %4114 = vadd.xlane.f32.xlu0 %v4113
        %v4115 = vpop.xlane.xlu0 %4114
        %v4116 = vsel %vm2039, %v4112, 0.0
        %4117 = vadd.xlane.f32.xlu0 %v4116
        %v4118 = vpop.xlane.xlu0 %4117
        %v4119 = vmul.f32 %v4115, %v2802
        %v4120 = vmul.f32 %v4118, %v2802
        %v4121 = vadd.f32 %v4119, 1e-05
        %v4122 = vadd.f32 %v4120, 1e-05
        %v4123 = vrsqrt.pop %v4121
        %v4124 = vrsqrt.pop %v4122
        %v4125 = vmul.f32 %v4109, %v4123
        %v4126 = vmul.f32 %v4110, %v4124
        %v4127 = vlaneseq
        %v4128 = vshrl.u32 %v4127, 7
        %v4129 = vsub.s32 0, %v4128
        %v4130 = vrot.slane %v4099, %v4129
        %v4131 = vmul.f32 %v4125, %v4130
        %v4132 = vmul.f32 %v4126, %v4130
        %v4133 = vlaneseq
        %v4134 = vshrl.u32 %v4133, 7
        %v4135 = vsub.s32 0, %v4134
        %v4136 = vrot.slane %v4100, %v4135
        %v4137 = vadd.f32 %v4131, %v4136
        %v4138 = vadd.f32 %v4132, %v4136
        %v4139 = vld [vmem:[#allocation2 + $0x180] sm:$0xff]
        %v4140 = vld [vmem:[#allocation2 + $0x188] sm:$0xff]
        %v4141 = vld [vmem:[#allocation2 + $0x190] sm:$0xff]
        %v4142 = vld [vmem:[#allocation2 + $0x198] sm:$0xff]
        %v4143 = vld [vmem:[#allocation2 + $0x1a0] sm:$0x1]
        %v4144 = vpack.c.bf16 %v4138, %v4137
        %v4145 = vpack.c.bf16 %v4140, %v4139
        %v4146 = vpack.c.bf16 %v4142, %v4141
        %v4147 = vlaneseq
        %v4148 = vshrl.u32 %v4147, 7
        %v4149 = vsub.s32 0, %v4148
        %v4150 = vrot.slane %v4143, %v4149
        %v4152 = vsel %vm2039, %v4144, 0
        %4154 = vmatprep.subr.bf16.mxu0 0
        %4155 = vmatpush1.bf16.msra.mxu0 %v4145
        %4156 = vmatprep.subr.bf16.mxu0 0
        %4157 = vmatpush1.bf16.msra.mxu0 %v4146
        %4158 = vmatprep.subr.bf16.mxu0 0
        %4159 = vmatpush1.bf16.msra.mxu0 0
        %4160 = vmatprep.subr.bf16.mxu0 0
        %4161 = vmatpush1.bf16.msra.mxu0 0
        %4162 = vmatprep.subr.bf16.mxu0 0
        %4163 = vmatpush1.bf16.msra.mxu0 0
        %4164 = vmatprep.subr.bf16.mxu0 0
        %4165 = vmatpush1.bf16.msra.mxu0 0
        %4166 = vmatprep.subr.bf16.mxu0 0
        %4167 = vmatpush1.bf16.msra.mxu0 0
        %4168 = vmatprep.subr.bf16.mxu0 0
        %4169 = vmatpush1.bf16.msra.mxu0 0
        %4170 = vmatprep.subr.bf16.mxu0 0
        %4171 = vmatpush1.bf16.msra.mxu0 0
        %4172 = vmatprep.subr.bf16.mxu0 0
        %4173 = vmatpush1.bf16.msra.mxu0 0
        %4174 = vmatprep.subr.bf16.mxu0 0
        %4175 = vmatpush1.bf16.msra.mxu0 0
        %4176 = vmatprep.subr.bf16.mxu0 0
        %4177 = vmatpush1.bf16.msra.mxu0 0
        %4178 = vmatprep.subr.bf16.mxu0 0
        %4179 = vmatpush1.bf16.msra.mxu0 0
        %4180 = vmatprep.subr.bf16.mxu0 0
        %4181 = vmatpush1.bf16.msra.mxu0 0
        %4182 = vmatprep.subr.bf16.mxu0 0
        %4183 = vmatpush1.bf16.msra.mxu0 0
        %4184 = vmatprep.subr.bf16.mxu0 0
        %4185 = vmatpush1.bf16.msra.mxu0 0
        %4186 = vmatprep.mubr.bf16.mxu0 0
        %4187 = vmatmul.mubr.bf16.gmra.mrb[0].mxu0 %v4152
        %v4188 = vpop.f32.mrb[0].mxu0
        %v4189 = vadd.f32 %v4150, %v4188
        %v4190 = vpop.f32.mrb[0].mxu0
        %v4191 = vpop.f32.mrb[0].mxu0
        %v4192 = vadd.f32 %v4150, %v4191
        %v4193 = vpop.f32.mrb[0].mxu0
        %4194 = vdwg.mxu0
        %v4195 = vpack.c.bf16 %v3037, %v3036
        %4198 = vrot.lane.b32.xlu0 %v4145, 96
        %v4199 = vpop.permute.xlu0 %4198
        %4200 = vrot.lane.b32.xlu0 %v4146, 96
        %v4201 = vpop.permute.xlu0 %4200
        %4205 = vrot.lane.b32.xlu0 %v4150, 96
        %v4206 = vpop.permute.xlu0 %4205
        %v4209 = vsel %vm2039, %v4195, 0
        %4211 = vmatprep.subr.bf16.mxu0 0
        %4212 = vmatpush1.bf16.msra.mxu0 %v4199
        %4213 = vmatprep.subr.bf16.mxu0 0
        %4214 = vmatpush1.bf16.msra.mxu0 %v4201
        %4215 = vmatprep.subr.bf16.mxu0 0
        %4216 = vmatpush1.bf16.msra.mxu0 0
        %4217 = vmatprep.subr.bf16.mxu0 0
        %4218 = vmatpush1.bf16.msra.mxu0 0
        %4219 = vmatprep.subr.bf16.mxu0 0
        %4220 = vmatpush1.bf16.msra.mxu0 0
        %4221 = vmatprep.subr.bf16.mxu0 0
        %4222 = vmatpush1.bf16.msra.mxu0 0
        %4223 = vmatprep.subr.bf16.mxu0 0
        %4224 = vmatpush1.bf16.msra.mxu0 0
        %4225 = vmatprep.subr.bf16.mxu0 0
        %4226 = vmatpush1.bf16.msra.mxu0 0
        %4227 = vmatprep.subr.bf16.mxu0 0
        %4228 = vmatpush1.bf16.msra.mxu0 0
        %4229 = vmatprep.subr.bf16.mxu0 0
        %4230 = vmatpush1.bf16.msra.mxu0 0
        %4231 = vmatprep.subr.bf16.mxu0 0
        %4232 = vmatpush1.bf16.msra.mxu0 0
        %4233 = vmatprep.subr.bf16.mxu0 0
        %4234 = vmatpush1.bf16.msra.mxu0 0
        %4235 = vmatprep.subr.bf16.mxu0 0
        %4236 = vmatpush1.bf16.msra.mxu0 0
        %4237 = vmatprep.subr.bf16.mxu0 0
        %4238 = vmatpush1.bf16.msra.mxu0 0
        %4239 = vmatprep.subr.bf16.mxu0 0
        %4240 = vmatpush1.bf16.msra.mxu0 0
        %4241 = vmatprep.subr.bf16.mxu0 0
        %4242 = vmatpush1.bf16.msra.mxu0 0
        %4243 = vmatprep.mubr.bf16.mxu0 0
        %4244 = vmatmul.mubr.bf16.gmra.mrb[0].mxu0 %v4209
        %v4245 = vpop.f32.mrb[0].mxu0
        %v4246 = vadd.f32 %v4206, %v4245
        %v4247 = vpop.f32.mrb[0].mxu0
        %v4248 = vpop.f32.mrb[0].mxu0
        %v4249 = vadd.f32 %v4206, %v4248
        %v4250 = vpop.f32.mrb[0].mxu0
        %4251 = vdwg.mxu0
        %v4252 = vmul.f32 %v4189, %v2086
        %v4253 = vmul.f32 %v4192, %v2086
        %v4254 = vld [vmem:[#allocation2 + $0x1a8] sm:$0xff]
        %v4255 = vld [vmem:[#allocation2 + $0x1b0] sm:$0xff]
        %v4256 = vld [vmem:[#allocation2 + $0x1b8] sm:$0xff]
        %v4257 = vld [vmem:[#allocation2 + $0x1c0] sm:$0xff]
        %v4258 = vpack.c.bf16 %v4253, %v4252
        %v4259 = vpack.c.bf16 %v4249, %v4246
        %v4261 = vsel %vm2103, %v4258, 0
        %v4264 = vsel %vm2103, %v4259, 0
        %4266 = vmatprep.subr.bf16.mxu0 0
        %4267 = vmatpush1.bf16.xpose.msra.mxu0 %v4264
        %4268 = vmatprep.subr.bf16.mxu0 0
        %4269 = vmatpush1.bf16.xpose.msra.mxu0 0
        %4270 = vmatprep.subr.bf16.mxu0 0
        %4271 = vmatpush1.bf16.xpose.msra.mxu0 0
        %4272 = vmatprep.subr.bf16.mxu0 0
        %4273 = vmatpush1.bf16.xpose.msra.mxu0 0
        %4274 = vmatprep.subr.bf16.mxu0 0
        %4275 = vmatpush1.bf16.xpose.msra.mxu0 0
        %4276 = vmatprep.subr.bf16.mxu0 0
        %4277 = vmatpush1.bf16.xpose.msra.mxu0 0
        %4278 = vmatprep.subr.bf16.mxu0 0
        %4279 = vmatpush1.bf16.xpose.msra.mxu0 0
        %4280 = vmatprep.subr.bf16.mxu0 0
        %4281 = vmatpush1.bf16.xpose.msra.mxu0 0
        %4282 = vmatprep.subr.bf16.mxu0 0
        %4283 = vmatpush1.bf16.xpose.msra.mxu0 0
        %4284 = vmatprep.subr.bf16.mxu0 0
        %4285 = vmatpush1.bf16.xpose.msra.mxu0 0
        %4286 = vmatprep.subr.bf16.mxu0 0
        %4287 = vmatpush1.bf16.xpose.msra.mxu0 0
        %4288 = vmatprep.subr.bf16.mxu0 0
        %4289 = vmatpush1.bf16.xpose.msra.mxu0 0
        %4290 = vmatprep.subr.bf16.mxu0 0
        %4291 = vmatpush1.bf16.xpose.msra.mxu0 0
        %4292 = vmatprep.subr.bf16.mxu0 0
        %4293 = vmatpush1.bf16.xpose.msra.mxu0 0
        %4294 = vmatprep.subr.bf16.mxu0 0
        %4295 = vmatpush1.bf16.xpose.msra.mxu0 0
        %4296 = vmatprep.subr.bf16.mxu0 0
        %4297 = vmatpush1.bf16.xpose.msra.mxu0 0
        %4298 = vmatprep.mubr.bf16.mxu0 0
        %4299 = vmatmul.mubr.bf16.gmra.mrb[0].mxu0 %v4261
        %v4300 = vpop.f32.mrb[0].mxu0
        %v4301 = vadd.f32 %v2099, %v4300
        %v4302 = vpop.f32.mrb[0].mxu0
        %v4303 = vpop.f32.mrb[0].mxu0
        %v4304 = vadd.f32 %v2099, %v4303
        %v4305 = vpop.f32.mrb[0].mxu0
        %4306 = vdwg.mxu0
        %v4307 = vsel %vm265, %v4301, -inf
        %4308 = vmax.xlane.f32.xlu0 %v4307
        %v4309 = vpop.xlane.xlu0 %4308
        %v4310 = vsel %vm265, %v4304, -inf
        %4311 = vmax.xlane.f32.xlu0 %v4310
        %v4312 = vpop.xlane.xlu0 %4311
        %v4313 = vsub.f32 %v4301, %v4309
        %v4314 = vsub.f32 %v4304, %v4312
        %v4315 = vmul.f32 %v4313, 1.442695
        %v4316 = vpow.pop %v4315
        %v4317 = vmul.f32 %v4314, 1.442695
        %v4318 = vpow.pop %v4317
        %v4319 = vsel %vm265, %v4316, 0.0
        %4320 = vadd.xlane.f32.xlu0 %v4319
        %v4321 = vpop.xlane.xlu0 %4320
        %v4322 = vsel %vm265, %v4318, 0.0
        %4323 = vadd.xlane.f32.xlu0 %v4322
        %v4324 = vpop.xlane.xlu0 %4323
        %v4325 = vrcp.pop %v4321
        %v4326 = vrcp.pop %v4324
        %v4327 = vmul.f32 %v4316, %v4325
        %v4328 = vmul.f32 %v4318, %v4326
        %v4329 = vpack.c.bf16 %v4328, %v4327
        %4331 = vrot.lane.b32.xlu0 %v4259, 96
        %v4332 = vpop.permute.xlu0 %4331
        %v4335 = vsel %vm265, %v4329, 0
        %4337 = vmatprep.subr.bf16.mxu0 0
        %4338 = vmatpush1.bf16.msra.mxu0 %v4332
        %4339 = vmatprep.subr.bf16.mxu0 0
        %4340 = vmatpush1.bf16.msra.mxu0 0
        %4341 = vmatprep.subr.bf16.mxu0 0
        %4342 = vmatpush1.bf16.msra.mxu0 0
        %4343 = vmatprep.subr.bf16.mxu0 0
        %4344 = vmatpush1.bf16.msra.mxu0 0
        %4345 = vmatprep.subr.bf16.mxu0 0
        %4346 = vmatpush1.bf16.msra.mxu0 0
        %4347 = vmatprep.subr.bf16.mxu0 0
        %4348 = vmatpush1.bf16.msra.mxu0 0
        %4349 = vmatprep.subr.bf16.mxu0 0
        %4350 = vmatpush1.bf16.msra.mxu0 0
        %4351 = vmatprep.subr.bf16.mxu0 0
        %4352 = vmatpush1.bf16.msra.mxu0 0
        %4353 = vmatprep.subr.bf16.mxu0 0
        %4354 = vmatpush1.bf16.msra.mxu0 0
        %4355 = vmatprep.subr.bf16.mxu0 0
        %4356 = vmatpush1.bf16.msra.mxu0 0
        %4357 = vmatprep.subr.bf16.mxu0 0
        %4358 = vmatpush1.bf16.msra.mxu0 0
        %4359 = vmatprep.subr.bf16.mxu0 0
        %4360 = vmatpush1.bf16.msra.mxu0 0
        %4361 = vmatprep.subr.bf16.mxu0 0
        %4362 = vmatpush1.bf16.msra.mxu0 0
        %4363 = vmatprep.subr.bf16.mxu0 0
        %4364 = vmatpush1.bf16.msra.mxu0 0
        %4365 = vmatprep.subr.bf16.mxu0 0
        %4366 = vmatpush1.bf16.msra.mxu0 0
        %4367 = vmatprep.subr.bf16.mxu0 0
        %4368 = vmatpush1.bf16.msra.mxu0 0
        %4369 = vmatprep.mubr.bf16.mxu0 0
        %4370 = vmatmul.mubr.bf16.gmra.mrb[0].mxu0 %v4335
        %v4371 = vpop.f32.mrb[0].mxu0
        %v4372 = vadd.f32 0.0, %v4371
        %v4373 = vpop.f32.mrb[0].mxu0
        %v4374 = vpop.f32.mrb[0].mxu0
        %v4375 = vadd.f32 0.0, %v4374
        %v4376 = vpop.f32.mrb[0].mxu0
        %4377 = vdwg.mxu0
        %v4378 = vpack.c.bf16 %v4375, %v4372
        %v4379 = vpack.c.bf16 %v4254, %v4254
        %4381 = vrot.lane.b32.xlu0 %v4258, 120
        %v4382 = vpop.permute.xlu0 %4381
        %4383 = vrot.lane.b32.xlu0 %v4259, 120
        %v4384 = vpop.permute.xlu0 %4383
        %v4386 = vsel %vm2103, %v4382, 0
        %v4389 = vsel %vm2103, %v4384, 0
        %4391 = vmatprep.subr.bf16.mxu0 0
        %4392 = vmatpush1.bf16.xpose.msra.mxu0 %v4389
        %4393 = vmatprep.subr.bf16.mxu0 0
        %4394 = vmatpush1.bf16.xpose.msra.mxu0 0
        %4395 = vmatprep.subr.bf16.mxu0 0
        %4396 = vmatpush1.bf16.xpose.msra.mxu0 0
        %4397 = vmatprep.subr.bf16.mxu0 0
        %4398 = vmatpush1.bf16.xpose.msra.mxu0 0
        %4399 = vmatprep.subr.bf16.mxu0 0
        %4400 = vmatpush1.bf16.xpose.msra.mxu0 0
        %4401 = vmatprep.subr.bf16.mxu0 0
        %4402 = vmatpush1.bf16.xpose.msra.mxu0 0
        %4403 = vmatprep.subr.bf16.mxu0 0
        %4404 = vmatpush1.bf16.xpose.msra.mxu0 0
        %4405 = vmatprep.subr.bf16.mxu0 0
        %4406 = vmatpush1.bf16.xpose.msra.mxu0 0
        %4407 = vmatprep.subr.bf16.mxu0 0
        %4408 = vmatpush1.bf16.xpose.msra.mxu0 0
        %4409 = vmatprep.subr.bf16.mxu0 0
        %4410 = vmatpush1.bf16.xpose.msra.mxu0 0
        %4411 = vmatprep.subr.bf16.mxu0 0
        %4412 = vmatpush1.bf16.xpose.msra.mxu0 0
        %4413 = vmatprep.subr.bf16.mxu0 0
        %4414 = vmatpush1.bf16.xpose.msra.mxu0 0
        %4415 = vmatprep.subr.bf16.mxu0 0
        %4416 = vmatpush1.bf16.xpose.msra.mxu0 0
        %4417 = vmatprep.subr.bf16.mxu0 0
        %4418 = vmatpush1.bf16.xpose.msra.mxu0 0
        %4419 = vmatprep.subr.bf16.mxu0 0
        %4420 = vmatpush1.bf16.xpose.msra.mxu0 0
        %4421 = vmatprep.subr.bf16.mxu0 0
        %4422 = vmatpush1.bf16.xpose.msra.mxu0 0
        %4423 = vmatprep.mubr.bf16.mxu0 0
        %4424 = vmatmul.mubr.bf16.gmra.mrb[0].mxu0 %v4386
        %v4425 = vpop.f32.mrb[0].mxu0
        %v4426 = vadd.f32 %v2099, %v4425
        %v4427 = vpop.f32.mrb[0].mxu0
        %v4428 = vpop.f32.mrb[0].mxu0
        %v4429 = vadd.f32 %v2099, %v4428
        %v4430 = vpop.f32.mrb[0].mxu0
        %4431 = vdwg.mxu0
        %v4432 = vsel %vm265, %v4426, -inf
        %4433 = vmax.xlane.f32.xlu0 %v4432
        %v4434 = vpop.xlane.xlu0 %4433
        %v4435 = vsel %vm265, %v4429, -inf
        %4436 = vmax.xlane.f32.xlu0 %v4435
        %v4437 = vpop.xlane.xlu0 %4436
        %v4438 = vsub.f32 %v4426, %v4434
        %v4439 = vsub.f32 %v4429, %v4437
        %v4440 = vmul.f32 %v4438, 1.442695
        %v4441 = vpow.pop %v4440
        %v4442 = vmul.f32 %v4439, 1.442695
        %v4443 = vpow.pop %v4442
        %v4444 = vsel %vm265, %v4441, 0.0
        %4445 = vadd.xlane.f32.xlu0 %v4444
        %v4446 = vpop.xlane.xlu0 %4445
        %v4447 = vsel %vm265, %v4443, 0.0
        %4448 = vadd.xlane.f32.xlu0 %v4447
        %v4449 = vpop.xlane.xlu0 %4448
        %v4450 = vrcp.pop %v4446
        %v4451 = vrcp.pop %v4449
        %v4452 = vmul.f32 %v4441, %v4450
        %v4453 = vmul.f32 %v4443, %v4451
        %v4454 = vpack.c.bf16 %v4453, %v4452
        %4455 = vrot.lane.b32.xlu0 %v4259, 88
        %v4456 = vpop.permute.xlu0 %4455
        %v4459 = vsel %vm265, %v4454, 0
        %4461 = vmatprep.subr.bf16.mxu0 0
        %4462 = vmatpush1.bf16.msra.mxu0 %v4456
        %4463 = vmatprep.subr.bf16.mxu0 0
        %4464 = vmatpush1.bf16.msra.mxu0 0
        %4465 = vmatprep.subr.bf16.mxu0 0
        %4466 = vmatpush1.bf16.msra.mxu0 0
        %4467 = vmatprep.subr.bf16.mxu0 0
        %4468 = vmatpush1.bf16.msra.mxu0 0
        %4469 = vmatprep.subr.bf16.mxu0 0
        %4470 = vmatpush1.bf16.msra.mxu0 0
        %4471 = vmatprep.subr.bf16.mxu0 0
        %4472 = vmatpush1.bf16.msra.mxu0 0
        %4473 = vmatprep.subr.bf16.mxu0 0
        %4474 = vmatpush1.bf16.msra.mxu0 0
        %4475 = vmatprep.subr.bf16.mxu0 0
        %4476 = vmatpush1.bf16.msra.mxu0 0
        %4477 = vmatprep.subr.bf16.mxu0 0
        %4478 = vmatpush1.bf16.msra.mxu0 0
        %4479 = vmatprep.subr.bf16.mxu0 0
        %4480 = vmatpush1.bf16.msra.mxu0 0
        %4481 = vmatprep.subr.bf16.mxu0 0
        %4482 = vmatpush1.bf16.msra.mxu0 0
        %4483 = vmatprep.subr.bf16.mxu0 0
        %4484 = vmatpush1.bf16.msra.mxu0 0
        %4485 = vmatprep.subr.bf16.mxu0 0
        %4486 = vmatpush1.bf16.msra.mxu0 0
        %4487 = vmatprep.subr.bf16.mxu0 0
        %4488 = vmatpush1.bf16.msra.mxu0 0
        %4489 = vmatprep.subr.bf16.mxu0 0
        %4490 = vmatpush1.bf16.msra.mxu0 0
        %4491 = vmatprep.subr.bf16.mxu0 0
        %4492 = vmatpush1.bf16.msra.mxu0 0
        %4493 = vmatprep.mubr.bf16.mxu0 0
        %4494 = vmatmul.mubr.bf16.gmra.mrb[0].mxu0 %v4459
        %v4495 = vpop.f32.mrb[0].mxu0
        %v4496 = vadd.f32 0.0, %v4495
        %v4497 = vpop.f32.mrb[0].mxu0
        %v4498 = vpop.f32.mrb[0].mxu0
        %v4499 = vadd.f32 0.0, %v4498
        %v4500 = vpop.f32.mrb[0].mxu0
        %4501 = vdwg.mxu0
        %v4502 = vpack.c.bf16 %v4499, %v4496
        %v4503 = vpack.c.bf16 %v4255, %v4255
        %v4505 = vsel %vm2103, %v4502, 0
        %v4508 = vsel %vm570, %v4503, 0
        %4510 = vmatprep.subr.bf16.mxu0 0
        %4511 = vmatpush1.bf16.msra.mxu0 %v4508
        %4512 = vmatprep.subr.bf16.mxu0 0
        %4513 = vmatpush1.bf16.msra.mxu0 0
        %4514 = vmatprep.subr.bf16.mxu0 0
        %4515 = vmatpush1.bf16.msra.mxu0 0
        %4516 = vmatprep.subr.bf16.mxu0 0
        %4517 = vmatpush1.bf16.msra.mxu0 0
        %4518 = vmatprep.subr.bf16.mxu0 0
        %4519 = vmatpush1.bf16.msra.mxu0 0
        %4520 = vmatprep.subr.bf16.mxu0 0
        %4521 = vmatpush1.bf16.msra.mxu0 0
        %4522 = vmatprep.subr.bf16.mxu0 0
        %4523 = vmatpush1.bf16.msra.mxu0 0
        %4524 = vmatprep.subr.bf16.mxu0 0
        %4525 = vmatpush1.bf16.msra.mxu0 0
        %4526 = vmatprep.subr.bf16.mxu0 0
        %4527 = vmatpush1.bf16.msra.mxu0 0
        %4528 = vmatprep.subr.bf16.mxu0 0
        %4529 = vmatpush1.bf16.msra.mxu0 0
        %4530 = vmatprep.subr.bf16.mxu0 0
        %4531 = vmatpush1.bf16.msra.mxu0 0
        %4532 = vmatprep.subr.bf16.mxu0 0
        %4533 = vmatpush1.bf16.msra.mxu0 0
        %4534 = vmatprep.subr.bf16.mxu0 0
        %4535 = vmatpush1.bf16.msra.mxu0 0
        %4536 = vmatprep.subr.bf16.mxu0 0
        %4537 = vmatpush1.bf16.msra.mxu0 0
        %4538 = vmatprep.subr.bf16.mxu0 0
        %4539 = vmatpush1.bf16.msra.mxu0 0
        %4540 = vmatprep.subr.bf16.mxu0 0
        %4541 = vmatpush1.bf16.msra.mxu0 0
        %4542 = vmatprep.mubr.bf16.mxu0 0
        %4543 = vmatmul.mubr.bf16.gmra.mrb[0].mxu0 %v4505
        %v4544 = vpop.f32.mrb[0].mxu0
        %v4545 = vadd.f32 0.0, %v4544
        %v4546 = vpop.f32.mrb[0].mxu0
        %v4547 = vpop.f32.mrb[0].mxu0
        %v4548 = vadd.f32 0.0, %v4547
        %v4549 = vpop.f32.mrb[0].mxu0
        %4550 = vdwg.mxu0
        %v4552 = vsel %vm2103, %v4378, 0
        %v4555 = vsel %vm570, %v4379, 0
        %4557 = vmatprep.subr.bf16.mxu0 0
        %4558 = vmatpush1.bf16.msra.mxu0 %v4555
        %4559 = vmatprep.subr.bf16.mxu0 0
        %4560 = vmatpush1.bf16.msra.mxu0 0
        %4561 = vmatprep.subr.bf16.mxu0 0
        %4562 = vmatpush1.bf16.msra.mxu0 0
        %4563 = vmatprep.subr.bf16.mxu0 0
        %4564 = vmatpush1.bf16.msra.mxu0 0
        %4565 = vmatprep.subr.bf16.mxu0 0
        %4566 = vmatpush1.bf16.msra.mxu0 0
        %4567 = vmatprep.subr.bf16.mxu0 0
        %4568 = vmatpush1.bf16.msra.mxu0 0
        %4569 = vmatprep.subr.bf16.mxu0 0
        %4570 = vmatpush1.bf16.msra.mxu0 0
        %4571 = vmatprep.subr.bf16.mxu0 0
        %4572 = vmatpush1.bf16.msra.mxu0 0
        %4573 = vmatprep.subr.bf16.mxu0 0
        %4574 = vmatpush1.bf16.msra.mxu0 0
        %4575 = vmatprep.subr.bf16.mxu0 0
        %4576 = vmatpush1.bf16.msra.mxu0 0
        %4577 = vmatprep.subr.bf16.mxu0 0
        %4578 = vmatpush1.bf16.msra.mxu0 0
        %4579 = vmatprep.subr.bf16.mxu0 0
        %4580 = vmatpush1.bf16.msra.mxu0 0
        %4581 = vmatprep.subr.bf16.mxu0 0
        %4582 = vmatpush1.bf16.msra.mxu0 0
        %4583 = vmatprep.subr.bf16.mxu0 0
        %4584 = vmatpush1.bf16.msra.mxu0 0
        %4585 = vmatprep.subr.bf16.mxu0 0
        %4586 = vmatpush1.bf16.msra.mxu0 0
        %4587 = vmatprep.subr.bf16.mxu0 0
        %4588 = vmatpush1.bf16.msra.mxu0 0
        %4589 = vmatprep.mubr.bf16.mxu0 0
        %4590 = vmatmul.mubr.bf16.gmra.mrb[0].mxu0 %v4552
        %v4591 = vpop.f32.mrb[0].mxu0
        %v4592 = vadd.f32 %v4545, %v4591
        %v4593 = vpop.f32.mrb[0].mxu0
        %v4594 = vpop.f32.mrb[0].mxu0
        %v4595 = vadd.f32 %v4548, %v4594
        %v4596 = vpop.f32.mrb[0].mxu0
        %4597 = vdwg.mxu0
        %4598 = vrot.lane.b32.xlu0 %v4258, 112
        %v4599 = vpop.permute.xlu0 %4598
        %4600 = vrot.lane.b32.xlu0 %v4259, 112
        %v4601 = vpop.permute.xlu0 %4600
        %v4603 = vsel %vm2103, %v4599, 0
        %v4606 = vsel %vm2103, %v4601, 0
        %4608 = vmatprep.subr.bf16.mxu0 0
        %4609 = vmatpush1.bf16.xpose.msra.mxu0 %v4606
        %4610 = vmatprep.subr.bf16.mxu0 0
        %4611 = vmatpush1.bf16.xpose.msra.mxu0 0
        %4612 = vmatprep.subr.bf16.mxu0 0
        %4613 = vmatpush1.bf16.xpose.msra.mxu0 0
        %4614 = vmatprep.subr.bf16.mxu0 0
        %4615 = vmatpush1.bf16.xpose.msra.mxu0 0
        %4616 = vmatprep.subr.bf16.mxu0 0
        %4617 = vmatpush1.bf16.xpose.msra.mxu0 0
        %4618 = vmatprep.subr.bf16.mxu0 0
        %4619 = vmatpush1.bf16.xpose.msra.mxu0 0
        %4620 = vmatprep.subr.bf16.mxu0 0
        %4621 = vmatpush1.bf16.xpose.msra.mxu0 0
        %4622 = vmatprep.subr.bf16.mxu0 0
        %4623 = vmatpush1.bf16.xpose.msra.mxu0 0
        %4624 = vmatprep.subr.bf16.mxu0 0
        %4625 = vmatpush1.bf16.xpose.msra.mxu0 0
        %4626 = vmatprep.subr.bf16.mxu0 0
        %4627 = vmatpush1.bf16.xpose.msra.mxu0 0
        %4628 = vmatprep.subr.bf16.mxu0 0
        %4629 = vmatpush1.bf16.xpose.msra.mxu0 0
        %4630 = vmatprep.subr.bf16.mxu0 0
        %4631 = vmatpush1.bf16.xpose.msra.mxu0 0
        %4632 = vmatprep.subr.bf16.mxu0 0
        %4633 = vmatpush1.bf16.xpose.msra.mxu0 0
        %4634 = vmatprep.subr.bf16.mxu0 0
        %4635 = vmatpush1.bf16.xpose.msra.mxu0 0
        %4636 = vmatprep.subr.bf16.mxu0 0
        %4637 = vmatpush1.bf16.xpose.msra.mxu0 0
        %4638 = vmatprep.subr.bf16.mxu0 0
        %4639 = vmatpush1.bf16.xpose.msra.mxu0 0
        %4640 = vmatprep.mubr.bf16.mxu0 0
        %4641 = vmatmul.mubr.bf16.gmra.mrb[0].mxu0 %v4603
        %v4642 = vpop.f32.mrb[0].mxu0
        %v4643 = vadd.f32 %v2099, %v4642
        %v4644 = vpop.f32.mrb[0].mxu0
        %v4645 = vpop.f32.mrb[0].mxu0
        %v4646 = vadd.f32 %v2099, %v4645
        %v4647 = vpop.f32.mrb[0].mxu0
        %4648 = vdwg.mxu0
        %v4649 = vsel %vm265, %v4643, -inf
        %4650 = vmax.xlane.f32.xlu0 %v4649
        %v4651 = vpop.xlane.xlu0 %4650
        %v4652 = vsel %vm265, %v4646, -inf
        %4653 = vmax.xlane.f32.xlu0 %v4652
        %v4654 = vpop.xlane.xlu0 %4653
        %v4655 = vsub.f32 %v4643, %v4651
        %v4656 = vsub.f32 %v4646, %v4654
        %v4657 = vmul.f32 %v4655, 1.442695
        %v4658 = vpow.pop %v4657
        %v4659 = vmul.f32 %v4656, 1.442695
        %v4660 = vpow.pop %v4659
        %v4661 = vsel %vm265, %v4658, 0.0
        %4662 = vadd.xlane.f32.xlu0 %v4661
        %v4663 = vpop.xlane.xlu0 %4662
        %v4664 = vsel %vm265, %v4660, 0.0
        %4665 = vadd.xlane.f32.xlu0 %v4664
        %v4666 = vpop.xlane.xlu0 %4665
        %v4667 = vrcp.pop %v4663
        %v4668 = vrcp.pop %v4666
        %v4669 = vmul.f32 %v4658, %v4667
        %v4670 = vmul.f32 %v4660, %v4668
        %v4671 = vpack.c.bf16 %v4670, %v4669
        %4672 = vrot.lane.b32.xlu0 %v4259, 80
        %v4673 = vpop.permute.xlu0 %4672
        %v4676 = vsel %vm265, %v4671, 0
        %4678 = vmatprep.subr.bf16.mxu0 0
        %4679 = vmatpush1.bf16.msra.mxu0 %v4673
        %4680 = vmatprep.subr.bf16.mxu0 0
        %4681 = vmatpush1.bf16.msra.mxu0 0
        %4682 = vmatprep.subr.bf16.mxu0 0
        %4683 = vmatpush1.bf16.msra.mxu0 0
        %4684 = vmatprep.subr.bf16.mxu0 0
        %4685 = vmatpush1.bf16.msra.mxu0 0
        %4686 = vmatprep.subr.bf16.mxu0 0
        %4687 = vmatpush1.bf16.msra.mxu0 0
        %4688 = vmatprep.subr.bf16.mxu0 0
        %4689 = vmatpush1.bf16.msra.mxu0 0
        %4690 = vmatprep.subr.bf16.mxu0 0
        %4691 = vmatpush1.bf16.msra.mxu0 0
        %4692 = vmatprep.subr.bf16.mxu0 0
        %4693 = vmatpush1.bf16.msra.mxu0 0
        %4694 = vmatprep.subr.bf16.mxu0 0
        %4695 = vmatpush1.bf16.msra.mxu0 0
        %4696 = vmatprep.subr.bf16.mxu0 0
        %4697 = vmatpush1.bf16.msra.mxu0 0
        %4698 = vmatprep.subr.bf16.mxu0 0
        %4699 = vmatpush1.bf16.msra.mxu0 0
        %4700 = vmatprep.subr.bf16.mxu0 0
        %4701 = vmatpush1.bf16.msra.mxu0 0
        %4702 = vmatprep.subr.bf16.mxu0 0
        %4703 = vmatpush1.bf16.msra.mxu0 0
        %4704 = vmatprep.subr.bf16.mxu0 0
        %4705 = vmatpush1.bf16.msra.mxu0 0
        %4706 = vmatprep.subr.bf16.mxu0 0
        %4707 = vmatpush1.bf16.msra.mxu0 0
        %4708 = vmatprep.subr.bf16.mxu0 0
        %4709 = vmatpush1.bf16.msra.mxu0 0
        %4710 = vmatprep.mubr.bf16.mxu0 0
        %4711 = vmatmul.mubr.bf16.gmra.mrb[0].mxu0 %v4676
        %v4712 = vpop.f32.mrb[0].mxu0
        %v4713 = vadd.f32 0.0, %v4712
        %v4714 = vpop.f32.mrb[0].mxu0
        %v4715 = vpop.f32.mrb[0].mxu0
        %v4716 = vadd.f32 0.0, %v4715
        %v4717 = vpop.f32.mrb[0].mxu0
        %4718 = vdwg.mxu0
        %v4719 = vpack.c.bf16 %v4716, %v4713
        %v4720 = vpack.c.bf16 %v4256, %v4256
        %v4722 = vsel %vm2103, %v4719, 0
        %v4725 = vsel %vm570, %v4720, 0
        %4727 = vmatprep.subr.bf16.mxu0 0
        %4728 = vmatpush1.bf16.msra.mxu0 %v4725
        %4729 = vmatprep.subr.bf16.mxu0 0
        %4730 = vmatpush1.bf16.msra.mxu0 0
        %4731 = vmatprep.subr.bf16.mxu0 0
        %4732 = vmatpush1.bf16.msra.mxu0 0
        %4733 = vmatprep.subr.bf16.mxu0 0
        %4734 = vmatpush1.bf16.msra.mxu0 0
        %4735 = vmatprep.subr.bf16.mxu0 0
        %4736 = vmatpush1.bf16.msra.mxu0 0
        %4737 = vmatprep.subr.bf16.mxu0 0
        %4738 = vmatpush1.bf16.msra.mxu0 0
        %4739 = vmatprep.subr.bf16.mxu0 0
        %4740 = vmatpush1.bf16.msra.mxu0 0
        %4741 = vmatprep.subr.bf16.mxu0 0
        %4742 = vmatpush1.bf16.msra.mxu0 0
        %4743 = vmatprep.subr.bf16.mxu0 0
        %4744 = vmatpush1.bf16.msra.mxu0 0
        %4745 = vmatprep.subr.bf16.mxu0 0
        %4746 = vmatpush1.bf16.msra.mxu0 0
        %4747 = vmatprep.subr.bf16.mxu0 0
        %4748 = vmatpush1.bf16.msra.mxu0 0
        %4749 = vmatprep.subr.bf16.mxu0 0
        %4750 = vmatpush1.bf16.msra.mxu0 0
        %4751 = vmatprep.subr.bf16.mxu0 0
        %4752 = vmatpush1.bf16.msra.mxu0 0
        %4753 = vmatprep.subr.bf16.mxu0 0
        %4754 = vmatpush1.bf16.msra.mxu0 0
        %4755 = vmatprep.subr.bf16.mxu0 0
        %4756 = vmatpush1.bf16.msra.mxu0 0
        %4757 = vmatprep.subr.bf16.mxu0 0
        %4758 = vmatpush1.bf16.msra.mxu0 0
        %4759 = vmatprep.mubr.bf16.mxu0 0
        %4760 = vmatmul.mubr.bf16.gmra.mrb[0].mxu0 %v4722
        %v4761 = vpop.f32.mrb[0].mxu0
        %v4762 = vadd.f32 0.0, %v4761
        %v4763 = vpop.f32.mrb[0].mxu0
        %v4764 = vpop.f32.mrb[0].mxu0
        %v4765 = vadd.f32 0.0, %v4764
        %v4766 = vpop.f32.mrb[0].mxu0
        %4767 = vdwg.mxu0
        %v4768 = vadd.f32 %v4592, %v4762
        %v4769 = vadd.f32 %v4595, %v4765
        %4770 = vrot.lane.b32.xlu0 %v4258, 104
        %v4771 = vpop.permute.xlu0 %4770
        %4772 = vrot.lane.b32.xlu0 %v4259, 104
        %v4773 = vpop.permute.xlu0 %4772
        %v4775 = vsel %vm2103, %v4771, 0
        %v4778 = vsel %vm2103, %v4773, 0
        %4780 = vmatprep.subr.bf16.mxu0 0
        %4781 = vmatpush1.bf16.xpose.msra.mxu0 %v4778
        %4782 = vmatprep.subr.bf16.mxu0 0
        %4783 = vmatpush1.bf16.xpose.msra.mxu0 0
        %4784 = vmatprep.subr.bf16.mxu0 0
        %4785 = vmatpush1.bf16.xpose.msra.mxu0 0
        %4786 = vmatprep.subr.bf16.mxu0 0
        %4787 = vmatpush1.bf16.xpose.msra.mxu0 0
        %4788 = vmatprep.subr.bf16.mxu0 0
        %4789 = vmatpush1.bf16.xpose.msra.mxu0 0
        %4790 = vmatprep.subr.bf16.mxu0 0
        %4791 = vmatpush1.bf16.xpose.msra.mxu0 0
        %4792 = vmatprep.subr.bf16.mxu0 0
        %4793 = vmatpush1.bf16.xpose.msra.mxu0 0
        %4794 = vmatprep.subr.bf16.mxu0 0
        %4795 = vmatpush1.bf16.xpose.msra.mxu0 0
        %4796 = vmatprep.subr.bf16.mxu0 0
        %4797 = vmatpush1.bf16.xpose.msra.mxu0 0
        %4798 = vmatprep.subr.bf16.mxu0 0
        %4799 = vmatpush1.bf16.xpose.msra.mxu0 0
        %4800 = vmatprep.subr.bf16.mxu0 0
        %4801 = vmatpush1.bf16.xpose.msra.mxu0 0
        %4802 = vmatprep.subr.bf16.mxu0 0
        %4803 = vmatpush1.bf16.xpose.msra.mxu0 0
        %4804 = vmatprep.subr.bf16.mxu0 0
        %4805 = vmatpush1.bf16.xpose.msra.mxu0 0
        %4806 = vmatprep.subr.bf16.mxu0 0
        %4807 = vmatpush1.bf16.xpose.msra.mxu0 0
        %4808 = vmatprep.subr.bf16.mxu0 0
        %4809 = vmatpush1.bf16.xpose.msra.mxu0 0
        %4810 = vmatprep.subr.bf16.mxu0 0
        %4811 = vmatpush1.bf16.xpose.msra.mxu0 0
        %4812 = vmatprep.mubr.bf16.mxu0 0
        %4813 = vmatmul.mubr.bf16.gmra.mrb[0].mxu0 %v4775
        %v4814 = vpop.f32.mrb[0].mxu0
        %v4815 = vadd.f32 %v2099, %v4814
        %v4816 = vpop.f32.mrb[0].mxu0
        %v4817 = vpop.f32.mrb[0].mxu0
        %v4818 = vadd.f32 %v2099, %v4817
        %v4819 = vpop.f32.mrb[0].mxu0
        %4820 = vdwg.mxu0
        %v4821 = vsel %vm265, %v4815, -inf
        %4822 = vmax.xlane.f32.xlu0 %v4821
        %v4823 = vpop.xlane.xlu0 %4822
        %v4824 = vsel %vm265, %v4818, -inf
        %4825 = vmax.xlane.f32.xlu0 %v4824
        %v4826 = vpop.xlane.xlu0 %4825
        %v4827 = vsub.f32 %v4815, %v4823
        %v4828 = vsub.f32 %v4818, %v4826
        %v4829 = vmul.f32 %v4827, 1.442695
        %v4830 = vpow.pop %v4829
        %v4831 = vmul.f32 %v4828, 1.442695
        %v4832 = vpow.pop %v4831
        %v4833 = vsel %vm265, %v4830, 0.0
        %4834 = vadd.xlane.f32.xlu0 %v4833
        %v4835 = vpop.xlane.xlu0 %4834
        %v4836 = vsel %vm265, %v4832, 0.0
        %4837 = vadd.xlane.f32.xlu0 %v4836
        %v4838 = vpop.xlane.xlu0 %4837
        %v4839 = vrcp.pop %v4835
        %v4840 = vrcp.pop %v4838
        %v4841 = vmul.f32 %v4830, %v4839
        %v4842 = vmul.f32 %v4832, %v4840
        %v4843 = vpack.c.bf16 %v4842, %v4841
        %4844 = vrot.lane.b32.xlu0 %v4259, 72
        %v4845 = vpop.permute.xlu0 %4844
        %v4848 = vsel %vm265, %v4843, 0
        %4850 = vmatprep.subr.bf16.mxu0 0
        %4851 = vmatpush1.bf16.msra.mxu0 %v4845
        %4852 = vmatprep.subr.bf16.mxu0 0
        %4853 = vmatpush1.bf16.msra.mxu0 0
        %4854 = vmatprep.subr.bf16.mxu0 0
        %4855 = vmatpush1.bf16.msra.mxu0 0
        %4856 = vmatprep.subr.bf16.mxu0 0
        %4857 = vmatpush1.bf16.msra.mxu0 0
        %4858 = vmatprep.subr.bf16.mxu0 0
        %4859 = vmatpush1.bf16.msra.mxu0 0
        %4860 = vmatprep.subr.bf16.mxu0 0
        %4861 = vmatpush1.bf16.msra.mxu0 0
        %4862 = vmatprep.subr.bf16.mxu0 0
        %4863 = vmatpush1.bf16.msra.mxu0 0
        %4864 = vmatprep.subr.bf16.mxu0 0
        %4865 = vmatpush1.bf16.msra.mxu0 0
        %4866 = vmatprep.subr.bf16.mxu0 0
        %4867 = vmatpush1.bf16.msra.mxu0 0
        %4868 = vmatprep.subr.bf16.mxu0 0
        %4869 = vmatpush1.bf16.msra.mxu0 0
        %4870 = vmatprep.subr.bf16.mxu0 0
        %4871 = vmatpush1.bf16.msra.mxu0 0
        %4872 = vmatprep.subr.bf16.mxu0 0
        %4873 = vmatpush1.bf16.msra.mxu0 0
        %4874 = vmatprep.subr.bf16.mxu0 0
        %4875 = vmatpush1.bf16.msra.mxu0 0
        %4876 = vmatprep.subr.bf16.mxu0 0
        %4877 = vmatpush1.bf16.msra.mxu0 0
        %4878 = vmatprep.subr.bf16.mxu0 0
        %4879 = vmatpush1.bf16.msra.mxu0 0
        %4880 = vmatprep.subr.bf16.mxu0 0
        %4881 = vmatpush1.bf16.msra.mxu0 0
        %4882 = vmatprep.mubr.bf16.mxu0 0
        %4883 = vmatmul.mubr.bf16.gmra.mrb[0].mxu0 %v4848
        %v4884 = vpop.f32.mrb[0].mxu0
        %v4885 = vadd.f32 0.0, %v4884
        %v4886 = vpop.f32.mrb[0].mxu0
        %v4887 = vpop.f32.mrb[0].mxu0
        %v4888 = vadd.f32 0.0, %v4887
        %v4889 = vpop.f32.mrb[0].mxu0
        %4890 = vdwg.mxu0
        %v4891 = vpack.c.bf16 %v4888, %v4885
        %v4892 = vpack.c.bf16 %v4257, %v4257
        %v4894 = vsel %vm2103, %v4891, 0
        %v4897 = vsel %vm570, %v4892, 0
        %4899 = vmatprep.subr.bf16.mxu0 0
        %4900 = vmatpush1.bf16.msra.mxu0 %v4897
        %4901 = vmatprep.subr.bf16.mxu0 0
        %4902 = vmatpush1.bf16.msra.mxu0 0
        %4903 = vmatprep.subr.bf16.mxu0 0
        %4904 = vmatpush1.bf16.msra.mxu0 0
        %4905 = vmatprep.subr.bf16.mxu0 0
        %4906 = vmatpush1.bf16.msra.mxu0 0
        %4907 = vmatprep.subr.bf16.mxu0 0
        %4908 = vmatpush1.bf16.msra.mxu0 0
        %4909 = vmatprep.subr.bf16.mxu0 0
        %4910 = vmatpush1.bf16.msra.mxu0 0
        %4911 = vmatprep.subr.bf16.mxu0 0
        %4912 = vmatpush1.bf16.msra.mxu0 0
        %4913 = vmatprep.subr.bf16.mxu0 0
        %4914 = vmatpush1.bf16.msra.mxu0 0
        %4915 = vmatprep.subr.bf16.mxu0 0
        %4916 = vmatpush1.bf16.msra.mxu0 0
        %4917 = vmatprep.subr.bf16.mxu0 0
        %4918 = vmatpush1.bf16.msra.mxu0 0
        %4919 = vmatprep.subr.bf16.mxu0 0
        %4920 = vmatpush1.bf16.msra.mxu0 0
        %4921 = vmatprep.subr.bf16.mxu0 0
        %4922 = vmatpush1.bf16.msra.mxu0 0
        %4923 = vmatprep.subr.bf16.mxu0 0
        %4924 = vmatpush1.bf16.msra.mxu0 0
        %4925 = vmatprep.subr.bf16.mxu0 0
        %4926 = vmatpush1.bf16.msra.mxu0 0
        %4927 = vmatprep.subr.bf16.mxu0 0
        %4928 = vmatpush1.bf16.msra.mxu0 0
        %4929 = vmatprep.subr.bf16.mxu0 0
        %4930 = vmatpush1.bf16.msra.mxu0 0
        %4931 = vmatprep.mubr.bf16.mxu0 0
        %4932 = vmatmul.mubr.bf16.gmra.mrb[0].mxu0 %v4894
        %v4933 = vpop.f32.mrb[0].mxu0
        %v4934 = vadd.f32 0.0, %v4933
        %v4935 = vpop.f32.mrb[0].mxu0
        %v4936 = vpop.f32.mrb[0].mxu0
        %v4937 = vadd.f32 0.0, %v4936
        %v4938 = vpop.f32.mrb[0].mxu0
        %4939 = vdwg.mxu0
        %v4940 = vadd.f32 %v4768, %v4934
        %v4941 = vadd.f32 %v4769, %v4937
        %v4942 = vld [vmem:[#allocation2 + $0x1c8] sm:$0x1]
        %v4943 = vlaneseq
        %v4944 = vshrl.u32 %v4943, 7
        %v4945 = vsub.s32 0, %v4944
        %v4946 = vrot.slane %v4942, %v4945
        %v4947 = vadd.f32 %v4940, %v4946
        %v4948 = vadd.f32 %v4941, %v4946
        %v4949 = vadd.f32 %v4137, %v4947
        %v4950 = vadd.f32 %v4138, %v4948
        %v4951 = vld [vmem:[#allocation2 + $0x250] sm:$0x1]
        %v4952 = vld [vmem:[#allocation2 + $0x258] sm:$0x1]
        %v4953 = vsel %vm2039, %v4949, 0.0
        %4954 = vadd.xlane.f32.xlu0 %v4953
        %v4955 = vpop.xlane.xlu0 %4954
        %v4956 = vsel %vm2039, %v4950, 0.0
        %4957 = vadd.xlane.f32.xlu0 %v4956
        %v4958 = vpop.xlane.xlu0 %4957
        %v4959 = vmul.f32 %v4955, %v2802
        %v4960 = vmul.f32 %v4958, %v2802
        %v4961 = vsub.f32 %v4949, %v4959
        %v4962 = vsub.f32 %v4950, %v4960
        %v4963 = vmul.f32 %v4961, %v4961
        %v4964 = vmul.f32 %v4962, %v4962
        %v4965 = vsel %vm2039, %v4963, 0.0
        %4966 = vadd.xlane.f32.xlu0 %v4965
        %v4967 = vpop.xlane.xlu0 %4966
        %v4968 = vsel %vm2039, %v4964, 0.0
        %4969 = vadd.xlane.f32.xlu0 %v4968
        %v4970 = vpop.xlane.xlu0 %4969
        %v4971 = vmul.f32 %v4967, %v2802
        %v4972 = vmul.f32 %v4970, %v2802
        %v4973 = vadd.f32 %v4971, 1e-05
        %v4974 = vadd.f32 %v4972, 1e-05
        %v4975 = vrsqrt.pop %v4973
        %v4976 = vrsqrt.pop %v4974
        %v4977 = vmul.f32 %v4961, %v4975
        %v4978 = vmul.f32 %v4962, %v4976
        %v4979 = vlaneseq
        %v4980 = vshrl.u32 %v4979, 7
        %v4981 = vsub.s32 0, %v4980
        %v4982 = vrot.slane %v4951, %v4981
        %v4983 = vmul.f32 %v4977, %v4982
        %v4984 = vmul.f32 %v4978, %v4982
        %v4985 = vlaneseq
        %v4986 = vshrl.u32 %v4985, 7
        %v4987 = vsub.s32 0, %v4986
        %v4988 = vrot.slane %v4952, %v4987
        %v4989 = vadd.f32 %v4983, %v4988
        %v4990 = vadd.f32 %v4984, %v4988
        %v4991 = vld [vmem:[#allocation2 + $0x1d0] sm:$0xff]
        %v4992 = vld [vmem:[#allocation2 + $0x1d8] sm:$0xff]
        %v4993 = vld [vmem:[#allocation2 + $0x1e0] sm:$0xff]
        %v4994 = vld [vmem:[#allocation2 + $0x1e8] sm:$0xff]
        %v4995 = vpack.c.bf16 %v4990, %v4989
        %v4996 = vpack.c.bf16 %v4992, %v4991
        %v4997 = vpack.c.bf16 %v4994, %v4993
        %v4998 = vld [vmem:[#allocation2 + $0x1f0] sm:$0x1]
        %v4999 = vlaneseq
        %v5000 = vshrl.u32 %v4999, 7
        %v5001 = vsub.s32 0, %v5000
        %v5002 = vrot.slane %v4998, %v5001
        %v5004 = vsel %vm2039, %v4995, 0
        %5006 = vmatprep.subr.bf16.mxu0 0
        %5007 = vmatpush1.bf16.msra.mxu0 %v4996
        %5008 = vmatprep.subr.bf16.mxu0 0
        %5009 = vmatpush1.bf16.msra.mxu0 %v4997
        %5010 = vmatprep.subr.bf16.mxu0 0
        %5011 = vmatpush1.bf16.msra.mxu0 0
        %5012 = vmatprep.subr.bf16.mxu0 0
        %5013 = vmatpush1.bf16.msra.mxu0 0
        %5014 = vmatprep.subr.bf16.mxu0 0
        %5015 = vmatpush1.bf16.msra.mxu0 0
        %5016 = vmatprep.subr.bf16.mxu0 0
        %5017 = vmatpush1.bf16.msra.mxu0 0
        %5018 = vmatprep.subr.bf16.mxu0 0
        %5019 = vmatpush1.bf16.msra.mxu0 0
        %5020 = vmatprep.subr.bf16.mxu0 0
        %5021 = vmatpush1.bf16.msra.mxu0 0
        %5022 = vmatprep.subr.bf16.mxu0 0
        %5023 = vmatpush1.bf16.msra.mxu0 0
        %5024 = vmatprep.subr.bf16.mxu0 0
        %5025 = vmatpush1.bf16.msra.mxu0 0
        %5026 = vmatprep.subr.bf16.mxu0 0
        %5027 = vmatpush1.bf16.msra.mxu0 0
        %5028 = vmatprep.subr.bf16.mxu0 0
        %5029 = vmatpush1.bf16.msra.mxu0 0
        %5030 = vmatprep.subr.bf16.mxu0 0
        %5031 = vmatpush1.bf16.msra.mxu0 0
        %5032 = vmatprep.subr.bf16.mxu0 0
        %5033 = vmatpush1.bf16.msra.mxu0 0
        %5034 = vmatprep.subr.bf16.mxu0 0
        %5035 = vmatpush1.bf16.msra.mxu0 0
        %5036 = vmatprep.subr.bf16.mxu0 0
        %5037 = vmatpush1.bf16.msra.mxu0 0
        %5038 = vmatprep.mubr.bf16.mxu0 0
        %5039 = vmatmul.mubr.bf16.gmra.mrb[0].mxu0 %v5004
        %v5040 = vpop.f32.mrb[0].mxu0
        %v5041 = vadd.f32 %v5002, %v5040
        %v5042 = vpop.f32.mrb[0].mxu0
        %v5043 = vpop.f32.mrb[0].mxu0
        %v5044 = vadd.f32 %v5002, %v5043
        %v5045 = vpop.f32.mrb[0].mxu0
        %5046 = vdwg.mxu0
        %v5047 = vmax.f32 %v5041, 0.0
        %v5048 = vmax.f32 %v5044, 0.0
        %v5049 = vld [vmem:[#allocation2 + $0x1f8] sm:$0xff]
        %v5050 = vld [vmem:[#allocation2 + $0x200] sm:$0xff]
        %v5051 = vld [vmem:[#allocation2 + $0x208] sm:$0xff]
        %v5052 = vld [vmem:[#allocation2 + $0x210] sm:$0xff]
        %v5053 = vld [vmem:[#allocation2 + $0x218] sm:$0xff]
        %v5054 = vld [vmem:[#allocation2 + $0x220] sm:$0xff]
        %v5055 = vld [vmem:[#allocation2 + $0x228] sm:$0xff]
        %v5056 = vld [vmem:[#allocation2 + $0x230] sm:$0xff]
        %v5057 = vpack.c.bf16 %v5048, %v5047
        %v5058 = vpack.c.bf16 %v5050, %v5049
        %v5059 = vpack.c.bf16 %v5052, %v5051
        %v5060 = vpack.c.bf16 %v5054, %v5053
        %v5061 = vpack.c.bf16 %v5056, %v5055
        %v5062 = vld [vmem:[#allocation2 + $0x238] sm:$0x1]
        %v5063 = vlaneseq
        %v5064 = vshrl.u32 %v5063, 7
        %v5065 = vsub.s32 0, %v5064
        %v5066 = vrot.slane %v5062, %v5065
        %v5068 = vsel %vm2911, %v5057, 0
        %5070 = vmatprep.subr.bf16.mxu0 0
        %5071 = vmatpush1.bf16.msra.mxu0 %v5058
        %5072 = vmatprep.subr.bf16.mxu0 0
        %5073 = vmatpush1.bf16.msra.mxu0 %v5059
        %5074 = vmatprep.subr.bf16.mxu0 0
        %5075 = vmatpush1.bf16.msra.mxu0 %v5060
        %5076 = vmatprep.subr.bf16.mxu0 0
        %5077 = vmatpush1.bf16.msra.mxu0 %v5061
        %5078 = vmatprep.subr.bf16.mxu0 0
        %5079 = vmatpush1.bf16.msra.mxu0 0
        %5080 = vmatprep.subr.bf16.mxu0 0
        %5081 = vmatpush1.bf16.msra.mxu0 0
        %5082 = vmatprep.subr.bf16.mxu0 0
        %5083 = vmatpush1.bf16.msra.mxu0 0
        %5084 = vmatprep.subr.bf16.mxu0 0
        %5085 = vmatpush1.bf16.msra.mxu0 0
        %5086 = vmatprep.subr.bf16.mxu0 0
        %5087 = vmatpush1.bf16.msra.mxu0 0
        %5088 = vmatprep.subr.bf16.mxu0 0
        %5089 = vmatpush1.bf16.msra.mxu0 0
        %5090 = vmatprep.subr.bf16.mxu0 0
        %5091 = vmatpush1.bf16.msra.mxu0 0
        %5092 = vmatprep.subr.bf16.mxu0 0
        %5093 = vmatpush1.bf16.msra.mxu0 0
        %5094 = vmatprep.subr.bf16.mxu0 0
        %5095 = vmatpush1.bf16.msra.mxu0 0
        %5096 = vmatprep.subr.bf16.mxu0 0
        %5097 = vmatpush1.bf16.msra.mxu0 0
        %5098 = vmatprep.subr.bf16.mxu0 0
        %5099 = vmatpush1.bf16.msra.mxu0 0
        %5100 = vmatprep.subr.bf16.mxu0 0
        %5101 = vmatpush1.bf16.msra.mxu0 0
        %5102 = vmatprep.mubr.bf16.mxu0 0
        %5103 = vmatmul.mubr.bf16.gmra.mrb[0].mxu0 %v5068
        %v5104 = vpop.f32.mrb[0].mxu0
        %v5105 = vadd.f32 %v5066, %v5104
        %v5106 = vpop.f32.mrb[0].mxu0
        %v5107 = vpop.f32.mrb[0].mxu0
        %v5108 = vadd.f32 %v5066, %v5107
        %v5109 = vpop.f32.mrb[0].mxu0
        %5110 = vdwg.mxu0
        %v5111 = vadd.f32 %v4989, %v5105
        %v5112 = vadd.f32 %v4990, %v5108
        %v5113 = vld [vmem:[#allocation2 + $0x260] sm:$0x1]
        %v5114 = vld [vmem:[#allocation2 + $0x268] sm:$0x1]
        %v5115 = vsel %vm2039, %v5111, 0.0
        %5116 = vadd.xlane.f32.xlu0 %v5115
        %v5117 = vpop.xlane.xlu0 %5116
        %v5118 = vsel %vm2039, %v5112, 0.0
        %5119 = vadd.xlane.f32.xlu0 %v5118
        %v5120 = vpop.xlane.xlu0 %5119
        %v5121 = vmul.f32 %v5117, %v2802
        %v5122 = vmul.f32 %v5120, %v2802
        %v5123 = vsub.f32 %v5111, %v5121
        %v5124 = vsub.f32 %v5112, %v5122
        %v5125 = vmul.f32 %v5123, %v5123
        %v5126 = vmul.f32 %v5124, %v5124
        %v5127 = vsel %vm2039, %v5125, 0.0
        %5128 = vadd.xlane.f32.xlu0 %v5127
        %v5129 = vpop.xlane.xlu0 %5128
        %v5130 = vsel %vm2039, %v5126, 0.0
        %5131 = vadd.xlane.f32.xlu0 %v5130
        %v5132 = vpop.xlane.xlu0 %5131
        %v5133 = vmul.f32 %v5129, %v2802
        %v5134 = vmul.f32 %v5132, %v2802
        %v5135 = vadd.f32 %v5133, 1e-05
        %v5136 = vadd.f32 %v5134, 1e-05
        %v5137 = vrsqrt.pop %v5135
        %v5138 = vrsqrt.pop %v5136
        %v5139 = vmul.f32 %v5123, %v5137
        %v5140 = vmul.f32 %v5124, %v5138
        %v5141 = vlaneseq
        %v5142 = vshrl.u32 %v5141, 7
        %v5143 = vsub.s32 0, %v5142
        %v5144 = vrot.slane %v5113, %v5143
        %v5145 = vmul.f32 %v5139, %v5144
        %v5146 = vmul.f32 %v5140, %v5144
        %v5147 = vlaneseq
        %v5148 = vshrl.u32 %v5147, 7
        %v5149 = vsub.s32 0, %v5148
        %v5150 = vrot.slane %v5114, %v5149
        %v5151 = vadd.f32 %v5145, %v5150
        %v5152 = vadd.f32 %v5146, %v5150
        %v5153 = vld [vmem:[#allocation2 + $0x270] sm:$0x1]
        %v5154 = vld [vmem:[#allocation2 + $0x278] sm:$0x1]
        %v5155 = vsel %vm2039, %v5151, 0.0
        %5156 = vadd.xlane.f32.xlu0 %v5155
        %v5157 = vpop.xlane.xlu0 %5156
        %v5158 = vsel %vm2039, %v5152, 0.0
        %5159 = vadd.xlane.f32.xlu0 %v5158
        %v5160 = vpop.xlane.xlu0 %5159
        %v5161 = vmul.f32 %v5157, %v2802
        %v5162 = vmul.f32 %v5160, %v2802
        %v5163 = vsub.f32 %v5151, %v5161
        %v5164 = vsub.f32 %v5152, %v5162
        %v5165 = vmul.f32 %v5163, %v5163
        %v5166 = vmul.f32 %v5164, %v5164
        %v5167 = vsel %vm2039, %v5165, 0.0
        %5168 = vadd.xlane.f32.xlu0 %v5167
        %v5169 = vpop.xlane.xlu0 %5168
        %v5170 = vsel %vm2039, %v5166, 0.0
        %5171 = vadd.xlane.f32.xlu0 %v5170
        %v5172 = vpop.xlane.xlu0 %5171
        %v5173 = vmul.f32 %v5169, %v2802
        %v5174 = vmul.f32 %v5172, %v2802
        %v5175 = vadd.f32 %v5173, 1e-05
        %v5176 = vadd.f32 %v5174, 1e-05
        %v5177 = vrsqrt.pop %v5175
        %v5178 = vrsqrt.pop %v5176
        %v5179 = vmul.f32 %v5163, %v5177
        %v5180 = vmul.f32 %v5164, %v5178
        %v5181 = vlaneseq
        %v5182 = vshrl.u32 %v5181, 7
        %v5183 = vsub.s32 0, %v5182
        %v5184 = vrot.slane %v5153, %v5183
        %v5185 = vmul.f32 %v5179, %v5184
        %v5186 = vmul.f32 %v5180, %v5184
        %v5187 = vlaneseq
        %v5188 = vshrl.u32 %v5187, 7
        %v5189 = vsub.s32 0, %v5188
        %v5190 = vrot.slane %v5154, %v5189
        %v5191 = vadd.f32 %v5185, %v5190
        %v5192 = vadd.f32 %v5186, %v5190
        %v5193 = vld [vmem:[#allocation2 + $0x280] sm:$0xff]
        %v5194 = vld [vmem:[#allocation2 + $0x288] sm:$0xff]
        %v5195 = vld [vmem:[#allocation2 + $0x290] sm:$0xff]
        %v5196 = vld [vmem:[#allocation2 + $0x298] sm:$0xff]
        %v5197 = vpack.c.bf16 %v5192, %v5191
        %v5198 = vpack.c.bf16 %v5194, %v5193
        %v5199 = vpack.c.bf16 %v5196, %v5195
        %v5200 = vld [vmem:[#allocation2 + $0x2a0] sm:$0x1]
        %v5201 = vlaneseq
        %v5202 = vshrl.u32 %v5201, 7
        %v5203 = vsub.s32 0, %v5202
        %v5204 = vrot.slane %v5200, %v5203
        %v5206 = vsel %vm2039, %v5197, 0
        %5208 = vmatprep.subr.bf16.mxu0 0
        %5209 = vmatpush1.bf16.msra.mxu0 %v5198
        %5210 = vmatprep.subr.bf16.mxu0 0
        %5211 = vmatpush1.bf16.msra.mxu0 %v5199
        %5212 = vmatprep.subr.bf16.mxu0 0
        %5213 = vmatpush1.bf16.msra.mxu0 0
        %5214 = vmatprep.subr.bf16.mxu0 0
        %5215 = vmatpush1.bf16.msra.mxu0 0
        %5216 = vmatprep.subr.bf16.mxu0 0
        %5217 = vmatpush1.bf16.msra.mxu0 0
        %5218 = vmatprep.subr.bf16.mxu0 0
        %5219 = vmatpush1.bf16.msra.mxu0 0
        %5220 = vmatprep.subr.bf16.mxu0 0
        %5221 = vmatpush1.bf16.msra.mxu0 0
        %5222 = vmatprep.subr.bf16.mxu0 0
        %5223 = vmatpush1.bf16.msra.mxu0 0
        %5224 = vmatprep.subr.bf16.mxu0 0
        %5225 = vmatpush1.bf16.msra.mxu0 0
        %5226 = vmatprep.subr.bf16.mxu0 0
        %5227 = vmatpush1.bf16.msra.mxu0 0
        %5228 = vmatprep.subr.bf16.mxu0 0
        %5229 = vmatpush1.bf16.msra.mxu0 0
        %5230 = vmatprep.subr.bf16.mxu0 0
        %5231 = vmatpush1.bf16.msra.mxu0 0
        %5232 = vmatprep.subr.bf16.mxu0 0
        %5233 = vmatpush1.bf16.msra.mxu0 0
        %5234 = vmatprep.subr.bf16.mxu0 0
        %5235 = vmatpush1.bf16.msra.mxu0 0
        %5236 = vmatprep.subr.bf16.mxu0 0
        %5237 = vmatpush1.bf16.msra.mxu0 0
        %5238 = vmatprep.subr.bf16.mxu0 0
        %5239 = vmatpush1.bf16.msra.mxu0 0
        %5240 = vmatprep.mubr.bf16.mxu0 0
        %5241 = vmatmul.mubr.bf16.gmra.mrb[0].mxu0 %v5206
        %v5242 = vpop.f32.mrb[0].mxu0
        %v5243 = vpop.f32.mrb[0].mxu0
        %v5244 = vpop.f32.mrb[0].mxu0
        %v5245 = vadd.f32 %v5204, %v5244
        %v5246 = vpop.f32.mrb[0].mxu0
        %5247 = vdwg.mxu0
        %v5248 = vmul.f32 %v5245, %v261
        %v5249 = vadd.f32 %v5248, %v239
        %5250 = vst.msk [vmem:[%s156] sm:$0xff] %vm228, %v5249
        %p5251 = scmp.lt.s32.totalorder %s14, 1
        %s5252 = scalar_select %p5251, %s14, 1
        %s5253 = smul.addr %s5252, 8
        %s5254 = scalar_lea.vmem %s2, %s5253
        // Predicated region
        $region33: #{forward.1} parent=27 // pred_check
          %p5255 = pneg %p79
        $region34: #{forward.1} parent=27 // pred_check_branch
          %5257 = sbr.rel (%p5255) target = $region36
        $region35: #{forward.1} parent=27 // pred_region
          _
        $region36: #{forward.1} parent=27 // pred_fallthru
          _
      $region28: #{forward.1} parent=5 // pred_fallthru
        _
      %p5258 = scmp.le.s32.totalorder 2, %s9
      // Predicated region
      $region37: #{forward.1} parent=5 // pred_check
        %p5259 = pneg %p5258
      $region38: #{forward.1} parent=5 // pred_check_branch
        %5261 = sbr.rel (%p5259) target = $region40
      $region39: #{forward.1} parent=5 // pred_region
        %s5262 = ssub.s32 %s9, 2
        // Predicated region
        $region41: #{forward.1} parent=39 // pred_check
          %p5263 = pneg %p85
        $region42: #{forward.1} parent=39 // pred_check_branch
          %5265 = sbr.rel (%p5263) target = $region44
        $region43: #{forward.1} parent=39 // pred_region
          %p5266 = scmp.lt.s32.totalorder %s15, 1
          %s5267 = scalar_select %p5266, %s15, 1
          %s5268 = smul.addr %s5267, 8
          %s5269 = scalar_lea.vmem %s2, %s5268
        $region44: #{forward.1} parent=39 // pred_fallthru
          _
      $region40: #{forward.1} parent=5 // pred_fallthru
        _
    $region6: #{forward.1} parent=1 // loop_footer
      %s13 = sadd.s32 1, %s9
    $region7: #{forward.1} parent=1 // loop_footer_branch
      %8 = sbr.rel target = $region3
    $region8: #{forward.1} parent=1 // loop_exit
      _
    %5270 = vsyncpa [#allocation3], 1
    %s5271 = scalar_lea.sflag [#allocation3], 1
    %5272 = vsyncpa %s5271, 1

</llo_original>
